<compile_context>
chip_gen: v6e
topology: v6e:2x2x1
jax: 0.10.0
libtpu: 0.0.40
codegen_flags: <defaults>
</compile_context>

<pallas_src>
import jax
import jax.numpy as jnp
from jax.experimental import pallas as pl
from jax.experimental.pallas import tpu as pltpu  # noqa: F401  (TPU backend)


# --------------------------- fused Pallas kernel -----------------------------

def _lenet_kernel(x_ref,
                  l1_ref, c1_ref, pr1_ref, pc1_ref, b1_ref,
                  l2_ref, c2_ref, pr2_ref, pc2_ref, b2_ref,
                  w1w_ref, fb1_ref, fw2_ref, fb2_ref, fw3_ref, fb3_ref,
                  out_ref):
    f32 = jnp.float32
    K = 5

    def conv_relu_pool(x2d, l_ref, c_ref, pr_ref, pc_ref, b_ref):
        # x2d: (C_in*H_in, W_in).  Returns relu(maxpool2x2(conv(x2d) + b)) in
        # (C_out*H_p, W_p) layout.  conv = sum_kj L[kj] @ (x2d @ C[kj]); the
        # 2x2 pool is an exact gather via 0/1 selection matmuls + element max.
        y = None
        for kj in range(K):
            z = jnp.dot(x2d, c_ref[kj], preferred_element_type=f32)
            t = jnp.dot(l_ref[kj], z, preferred_element_type=f32)
            y = t if y is None else y + t
        r0 = jnp.dot(pr_ref[0], y, preferred_element_type=f32)
        r1 = jnp.dot(pr_ref[1], y, preferred_element_type=f32)
        p00 = jnp.dot(r0, pc_ref[0], preferred_element_type=f32)
        p01 = jnp.dot(r0, pc_ref[1], preferred_element_type=f32)
        p10 = jnp.dot(r1, pc_ref[0], preferred_element_type=f32)
        p11 = jnp.dot(r1, pc_ref[1], preferred_element_type=f32)
        m = jnp.maximum(jnp.maximum(p00, p01), jnp.maximum(p10, p11))
        return jnp.maximum(m + b_ref[...], 0.0)

    batch = out_ref.shape[0]
    for b in range(batch):                       # B is tiny and static: unroll
        x_img = x_ref[b]                                              # (28, 28)
        p1 = conv_relu_pool(x_img, l1_ref, c1_ref, pr1_ref, pc1_ref, b1_ref)  # (72, 12)
        p2 = conv_relu_pool(p1,    l2_ref, c2_ref, pr2_ref, pc2_ref, b2_ref)  # (64, 4)

        # fc1 on the (C,H,W)-ordered flatten, folded per spatial column so no
        # in-kernel reshape/transpose is needed: h = sum_w W1w[w] @ p2[:, w].
        h = None
        for w in range(p2.shape[1]):
            t = jnp.dot(w1w_ref[w], p2[:, w:w + 1], preferred_element_type=f32)
            h = t if h is None else h + t
        h1 = jnp.maximum(h + fb1_ref[...], 0.0)                        # (120, 1)
        h2 = jnp.maximum(
            jnp.dot(fw2_ref[...], h1, preferred_element_type=f32) + fb2_ref[...],
            0.0)                                                       # (84, 1)
        logits = (jnp.dot(fw3_ref[...], h2, preferred_element_type=f32)
                  + fb3_ref[...])                                      # (10, 1)
        out_ref[b] = logits


# ----------------- one-time parameter preprocessing (hoisted) ----------------

def _conv_shift_mats(w, h_in):
    """Banded weight matrices L[kj] (C_out*H_out, C_in*H_in) and column-shift
    selectors C[kj] (W_in, W_out) so that conv(x) = sum_kj L[kj] @ x2d @ C[kj]
    for x2d in (C_in*H_in, W_in) layout (square spatial)."""
    c_out, c_in, k, _ = w.shape
    h_out = h_in - k + 1
    i_idx = jnp.arange(h_out)
    r_idx = jnp.arange(h_in)
    d = r_idx[None, :] - i_idx[:, None]                  # (h_out, h_in) == ki
    valid = (d >= 0) & (d < k)
    band = w[:, :, jnp.clip(d, 0, k - 1), :]             # (c_out,c_in,h_out,h_in,k)
    band = jnp.where(valid[None, None, :, :, None], band, 0.0)
    L = band.transpose(4, 0, 2, 1, 3).reshape(k, c_out * h_out, c_in * h_in)
    j_idx = jnp.arange(h_out)
    C = (jnp.arange(h_in)[None, :, None]
         == (j_idx[None, None, :] + jnp.arange(k)[:, None, None])
         ).astype(jnp.float32)                            # (k, w_in, w_out)
    return L.astype(jnp.float32), C


def _pool_select_mats(c_out, h_out):
    """0/1 selectors for the 4 phases of a 2x2/stride-2 pool of an activation
    stored as (C_out*H_out, W_out): rows (block-diag per channel) and cols."""
    h_p = h_out // 2
    o = jnp.arange(c_out * h_p)
    co, p = o // h_p, o % h_p
    rows = jnp.arange(c_out * h_out)
    Pr = jnp.stack([(rows[None, :] == (co * h_out + 2 * p + ph)[:, None])
                    .astype(jnp.float32) for ph in (0, 1)], axis=0)
    q = jnp.arange(h_p)
    Pc = jnp.stack([(jnp.arange(h_out)[:, None] == (2 * q + pw)[None, :])
                    .astype(jnp.float32) for pw in (0, 1)], axis=0)
    return Pr, Pc


def preprocess_params(params):
    """All weight-layout work, done once (never on the per-forward path)."""
    w1, b1, w2, b2, fw1, fb1, fw2, fb2, fw3, fb3 = params
    # conv1: 1x28x28 -> 6x24x24 -> pool -> 6x12x12
    L1, C1 = _conv_shift_mats(w1, 28)
    Pr1, Pc1 = _pool_select_mats(6, 24)
    b1r = jnp.repeat(b1, 12).reshape(6 * 12, 1)
    # conv2: 6x12x12 -> 16x8x8 -> pool -> 16x4x4
    L2, C2 = _conv_shift_mats(w2, 12)
    Pr2, Pc2 = _pool_select_mats(16, 8)
    b2r = jnp.repeat(b2, 4).reshape(16 * 4, 1)
    # fc1 weight regrouped per spatial column of the (16*4, 4) activation so
    # the PyTorch .view(B, -1) (C,H,W) ordering needs no in-kernel reshape.
    W1w = fw1.reshape(120, 16, 4, 4).transpose(3, 0, 1, 2).reshape(4, 120, 64)
    return (L1, C1, Pr1, Pc1, b1r,
            L2, C2, Pr2, Pc2, b2r,
            W1w, fb1.reshape(120, 1),
            fw2, fb2.reshape(84, 1),
            fw3, fb3.reshape(10, 1))


# ------------------------------ forward wrapper -------------------------------

@jax.jit
def lenet_forward(x, prep):
    B = x.shape[0]
    x2d = x.reshape(B, 28, 28)              # drop the singleton channel dim
    args = (x2d,) + tuple(prep)

    def full_spec(a):                        # whole array resident in VMEM
        return pl.BlockSpec(a.shape, lambda i, nd=a.ndim: (0,) * nd)

    out = pl.pallas_call(
        _lenet_kernel,
        out_shape=jax.ShapeDtypeStruct((B, 10, 1), jnp.float32),
        grid=(1,),
        in_specs=[full_spec(a) for a in args],
        out_specs=pl.BlockSpec((B, 10, 1), lambda i: (0, 0, 0)),
    )(*args)
    return out.reshape(B, 10)


# --------------------------- pure-JAX reference -------------------------------

def ref_forward(x, params):
    w1, b1, w2, b2, fw1, fb1, fw2, fb2, fw3, fb3 = params
    dn = ('NCHW', 'OIHW', 'NCHW')
    hp = jax.lax.Precision.HIGHEST
    y = jax.lax.conv_general_dilated(x, w1, (1, 1), 'VALID',
                                     dimension_numbers=dn, precision=hp)
    y = jax.nn.relu(y + b1[None, :, None, None])
    y = jax.lax.reduce_window(y, -jnp.inf, jax.lax.max,
                              (1, 1, 2, 2), (1, 1, 2, 2), 'VALID')
    y = jax.lax.conv_general_dilated(y, w2, (1, 1), 'VALID',
                                     dimension_numbers=dn, precision=hp)
    y = jax.nn.relu(y + b2[None, :, None, None])
    y = jax.lax.reduce_window(y, -jnp.inf, jax.lax.max,
                              (1, 1, 2, 2), (1, 1, 2, 2), 'VALID')
    y = y.reshape(y.shape[0], -1)
    y = jax.nn.relu(jnp.dot(y, fw1.T, precision=hp) + fb1)
    y = jax.nn.relu(jnp.dot(y, fw2.T, precision=hp) + fb2)
    return jnp.dot(y, fw3.T, precision=hp) + fb3


# ----------------------------------- main --------------------------------------

if __name__ == "__main__":
    key = jax.random.PRNGKey(0)
    ks = jax.random.split(key, 11)
    B = 2
    # fc1 expects 16*4*4 features, which pins the input spatial size to 28x28.
    x = jax.random.normal(ks[0], (B, 1, 28, 28), jnp.float32)
    params = (
        0.1 * jax.random.normal(ks[1], (6, 1, 5, 5), jnp.float32),   # conv1.weight
        0.1 * jax.random.normal(ks[2], (6,), jnp.float32),           # conv1.bias
        0.1 * jax.random.normal(ks[3], (16, 6, 5, 5), jnp.float32),  # conv2.weight
        0.1 * jax.random.normal(ks[4], (16,), jnp.float32),          # conv2.bias
        0.1 * jax.random.normal(ks[5], (120, 256), jnp.float32),     # fc1.weight
        0.1 * jax.random.normal(ks[6], (120,), jnp.float32),         # fc1.bias
        0.1 * jax.random.normal(ks[7], (84, 120), jnp.float32),      # fc2.weight
        0.1 * jax.random.normal(ks[8], (84,), jnp.float32),          # fc2.bias
        0.1 * jax.random.normal(ks[9], (10, 84), jnp.float32),       # fc3.weight
        0.1 * jax.random.normal(ks[10], (10,), jnp.float32),         # fc3.bias
    )

    prep = preprocess_params(params)        # one-time weight-layout hoist
    out = jax.block_until_ready(lenet_forward(x, prep))
    ref = jax.block_until_ready(ref_forward(x, params))

    assert out.shape == (B, 10), out.shape
    assert jnp.allclose(out, ref, rtol=3e-2, atol=3e-2), \
        f"max abs diff {jnp.max(jnp.abs(out - ref))}"
    print("KERNEL_OK")
</pallas_src>

<mosaic_0001>
module attributes {stable_mosaic.version = 11 : i64} {
  func.func @_lenet_kernel(%arg0: i32, %arg1: memref<2x28x28xf32, #tpu.memory_space<vmem>>, %arg2: memref<5x144x28xf32, #tpu.memory_space<vmem>>, %arg3: memref<5x28x24xf32, #tpu.memory_space<vmem>>, %arg4: memref<2x72x144xf32, #tpu.memory_space<vmem>>, %arg5: memref<2x24x12xf32, #tpu.memory_space<vmem>>, %arg6: memref<72x1xf32, #tpu.memory_space<vmem>>, %arg7: memref<5x128x72xf32, #tpu.memory_space<vmem>>, %arg8: memref<5x12x8xf32, #tpu.memory_space<vmem>>, %arg9: memref<2x64x128xf32, #tpu.memory_space<vmem>>, %arg10: memref<2x8x4xf32, #tpu.memory_space<vmem>>, %arg11: memref<64x1xf32, #tpu.memory_space<vmem>>, %arg12: memref<4x120x64xf32, #tpu.memory_space<vmem>>, %arg13: memref<120x1xf32, #tpu.memory_space<vmem>>, %arg14: memref<84x120xf32, #tpu.memory_space<vmem>>, %arg15: memref<84x1xf32, #tpu.memory_space<vmem>>, %arg16: memref<10x84xf32, #tpu.memory_space<vmem>>, %arg17: memref<10x1xf32, #tpu.memory_space<vmem>>, %arg18: memref<2x10x1xf32, #tpu.memory_space<vmem>>) attributes {dimension_semantics = [#tpu.dimension_semantics<arbitrary>], iteration_bounds = array<i64: 1>, scalar_prefetch = 0 : i64, scratch_operands = 0 : i64, tpu.core_type = #tpu.core_type<tc>, window_params = [{pipeline_mode = #tpu.pipeline_mode<synchronous>, transform_indices = @transform_0, window_bounds = array<i64: 2, 28, 28>}, {pipeline_mode = #tpu.pipeline_mode<synchronous>, transform_indices = @transform_1, window_bounds = array<i64: 5, 144, 28>}, {pipeline_mode = #tpu.pipeline_mode<synchronous>, transform_indices = @transform_2, window_bounds = array<i64: 5, 28, 24>}, {pipeline_mode = #tpu.pipeline_mode<synchronous>, transform_indices = @transform_3, window_bounds = array<i64: 2, 72, 144>}, {pipeline_mode = #tpu.pipeline_mode<synchronous>, transform_indices = @transform_4, window_bounds = array<i64: 2, 24, 12>}, {pipeline_mode = #tpu.pipeline_mode<synchronous>, transform_indices = @transform_5, window_bounds = array<i64: 72, 1>}, {pipeline_mode = #tpu.pipeline_mode<synchronous>, transform_indices = @transform_6, window_bounds = array<i64: 5, 128, 72>}, {pipeline_mode = #tpu.pipeline_mode<synchronous>, transform_indices = @transform_7, window_bounds = array<i64: 5, 12, 8>}, {pipeline_mode = #tpu.pipeline_mode<synchronous>, transform_indices = @transform_8, window_bounds = array<i64: 2, 64, 128>}, {pipeline_mode = #tpu.pipeline_mode<synchronous>, transform_indices = @transform_9, window_bounds = array<i64: 2, 8, 4>}, {pipeline_mode = #tpu.pipeline_mode<synchronous>, transform_indices = @transform_10, window_bounds = array<i64: 64, 1>}, {pipeline_mode = #tpu.pipeline_mode<synchronous>, transform_indices = @transform_11, window_bounds = array<i64: 4, 120, 64>}, {pipeline_mode = #tpu.pipeline_mode<synchronous>, transform_indices = @transform_12, window_bounds = array<i64: 120, 1>}, {pipeline_mode = #tpu.pipeline_mode<synchronous>, transform_indices = @transform_13, window_bounds = array<i64: 84, 120>}, {pipeline_mode = #tpu.pipeline_mode<synchronous>, transform_indices = @transform_14, window_bounds = array<i64: 84, 1>}, {pipeline_mode = #tpu.pipeline_mode<synchronous>, transform_indices = @transform_15, window_bounds = array<i64: 10, 84>}, {pipeline_mode = #tpu.pipeline_mode<synchronous>, transform_indices = @transform_16, window_bounds = array<i64: 10, 1>}, {pipeline_mode = #tpu.pipeline_mode<synchronous>, transform_indices = @transform_17, window_bounds = array<i64: 2, 10, 1>}]} {
    %c0 = arith.constant 0 : index
    %c0_0 = arith.constant 0 : index
    %c0_1 = arith.constant 0 : index
    %0 = vector.load %arg1[%c0, %c0_0, %c0_1] : memref<2x28x28xf32, #tpu.memory_space<vmem>>, vector<1x28x28xf32>
    %1 = vector.shape_cast %0 : vector<1x28x28xf32> to vector<28x28xf32>
    %c0_2 = arith.constant 0 : index
    %c0_3 = arith.constant 0 : index
    %c0_4 = arith.constant 0 : index
    %2 = vector.load %arg3[%c0_2, %c0_3, %c0_4] : memref<5x28x24xf32, #tpu.memory_space<vmem>>, vector<1x28x24xf32>
    %3 = vector.shape_cast %2 : vector<1x28x24xf32> to vector<28x24xf32>
    %cst = arith.constant dense<0.000000e+00> : vector<28x24xf32>
    %4 = tpu.matmul %1, %3, %cst {dimension_numbers = #tpu.dot_dimension_numbers<[1], [0], [0], [1], [0, 0, 1, 1], [], []>} : vector<28x28xf32>, vector<28x24xf32>, vector<28x24xf32> -> vector<28x24xf32>
    %c0_5 = arith.constant 0 : index
    %c0_6 = arith.constant 0 : index
    %c0_7 = arith.constant 0 : index
    %5 = vector.load %arg2[%c0_5, %c0_6, %c0_7] : memref<5x144x28xf32, #tpu.memory_space<vmem>>, vector<1x144x28xf32>
    %6 = vector.shape_cast %5 : vector<1x144x28xf32> to vector<144x28xf32>
    %cst_8 = arith.constant dense<0.000000e+00> : vector<144x24xf32>
    %7 = tpu.matmul %6, %4, %cst_8 {dimension_numbers = #tpu.dot_dimension_numbers<[1], [0], [0], [1], [0, 0, 1, 1], [], []>} : vector<144x28xf32>, vector<28x24xf32>, vector<144x24xf32> -> vector<144x24xf32>
    %c1 = arith.constant 1 : index
    %c0_9 = arith.constant 0 : index
    %c0_10 = arith.constant 0 : index
    %8 = vector.load %arg3[%c1, %c0_9, %c0_10] : memref<5x28x24xf32, #tpu.memory_space<vmem>>, vector<1x28x24xf32>
    %9 = vector.shape_cast %8 : vector<1x28x24xf32> to vector<28x24xf32>
    %cst_11 = arith.constant dense<0.000000e+00> : vector<28x24xf32>
    %10 = tpu.matmul %1, %9, %cst_11 {dimension_numbers = #tpu.dot_dimension_numbers<[1], [0], [0], [1], [0, 0, 1, 1], [], []>} : vector<28x28xf32>, vector<28x24xf32>, vector<28x24xf32> -> vector<28x24xf32>
    %c1_12 = arith.constant 1 : index
    %c0_13 = arith.constant 0 : index
    %c0_14 = arith.constant 0 : index
    %11 = vector.load %arg2[%c1_12, %c0_13, %c0_14] : memref<5x144x28xf32, #tpu.memory_space<vmem>>, vector<1x144x28xf32>
    %12 = vector.shape_cast %11 : vector<1x144x28xf32> to vector<144x28xf32>
    %cst_15 = arith.constant dense<0.000000e+00> : vector<144x24xf32>
    %13 = tpu.matmul %12, %10, %cst_15 {dimension_numbers = #tpu.dot_dimension_numbers<[1], [0], [0], [1], [0, 0, 1, 1], [], []>} : vector<144x28xf32>, vector<28x24xf32>, vector<144x24xf32> -> vector<144x24xf32>
    %14 = arith.addf %7, %13 : vector<144x24xf32>
    %c2 = arith.constant 2 : index
    %c0_16 = arith.constant 0 : index
    %c0_17 = arith.constant 0 : index
    %15 = vector.load %arg3[%c2, %c0_16, %c0_17] : memref<5x28x24xf32, #tpu.memory_space<vmem>>, vector<1x28x24xf32>
    %16 = vector.shape_cast %15 : vector<1x28x24xf32> to vector<28x24xf32>
    %cst_18 = arith.constant dense<0.000000e+00> : vector<28x24xf32>
    %17 = tpu.matmul %1, %16, %cst_18 {dimension_numbers = #tpu.dot_dimension_numbers<[1], [0], [0], [1], [0, 0, 1, 1], [], []>} : vector<28x28xf32>, vector<28x24xf32>, vector<28x24xf32> -> vector<28x24xf32>
    %c2_19 = arith.constant 2 : index
    %c0_20 = arith.constant 0 : index
    %c0_21 = arith.constant 0 : index
    %18 = vector.load %arg2[%c2_19, %c0_20, %c0_21] : memref<5x144x28xf32, #tpu.memory_space<vmem>>, vector<1x144x28xf32>
    %19 = vector.shape_cast %18 : vector<1x144x28xf32> to vector<144x28xf32>
    %cst_22 = arith.constant dense<0.000000e+00> : vector<144x24xf32>
    %20 = tpu.matmul %19, %17, %cst_22 {dimension_numbers = #tpu.dot_dimension_numbers<[1], [0], [0], [1], [0, 0, 1, 1], [], []>} : vector<144x28xf32>, vector<28x24xf32>, vector<144x24xf32> -> vector<144x24xf32>
    %21 = arith.addf %14, %20 : vector<144x24xf32>
    %c3 = arith.constant 3 : index
    %c0_23 = arith.constant 0 : index
    %c0_24 = arith.constant 0 : index
    %22 = vector.load %arg3[%c3, %c0_23, %c0_24] : memref<5x28x24xf32, #tpu.memory_space<vmem>>, vector<1x28x24xf32>
    %23 = vector.shape_cast %22 : vector<1x28x24xf32> to vector<28x24xf32>
    %cst_25 = arith.constant dense<0.000000e+00> : vector<28x24xf32>
    %24 = tpu.matmul %1, %23, %cst_25 {dimension_numbers = #tpu.dot_dimension_numbers<[1], [0], [0], [1], [0, 0, 1, 1], [], []>} : vector<28x28xf32>, vector<28x24xf32>, vector<28x24xf32> -> vector<28x24xf32>
    %c3_26 = arith.constant 3 : index
    %c0_27 = arith.constant 0 : index
    %c0_28 = arith.constant 0 : index
    %25 = vector.load %arg2[%c3_26, %c0_27, %c0_28] : memref<5x144x28xf32, #tpu.memory_space<vmem>>, vector<1x144x28xf32>
    %26 = vector.shape_cast %25 : vector<1x144x28xf32> to vector<144x28xf32>
    %cst_29 = arith.constant dense<0.000000e+00> : vector<144x24xf32>
    %27 = tpu.matmul %26, %24, %cst_29 {dimension_numbers = #tpu.dot_dimension_numbers<[1], [0], [0], [1], [0, 0, 1, 1], [], []>} : vector<144x28xf32>, vector<28x24xf32>, vector<144x24xf32> -> vector<144x24xf32>
    %28 = arith.addf %21, %27 : vector<144x24xf32>
    %c4 = arith.constant 4 : index
    %c0_30 = arith.constant 0 : index
    %c0_31 = arith.constant 0 : index
    %29 = vector.load %arg3[%c4, %c0_30, %c0_31] : memref<5x28x24xf32, #tpu.memory_space<vmem>>, vector<1x28x24xf32>
    %30 = vector.shape_cast %29 : vector<1x28x24xf32> to vector<28x24xf32>
    %cst_32 = arith.constant dense<0.000000e+00> : vector<28x24xf32>
    %31 = tpu.matmul %1, %30, %cst_32 {dimension_numbers = #tpu.dot_dimension_numbers<[1], [0], [0], [1], [0, 0, 1, 1], [], []>} : vector<28x28xf32>, vector<28x24xf32>, vector<28x24xf32> -> vector<28x24xf32>
    %c4_33 = arith.constant 4 : index
    %c0_34 = arith.constant 0 : index
    %c0_35 = arith.constant 0 : index
    %32 = vector.load %arg2[%c4_33, %c0_34, %c0_35] : memref<5x144x28xf32, #tpu.memory_space<vmem>>, vector<1x144x28xf32>
    %33 = vector.shape_cast %32 : vector<1x144x28xf32> to vector<144x28xf32>
    %cst_36 = arith.constant dense<0.000000e+00> : vector<144x24xf32>
    %34 = tpu.matmul %33, %31, %cst_36 {dimension_numbers = #tpu.dot_dimension_numbers<[1], [0], [0], [1], [0, 0, 1, 1], [], []>} : vector<144x28xf32>, vector<28x24xf32>, vector<144x24xf32> -> vector<144x24xf32>
    %35 = arith.addf %28, %34 : vector<144x24xf32>
    %c0_37 = arith.constant 0 : index
    %c0_38 = arith.constant 0 : index
    %c0_39 = arith.constant 0 : index
    %36 = vector.load %arg4[%c0_37, %c0_38, %c0_39] : memref<2x72x144xf32, #tpu.memory_space<vmem>>, vector<1x72x144xf32>
    %37 = vector.shape_cast %36 : vector<1x72x144xf32> to vector<72x144xf32>
    %cst_40 = arith.constant dense<0.000000e+00> : vector<72x24xf32>
    %38 = tpu.matmul %37, %35, %cst_40 {dimension_numbers = #tpu.dot_dimension_numbers<[1], [0], [0], [1], [0, 0, 1, 1], [], []>} : vector<72x144xf32>, vector<144x24xf32>, vector<72x24xf32> -> vector<72x24xf32>
    %c1_41 = arith.constant 1 : index
    %c0_42 = arith.constant 0 : index
    %c0_43 = arith.constant 0 : index
    %39 = vector.load %arg4[%c1_41, %c0_42, %c0_43] : memref<2x72x144xf32, #tpu.memory_space<vmem>>, vector<1x72x144xf32>
    %40 = vector.shape_cast %39 : vector<1x72x144xf32> to vector<72x144xf32>
    %cst_44 = arith.constant dense<0.000000e+00> : vector<72x24xf32>
    %41 = tpu.matmul %40, %35, %cst_44 {dimension_numbers = #tpu.dot_dimension_numbers<[1], [0], [0], [1], [0, 0, 1, 1], [], []>} : vector<72x144xf32>, vector<144x24xf32>, vector<72x24xf32> -> vector<72x24xf32>
    %c0_45 = arith.constant 0 : index
    %c0_46 = arith.constant 0 : index
    %c0_47 = arith.constant 0 : index
    %42 = vector.load %arg5[%c0_45, %c0_46, %c0_47] : memref<2x24x12xf32, #tpu.memory_space<vmem>>, vector<1x24x12xf32>
    %43 = vector.shape_cast %42 : vector<1x24x12xf32> to vector<24x12xf32>
    %cst_48 = arith.constant dense<0.000000e+00> : vector<72x12xf32>
    %44 = tpu.matmul %38, %43, %cst_48 {dimension_numbers = #tpu.dot_dimension_numbers<[1], [0], [0], [1], [0, 0, 1, 1], [], []>} : vector<72x24xf32>, vector<24x12xf32>, vector<72x12xf32> -> vector<72x12xf32>
    %c1_49 = arith.constant 1 : index
    %c0_50 = arith.constant 0 : index
    %c0_51 = arith.constant 0 : index
    %45 = vector.load %arg5[%c1_49, %c0_50, %c0_51] : memref<2x24x12xf32, #tpu.memory_space<vmem>>, vector<1x24x12xf32>
    %46 = vector.shape_cast %45 : vector<1x24x12xf32> to vector<24x12xf32>
    %cst_52 = arith.constant dense<0.000000e+00> : vector<72x12xf32>
    %47 = tpu.matmul %38, %46, %cst_52 {dimension_numbers = #tpu.dot_dimension_numbers<[1], [0], [0], [1], [0, 0, 1, 1], [], []>} : vector<72x24xf32>, vector<24x12xf32>, vector<72x12xf32> -> vector<72x12xf32>
    %c0_53 = arith.constant 0 : index
    %c0_54 = arith.constant 0 : index
    %c0_55 = arith.constant 0 : index
    %48 = vector.load %arg5[%c0_53, %c0_54, %c0_55] : memref<2x24x12xf32, #tpu.memory_space<vmem>>, vector<1x24x12xf32>
    %49 = vector.shape_cast %48 : vector<1x24x12xf32> to vector<24x12xf32>
    %cst_56 = arith.constant dense<0.000000e+00> : vector<72x12xf32>
    %50 = tpu.matmul %41, %49, %cst_56 {dimension_numbers = #tpu.dot_dimension_numbers<[1], [0], [0], [1], [0, 0, 1, 1], [], []>} : vector<72x24xf32>, vector<24x12xf32>, vector<72x12xf32> -> vector<72x12xf32>
    %c1_57 = arith.constant 1 : index
    %c0_58 = arith.constant 0 : index
    %c0_59 = arith.constant 0 : index
    %51 = vector.load %arg5[%c1_57, %c0_58, %c0_59] : memref<2x24x12xf32, #tpu.memory_space<vmem>>, vector<1x24x12xf32>
    %52 = vector.shape_cast %51 : vector<1x24x12xf32> to vector<24x12xf32>
    %cst_60 = arith.constant dense<0.000000e+00> : vector<72x12xf32>
    %53 = tpu.matmul %41, %52, %cst_60 {dimension_numbers = #tpu.dot_dimension_numbers<[1], [0], [0], [1], [0, 0, 1, 1], [], []>} : vector<72x24xf32>, vector<24x12xf32>, vector<72x12xf32> -> vector<72x12xf32>
    %54 = arith.maximumf %44, %47 : vector<72x12xf32>
    %55 = arith.maximumf %50, %53 : vector<72x12xf32>
    %56 = arith.maximumf %54, %55 : vector<72x12xf32>
    %c0_61 = arith.constant 0 : index
    %c0_62 = arith.constant 0 : index
    %57 = vector.load %arg6[%c0_61, %c0_62] : memref<72x1xf32, #tpu.memory_space<vmem>>, vector<72x1xf32>
    %58 = vector.broadcast %57 : vector<72x1xf32> to vector<72x12xf32>
    %59 = arith.addf %56, %58 : vector<72x12xf32>
    %cst_63 = arith.constant 0.000000e+00 : f32
    %60 = vector.broadcast %cst_63 : f32 to vector<72x12xf32>
    %61 = arith.maximumf %59, %60 : vector<72x12xf32>
    %c0_64 = arith.constant 0 : index
    %c0_65 = arith.constant 0 : index
    %c0_66 = arith.constant 0 : index
    %62 = vector.load %arg8[%c0_64, %c0_65, %c0_66] : memref<5x12x8xf32, #tpu.memory_space<vmem>>, vector<1x12x8xf32>
    %63 = vector.shape_cast %62 : vector<1x12x8xf32> to vector<12x8xf32>
    %cst_67 = arith.constant dense<0.000000e+00> : vector<72x8xf32>
    %64 = tpu.matmul %61, %63, %cst_67 {dimension_numbers = #tpu.dot_dimension_numbers<[1], [0], [0], [1], [0, 0, 1, 1], [], []>} : vector<72x12xf32>, vector<12x8xf32>, vector<72x8xf32> -> vector<72x8xf32>
    %c0_68 = arith.constant 0 : index
    %c0_69 = arith.constant 0 : index
    %c0_70 = arith.constant 0 : index
    %65 = vector.load %arg7[%c0_68, %c0_69, %c0_70] : memref<5x128x72xf32, #tpu.memory_space<vmem>>, vector<1x128x72xf32>
    %66 = vector.shape_cast %65 : vector<1x128x72xf32> to vector<128x72xf32>
    %cst_71 = arith.constant dense<0.000000e+00> : vector<128x8xf32>
    %67 = tpu.matmul %66, %64, %cst_71 {dimension_numbers = #tpu.dot_dimension_numbers<[1], [0], [0], [1], [0, 0, 1, 1], [], []>} : vector<128x72xf32>, vector<72x8xf32>, vector<128x8xf32> -> vector<128x8xf32>
    %c1_72 = arith.constant 1 : index
    %c0_73 = arith.constant 0 : index
    %c0_74 = arith.constant 0 : index
    %68 = vector.load %arg8[%c1_72, %c0_73, %c0_74] : memref<5x12x8xf32, #tpu.memory_space<vmem>>, vector<1x12x8xf32>
    %69 = vector.shape_cast %68 : vector<1x12x8xf32> to vector<12x8xf32>
    %cst_75 = arith.constant dense<0.000000e+00> : vector<72x8xf32>
    %70 = tpu.matmul %61, %69, %cst_75 {dimension_numbers = #tpu.dot_dimension_numbers<[1], [0], [0], [1], [0, 0, 1, 1], [], []>} : vector<72x12xf32>, vector<12x8xf32>, vector<72x8xf32> -> vector<72x8xf32>
    %c1_76 = arith.constant 1 : index
    %c0_77 = arith.constant 0 : index
    %c0_78 = arith.constant 0 : index
    %71 = vector.load %arg7[%c1_76, %c0_77, %c0_78] : memref<5x128x72xf32, #tpu.memory_space<vmem>>, vector<1x128x72xf32>
    %72 = vector.shape_cast %71 : vector<1x128x72xf32> to vector<128x72xf32>
    %cst_79 = arith.constant dense<0.000000e+00> : vector<128x8xf32>
    %73 = tpu.matmul %72, %70, %cst_79 {dimension_numbers = #tpu.dot_dimension_numbers<[1], [0], [0], [1], [0, 0, 1, 1], [], []>} : vector<128x72xf32>, vector<72x8xf32>, vector<128x8xf32> -> vector<128x8xf32>
    %74 = arith.addf %67, %73 : vector<128x8xf32>
    %c2_80 = arith.constant 2 : index
    %c0_81 = arith.constant 0 : index
    %c0_82 = arith.constant 0 : index
    %75 = vector.load %arg8[%c2_80, %c0_81, %c0_82] : memref<5x12x8xf32, #tpu.memory_space<vmem>>, vector<1x12x8xf32>
    %76 = vector.shape_cast %75 : vector<1x12x8xf32> to vector<12x8xf32>
    %cst_83 = arith.constant dense<0.000000e+00> : vector<72x8xf32>
    %77 = tpu.matmul %61, %76, %cst_83 {dimension_numbers = #tpu.dot_dimension_numbers<[1], [0], [0], [1], [0, 0, 1, 1], [], []>} : vector<72x12xf32>, vector<12x8xf32>, vector<72x8xf32> -> vector<72x8xf32>
    %c2_84 = arith.constant 2 : index
    %c0_85 = arith.constant 0 : index
    %c0_86 = arith.constant 0 : index
    %78 = vector.load %arg7[%c2_84, %c0_85, %c0_86] : memref<5x128x72xf32, #tpu.memory_space<vmem>>, vector<1x128x72xf32>
    %79 = vector.shape_cast %78 : vector<1x128x72xf32> to vector<128x72xf32>
    %cst_87 = arith.constant dense<0.000000e+00> : vector<128x8xf32>
    %80 = tpu.matmul %79, %77, %cst_87 {dimension_numbers = #tpu.dot_dimension_numbers<[1], [0], [0], [1], [0, 0, 1, 1], [], []>} : vector<128x72xf32>, vector<72x8xf32>, vector<128x8xf32> -> vector<128x8xf32>
    %81 = arith.addf %74, %80 : vector<128x8xf32>
    %c3_88 = arith.constant 3 : index
    %c0_89 = arith.constant 0 : index
    %c0_90 = arith.constant 0 : index
    %82 = vector.load %arg8[%c3_88, %c0_89, %c0_90] : memref<5x12x8xf32, #tpu.memory_space<vmem>>, vector<1x12x8xf32>
    %83 = vector.shape_cast %82 : vector<1x12x8xf32> to vector<12x8xf32>
    %cst_91 = arith.constant dense<0.000000e+00> : vector<72x8xf32>
    %84 = tpu.matmul %61, %83, %cst_91 {dimension_numbers = #tpu.dot_dimension_numbers<[1], [0], [0], [1], [0, 0, 1, 1], [], []>} : vector<72x12xf32>, vector<12x8xf32>, vector<72x8xf32> -> vector<72x8xf32>
    %c3_92 = arith.constant 3 : index
    %c0_93 = arith.constant 0 : index
    %c0_94 = arith.constant 0 : index
    %85 = vector.load %arg7[%c3_92, %c0_93, %c0_94] : memref<5x128x72xf32, #tpu.memory_space<vmem>>, vector<1x128x72xf32>
    %86 = vector.shape_cast %85 : vector<1x128x72xf32> to vector<128x72xf32>
    %cst_95 = arith.constant dense<0.000000e+00> : vector<128x8xf32>
    %87 = tpu.matmul %86, %84, %cst_95 {dimension_numbers = #tpu.dot_dimension_numbers<[1], [0], [0], [1], [0, 0, 1, 1], [], []>} : vector<128x72xf32>, vector<72x8xf32>, vector<128x8xf32> -> vector<128x8xf32>
    %88 = arith.addf %81, %87 : vector<128x8xf32>
    %c4_96 = arith.constant 4 : index
    %c0_97 = arith.constant 0 : index
    %c0_98 = arith.constant 0 : index
    %89 = vector.load %arg8[%c4_96, %c0_97, %c0_98] : memref<5x12x8xf32, #tpu.memory_space<vmem>>, vector<1x12x8xf32>
    %90 = vector.shape_cast %89 : vector<1x12x8xf32> to vector<12x8xf32>
    %cst_99 = arith.constant dense<0.000000e+00> : vector<72x8xf32>
    %91 = tpu.matmul %61, %90, %cst_99 {dimension_numbers = #tpu.dot_dimension_numbers<[1], [0], [0], [1], [0, 0, 1, 1], [], []>} : vector<72x12xf32>, vector<12x8xf32>, vector<72x8xf32> -> vector<72x8xf32>
    %c4_100 = arith.constant 4 : index
    %c0_101 = arith.constant 0 : index
    %c0_102 = arith.constant 0 : index
    %92 = vector.load %arg7[%c4_100, %c0_101, %c0_102] : memref<5x128x72xf32, #tpu.memory_space<vmem>>, vector<1x128x72xf32>
    %93 = vector.shape_cast %92 : vector<1x128x72xf32> to vector<128x72xf32>
    %cst_103 = arith.constant dense<0.000000e+00> : vector<128x8xf32>
    %94 = tpu.matmul %93, %91, %cst_103 {dimension_numbers = #tpu.dot_dimension_numbers<[1], [0], [0], [1], [0, 0, 1, 1], [], []>} : vector<128x72xf32>, vector<72x8xf32>, vector<128x8xf32> -> vector<128x8xf32>
    %95 = arith.addf %88, %94 : vector<128x8xf32>
    %c0_104 = arith.constant 0 : index
    %c0_105 = arith.constant 0 : index
    %c0_106 = arith.constant 0 : index
    %96 = vector.load %arg9[%c0_104, %c0_105, %c0_106] : memref<2x64x128xf32, #tpu.memory_space<vmem>>, vector<1x64x128xf32>
    %97 = vector.shape_cast %96 : vector<1x64x128xf32> to vector<64x128xf32>
    %cst_107 = arith.constant dense<0.000000e+00> : vector<64x8xf32>
    %98 = tpu.matmul %97, %95, %cst_107 {dimension_numbers = #tpu.dot_dimension_numbers<[1], [0], [0], [1], [0, 0, 1, 1], [], []>} : vector<64x128xf32>, vector<128x8xf32>, vector<64x8xf32> -> vector<64x8xf32>
    %c1_108 = arith.constant 1 : index
    %c0_109 = arith.constant 0 : index
    %c0_110 = arith.constant 0 : index
    %99 = vector.load %arg9[%c1_108, %c0_109, %c0_110] : memref<2x64x128xf32, #tpu.memory_space<vmem>>, vector<1x64x128xf32>
    %100 = vector.shape_cast %99 : vector<1x64x128xf32> to vector<64x128xf32>
    %cst_111 = arith.constant dense<0.000000e+00> : vector<64x8xf32>
    %101 = tpu.matmul %100, %95, %cst_111 {dimension_numbers = #tpu.dot_dimension_numbers<[1], [0], [0], [1], [0, 0, 1, 1], [], []>} : vector<64x128xf32>, vector<128x8xf32>, vector<64x8xf32> -> vector<64x8xf32>
    %c0_112 = arith.constant 0 : index
    %c0_113 = arith.constant 0 : index
    %c0_114 = arith.constant 0 : index
    %102 = vector.load %arg10[%c0_112, %c0_113, %c0_114] : memref<2x8x4xf32, #tpu.memory_space<vmem>>, vector<1x8x4xf32>
    %103 = vector.shape_cast %102 : vector<1x8x4xf32> to vector<8x4xf32>
    %cst_115 = arith.constant dense<0.000000e+00> : vector<64x4xf32>
    %104 = tpu.matmul %98, %103, %cst_115 {dimension_numbers = #tpu.dot_dimension_numbers<[1], [0], [0], [1], [0, 0, 1, 1], [], []>} : vector<64x8xf32>, vector<8x4xf32>, vector<64x4xf32> -> vector<64x4xf32>
    %c1_116 = arith.constant 1 : index
    %c0_117 = arith.constant 0 : index
    %c0_118 = arith.constant 0 : index
    %105 = vector.load %arg10[%c1_116, %c0_117, %c0_118] : memref<2x8x4xf32, #tpu.memory_space<vmem>>, vector<1x8x4xf32>
    %106 = vector.shape_cast %105 : vector<1x8x4xf32> to vector<8x4xf32>
    %cst_119 = arith.constant dense<0.000000e+00> : vector<64x4xf32>
    %107 = tpu.matmul %98, %106, %cst_119 {dimension_numbers = #tpu.dot_dimension_numbers<[1], [0], [0], [1], [0, 0, 1, 1], [], []>} : vector<64x8xf32>, vector<8x4xf32>, vector<64x4xf32> -> vector<64x4xf32>
    %c0_120 = arith.constant 0 : index
    %c0_121 = arith.constant 0 : index
    %c0_122 = arith.constant 0 : index
    %108 = vector.load %arg10[%c0_120, %c0_121, %c0_122] : memref<2x8x4xf32, #tpu.memory_space<vmem>>, vector<1x8x4xf32>
    %109 = vector.shape_cast %108 : vector<1x8x4xf32> to vector<8x4xf32>
    %cst_123 = arith.constant dense<0.000000e+00> : vector<64x4xf32>
    %110 = tpu.matmul %101, %109, %cst_123 {dimension_numbers = #tpu.dot_dimension_numbers<[1], [0], [0], [1], [0, 0, 1, 1], [], []>} : vector<64x8xf32>, vector<8x4xf32>, vector<64x4xf32> -> vector<64x4xf32>
    %c1_124 = arith.constant 1 : index
    %c0_125 = arith.constant 0 : index
    %c0_126 = arith.constant 0 : index
    %111 = vector.load %arg10[%c1_124, %c0_125, %c0_126] : memref<2x8x4xf32, #tpu.memory_space<vmem>>, vector<1x8x4xf32>
    %112 = vector.shape_cast %111 : vector<1x8x4xf32> to vector<8x4xf32>
    %cst_127 = arith.constant dense<0.000000e+00> : vector<64x4xf32>
    %113 = tpu.matmul %101, %112, %cst_127 {dimension_numbers = #tpu.dot_dimension_numbers<[1], [0], [0], [1], [0, 0, 1, 1], [], []>} : vector<64x8xf32>, vector<8x4xf32>, vector<64x4xf32> -> vector<64x4xf32>
    %114 = arith.maximumf %104, %107 : vector<64x4xf32>
    %115 = arith.maximumf %110, %113 : vector<64x4xf32>
    %116 = arith.maximumf %114, %115 : vector<64x4xf32>
    %c0_128 = arith.constant 0 : index
    %c0_129 = arith.constant 0 : index
    %117 = vector.load %arg11[%c0_128, %c0_129] : memref<64x1xf32, #tpu.memory_space<vmem>>, vector<64x1xf32>
    %118 = vector.broadcast %117 : vector<64x1xf32> to vector<64x4xf32>
    %119 = arith.addf %116, %118 : vector<64x4xf32>
    %cst_130 = arith.constant 0.000000e+00 : f32
    %120 = vector.broadcast %cst_130 : f32 to vector<64x4xf32>
    %121 = arith.maximumf %119, %120 : vector<64x4xf32>
    %c0_131 = arith.constant 0 : index
    %c0_132 = arith.constant 0 : index
    %c0_133 = arith.constant 0 : index
    %122 = vector.load %arg12[%c0_131, %c0_132, %c0_133] : memref<4x120x64xf32, #tpu.memory_space<vmem>>, vector<1x120x64xf32>
    %123 = vector.shape_cast %122 : vector<1x120x64xf32> to vector<120x64xf32>
    %124 = vector.extract_strided_slice %121 {offsets = [0, 0], sizes = [64, 1], strides = [1, 1]} : vector<64x4xf32> to vector<64x1xf32>
    %cst_134 = arith.constant dense<0.000000e+00> : vector<120x1xf32>
    %125 = tpu.matmul %123, %124, %cst_134 {dimension_numbers = #tpu.dot_dimension_numbers<[1], [0], [0], [1], [0, 0, 1, 1], [], []>} : vector<120x64xf32>, vector<64x1xf32>, vector<120x1xf32> -> vector<120x1xf32>
    %c1_135 = arith.constant 1 : index
    %c0_136 = arith.constant 0 : index
    %c0_137 = arith.constant 0 : index
    %126 = vector.load %arg12[%c1_135, %c0_136, %c0_137] : memref<4x120x64xf32, #tpu.memory_space<vmem>>, vector<1x120x64xf32>
    %127 = vector.shape_cast %126 : vector<1x120x64xf32> to vector<120x64xf32>
    %128 = vector.extract_strided_slice %121 {offsets = [0, 1], sizes = [64, 1], strides = [1, 1]} : vector<64x4xf32> to vector<64x1xf32>
    %cst_138 = arith.constant dense<0.000000e+00> : vector<120x1xf32>
    %129 = tpu.matmul %127, %128, %cst_138 {dimension_numbers = #tpu.dot_dimension_numbers<[1], [0], [0], [1], [0, 0, 1, 1], [], []>} : vector<120x64xf32>, vector<64x1xf32>, vector<120x1xf32> -> vector<120x1xf32>
    %130 = arith.addf %125, %129 : vector<120x1xf32>
    %c2_139 = arith.constant 2 : index
    %c0_140 = arith.constant 0 : index
    %c0_141 = arith.constant 0 : index
    %131 = vector.load %arg12[%c2_139, %c0_140, %c0_141] : memref<4x120x64xf32, #tpu.memory_space<vmem>>, vector<1x120x64xf32>
    %132 = vector.shape_cast %131 : vector<1x120x64xf32> to vector<120x64xf32>
    %133 = vector.extract_strided_slice %121 {offsets = [0, 2], sizes = [64, 1], strides = [1, 1]} : vector<64x4xf32> to vector<64x1xf32>
    %cst_142 = arith.constant dense<0.000000e+00> : vector<120x1xf32>
    %134 = tpu.matmul %132, %133, %cst_142 {dimension_numbers = #tpu.dot_dimension_numbers<[1], [0], [0], [1], [0, 0, 1, 1], [], []>} : vector<120x64xf32>, vector<64x1xf32>, vector<120x1xf32> -> vector<120x1xf32>
    %135 = arith.addf %130, %134 : vector<120x1xf32>
    %c3_143 = arith.constant 3 : index
    %c0_144 = arith.constant 0 : index
    %c0_145 = arith.constant 0 : index
    %136 = vector.load %arg12[%c3_143, %c0_144, %c0_145] : memref<4x120x64xf32, #tpu.memory_space<vmem>>, vector<1x120x64xf32>
    %137 = vector.shape_cast %136 : vector<1x120x64xf32> to vector<120x64xf32>
    %138 = vector.extract_strided_slice %121 {offsets = [0, 3], sizes = [64, 1], strides = [1, 1]} : vector<64x4xf32> to vector<64x1xf32>
    %cst_146 = arith.constant dense<0.000000e+00> : vector<120x1xf32>
    %139 = tpu.matmul %137, %138, %cst_146 {dimension_numbers = #tpu.dot_dimension_numbers<[1], [0], [0], [1], [0, 0, 1, 1], [], []>} : vector<120x64xf32>, vector<64x1xf32>, vector<120x1xf32> -> vector<120x1xf32>
    %140 = arith.addf %135, %139 : vector<120x1xf32>
    %c0_147 = arith.constant 0 : index
    %c0_148 = arith.constant 0 : index
    %141 = vector.load %arg13[%c0_147, %c0_148] : memref<120x1xf32, #tpu.memory_space<vmem>>, vector<120x1xf32>
    %142 = arith.addf %140, %141 : vector<120x1xf32>
    %cst_149 = arith.constant 0.000000e+00 : f32
    %143 = vector.broadcast %cst_149 : f32 to vector<120x1xf32>
    %144 = arith.maximumf %142, %143 : vector<120x1xf32>
    %c0_150 = arith.constant 0 : index
    %c0_151 = arith.constant 0 : index
    %145 = vector.load %arg14[%c0_150, %c0_151] : memref<84x120xf32, #tpu.memory_space<vmem>>, vector<84x120xf32>
    %cst_152 = arith.constant dense<0.000000e+00> : vector<84x1xf32>
    %146 = tpu.matmul %145, %144, %cst_152 {dimension_numbers = #tpu.dot_dimension_numbers<[1], [0], [0], [1], [0, 0, 1, 1], [], []>} : vector<84x120xf32>, vector<120x1xf32>, vector<84x1xf32> -> vector<84x1xf32>
    %c0_153 = arith.constant 0 : index
    %c0_154 = arith.constant 0 : index
    %147 = vector.load %arg15[%c0_153, %c0_154] : memref<84x1xf32, #tpu.memory_space<vmem>>, vector<84x1xf32>
    %148 = arith.addf %146, %147 : vector<84x1xf32>
    %cst_155 = arith.constant 0.000000e+00 : f32
    %149 = vector.broadcast %cst_155 : f32 to vector<84x1xf32>
    %150 = arith.maximumf %148, %149 : vector<84x1xf32>
    %c0_156 = arith.constant 0 : index
    %c0_157 = arith.constant 0 : index
    %151 = vector.load %arg16[%c0_156, %c0_157] : memref<10x84xf32, #tpu.memory_space<vmem>>, vector<10x84xf32>
    %cst_158 = arith.constant dense<0.000000e+00> : vector<10x1xf32>
    %152 = tpu.matmul %151, %150, %cst_158 {dimension_numbers = #tpu.dot_dimension_numbers<[1], [0], [0], [1], [0, 0, 1, 1], [], []>} : vector<10x84xf32>, vector<84x1xf32>, vector<10x1xf32> -> vector<10x1xf32>
    %c0_159 = arith.constant 0 : index
    %c0_160 = arith.constant 0 : index
    %153 = vector.load %arg17[%c0_159, %c0_160] : memref<10x1xf32, #tpu.memory_space<vmem>>, vector<10x1xf32>
    %154 = arith.addf %152, %153 : vector<10x1xf32>
    %c0_161 = arith.constant 0 : index
    %c0_162 = arith.constant 0 : index
    %c0_163 = arith.constant 0 : index
    %155 = vector.load %arg18[%c0_161, %c0_162, %c0_163] : memref<2x10x1xf32, #tpu.memory_space<vmem>>, vector<1x10x1xf32>
    %156 = vector.shape_cast %155 : vector<1x10x1xf32> to vector<10x1xf32>
    %157 = vector.shape_cast %154 : vector<10x1xf32> to vector<1x10x1xf32>
    tpu.vector_store %arg18[%c0_161, %c0_162, %c0_163], %157 {strides = array<i32>} : memref<2x10x1xf32, #tpu.memory_space<vmem>>, vector<1x10x1xf32>,
    %c1_164 = arith.constant 1 : index
    %c0_165 = arith.constant 0 : index
    %c0_166 = arith.constant 0 : index
    %158 = vector.load %arg1[%c1_164, %c0_165, %c0_166] : memref<2x28x28xf32, #tpu.memory_space<vmem>>, vector<1x28x28xf32>
    %159 = vector.shape_cast %158 : vector<1x28x28xf32> to vector<28x28xf32>
    %c0_167 = arith.constant 0 : index
    %c0_168 = arith.constant 0 : index
    %c0_169 = arith.constant 0 : index
    %160 = vector.load %arg3[%c0_167, %c0_168, %c0_169] : memref<5x28x24xf32, #tpu.memory_space<vmem>>, vector<1x28x24xf32>
    %161 = vector.shape_cast %160 : vector<1x28x24xf32> to vector<28x24xf32>
    %cst_170 = arith.constant dense<0.000000e+00> : vector<28x24xf32>
    %162 = tpu.matmul %159, %161, %cst_170 {dimension_numbers = #tpu.dot_dimension_numbers<[1], [0], [0], [1], [0, 0, 1, 1], [], []>} : vector<28x28xf32>, vector<28x24xf32>, vector<28x24xf32> -> vector<28x24xf32>
    %c0_171 = arith.constant 0 : index
    %c0_172 = arith.constant 0 : index
    %c0_173 = arith.constant 0 : index
    %163 = vector.load %arg2[%c0_171, %c0_172, %c0_173] : memref<5x144x28xf32, #tpu.memory_space<vmem>>, vector<1x144x28xf32>
    %164 = vector.shape_cast %163 : vector<1x144x28xf32> to vector<144x28xf32>
    %cst_174 = arith.constant dense<0.000000e+00> : vector<144x24xf32>
    %165 = tpu.matmul %164, %162, %cst_174 {dimension_numbers = #tpu.dot_dimension_numbers<[1], [0], [0], [1], [0, 0, 1, 1], [], []>} : vector<144x28xf32>, vector<28x24xf32>, vector<144x24xf32> -> vector<144x24xf32>
    %c1_175 = arith.constant 1 : index
    %c0_176 = arith.constant 0 : index
    %c0_177 = arith.constant 0 : index
    %166 = vector.load %arg3[%c1_175, %c0_176, %c0_177] : memref<5x28x24xf32, #tpu.memory_space<vmem>>, vector<1x28x24xf32>
    %167 = vector.shape_cast %166 : vector<1x28x24xf32> to vector<28x24xf32>
    %cst_178 = arith.constant dense<0.000000e+00> : vector<28x24xf32>
    %168 = tpu.matmul %159, %167, %cst_178 {dimension_numbers = #tpu.dot_dimension_numbers<[1], [0], [0], [1], [0, 0, 1, 1], [], []>} : vector<28x28xf32>, vector<28x24xf32>, vector<28x24xf32> -> vector<28x24xf32>
    %c1_179 = arith.constant 1 : index
    %c0_180 = arith.constant 0 : index
    %c0_181 = arith.constant 0 : index
    %169 = vector.load %arg2[%c1_179, %c0_180, %c0_181] : memref<5x144x28xf32, #tpu.memory_space<vmem>>, vector<1x144x28xf32>
    %170 = vector.shape_cast %169 : vector<1x144x28xf32> to vector<144x28xf32>
    %cst_182 = arith.constant dense<0.000000e+00> : vector<144x24xf32>
    %171 = tpu.matmul %170, %168, %cst_182 {dimension_numbers = #tpu.dot_dimension_numbers<[1], [0], [0], [1], [0, 0, 1, 1], [], []>} : vector<144x28xf32>, vector<28x24xf32>, vector<144x24xf32> -> vector<144x24xf32>
    %172 = arith.addf %165, %171 : vector<144x24xf32>
    %c2_183 = arith.constant 2 : index
    %c0_184 = arith.constant 0 : index
    %c0_185 = arith.constant 0 : index
    %173 = vector.load %arg3[%c2_183, %c0_184, %c0_185] : memref<5x28x24xf32, #tpu.memory_space<vmem>>, vector<1x28x24xf32>
    %174 = vector.shape_cast %173 : vector<1x28x24xf32> to vector<28x24xf32>
    %cst_186 = arith.constant dense<0.000000e+00> : vector<28x24xf32>
    %175 = tpu.matmul %159, %174, %cst_186 {dimension_numbers = #tpu.dot_dimension_numbers<[1], [0], [0], [1], [0, 0, 1, 1], [], []>} : vector<28x28xf32>, vector<28x24xf32>, vector<28x24xf32> -> vector<28x24xf32>
    %c2_187 = arith.constant 2 : index
    %c0_188 = arith.constant 0 : index
    %c0_189 = arith.constant 0 : index
    %176 = vector.load %arg2[%c2_187, %c0_188, %c0_189] : memref<5x144x28xf32, #tpu.memory_space<vmem>>, vector<1x144x28xf32>
    %177 = vector.shape_cast %176 : vector<1x144x28xf32> to vector<144x28xf32>
    %cst_190 = arith.constant dense<0.000000e+00> : vector<144x24xf32>
    %178 = tpu.matmul %177, %175, %cst_190 {dimension_numbers = #tpu.dot_dimension_numbers<[1], [0], [0], [1], [0, 0, 1, 1], [], []>} : vector<144x28xf32>, vector<28x24xf32>, vector<144x24xf32> -> vector<144x24xf32>
    %179 = arith.addf %172, %178 : vector<144x24xf32>
    %c3_191 = arith.constant 3 : index
    %c0_192 = arith.constant 0 : index
    %c0_193 = arith.constant 0 : index
    %180 = vector.load %arg3[%c3_191, %c0_192, %c0_193] : memref<5x28x24xf32, #tpu.memory_space<vmem>>, vector<1x28x24xf32>
    %181 = vector.shape_cast %180 : vector<1x28x24xf32> to vector<28x24xf32>
    %cst_194 = arith.constant dense<0.000000e+00> : vector<28x24xf32>
    %182 = tpu.matmul %159, %181, %cst_194 {dimension_numbers = #tpu.dot_dimension_numbers<[1], [0], [0], [1], [0, 0, 1, 1], [], []>} : vector<28x28xf32>, vector<28x24xf32>, vector<28x24xf32> -> vector<28x24xf32>
    %c3_195 = arith.constant 3 : index
    %c0_196 = arith.constant 0 : index
    %c0_197 = arith.constant 0 : index
    %183 = vector.load %arg2[%c3_195, %c0_196, %c0_197] : memref<5x144x28xf32, #tpu.memory_space<vmem>>, vector<1x144x28xf32>
    %184 = vector.shape_cast %183 : vector<1x144x28xf32> to vector<144x28xf32>
    %cst_198 = arith.constant dense<0.000000e+00> : vector<144x24xf32>
    %185 = tpu.matmul %184, %182, %cst_198 {dimension_numbers = #tpu.dot_dimension_numbers<[1], [0], [0], [1], [0, 0, 1, 1], [], []>} : vector<144x28xf32>, vector<28x24xf32>, vector<144x24xf32> -> vector<144x24xf32>
    %186 = arith.addf %179, %185 : vector<144x24xf32>
    %c4_199 = arith.constant 4 : index
    %c0_200 = arith.constant 0 : index
    %c0_201 = arith.constant 0 : index
    %187 = vector.load %arg3[%c4_199, %c0_200, %c0_201] : memref<5x28x24xf32, #tpu.memory_space<vmem>>, vector<1x28x24xf32>
    %188 = vector.shape_cast %187 : vector<1x28x24xf32> to vector<28x24xf32>
    %cst_202 = arith.constant dense<0.000000e+00> : vector<28x24xf32>
    %189 = tpu.matmul %159, %188, %cst_202 {dimension_numbers = #tpu.dot_dimension_numbers<[1], [0], [0], [1], [0, 0, 1, 1], [], []>} : vector<28x28xf32>, vector<28x24xf32>, vector<28x24xf32> -> vector<28x24xf32>
    %c4_203 = arith.constant 4 : index
    %c0_204 = arith.constant 0 : index
    %c0_205 = arith.constant 0 : index
    %190 = vector.load %arg2[%c4_203, %c0_204, %c0_205] : memref<5x144x28xf32, #tpu.memory_space<vmem>>, vector<1x144x28xf32>
    %191 = vector.shape_cast %190 : vector<1x144x28xf32> to vector<144x28xf32>
    %cst_206 = arith.constant dense<0.000000e+00> : vector<144x24xf32>
    %192 = tpu.matmul %191, %189, %cst_206 {dimension_numbers = #tpu.dot_dimension_numbers<[1], [0], [0], [1], [0, 0, 1, 1], [], []>} : vector<144x28xf32>, vector<28x24xf32>, vector<144x24xf32> -> vector<144x24xf32>
    %193 = arith.addf %186, %192 : vector<144x24xf32>
    %c0_207 = arith.constant 0 : index
    %c0_208 = arith.constant 0 : index
    %c0_209 = arith.constant 0 : index
    %194 = vector.load %arg4[%c0_207, %c0_208, %c0_209] : memref<2x72x144xf32, #tpu.memory_space<vmem>>, vector<1x72x144xf32>
    %195 = vector.shape_cast %194 : vector<1x72x144xf32> to vector<72x144xf32>
    %cst_210 = arith.constant dense<0.000000e+00> : vector<72x24xf32>
    %196 = tpu.matmul %195, %193, %cst_210 {dimension_numbers = #tpu.dot_dimension_numbers<[1], [0], [0], [1], [0, 0, 1, 1], [], []>} : vector<72x144xf32>, vector<144x24xf32>, vector<72x24xf32> -> vector<72x24xf32>
    %c1_211 = arith.constant 1 : index
    %c0_212 = arith.constant 0 : index
    %c0_213 = arith.constant 0 : index
    %197 = vector.load %arg4[%c1_211, %c0_212, %c0_213] : memref<2x72x144xf32, #tpu.memory_space<vmem>>, vector<1x72x144xf32>
    %198 = vector.shape_cast %197 : vector<1x72x144xf32> to vector<72x144xf32>
    %cst_214 = arith.constant dense<0.000000e+00> : vector<72x24xf32>
    %199 = tpu.matmul %198, %193, %cst_214 {dimension_numbers = #tpu.dot_dimension_numbers<[1], [0], [0], [1], [0, 0, 1, 1], [], []>} : vector<72x144xf32>, vector<144x24xf32>, vector<72x24xf32> -> vector<72x24xf32>
    %c0_215 = arith.constant 0 : index
    %c0_216 = arith.constant 0 : index
    %c0_217 = arith.constant 0 : index
    %200 = vector.load %arg5[%c0_215, %c0_216, %c0_217] : memref<2x24x12xf32, #tpu.memory_space<vmem>>, vector<1x24x12xf32>
    %201 = vector.shape_cast %200 : vector<1x24x12xf32> to vector<24x12xf32>
    %cst_218 = arith.constant dense<0.000000e+00> : vector<72x12xf32>
    %202 = tpu.matmul %196, %201, %cst_218 {dimension_numbers = #tpu.dot_dimension_numbers<[1], [0], [0], [1], [0, 0, 1, 1], [], []>} : vector<72x24xf32>, vector<24x12xf32>, vector<72x12xf32> -> vector<72x12xf32>
    %c1_219 = arith.constant 1 : index
    %c0_220 = arith.constant 0 : index
    %c0_221 = arith.constant 0 : index
    %203 = vector.load %arg5[%c1_219, %c0_220, %c0_221] : memref<2x24x12xf32, #tpu.memory_space<vmem>>, vector<1x24x12xf32>
    %204 = vector.shape_cast %203 : vector<1x24x12xf32> to vector<24x12xf32>
    %cst_222 = arith.constant dense<0.000000e+00> : vector<72x12xf32>
    %205 = tpu.matmul %196, %204, %cst_222 {dimension_numbers = #tpu.dot_dimension_numbers<[1], [0], [0], [1], [0, 0, 1, 1], [], []>} : vector<72x24xf32>, vector<24x12xf32>, vector<72x12xf32> -> vector<72x12xf32>
    %c0_223 = arith.constant 0 : index
    %c0_224 = arith.constant 0 : index
    %c0_225 = arith.constant 0 : index
    %206 = vector.load %arg5[%c0_223, %c0_224, %c0_225] : memref<2x24x12xf32, #tpu.memory_space<vmem>>, vector<1x24x12xf32>
    %207 = vector.shape_cast %206 : vector<1x24x12xf32> to vector<24x12xf32>
    %cst_226 = arith.constant dense<0.000000e+00> : vector<72x12xf32>
    %208 = tpu.matmul %199, %207, %cst_226 {dimension_numbers = #tpu.dot_dimension_numbers<[1], [0], [0], [1], [0, 0, 1, 1], [], []>} : vector<72x24xf32>, vector<24x12xf32>, vector<72x12xf32> -> vector<72x12xf32>
    %c1_227 = arith.constant 1 : index
    %c0_228 = arith.constant 0 : index
    %c0_229 = arith.constant 0 : index
    %209 = vector.load %arg5[%c1_227, %c0_228, %c0_229] : memref<2x24x12xf32, #tpu.memory_space<vmem>>, vector<1x24x12xf32>
    %210 = vector.shape_cast %209 : vector<1x24x12xf32> to vector<24x12xf32>
    %cst_230 = arith.constant dense<0.000000e+00> : vector<72x12xf32>
    %211 = tpu.matmul %199, %210, %cst_230 {dimension_numbers = #tpu.dot_dimension_numbers<[1], [0], [0], [1], [0, 0, 1, 1], [], []>} : vector<72x24xf32>, vector<24x12xf32>, vector<72x12xf32> -> vector<72x12xf32>
    %212 = arith.maximumf %202, %205 : vector<72x12xf32>
    %213 = arith.maximumf %208, %211 : vector<72x12xf32>
    %214 = arith.maximumf %212, %213 : vector<72x12xf32>
    %c0_231 = arith.constant 0 : index
    %c0_232 = arith.constant 0 : index
    %215 = vector.load %arg6[%c0_231, %c0_232] : memref<72x1xf32, #tpu.memory_space<vmem>>, vector<72x1xf32>
    %216 = vector.broadcast %215 : vector<72x1xf32> to vector<72x12xf32>
    %217 = arith.addf %214, %216 : vector<72x12xf32>
    %cst_233 = arith.constant 0.000000e+00 : f32
    %218 = vector.broadcast %cst_233 : f32 to vector<72x12xf32>
    %219 = arith.maximumf %217, %218 : vector<72x12xf32>
    %c0_234 = arith.constant 0 : index
    %c0_235 = arith.constant 0 : index
    %c0_236 = arith.constant 0 : index
    %220 = vector.load %arg8[%c0_234, %c0_235, %c0_236] : memref<5x12x8xf32, #tpu.memory_space<vmem>>, vector<1x12x8xf32>
    %221 = vector.shape_cast %220 : vector<1x12x8xf32> to vector<12x8xf32>
    %cst_237 = arith.constant dense<0.000000e+00> : vector<72x8xf32>
    %222 = tpu.matmul %219, %221, %cst_237 {dimension_numbers = #tpu.dot_dimension_numbers<[1], [0], [0], [1], [0, 0, 1, 1], [], []>} : vector<72x12xf32>, vector<12x8xf32>, vector<72x8xf32> -> vector<72x8xf32>
    %c0_238 = arith.constant 0 : index
    %c0_239 = arith.constant 0 : index
    %c0_240 = arith.constant 0 : index
    %223 = vector.load %arg7[%c0_238, %c0_239, %c0_240] : memref<5x128x72xf32, #tpu.memory_space<vmem>>, vector<1x128x72xf32>
    %224 = vector.shape_cast %223 : vector<1x128x72xf32> to vector<128x72xf32>
    %cst_241 = arith.constant dense<0.000000e+00> : vector<128x8xf32>
    %225 = tpu.matmul %224, %222, %cst_241 {dimension_numbers = #tpu.dot_dimension_numbers<[1], [0], [0], [1], [0, 0, 1, 1], [], []>} : vector<128x72xf32>, vector<72x8xf32>, vector<128x8xf32> -> vector<128x8xf32>
    %c1_242 = arith.constant 1 : index
    %c0_243 = arith.constant 0 : index
    %c0_244 = arith.constant 0 : index
    %226 = vector.load %arg8[%c1_242, %c0_243, %c0_244] : memref<5x12x8xf32, #tpu.memory_space<vmem>>, vector<1x12x8xf32>
    %227 = vector.shape_cast %226 : vector<1x12x8xf32> to vector<12x8xf32>
    %cst_245 = arith.constant dense<0.000000e+00> : vector<72x8xf32>
    %228 = tpu.matmul %219, %227, %cst_245 {dimension_numbers = #tpu.dot_dimension_numbers<[1], [0], [0], [1], [0, 0, 1, 1], [], []>} : vector<72x12xf32>, vector<12x8xf32>, vector<72x8xf32> -> vector<72x8xf32>
    %c1_246 = arith.constant 1 : index
    %c0_247 = arith.constant 0 : index
    %c0_248 = arith.constant 0 : index
    %229 = vector.load %arg7[%c1_246, %c0_247, %c0_248] : memref<5x128x72xf32, #tpu.memory_space<vmem>>, vector<1x128x72xf32>
    %230 = vector.shape_cast %229 : vector<1x128x72xf32> to vector<128x72xf32>
    %cst_249 = arith.constant dense<0.000000e+00> : vector<128x8xf32>
    %231 = tpu.matmul %230, %228, %cst_249 {dimension_numbers = #tpu.dot_dimension_numbers<[1], [0], [0], [1], [0, 0, 1, 1], [], []>} : vector<128x72xf32>, vector<72x8xf32>, vector<128x8xf32> -> vector<128x8xf32>
    %232 = arith.addf %225, %231 : vector<128x8xf32>
    %c2_250 = arith.constant 2 : index
    %c0_251 = arith.constant 0 : index
    %c0_252 = arith.constant 0 : index
    %233 = vector.load %arg8[%c2_250, %c0_251, %c0_252] : memref<5x12x8xf32, #tpu.memory_space<vmem>>, vector<1x12x8xf32>
    %234 = vector.shape_cast %233 : vector<1x12x8xf32> to vector<12x8xf32>
    %cst_253 = arith.constant dense<0.000000e+00> : vector<72x8xf32>
    %235 = tpu.matmul %219, %234, %cst_253 {dimension_numbers = #tpu.dot_dimension_numbers<[1], [0], [0], [1], [0, 0, 1, 1], [], []>} : vector<72x12xf32>, vector<12x8xf32>, vector<72x8xf32> -> vector<72x8xf32>
    %c2_254 = arith.constant 2 : index
    %c0_255 = arith.constant 0 : index
    %c0_256 = arith.constant 0 : index
    %236 = vector.load %arg7[%c2_254, %c0_255, %c0_256] : memref<5x128x72xf32, #tpu.memory_space<vmem>>, vector<1x128x72xf32>
    %237 = vector.shape_cast %236 : vector<1x128x72xf32> to vector<128x72xf32>
    %cst_257 = arith.constant dense<0.000000e+00> : vector<128x8xf32>
    %238 = tpu.matmul %237, %235, %cst_257 {dimension_numbers = #tpu.dot_dimension_numbers<[1], [0], [0], [1], [0, 0, 1, 1], [], []>} : vector<128x72xf32>, vector<72x8xf32>, vector<128x8xf32> -> vector<128x8xf32>
    %239 = arith.addf %232, %238 : vector<128x8xf32>
    %c3_258 = arith.constant 3 : index
    %c0_259 = arith.constant 0 : index
    %c0_260 = arith.constant 0 : index
    %240 = vector.load %arg8[%c3_258, %c0_259, %c0_260] : memref<5x12x8xf32, #tpu.memory_space<vmem>>, vector<1x12x8xf32>
    %241 = vector.shape_cast %240 : vector<1x12x8xf32> to vector<12x8xf32>
    %cst_261 = arith.constant dense<0.000000e+00> : vector<72x8xf32>
    %242 = tpu.matmul %219, %241, %cst_261 {dimension_numbers = #tpu.dot_dimension_numbers<[1], [0], [0], [1], [0, 0, 1, 1], [], []>} : vector<72x12xf32>, vector<12x8xf32>, vector<72x8xf32> -> vector<72x8xf32>
    %c3_262 = arith.constant 3 : index
    %c0_263 = arith.constant 0 : index
    %c0_264 = arith.constant 0 : index
    %243 = vector.load %arg7[%c3_262, %c0_263, %c0_264] : memref<5x128x72xf32, #tpu.memory_space<vmem>>, vector<1x128x72xf32>
    %244 = vector.shape_cast %243 : vector<1x128x72xf32> to vector<128x72xf32>
    %cst_265 = arith.constant dense<0.000000e+00> : vector<128x8xf32>
    %245 = tpu.matmul %244, %242, %cst_265 {dimension_numbers = #tpu.dot_dimension_numbers<[1], [0], [0], [1], [0, 0, 1, 1], [], []>} : vector<128x72xf32>, vector<72x8xf32>, vector<128x8xf32> -> vector<128x8xf32>
    %246 = arith.addf %239, %245 : vector<128x8xf32>
    %c4_266 = arith.constant 4 : index
    %c0_267 = arith.constant 0 : index
    %c0_268 = arith.constant 0 : index
    %247 = vector.load %arg8[%c4_266, %c0_267, %c0_268] : memref<5x12x8xf32, #tpu.memory_space<vmem>>, vector<1x12x8xf32>
    %248 = vector.shape_cast %247 : vector<1x12x8xf32> to vector<12x8xf32>
    %cst_269 = arith.constant dense<0.000000e+00> : vector<72x8xf32>
    %249 = tpu.matmul %219, %248, %cst_269 {dimension_numbers = #tpu.dot_dimension_numbers<[1], [0], [0], [1], [0, 0, 1, 1], [], []>} : vector<72x12xf32>, vector<12x8xf32>, vector<72x8xf32> -> vector<72x8xf32>
    %c4_270 = arith.constant 4 : index
    %c0_271 = arith.constant 0 : index
    %c0_272 = arith.constant 0 : index
    %250 = vector.load %arg7[%c4_270, %c0_271, %c0_272] : memref<5x128x72xf32, #tpu.memory_space<vmem>>, vector<1x128x72xf32>
    %251 = vector.shape_cast %250 : vector<1x128x72xf32> to vector<128x72xf32>
    %cst_273 = arith.constant dense<0.000000e+00> : vector<128x8xf32>
    %252 = tpu.matmul %251, %249, %cst_273 {dimension_numbers = #tpu.dot_dimension_numbers<[1], [0], [0], [1], [0, 0, 1, 1], [], []>} : vector<128x72xf32>, vector<72x8xf32>, vector<128x8xf32> -> vector<128x8xf32>
    %253 = arith.addf %246, %252 : vector<128x8xf32>
    %c0_274 = arith.constant 0 : index
    %c0_275 = arith.constant 0 : index
    %c0_276 = arith.constant 0 : index
    %254 = vector.load %arg9[%c0_274, %c0_275, %c0_276] : memref<2x64x128xf32, #tpu.memory_space<vmem>>, vector<1x64x128xf32>
    %255 = vector.shape_cast %254 : vector<1x64x128xf32> to vector<64x128xf32>
    %cst_277 = arith.constant dense<0.000000e+00> : vector<64x8xf32>
    %256 = tpu.matmul %255, %253, %cst_277 {dimension_numbers = #tpu.dot_dimension_numbers<[1], [0], [0], [1], [0, 0, 1, 1], [], []>} : vector<64x128xf32>, vector<128x8xf32>, vector<64x8xf32> -> vector<64x8xf32>
    %c1_278 = arith.constant 1 : index
    %c0_279 = arith.constant 0 : index
    %c0_280 = arith.constant 0 : index
    %257 = vector.load %arg9[%c1_278, %c0_279, %c0_280] : memref<2x64x128xf32, #tpu.memory_space<vmem>>, vector<1x64x128xf32>
    %258 = vector.shape_cast %257 : vector<1x64x128xf32> to vector<64x128xf32>
    %cst_281 = arith.constant dense<0.000000e+00> : vector<64x8xf32>
    %259 = tpu.matmul %258, %253, %cst_281 {dimension_numbers = #tpu.dot_dimension_numbers<[1], [0], [0], [1], [0, 0, 1, 1], [], []>} : vector<64x128xf32>, vector<128x8xf32>, vector<64x8xf32> -> vector<64x8xf32>
    %c0_282 = arith.constant 0 : index
    %c0_283 = arith.constant 0 : index
    %c0_284 = arith.constant 0 : index
    %260 = vector.load %arg10[%c0_282, %c0_283, %c0_284] : memref<2x8x4xf32, #tpu.memory_space<vmem>>, vector<1x8x4xf32>
    %261 = vector.shape_cast %260 : vector<1x8x4xf32> to vector<8x4xf32>
    %cst_285 = arith.constant dense<0.000000e+00> : vector<64x4xf32>
    %262 = tpu.matmul %256, %261, %cst_285 {dimension_numbers = #tpu.dot_dimension_numbers<[1], [0], [0], [1], [0, 0, 1, 1], [], []>} : vector<64x8xf32>, vector<8x4xf32>, vector<64x4xf32> -> vector<64x4xf32>
    %c1_286 = arith.constant 1 : index
    %c0_287 = arith.constant 0 : index
    %c0_288 = arith.constant 0 : index
    %263 = vector.load %arg10[%c1_286, %c0_287, %c0_288] : memref<2x8x4xf32, #tpu.memory_space<vmem>>, vector<1x8x4xf32>
    %264 = vector.shape_cast %263 : vector<1x8x4xf32> to vector<8x4xf32>
    %cst_289 = arith.constant dense<0.000000e+00> : vector<64x4xf32>
    %265 = tpu.matmul %256, %264, %cst_289 {dimension_numbers = #tpu.dot_dimension_numbers<[1], [0], [0], [1], [0, 0, 1, 1], [], []>} : vector<64x8xf32>, vector<8x4xf32>, vector<64x4xf32> -> vector<64x4xf32>
    %c0_290 = arith.constant 0 : index
    %c0_291 = arith.constant 0 : index
    %c0_292 = arith.constant 0 : index
    %266 = vector.load %arg10[%c0_290, %c0_291, %c0_292] : memref<2x8x4xf32, #tpu.memory_space<vmem>>, vector<1x8x4xf32>
    %267 = vector.shape_cast %266 : vector<1x8x4xf32> to vector<8x4xf32>
    %cst_293 = arith.constant dense<0.000000e+00> : vector<64x4xf32>
    %268 = tpu.matmul %259, %267, %cst_293 {dimension_numbers = #tpu.dot_dimension_numbers<[1], [0], [0], [1], [0, 0, 1, 1], [], []>} : vector<64x8xf32>, vector<8x4xf32>, vector<64x4xf32> -> vector<64x4xf32>
    %c1_294 = arith.constant 1 : index
    %c0_295 = arith.constant 0 : index
    %c0_296 = arith.constant 0 : index
    %269 = vector.load %arg10[%c1_294, %c0_295, %c0_296] : memref<2x8x4xf32, #tpu.memory_space<vmem>>, vector<1x8x4xf32>
    %270 = vector.shape_cast %269 : vector<1x8x4xf32> to vector<8x4xf32>
    %cst_297 = arith.constant dense<0.000000e+00> : vector<64x4xf32>
    %271 = tpu.matmul %259, %270, %cst_297 {dimension_numbers = #tpu.dot_dimension_numbers<[1], [0], [0], [1], [0, 0, 1, 1], [], []>} : vector<64x8xf32>, vector<8x4xf32>, vector<64x4xf32> -> vector<64x4xf32>
    %272 = arith.maximumf %262, %265 : vector<64x4xf32>
    %273 = arith.maximumf %268, %271 : vector<64x4xf32>
    %274 = arith.maximumf %272, %273 : vector<64x4xf32>
    %c0_298 = arith.constant 0 : index
    %c0_299 = arith.constant 0 : index
    %275 = vector.load %arg11[%c0_298, %c0_299] : memref<64x1xf32, #tpu.memory_space<vmem>>, vector<64x1xf32>
    %276 = vector.broadcast %275 : vector<64x1xf32> to vector<64x4xf32>
    %277 = arith.addf %274, %276 : vector<64x4xf32>
    %cst_300 = arith.constant 0.000000e+00 : f32
    %278 = vector.broadcast %cst_300 : f32 to vector<64x4xf32>
    %279 = arith.maximumf %277, %278 : vector<64x4xf32>
    %c0_301 = arith.constant 0 : index
    %c0_302 = arith.constant 0 : index
    %c0_303 = arith.constant 0 : index
    %280 = vector.load %arg12[%c0_301, %c0_302, %c0_303] : memref<4x120x64xf32, #tpu.memory_space<vmem>>, vector<1x120x64xf32>
    %281 = vector.shape_cast %280 : vector<1x120x64xf32> to vector<120x64xf32>
    %282 = vector.extract_strided_slice %279 {offsets = [0, 0], sizes = [64, 1], strides = [1, 1]} : vector<64x4xf32> to vector<64x1xf32>
    %cst_304 = arith.constant dense<0.000000e+00> : vector<120x1xf32>
    %283 = tpu.matmul %281, %282, %cst_304 {dimension_numbers = #tpu.dot_dimension_numbers<[1], [0], [0], [1], [0, 0, 1, 1], [], []>} : vector<120x64xf32>, vector<64x1xf32>, vector<120x1xf32> -> vector<120x1xf32>
    %c1_305 = arith.constant 1 : index
    %c0_306 = arith.constant 0 : index
    %c0_307 = arith.constant 0 : index
    %284 = vector.load %arg12[%c1_305, %c0_306, %c0_307] : memref<4x120x64xf32, #tpu.memory_space<vmem>>, vector<1x120x64xf32>
    %285 = vector.shape_cast %284 : vector<1x120x64xf32> to vector<120x64xf32>
    %286 = vector.extract_strided_slice %279 {offsets = [0, 1], sizes = [64, 1], strides = [1, 1]} : vector<64x4xf32> to vector<64x1xf32>
    %cst_308 = arith.constant dense<0.000000e+00> : vector<120x1xf32>
    %287 = tpu.matmul %285, %286, %cst_308 {dimension_numbers = #tpu.dot_dimension_numbers<[1], [0], [0], [1], [0, 0, 1, 1], [], []>} : vector<120x64xf32>, vector<64x1xf32>, vector<120x1xf32> -> vector<120x1xf32>
    %288 = arith.addf %283, %287 : vector<120x1xf32>
    %c2_309 = arith.constant 2 : index
    %c0_310 = arith.constant 0 : index
    %c0_311 = arith.constant 0 : index
    %289 = vector.load %arg12[%c2_309, %c0_310, %c0_311] : memref<4x120x64xf32, #tpu.memory_space<vmem>>, vector<1x120x64xf32>
    %290 = vector.shape_cast %289 : vector<1x120x64xf32> to vector<120x64xf32>
    %291 = vector.extract_strided_slice %279 {offsets = [0, 2], sizes = [64, 1], strides = [1, 1]} : vector<64x4xf32> to vector<64x1xf32>
    %cst_312 = arith.constant dense<0.000000e+00> : vector<120x1xf32>
    %292 = tpu.matmul %290, %291, %cst_312 {dimension_numbers = #tpu.dot_dimension_numbers<[1], [0], [0], [1], [0, 0, 1, 1], [], []>} : vector<120x64xf32>, vector<64x1xf32>, vector<120x1xf32> -> vector<120x1xf32>
    %293 = arith.addf %288, %292 : vector<120x1xf32>
    %c3_313 = arith.constant 3 : index
    %c0_314 = arith.constant 0 : index
    %c0_315 = arith.constant 0 : index
    %294 = vector.load %arg12[%c3_313, %c0_314, %c0_315] : memref<4x120x64xf32, #tpu.memory_space<vmem>>, vector<1x120x64xf32>
    %295 = vector.shape_cast %294 : vector<1x120x64xf32> to vector<120x64xf32>
    %296 = vector.extract_strided_slice %279 {offsets = [0, 3], sizes = [64, 1], strides = [1, 1]} : vector<64x4xf32> to vector<64x1xf32>
    %cst_316 = arith.constant dense<0.000000e+00> : vector<120x1xf32>
    %297 = tpu.matmul %295, %296, %cst_316 {dimension_numbers = #tpu.dot_dimension_numbers<[1], [0], [0], [1], [0, 0, 1, 1], [], []>} : vector<120x64xf32>, vector<64x1xf32>, vector<120x1xf32> -> vector<120x1xf32>
    %298 = arith.addf %293, %297 : vector<120x1xf32>
    %c0_317 = arith.constant 0 : index
    %c0_318 = arith.constant 0 : index
    %299 = vector.load %arg13[%c0_317, %c0_318] : memref<120x1xf32, #tpu.memory_space<vmem>>, vector<120x1xf32>
    %300 = arith.addf %298, %299 : vector<120x1xf32>
    %cst_319 = arith.constant 0.000000e+00 : f32
    %301 = vector.broadcast %cst_319 : f32 to vector<120x1xf32>
    %302 = arith.maximumf %300, %301 : vector<120x1xf32>
    %c0_320 = arith.constant 0 : index
    %c0_321 = arith.constant 0 : index
    %303 = vector.load %arg14[%c0_320, %c0_321] : memref<84x120xf32, #tpu.memory_space<vmem>>, vector<84x120xf32>
    %cst_322 = arith.constant dense<0.000000e+00> : vector<84x1xf32>
    %304 = tpu.matmul %303, %302, %cst_322 {dimension_numbers = #tpu.dot_dimension_numbers<[1], [0], [0], [1], [0, 0, 1, 1], [], []>} : vector<84x120xf32>, vector<120x1xf32>, vector<84x1xf32> -> vector<84x1xf32>
    %c0_323 = arith.constant 0 : index
    %c0_324 = arith.constant 0 : index
    %305 = vector.load %arg15[%c0_323, %c0_324] : memref<84x1xf32, #tpu.memory_space<vmem>>, vector<84x1xf32>
    %306 = arith.addf %304, %305 : vector<84x1xf32>
    %cst_325 = arith.constant 0.000000e+00 : f32
    %307 = vector.broadcast %cst_325 : f32 to vector<84x1xf32>
    %308 = arith.maximumf %306, %307 : vector<84x1xf32>
    %c0_326 = arith.constant 0 : index
    %c0_327 = arith.constant 0 : index
    %309 = vector.load %arg16[%c0_326, %c0_327] : memref<10x84xf32, #tpu.memory_space<vmem>>, vector<10x84xf32>
    %cst_328 = arith.constant dense<0.000000e+00> : vector<10x1xf32>
    %310 = tpu.matmul %309, %308, %cst_328 {dimension_numbers = #tpu.dot_dimension_numbers<[1], [0], [0], [1], [0, 0, 1, 1], [], []>} : vector<10x84xf32>, vector<84x1xf32>, vector<10x1xf32> -> vector<10x1xf32>
    %c0_329 = arith.constant 0 : index
    %c0_330 = arith.constant 0 : index
    %311 = vector.load %arg17[%c0_329, %c0_330] : memref<10x1xf32, #tpu.memory_space<vmem>>, vector<10x1xf32>
    %312 = arith.addf %310, %311 : vector<10x1xf32>
    %c1_331 = arith.constant 1 : index
    %c0_332 = arith.constant 0 : index
    %c0_333 = arith.constant 0 : index
    %313 = vector.load %arg18[%c1_331, %c0_332, %c0_333] : memref<2x10x1xf32, #tpu.memory_space<vmem>>, vector<1x10x1xf32>
    %314 = vector.shape_cast %313 : vector<1x10x1xf32> to vector<10x1xf32>
    %315 = vector.shape_cast %312 : vector<10x1xf32> to vector<1x10x1xf32>
    tpu.vector_store %arg18[%c1_331, %c0_332, %c0_333], %315 {strides = array<i32>} : memref<2x10x1xf32, #tpu.memory_space<vmem>>, vector<1x10x1xf32>,
    return
  }
  func.func @transform_0(%arg0: i32) -> (i32, i32, i32) {
    %c0_i32 = arith.constant 0 : i32
    %c0_i32_0 = arith.constant 0 : i32
    %c0_i32_1 = arith.constant 0 : i32
    %c0_i32_2 = arith.constant 0 : i32
    return %c0_i32, %c0_i32_0, %c0_i32_1 : i32, i32, i32
  }
  func.func @transform_1(%arg0: i32) -> (i32, i32, i32) {
    %c0_i32 = arith.constant 0 : i32
    %c0_i32_0 = arith.constant 0 : i32
    %c0_i32_1 = arith.constant 0 : i32
    %c0_i32_2 = arith.constant 0 : i32
    return %c0_i32, %c0_i32_0, %c0_i32_1 : i32, i32, i32
  }
  func.func @transform_2(%arg0: i32) -> (i32, i32, i32) {
    %c0_i32 = arith.constant 0 : i32
    %c0_i32_0 = arith.constant 0 : i32
    %c0_i32_1 = arith.constant 0 : i32
    %c0_i32_2 = arith.constant 0 : i32
    return %c0_i32, %c0_i32_0, %c0_i32_1 : i32, i32, i32
  }
  func.func @transform_3(%arg0: i32) -> (i32, i32, i32) {
    %c0_i32 = arith.constant 0 : i32
    %c0_i32_0 = arith.constant 0 : i32
    %c0_i32_1 = arith.constant 0 : i32
    %c0_i32_2 = arith.constant 0 : i32
    return %c0_i32, %c0_i32_0, %c0_i32_1 : i32, i32, i32
  }
  func.func @transform_4(%arg0: i32) -> (i32, i32, i32) {
    %c0_i32 = arith.constant 0 : i32
    %c0_i32_0 = arith.constant 0 : i32
    %c0_i32_1 = arith.constant 0 : i32
    %c0_i32_2 = arith.constant 0 : i32
    return %c0_i32, %c0_i32_0, %c0_i32_1 : i32, i32, i32
  }
  func.func @transform_5(%arg0: i32) -> (i32, i32) {
    %c0_i32 = arith.constant 0 : i32
    %c0_i32_0 = arith.constant 0 : i32
    %c0_i32_1 = arith.constant 0 : i32
    return %c0_i32, %c0_i32_0 : i32, i32
  }
  func.func @transform_6(%arg0: i32) -> (i32, i32, i32) {
    %c0_i32 = arith.constant 0 : i32
    %c0_i32_0 = arith.constant 0 : i32
    %c0_i32_1 = arith.constant 0 : i32
    %c0_i32_2 = arith.constant 0 : i32
    return %c0_i32, %c0_i32_0, %c0_i32_1 : i32, i32, i32
  }
  func.func @transform_7(%arg0: i32) -> (i32, i32, i32) {
    %c0_i32 = arith.constant 0 : i32
    %c0_i32_0 = arith.constant 0 : i32
    %c0_i32_1 = arith.constant 0 : i32
    %c0_i32_2 = arith.constant 0 : i32
    return %c0_i32, %c0_i32_0, %c0_i32_1 : i32, i32, i32
  }
  func.func @transform_8(%arg0: i32) -> (i32, i32, i32) {
    %c0_i32 = arith.constant 0 : i32
    %c0_i32_0 = arith.constant 0 : i32
    %c0_i32_1 = arith.constant 0 : i32
    %c0_i32_2 = arith.constant 0 : i32
    return %c0_i32, %c0_i32_0, %c0_i32_1 : i32, i32, i32
  }
  func.func @transform_9(%arg0: i32) -> (i32, i32, i32) {
    %c0_i32 = arith.constant 0 : i32
    %c0_i32_0 = arith.constant 0 : i32
    %c0_i32_1 = arith.constant 0 : i32
    %c0_i32_2 = arith.constant 0 : i32
    return %c0_i32, %c0_i32_0, %c0_i32_1 : i32, i32, i32
  }
  func.func @transform_10(%arg0: i32) -> (i32, i32) {
    %c0_i32 = arith.constant 0 : i32
    %c0_i32_0 = arith.constant 0 : i32
    %c0_i32_1 = arith.constant 0 : i32
    return %c0_i32, %c0_i32_0 : i32, i32
  }
  func.func @transform_11(%arg0: i32) -> (i32, i32, i32) {
    %c0_i32 = arith.constant 0 : i32
    %c0_i32_0 = arith.constant 0 : i32
    %c0_i32_1 = arith.constant 0 : i32
    %c0_i32_2 = arith.constant 0 : i32
    return %c0_i32, %c0_i32_0, %c0_i32_1 : i32, i32, i32
  }
  func.func @transform_12(%arg0: i32) -> (i32, i32) {
    %c0_i32 = arith.constant 0 : i32
    %c0_i32_0 = arith.constant 0 : i32
    %c0_i32_1 = arith.constant 0 : i32
    return %c0_i32, %c0_i32_0 : i32, i32
  }
  func.func @transform_13(%arg0: i32) -> (i32, i32) {
    %c0_i32 = arith.constant 0 : i32
    %c0_i32_0 = arith.constant 0 : i32
    %c0_i32_1 = arith.constant 0 : i32
    return %c0_i32, %c0_i32_0 : i32, i32
  }
  func.func @transform_14(%arg0: i32) -> (i32, i32) {
    %c0_i32 = arith.constant 0 : i32
    %c0_i32_0 = arith.constant 0 : i32
    %c0_i32_1 = arith.constant 0 : i32
    return %c0_i32, %c0_i32_0 : i32, i32
  }
  func.func @transform_15(%arg0: i32) -> (i32, i32) {
    %c0_i32 = arith.constant 0 : i32
    %c0_i32_0 = arith.constant 0 : i32
    %c0_i32_1 = arith.constant 0 : i32
    return %c0_i32, %c0_i32_0 : i32, i32
  }
  func.func @transform_16(%arg0: i32) -> (i32, i32) {
    %c0_i32 = arith.constant 0 : i32
    %c0_i32_0 = arith.constant 0 : i32
    %c0_i32_1 = arith.constant 0 : i32
    return %c0_i32, %c0_i32_0 : i32, i32
  }
  func.func @transform_17(%arg0: i32) -> (i32, i32, i32) {
    %c0_i32 = arith.constant 0 : i32
    %c0_i32_0 = arith.constant 0 : i32
    %c0_i32_1 = arith.constant 0 : i32
    %c0_i32_2 = arith.constant 0 : i32
    return %c0_i32, %c0_i32_0, %c0_i32_1 : i32, i32, i32
  }
}

</mosaic_0001>

<llo_original>
// kernel: lenet_forward.1
$region0: #{lenet_forward.1}
  #allocation0 [shape = 'u32[]', space=smem, size = 0x4, offset = 0x4, fixed_abs, tag = 'smem constant byte address 0x4 - core index']
  #allocation1 [shape = 'u32[144,128]{1,0:T(1,128)}', space=vmem, size = 0x12000, scoped, tag = 'internal scratch']
  %s0 = inlined_call_operand.vmem [shape: f32[2,28,28], index: 0, kind: input, shape index: {}]
  %s1 = inlined_call_operand.vmem [shape: f32[5,144,28], index: 1, kind: input, shape index: {}]
  %s2 = inlined_call_operand.vmem [shape: f32[5,28,24], index: 2, kind: input, shape index: {}]
  %s3 = inlined_call_operand.vmem [shape: f32[2,72,144], index: 3, kind: input, shape index: {}]
  %s4 = inlined_call_operand.vmem [shape: f32[2,24,12], index: 4, kind: input, shape index: {}]
  %s5 = inlined_call_operand.vmem [shape: f32[72,1], index: 5, kind: input, shape index: {}]
  %s6 = inlined_call_operand.vmem [shape: f32[5,128,72], index: 6, kind: input, shape index: {}]
  %s7 = inlined_call_operand.vmem [shape: f32[5,12,8], index: 7, kind: input, shape index: {}]
  %s8 = inlined_call_operand.vmem [shape: f32[2,64,128], index: 8, kind: input, shape index: {}]
  %s9 = inlined_call_operand.vmem [shape: f32[2,8,4], index: 9, kind: input, shape index: {}]
  %s10 = inlined_call_operand.vmem [shape: f32[64,1], index: 10, kind: input, shape index: {}]
  %s11 = inlined_call_operand.vmem [shape: f32[4,120,64], index: 11, kind: input, shape index: {}]
  %s12 = inlined_call_operand.vmem [shape: f32[120,1], index: 12, kind: input, shape index: {}]
  %s13 = inlined_call_operand.vmem [shape: f32[84,120], index: 13, kind: input, shape index: {}]
  %s14 = inlined_call_operand.vmem [shape: f32[84,1], index: 14, kind: input, shape index: {}]
  %s15 = inlined_call_operand.vmem [shape: f32[10,84], index: 15, kind: input, shape index: {}]
  %s16 = inlined_call_operand.vmem [shape: f32[10,1], index: 16, kind: input, shape index: {}]
  %s17 = inlined_call_operand.vmem [shape: f32[2,10,1], index: 17, kind: output, shape index: {}]
  %s18 = sld [smem:[#allocation0]]
  $region78: #{lenet_forward.1} parent=0
    _
  %s20 = ssub.s32 1, %s18
  %s21 = scalar_select 0, %s20, %s18
  // Predicated region
  $region2: #{lenet_forward.1} parent=0 // pred_check
    _
  $region3: #{lenet_forward.1} parent=0 // pred_check_branch
    %23 = sbr.rel (0) target = $region5
  $region4: #{lenet_forward.1} parent=0 // pred_region
    _
  $region5: #{lenet_forward.1} parent=0 // pred_fallthru
    _
  // Predicated region
  $region6: #{lenet_forward.1} parent=0 // pred_check
    _
  $region7: #{lenet_forward.1} parent=0 // pred_check_branch
    %25 = sbr.rel (0) target = $region9
  $region8: #{lenet_forward.1} parent=0 // pred_region
    _
  $region9: #{lenet_forward.1} parent=0 // pred_fallthru
    _
  // Predicated region
  $region10: #{lenet_forward.1} parent=0 // pred_check
    _
  $region11: #{lenet_forward.1} parent=0 // pred_check_branch
    %27 = sbr.rel (0) target = $region13
  $region12: #{lenet_forward.1} parent=0 // pred_region
    _
  $region13: #{lenet_forward.1} parent=0 // pred_fallthru
    _
  // Predicated region
  $region14: #{lenet_forward.1} parent=0 // pred_check
    _
  $region15: #{lenet_forward.1} parent=0 // pred_check_branch
    %29 = sbr.rel (0) target = $region17
  $region16: #{lenet_forward.1} parent=0 // pred_region
    _
  $region17: #{lenet_forward.1} parent=0 // pred_fallthru
    _
  // Predicated region
  $region18: #{lenet_forward.1} parent=0 // pred_check
    _
  $region19: #{lenet_forward.1} parent=0 // pred_check_branch
    %31 = sbr.rel (0) target = $region21
  $region20: #{lenet_forward.1} parent=0 // pred_region
    _
  $region21: #{lenet_forward.1} parent=0 // pred_fallthru
    _
  // Predicated region
  $region22: #{lenet_forward.1} parent=0 // pred_check
    _
  $region23: #{lenet_forward.1} parent=0 // pred_check_branch
    %33 = sbr.rel (0) target = $region25
  $region24: #{lenet_forward.1} parent=0 // pred_region
    _
  $region25: #{lenet_forward.1} parent=0 // pred_fallthru
    _
  // Predicated region
  $region26: #{lenet_forward.1} parent=0 // pred_check
    _
  $region27: #{lenet_forward.1} parent=0 // pred_check_branch
    %35 = sbr.rel (0) target = $region29
  $region28: #{lenet_forward.1} parent=0 // pred_region
    _
  $region29: #{lenet_forward.1} parent=0 // pred_fallthru
    _
  // Predicated region
  $region30: #{lenet_forward.1} parent=0 // pred_check
    _
  $region31: #{lenet_forward.1} parent=0 // pred_check_branch
    %37 = sbr.rel (0) target = $region33
  $region32: #{lenet_forward.1} parent=0 // pred_region
    _
  $region33: #{lenet_forward.1} parent=0 // pred_fallthru
    _
  // Predicated region
  $region34: #{lenet_forward.1} parent=0 // pred_check
    _
  $region35: #{lenet_forward.1} parent=0 // pred_check_branch
    %39 = sbr.rel (0) target = $region37
  $region36: #{lenet_forward.1} parent=0 // pred_region
    _
  $region37: #{lenet_forward.1} parent=0 // pred_fallthru
    _
  // Predicated region
  $region38: #{lenet_forward.1} parent=0 // pred_check
    _
  $region39: #{lenet_forward.1} parent=0 // pred_check_branch
    %41 = sbr.rel (0) target = $region41
  $region40: #{lenet_forward.1} parent=0 // pred_region
    _
  $region41: #{lenet_forward.1} parent=0 // pred_fallthru
    _
  // Predicated region
  $region42: #{lenet_forward.1} parent=0 // pred_check
    _
  $region43: #{lenet_forward.1} parent=0 // pred_check_branch
    %43 = sbr.rel (0) target = $region45
  $region44: #{lenet_forward.1} parent=0 // pred_region
    _
  $region45: #{lenet_forward.1} parent=0 // pred_fallthru
    _
  // Predicated region
  $region46: #{lenet_forward.1} parent=0 // pred_check
    _
  $region47: #{lenet_forward.1} parent=0 // pred_check_branch
    %45 = sbr.rel (0) target = $region49
  $region48: #{lenet_forward.1} parent=0 // pred_region
    _
  $region49: #{lenet_forward.1} parent=0 // pred_fallthru
    _
  // Predicated region
  $region50: #{lenet_forward.1} parent=0 // pred_check
    _
  $region51: #{lenet_forward.1} parent=0 // pred_check_branch
    %47 = sbr.rel (0) target = $region53
  $region52: #{lenet_forward.1} parent=0 // pred_region
    _
  $region53: #{lenet_forward.1} parent=0 // pred_fallthru
    _
  // Predicated region
  $region54: #{lenet_forward.1} parent=0 // pred_check
    _
  $region55: #{lenet_forward.1} parent=0 // pred_check_branch
    %49 = sbr.rel (0) target = $region57
  $region56: #{lenet_forward.1} parent=0 // pred_region
    _
  $region57: #{lenet_forward.1} parent=0 // pred_fallthru
    _
  // Predicated region
  $region58: #{lenet_forward.1} parent=0 // pred_check
    _
  $region59: #{lenet_forward.1} parent=0 // pred_check_branch
    %51 = sbr.rel (0) target = $region61
  $region60: #{lenet_forward.1} parent=0 // pred_region
    _
  $region61: #{lenet_forward.1} parent=0 // pred_fallthru
    _
  // Predicated region
  $region62: #{lenet_forward.1} parent=0 // pred_check
    _
  $region63: #{lenet_forward.1} parent=0 // pred_check_branch
    %53 = sbr.rel (0) target = $region65
  $region64: #{lenet_forward.1} parent=0 // pred_region
    _
  $region65: #{lenet_forward.1} parent=0 // pred_fallthru
    _
  // Predicated region
  $region66: #{lenet_forward.1} parent=0 // pred_check
    _
  $region67: #{lenet_forward.1} parent=0 // pred_check_branch
    %55 = sbr.rel (0) target = $region69
  $region68: #{lenet_forward.1} parent=0 // pred_region
    _
  $region69: #{lenet_forward.1} parent=0 // pred_fallthru
    _
  %v56 = vld [vmem:[%s0] sm:$0xff]
  %v57 = vld [vmem:[%s0 + $0x8] sm:$0xff]
  %v58 = vld [vmem:[%s0 + $0x10] sm:$0xff]
  %v59 = vld [vmem:[%s0 + $0x18] sm:$0xf]
  %v60 = vld [vmem:[%s2] sm:$0xff]
  %v61 = vld [vmem:[%s2 + $0x8] sm:$0xff]
  %v62 = vld [vmem:[%s2 + $0x10] sm:$0xff]
  %v63 = vld [vmem:[%s2 + $0x18] sm:$0xf]
  %vm64 = vcmask 228352
  %v66 = vsel %vm64, %v56, 0
  %v69 = vsel %vm64, %v57, 0
  %v72 = vsel %vm64, %v58, 0
  %v75 = vsel %vm64, %v59, 0
  %vm77 = vcmask 1043456
  %v79 = vsel %vm77, %v63, 0
  %81 = vmatprep.subr.mxu0 0.0
  %82 = vmatpush1.msra.mxu0 0.0
  %83 = vmatprep.subr.mxu0 0.0
  %84 = vmatpush1.msra.mxu0 0.0
  %85 = vmatprep.subr.mxu0 0.0
  %86 = vmatpush1.msra.mxu0 0.0
  %87 = vmatprep.subr.mxu0 0.0
  %88 = vmatpush1.msra.mxu0 0.0
  %89 = vmatprep.subr.mxu0 0.0
  %90 = vmatpush1.msra.mxu0 0.0
  %91 = vmatprep.subr.mxu0 0.0
  %92 = vmatpush1.msra.mxu0 0.0
  %93 = vmatprep.subr.mxu0 0.0
  %94 = vmatpush1.msra.mxu0 0.0
  %95 = vmatprep.subr.mxu0 0.0
  %96 = vmatpush1.msra.mxu0 0.0
  %97 = vmatprep.subr.mxu0 0.0
  %98 = vmatpush1.msra.mxu0 0.0
  %99 = vmatprep.subr.mxu0 0.0
  %100 = vmatpush1.msra.mxu0 0.0
  %101 = vmatprep.subr.mxu0 0.0
  %102 = vmatpush1.msra.mxu0 0.0
  %103 = vmatprep.subr.mxu0 0.0
  %104 = vmatpush1.msra.mxu0 0.0
  %105 = vmatprep.subr.mxu0 0.0
  %106 = vmatpush1.msra.mxu0 %v79
  %107 = vmatprep.subr.mxu0 0.0
  %108 = vmatpush1.msra.mxu0 %v62
  %109 = vmatprep.subr.mxu0 0.0
  %110 = vmatpush1.msra.mxu0 %v61
  %111 = vmatprep.subr.mxu0 0.0
  %112 = vmatpush1.msra.mxu0 %v60
  %113 = vmatprep.subr.mxu0 0.0
  %114 = vmatpush2.msra.mxu0 0.0
  %115 = vmatprep.subr.mxu0 0.0
  %116 = vmatpush2.msra.mxu0 0.0
  %117 = vmatprep.subr.mxu0 0.0
  %118 = vmatpush2.msra.mxu0 0.0
  %119 = vmatprep.subr.mxu0 0.0
  %120 = vmatpush2.msra.mxu0 0.0
  %121 = vmatprep.subr.mxu0 0.0
  %122 = vmatpush2.msra.mxu0 0.0
  %123 = vmatprep.subr.mxu0 0.0
  %124 = vmatpush2.msra.mxu0 0.0
  %125 = vmatprep.subr.mxu0 0.0
  %126 = vmatpush2.msra.mxu0 0.0
  %127 = vmatprep.subr.mxu0 0.0
  %128 = vmatpush2.msra.mxu0 0.0
  %129 = vmatprep.subr.mxu0 0.0
  %130 = vmatpush2.msra.mxu0 0.0
  %131 = vmatprep.subr.mxu0 0.0
  %132 = vmatpush2.msra.mxu0 0.0
  %133 = vmatprep.subr.mxu0 0.0
  %134 = vmatpush2.msra.mxu0 0.0
  %135 = vmatprep.subr.mxu0 0.0
  %136 = vmatpush2.msra.mxu0 0.0
  %137 = vmatprep.subr.mxu0 0.0
  %138 = vmatpush2.msra.mxu0 0.0
  %139 = vmatprep.subr.mxu0 0.0
  %140 = vmatpush2.msra.mxu0 0.0
  %141 = vmatprep.subr.mxu0 0.0
  %142 = vmatpush2.msra.mxu0 0.0
  %143 = vmatprep.subr.mxu0 0.0
  %144 = vmatpush2.msra.mxu0 0.0
  %145 = vmatprep.mubr.f32.mxu0 0.0
  %146 = vmatmul.mubr.f32.gmra.mxu0 %v66
  %v147 = vpop.f32.mrf.mxu0
  %v148 = vadd.f32 0.0, %v147
  %v149 = vpop.f32.mrf.mxu0
  %150 = vmatprep.mubr.f32.mxu0 0.0
  %151 = vmatmul.mubr.f32.gmra.mxu0 %v69
  %v152 = vpop.f32.mrf.mxu0
  %v153 = vadd.f32 0.0, %v152
  %v154 = vpop.f32.mrf.mxu0
  %155 = vmatprep.mubr.f32.mxu0 0.0
  %156 = vmatmul.mubr.f32.gmra.mxu0 %v72
  %v157 = vpop.f32.mrf.mxu0
  %v158 = vadd.f32 0.0, %v157
  %v159 = vpop.f32.mrf.mxu0
  %160 = vmatprep.mubr.f32.mxu0 0.0
  %161 = vmatmul.mubr.f32.gmra.mxu0 %v75
  %v162 = vpop.f32.mrf.mxu0
  %v163 = vadd.f32 0.0, %v162
  %v164 = vpop.f32.mrf.mxu0
  %165 = vdwg.mxu0
  %v166 = vld [vmem:[%s1] sm:$0xff]
  %v167 = vld [vmem:[%s1 + $0x8] sm:$0xff]
  %v168 = vld [vmem:[%s1 + $0x10] sm:$0xff]
  %v169 = vld [vmem:[%s1 + $0x18] sm:$0xff]
  %v170 = vld [vmem:[%s1 + $0x20] sm:$0xff]
  %v171 = vld [vmem:[%s1 + $0x28] sm:$0xff]
  %v172 = vld [vmem:[%s1 + $0x30] sm:$0xff]
  %v173 = vld [vmem:[%s1 + $0x38] sm:$0xff]
  %v174 = vld [vmem:[%s1 + $0x40] sm:$0xff]
  %v175 = vld [vmem:[%s1 + $0x48] sm:$0xff]
  %v176 = vld [vmem:[%s1 + $0x50] sm:$0xff]
  %v177 = vld [vmem:[%s1 + $0x58] sm:$0xff]
  %v178 = vld [vmem:[%s1 + $0x60] sm:$0xff]
  %v179 = vld [vmem:[%s1 + $0x68] sm:$0xff]
  %v180 = vld [vmem:[%s1 + $0x70] sm:$0xff]
  %v181 = vld [vmem:[%s1 + $0x78] sm:$0xff]
  %v182 = vld [vmem:[%s1 + $0x80] sm:$0xff]
  %v183 = vld [vmem:[%s1 + $0x88] sm:$0xff]
  %s184 = scalar_lea.vmem %s2, 32
  %v185 = vld [vmem:[%s184] sm:$0xff]
  %v186 = vld [vmem:[%s184 + $0x8] sm:$0xff]
  %v187 = vld [vmem:[%s184 + $0x10] sm:$0xff]
  %v188 = vld [vmem:[%s184 + $0x18] sm:$0xf]
  %v190 = vsel %vm77, %v188, 0
  %192 = vmatprep.subr.mxu0 0.0
  %193 = vmatpush1.msra.mxu0 0.0
  %194 = vmatprep.subr.mxu0 0.0
  %195 = vmatpush1.msra.mxu0 0.0
  %196 = vmatprep.subr.mxu0 0.0
  %197 = vmatpush1.msra.mxu0 0.0
  %198 = vmatprep.subr.mxu0 0.0
  %199 = vmatpush1.msra.mxu0 0.0
  %200 = vmatprep.subr.mxu0 0.0
  %201 = vmatpush1.msra.mxu0 0.0
  %202 = vmatprep.subr.mxu0 0.0
  %203 = vmatpush1.msra.mxu0 0.0
  %204 = vmatprep.subr.mxu0 0.0
  %205 = vmatpush1.msra.mxu0 0.0
  %206 = vmatprep.subr.mxu0 0.0
  %207 = vmatpush1.msra.mxu0 0.0
  %208 = vmatprep.subr.mxu0 0.0
  %209 = vmatpush1.msra.mxu0 0.0
  %210 = vmatprep.subr.mxu0 0.0
  %211 = vmatpush1.msra.mxu0 0.0
  %212 = vmatprep.subr.mxu0 0.0
  %213 = vmatpush1.msra.mxu0 0.0
  %214 = vmatprep.subr.mxu0 0.0
  %215 = vmatpush1.msra.mxu0 0.0
  %216 = vmatprep.subr.mxu0 0.0
  %217 = vmatpush1.msra.mxu0 %v190
  %218 = vmatprep.subr.mxu0 0.0
  %219 = vmatpush1.msra.mxu0 %v187
  %220 = vmatprep.subr.mxu0 0.0
  %221 = vmatpush1.msra.mxu0 %v186
  %222 = vmatprep.subr.mxu0 0.0
  %223 = vmatpush1.msra.mxu0 %v185
  %224 = vmatprep.subr.mxu0 0.0
  %225 = vmatpush2.msra.mxu0 0.0
  %226 = vmatprep.subr.mxu0 0.0
  %227 = vmatpush2.msra.mxu0 0.0
  %228 = vmatprep.subr.mxu0 0.0
  %229 = vmatpush2.msra.mxu0 0.0
  %230 = vmatprep.subr.mxu0 0.0
  %231 = vmatpush2.msra.mxu0 0.0
  %232 = vmatprep.subr.mxu0 0.0
  %233 = vmatpush2.msra.mxu0 0.0
  %234 = vmatprep.subr.mxu0 0.0
  %235 = vmatpush2.msra.mxu0 0.0
  %236 = vmatprep.subr.mxu0 0.0
  %237 = vmatpush2.msra.mxu0 0.0
  %238 = vmatprep.subr.mxu0 0.0
  %239 = vmatpush2.msra.mxu0 0.0
  %240 = vmatprep.subr.mxu0 0.0
  %241 = vmatpush2.msra.mxu0 0.0
  %242 = vmatprep.subr.mxu0 0.0
  %243 = vmatpush2.msra.mxu0 0.0
  %244 = vmatprep.subr.mxu0 0.0
  %245 = vmatpush2.msra.mxu0 0.0
  %246 = vmatprep.subr.mxu0 0.0
  %247 = vmatpush2.msra.mxu0 0.0
  %248 = vmatprep.subr.mxu0 0.0
  %249 = vmatpush2.msra.mxu0 0.0
  %250 = vmatprep.subr.mxu0 0.0
  %251 = vmatpush2.msra.mxu0 0.0
  %252 = vmatprep.subr.mxu0 0.0
  %253 = vmatpush2.msra.mxu0 0.0
  %254 = vmatprep.subr.mxu0 0.0
  %255 = vmatpush2.msra.mxu0 0.0
  %256 = vmatprep.mubr.f32.mxu0 0.0
  %257 = vmatmul.mubr.f32.gmra.mxu0 %v66
  %v258 = vpop.f32.mrf.mxu0
  %v259 = vadd.f32 0.0, %v258
  %v260 = vpop.f32.mrf.mxu0
  %261 = vmatprep.mubr.f32.mxu0 0.0
  %262 = vmatmul.mubr.f32.gmra.mxu0 %v69
  %v263 = vpop.f32.mrf.mxu0
  %v264 = vadd.f32 0.0, %v263
  %v265 = vpop.f32.mrf.mxu0
  %266 = vmatprep.mubr.f32.mxu0 0.0
  %267 = vmatmul.mubr.f32.gmra.mxu0 %v72
  %v268 = vpop.f32.mrf.mxu0
  %v269 = vadd.f32 0.0, %v268
  %v270 = vpop.f32.mrf.mxu0
  %271 = vmatprep.mubr.f32.mxu0 0.0
  %272 = vmatmul.mubr.f32.gmra.mxu0 %v75
  %v273 = vpop.f32.mrf.mxu0
  %v274 = vadd.f32 0.0, %v273
  %v275 = vpop.f32.mrf.mxu0
  %276 = vdwg.mxu0
  %s277 = scalar_lea.vmem %s1, 144
  %v278 = vld [vmem:[%s277] sm:$0xff]
  %v279 = vld [vmem:[%s277 + $0x8] sm:$0xff]
  %v280 = vld [vmem:[%s277 + $0x10] sm:$0xff]
  %v281 = vld [vmem:[%s277 + $0x18] sm:$0xff]
  %v282 = vld [vmem:[%s277 + $0x20] sm:$0xff]
  %v283 = vld [vmem:[%s277 + $0x28] sm:$0xff]
  %v284 = vld [vmem:[%s277 + $0x30] sm:$0xff]
  %v285 = vld [vmem:[%s277 + $0x38] sm:$0xff]
  %v286 = vld [vmem:[%s277 + $0x40] sm:$0xff]
  %v287 = vld [vmem:[%s277 + $0x48] sm:$0xff]
  %v288 = vld [vmem:[%s277 + $0x50] sm:$0xff]
  %v289 = vld [vmem:[%s277 + $0x58] sm:$0xff]
  %v290 = vld [vmem:[%s277 + $0x60] sm:$0xff]
  %v291 = vld [vmem:[%s277 + $0x68] sm:$0xff]
  %v292 = vld [vmem:[%s277 + $0x70] sm:$0xff]
  %v293 = vld [vmem:[%s277 + $0x78] sm:$0xff]
  %v294 = vld [vmem:[%s277 + $0x80] sm:$0xff]
  %v295 = vld [vmem:[%s277 + $0x88] sm:$0xff]
  %v297 = vsel %vm64, %v278, 0
  %v300 = vsel %vm64, %v279, 0
  %v303 = vsel %vm64, %v280, 0
  %v306 = vsel %vm64, %v281, 0
  %v309 = vsel %vm64, %v282, 0
  %v312 = vsel %vm64, %v283, 0
  %v315 = vsel %vm64, %v284, 0
  %v318 = vsel %vm64, %v285, 0
  %v321 = vsel %vm64, %v286, 0
  %v324 = vsel %vm64, %v287, 0
  %v327 = vsel %vm64, %v288, 0
  %v330 = vsel %vm64, %v289, 0
  %v333 = vsel %vm64, %v290, 0
  %v336 = vsel %vm64, %v291, 0
  %v339 = vsel %vm64, %v292, 0
  %v342 = vsel %vm64, %v293, 0
  %v345 = vsel %vm64, %v294, 0
  %v348 = vsel %vm64, %v295, 0
  %v351 = vsel %vm77, %v274, 0
  %353 = vmatprep.subr.mxu0 0.0
  %354 = vmatpush1.msra.mxu0 0.0
  %355 = vmatprep.subr.mxu0 0.0
  %356 = vmatpush1.msra.mxu0 0.0
  %357 = vmatprep.subr.mxu0 0.0
  %358 = vmatpush1.msra.mxu0 0.0
  %359 = vmatprep.subr.mxu0 0.0
  %360 = vmatpush1.msra.mxu0 0.0
  %361 = vmatprep.subr.mxu0 0.0
  %362 = vmatpush1.msra.mxu0 0.0
  %363 = vmatprep.subr.mxu0 0.0
  %364 = vmatpush1.msra.mxu0 0.0
  %365 = vmatprep.subr.mxu0 0.0
  %366 = vmatpush1.msra.mxu0 0.0
  %367 = vmatprep.subr.mxu0 0.0
  %368 = vmatpush1.msra.mxu0 0.0
  %369 = vmatprep.subr.mxu0 0.0
  %370 = vmatpush1.msra.mxu0 0.0
  %371 = vmatprep.subr.mxu0 0.0
  %372 = vmatpush1.msra.mxu0 0.0
  %373 = vmatprep.subr.mxu0 0.0
  %374 = vmatpush1.msra.mxu0 0.0
  %375 = vmatprep.subr.mxu0 0.0
  %376 = vmatpush1.msra.mxu0 0.0
  %377 = vmatprep.subr.mxu0 0.0
  %378 = vmatpush1.msra.mxu0 %v351
  %379 = vmatprep.subr.mxu0 0.0
  %380 = vmatpush1.msra.mxu0 %v269
  %381 = vmatprep.subr.mxu0 0.0
  %382 = vmatpush1.msra.mxu0 %v264
  %383 = vmatprep.subr.mxu0 0.0
  %384 = vmatpush1.msra.mxu0 %v259
  %385 = vmatprep.subr.mxu0 0.0
  %386 = vmatpush2.msra.mxu0 0.0
  %387 = vmatprep.subr.mxu0 0.0
  %388 = vmatpush2.msra.mxu0 0.0
  %389 = vmatprep.subr.mxu0 0.0
  %390 = vmatpush2.msra.mxu0 0.0
  %391 = vmatprep.subr.mxu0 0.0
  %392 = vmatpush2.msra.mxu0 0.0
  %393 = vmatprep.subr.mxu0 0.0
  %394 = vmatpush2.msra.mxu0 0.0
  %395 = vmatprep.subr.mxu0 0.0
  %396 = vmatpush2.msra.mxu0 0.0
  %397 = vmatprep.subr.mxu0 0.0
  %398 = vmatpush2.msra.mxu0 0.0
  %399 = vmatprep.subr.mxu0 0.0
  %400 = vmatpush2.msra.mxu0 0.0
  %401 = vmatprep.subr.mxu0 0.0
  %402 = vmatpush2.msra.mxu0 0.0
  %403 = vmatprep.subr.mxu0 0.0
  %404 = vmatpush2.msra.mxu0 0.0
  %405 = vmatprep.subr.mxu0 0.0
  %406 = vmatpush2.msra.mxu0 0.0
  %407 = vmatprep.subr.mxu0 0.0
  %408 = vmatpush2.msra.mxu0 0.0
  %409 = vmatprep.subr.mxu0 0.0
  %410 = vmatpush2.msra.mxu0 0.0
  %411 = vmatprep.subr.mxu0 0.0
  %412 = vmatpush2.msra.mxu0 0.0
  %413 = vmatprep.subr.mxu0 0.0
  %414 = vmatpush2.msra.mxu0 0.0
  %415 = vmatprep.subr.mxu0 0.0
  %416 = vmatpush2.msra.mxu0 0.0
  %417 = vmatprep.mubr.f32.mxu0 0.0
  %418 = vmatmul.mubr.f32.gmra.mxu0 %v297
  %v419 = vpop.f32.mrf.mxu0
  %v420 = vadd.f32 0.0, %v419
  %v421 = vpop.f32.mrf.mxu0
  %422 = vmatprep.mubr.f32.mxu0 0.0
  %423 = vmatmul.mubr.f32.gmra.mxu0 %v300
  %v424 = vpop.f32.mrf.mxu0
  %v425 = vadd.f32 0.0, %v424
  %v426 = vpop.f32.mrf.mxu0
  %427 = vmatprep.mubr.f32.mxu0 0.0
  %428 = vmatmul.mubr.f32.gmra.mxu0 %v303
  %v429 = vpop.f32.mrf.mxu0
  %v430 = vadd.f32 0.0, %v429
  %v431 = vpop.f32.mrf.mxu0
  %432 = vmatprep.mubr.f32.mxu0 0.0
  %433 = vmatmul.mubr.f32.gmra.mxu0 %v306
  %v434 = vpop.f32.mrf.mxu0
  %v435 = vadd.f32 0.0, %v434
  %v436 = vpop.f32.mrf.mxu0
  %437 = vmatprep.mubr.f32.mxu0 0.0
  %438 = vmatmul.mubr.f32.gmra.mxu0 %v309
  %v439 = vpop.f32.mrf.mxu0
  %v440 = vadd.f32 0.0, %v439
  %v441 = vpop.f32.mrf.mxu0
  %442 = vmatprep.mubr.f32.mxu0 0.0
  %443 = vmatmul.mubr.f32.gmra.mxu0 %v312
  %v444 = vpop.f32.mrf.mxu0
  %v445 = vadd.f32 0.0, %v444
  %v446 = vpop.f32.mrf.mxu0
  %447 = vmatprep.mubr.f32.mxu0 0.0
  %448 = vmatmul.mubr.f32.gmra.mxu0 %v315
  %v449 = vpop.f32.mrf.mxu0
  %v450 = vadd.f32 0.0, %v449
  %v451 = vpop.f32.mrf.mxu0
  %452 = vmatprep.mubr.f32.mxu0 0.0
  %453 = vmatmul.mubr.f32.gmra.mxu0 %v318
  %v454 = vpop.f32.mrf.mxu0
  %v455 = vadd.f32 0.0, %v454
  %v456 = vpop.f32.mrf.mxu0
  %457 = vmatprep.mubr.f32.mxu0 0.0
  %458 = vmatmul.mubr.f32.gmra.mxu0 %v321
  %v459 = vpop.f32.mrf.mxu0
  %v460 = vadd.f32 0.0, %v459
  %v461 = vpop.f32.mrf.mxu0
  %462 = vmatprep.mubr.f32.mxu0 0.0
  %463 = vmatmul.mubr.f32.gmra.mxu0 %v324
  %v464 = vpop.f32.mrf.mxu0
  %v465 = vadd.f32 0.0, %v464
  %v466 = vpop.f32.mrf.mxu0
  %467 = vmatprep.mubr.f32.mxu0 0.0
  %468 = vmatmul.mubr.f32.gmra.mxu0 %v327
  %v469 = vpop.f32.mrf.mxu0
  %v470 = vadd.f32 0.0, %v469
  %v471 = vpop.f32.mrf.mxu0
  %472 = vmatprep.mubr.f32.mxu0 0.0
  %473 = vmatmul.mubr.f32.gmra.mxu0 %v330
  %v474 = vpop.f32.mrf.mxu0
  %v475 = vadd.f32 0.0, %v474
  %v476 = vpop.f32.mrf.mxu0
  %477 = vmatprep.mubr.f32.mxu0 0.0
  %478 = vmatmul.mubr.f32.gmra.mxu0 %v333
  %v479 = vpop.f32.mrf.mxu0
  %v480 = vadd.f32 0.0, %v479
  %v481 = vpop.f32.mrf.mxu0
  %482 = vmatprep.mubr.f32.mxu0 0.0
  %483 = vmatmul.mubr.f32.gmra.mxu0 %v336
  %v484 = vpop.f32.mrf.mxu0
  %v485 = vadd.f32 0.0, %v484
  %v486 = vpop.f32.mrf.mxu0
  %487 = vmatprep.mubr.f32.mxu0 0.0
  %488 = vmatmul.mubr.f32.gmra.mxu0 %v339
  %v489 = vpop.f32.mrf.mxu0
  %v490 = vadd.f32 0.0, %v489
  %v491 = vpop.f32.mrf.mxu0
  %492 = vmatprep.mubr.f32.mxu0 0.0
  %493 = vmatmul.mubr.f32.gmra.mxu0 %v342
  %v494 = vpop.f32.mrf.mxu0
  %v495 = vadd.f32 0.0, %v494
  %v496 = vpop.f32.mrf.mxu0
  %497 = vmatprep.mubr.f32.mxu0 0.0
  %498 = vmatmul.mubr.f32.gmra.mxu0 %v345
  %v499 = vpop.f32.mrf.mxu0
  %v500 = vadd.f32 0.0, %v499
  %v501 = vpop.f32.mrf.mxu0
  %502 = vmatprep.mubr.f32.mxu0 0.0
  %503 = vmatmul.mubr.f32.gmra.mxu0 %v348
  %v504 = vpop.f32.mrf.mxu0
  %v505 = vadd.f32 0.0, %v504
  %v506 = vpop.f32.mrf.mxu0
  %507 = vdwg.mxu0
  %v509 = vsel %vm64, %v166, 0
  %v512 = vsel %vm64, %v167, 0
  %v515 = vsel %vm64, %v168, 0
  %v518 = vsel %vm64, %v169, 0
  %v521 = vsel %vm64, %v170, 0
  %v524 = vsel %vm64, %v171, 0
  %v527 = vsel %vm64, %v172, 0
  %v530 = vsel %vm64, %v173, 0
  %v533 = vsel %vm64, %v174, 0
  %v536 = vsel %vm64, %v175, 0
  %v539 = vsel %vm64, %v176, 0
  %v542 = vsel %vm64, %v177, 0
  %v545 = vsel %vm64, %v178, 0
  %v548 = vsel %vm64, %v179, 0
  %v551 = vsel %vm64, %v180, 0
  %v554 = vsel %vm64, %v181, 0
  %v557 = vsel %vm64, %v182, 0
  %v560 = vsel %vm64, %v183, 0
  %v563 = vsel %vm77, %v163, 0
  %565 = vmatprep.subr.mxu0 0.0
  %566 = vmatpush1.msra.mxu0 0.0
  %567 = vmatprep.subr.mxu0 0.0
  %568 = vmatpush1.msra.mxu0 0.0
  %569 = vmatprep.subr.mxu0 0.0
  %570 = vmatpush1.msra.mxu0 0.0
  %571 = vmatprep.subr.mxu0 0.0
  %572 = vmatpush1.msra.mxu0 0.0
  %573 = vmatprep.subr.mxu0 0.0
  %574 = vmatpush1.msra.mxu0 0.0
  %575 = vmatprep.subr.mxu0 0.0
  %576 = vmatpush1.msra.mxu0 0.0
  %577 = vmatprep.subr.mxu0 0.0
  %578 = vmatpush1.msra.mxu0 0.0
  %579 = vmatprep.subr.mxu0 0.0
  %580 = vmatpush1.msra.mxu0 0.0
  %581 = vmatprep.subr.mxu0 0.0
  %582 = vmatpush1.msra.mxu0 0.0
  %583 = vmatprep.subr.mxu0 0.0
  %584 = vmatpush1.msra.mxu0 0.0
  %585 = vmatprep.subr.mxu0 0.0
  %586 = vmatpush1.msra.mxu0 0.0
  %587 = vmatprep.subr.mxu0 0.0
  %588 = vmatpush1.msra.mxu0 0.0
  %589 = vmatprep.subr.mxu0 0.0
  %590 = vmatpush1.msra.mxu0 %v563
  %591 = vmatprep.subr.mxu0 0.0
  %592 = vmatpush1.msra.mxu0 %v158
  %593 = vmatprep.subr.mxu0 0.0
  %594 = vmatpush1.msra.mxu0 %v153
  %595 = vmatprep.subr.mxu0 0.0
  %596 = vmatpush1.msra.mxu0 %v148
  %597 = vmatprep.subr.mxu0 0.0
  %598 = vmatpush2.msra.mxu0 0.0
  %599 = vmatprep.subr.mxu0 0.0
  %600 = vmatpush2.msra.mxu0 0.0
  %601 = vmatprep.subr.mxu0 0.0
  %602 = vmatpush2.msra.mxu0 0.0
  %603 = vmatprep.subr.mxu0 0.0
  %604 = vmatpush2.msra.mxu0 0.0
  %605 = vmatprep.subr.mxu0 0.0
  %606 = vmatpush2.msra.mxu0 0.0
  %607 = vmatprep.subr.mxu0 0.0
  %608 = vmatpush2.msra.mxu0 0.0
  %609 = vmatprep.subr.mxu0 0.0
  %610 = vmatpush2.msra.mxu0 0.0
  %611 = vmatprep.subr.mxu0 0.0
  %612 = vmatpush2.msra.mxu0 0.0
  %613 = vmatprep.subr.mxu0 0.0
  %614 = vmatpush2.msra.mxu0 0.0
  %615 = vmatprep.subr.mxu0 0.0
  %616 = vmatpush2.msra.mxu0 0.0
  %617 = vmatprep.subr.mxu0 0.0
  %618 = vmatpush2.msra.mxu0 0.0
  %619 = vmatprep.subr.mxu0 0.0
  %620 = vmatpush2.msra.mxu0 0.0
  %621 = vmatprep.subr.mxu0 0.0
  %622 = vmatpush2.msra.mxu0 0.0
  %623 = vmatprep.subr.mxu0 0.0
  %624 = vmatpush2.msra.mxu0 0.0
  %625 = vmatprep.subr.mxu0 0.0
  %626 = vmatpush2.msra.mxu0 0.0
  %627 = vmatprep.subr.mxu0 0.0
  %628 = vmatpush2.msra.mxu0 0.0
  %629 = vmatprep.mubr.f32.mxu0 0.0
  %630 = vmatmul.mubr.f32.gmra.mxu0 %v509
  %v631 = vpop.f32.mrf.mxu0
  %v632 = vadd.f32 %v420, %v631
  %v633 = vpop.f32.mrf.mxu0
  %634 = vmatprep.mubr.f32.mxu0 0.0
  %635 = vmatmul.mubr.f32.gmra.mxu0 %v512
  %v636 = vpop.f32.mrf.mxu0
  %v637 = vadd.f32 %v425, %v636
  %v638 = vpop.f32.mrf.mxu0
  %639 = vmatprep.mubr.f32.mxu0 0.0
  %640 = vmatmul.mubr.f32.gmra.mxu0 %v515
  %v641 = vpop.f32.mrf.mxu0
  %v642 = vadd.f32 %v430, %v641
  %v643 = vpop.f32.mrf.mxu0
  %644 = vmatprep.mubr.f32.mxu0 0.0
  %645 = vmatmul.mubr.f32.gmra.mxu0 %v518
  %v646 = vpop.f32.mrf.mxu0
  %v647 = vadd.f32 %v435, %v646
  %v648 = vpop.f32.mrf.mxu0
  %649 = vmatprep.mubr.f32.mxu0 0.0
  %650 = vmatmul.mubr.f32.gmra.mxu0 %v521
  %v651 = vpop.f32.mrf.mxu0
  %v652 = vadd.f32 %v440, %v651
  %v653 = vpop.f32.mrf.mxu0
  %654 = vmatprep.mubr.f32.mxu0 0.0
  %655 = vmatmul.mubr.f32.gmra.mxu0 %v524
  %v656 = vpop.f32.mrf.mxu0
  %v657 = vadd.f32 %v445, %v656
  %v658 = vpop.f32.mrf.mxu0
  %659 = vmatprep.mubr.f32.mxu0 0.0
  %660 = vmatmul.mubr.f32.gmra.mxu0 %v527
  %v661 = vpop.f32.mrf.mxu0
  %v662 = vadd.f32 %v450, %v661
  %v663 = vpop.f32.mrf.mxu0
  %664 = vmatprep.mubr.f32.mxu0 0.0
  %665 = vmatmul.mubr.f32.gmra.mxu0 %v530
  %v666 = vpop.f32.mrf.mxu0
  %v667 = vadd.f32 %v455, %v666
  %v668 = vpop.f32.mrf.mxu0
  %669 = vmatprep.mubr.f32.mxu0 0.0
  %670 = vmatmul.mubr.f32.gmra.mxu0 %v533
  %v671 = vpop.f32.mrf.mxu0
  %v672 = vadd.f32 %v460, %v671
  %v673 = vpop.f32.mrf.mxu0
  %674 = vmatprep.mubr.f32.mxu0 0.0
  %675 = vmatmul.mubr.f32.gmra.mxu0 %v536
  %v676 = vpop.f32.mrf.mxu0
  %v677 = vadd.f32 %v465, %v676
  %v678 = vpop.f32.mrf.mxu0
  %679 = vmatprep.mubr.f32.mxu0 0.0
  %680 = vmatmul.mubr.f32.gmra.mxu0 %v539
  %v681 = vpop.f32.mrf.mxu0
  %v682 = vadd.f32 %v470, %v681
  %v683 = vpop.f32.mrf.mxu0
  %684 = vmatprep.mubr.f32.mxu0 0.0
  %685 = vmatmul.mubr.f32.gmra.mxu0 %v542
  %v686 = vpop.f32.mrf.mxu0
  %v687 = vadd.f32 %v475, %v686
  %v688 = vpop.f32.mrf.mxu0
  %689 = vmatprep.mubr.f32.mxu0 0.0
  %690 = vmatmul.mubr.f32.gmra.mxu0 %v545
  %v691 = vpop.f32.mrf.mxu0
  %v692 = vadd.f32 %v480, %v691
  %v693 = vpop.f32.mrf.mxu0
  %694 = vmatprep.mubr.f32.mxu0 0.0
  %695 = vmatmul.mubr.f32.gmra.mxu0 %v548
  %v696 = vpop.f32.mrf.mxu0
  %v697 = vadd.f32 %v485, %v696
  %v698 = vpop.f32.mrf.mxu0
  %699 = vmatprep.mubr.f32.mxu0 0.0
  %700 = vmatmul.mubr.f32.gmra.mxu0 %v551
  %v701 = vpop.f32.mrf.mxu0
  %v702 = vadd.f32 %v490, %v701
  %v703 = vpop.f32.mrf.mxu0
  %704 = vmatprep.mubr.f32.mxu0 0.0
  %705 = vmatmul.mubr.f32.gmra.mxu0 %v554
  %v706 = vpop.f32.mrf.mxu0
  %v707 = vadd.f32 %v495, %v706
  %v708 = vpop.f32.mrf.mxu0
  %709 = vmatprep.mubr.f32.mxu0 0.0
  %710 = vmatmul.mubr.f32.gmra.mxu0 %v557
  %v711 = vpop.f32.mrf.mxu0
  %v712 = vadd.f32 %v500, %v711
  %v713 = vpop.f32.mrf.mxu0
  %714 = vmatprep.mubr.f32.mxu0 0.0
  %715 = vmatmul.mubr.f32.gmra.mxu0 %v560
  %v716 = vpop.f32.mrf.mxu0
  %v717 = vadd.f32 %v505, %v716
  %v718 = vpop.f32.mrf.mxu0
  %719 = vdwg.mxu0
  %s720 = scalar_lea.vmem %s2, 64
  %v721 = vld [vmem:[%s720] sm:$0xff]
  %v722 = vld [vmem:[%s720 + $0x8] sm:$0xff]
  %v723 = vld [vmem:[%s720 + $0x10] sm:$0xff]
  %v724 = vld [vmem:[%s720 + $0x18] sm:$0xf]
  %v726 = vsel %vm77, %v724, 0
  %728 = vmatprep.subr.mxu0 0.0
  %729 = vmatpush1.msra.mxu0 0.0
  %730 = vmatprep.subr.mxu0 0.0
  %731 = vmatpush1.msra.mxu0 0.0
  %732 = vmatprep.subr.mxu0 0.0
  %733 = vmatpush1.msra.mxu0 0.0
  %734 = vmatprep.subr.mxu0 0.0
  %735 = vmatpush1.msra.mxu0 0.0
  %736 = vmatprep.subr.mxu0 0.0
  %737 = vmatpush1.msra.mxu0 0.0
  %738 = vmatprep.subr.mxu0 0.0
  %739 = vmatpush1.msra.mxu0 0.0
  %740 = vmatprep.subr.mxu0 0.0
  %741 = vmatpush1.msra.mxu0 0.0
  %742 = vmatprep.subr.mxu0 0.0
  %743 = vmatpush1.msra.mxu0 0.0
  %744 = vmatprep.subr.mxu0 0.0
  %745 = vmatpush1.msra.mxu0 0.0
  %746 = vmatprep.subr.mxu0 0.0
  %747 = vmatpush1.msra.mxu0 0.0
  %748 = vmatprep.subr.mxu0 0.0
  %749 = vmatpush1.msra.mxu0 0.0
  %750 = vmatprep.subr.mxu0 0.0
  %751 = vmatpush1.msra.mxu0 0.0
  %752 = vmatprep.subr.mxu0 0.0
  %753 = vmatpush1.msra.mxu0 %v726
  %754 = vmatprep.subr.mxu0 0.0
  %755 = vmatpush1.msra.mxu0 %v723
  %756 = vmatprep.subr.mxu0 0.0
  %757 = vmatpush1.msra.mxu0 %v722
  %758 = vmatprep.subr.mxu0 0.0
  %759 = vmatpush1.msra.mxu0 %v721
  %760 = vmatprep.subr.mxu0 0.0
  %761 = vmatpush2.msra.mxu0 0.0
  %762 = vmatprep.subr.mxu0 0.0
  %763 = vmatpush2.msra.mxu0 0.0
  %764 = vmatprep.subr.mxu0 0.0
  %765 = vmatpush2.msra.mxu0 0.0
  %766 = vmatprep.subr.mxu0 0.0
  %767 = vmatpush2.msra.mxu0 0.0
  %768 = vmatprep.subr.mxu0 0.0
  %769 = vmatpush2.msra.mxu0 0.0
  %770 = vmatprep.subr.mxu0 0.0
  %771 = vmatpush2.msra.mxu0 0.0
  %772 = vmatprep.subr.mxu0 0.0
  %773 = vmatpush2.msra.mxu0 0.0
  %774 = vmatprep.subr.mxu0 0.0
  %775 = vmatpush2.msra.mxu0 0.0
  %776 = vmatprep.subr.mxu0 0.0
  %777 = vmatpush2.msra.mxu0 0.0
  %778 = vmatprep.subr.mxu0 0.0
  %779 = vmatpush2.msra.mxu0 0.0
  %780 = vmatprep.subr.mxu0 0.0
  %781 = vmatpush2.msra.mxu0 0.0
  %782 = vmatprep.subr.mxu0 0.0
  %783 = vmatpush2.msra.mxu0 0.0
  %784 = vmatprep.subr.mxu0 0.0
  %785 = vmatpush2.msra.mxu0 0.0
  %786 = vmatprep.subr.mxu0 0.0
  %787 = vmatpush2.msra.mxu0 0.0
  %788 = vmatprep.subr.mxu0 0.0
  %789 = vmatpush2.msra.mxu0 0.0
  %790 = vmatprep.subr.mxu0 0.0
  %791 = vmatpush2.msra.mxu0 0.0
  %792 = vmatprep.mubr.f32.mxu0 0.0
  %793 = vmatmul.mubr.f32.gmra.mxu0 %v66
  %v794 = vpop.f32.mrf.mxu0
  %v795 = vadd.f32 0.0, %v794
  %v796 = vpop.f32.mrf.mxu0
  %797 = vmatprep.mubr.f32.mxu0 0.0
  %798 = vmatmul.mubr.f32.gmra.mxu0 %v69
  %v799 = vpop.f32.mrf.mxu0
  %v800 = vadd.f32 0.0, %v799
  %v801 = vpop.f32.mrf.mxu0
  %802 = vmatprep.mubr.f32.mxu0 0.0
  %803 = vmatmul.mubr.f32.gmra.mxu0 %v72
  %v804 = vpop.f32.mrf.mxu0
  %v805 = vadd.f32 0.0, %v804
  %v806 = vpop.f32.mrf.mxu0
  %807 = vmatprep.mubr.f32.mxu0 0.0
  %808 = vmatmul.mubr.f32.gmra.mxu0 %v75
  %v809 = vpop.f32.mrf.mxu0
  %v810 = vadd.f32 0.0, %v809
  %v811 = vpop.f32.mrf.mxu0
  %812 = vdwg.mxu0
  %s813 = scalar_lea.vmem %s1, 288
  %v814 = vld [vmem:[%s813] sm:$0xff]
  %v815 = vld [vmem:[%s813 + $0x8] sm:$0xff]
  %v816 = vld [vmem:[%s813 + $0x10] sm:$0xff]
  %v817 = vld [vmem:[%s813 + $0x18] sm:$0xff]
  %v818 = vld [vmem:[%s813 + $0x20] sm:$0xff]
  %v819 = vld [vmem:[%s813 + $0x28] sm:$0xff]
  %v820 = vld [vmem:[%s813 + $0x30] sm:$0xff]
  %v821 = vld [vmem:[%s813 + $0x38] sm:$0xff]
  %v822 = vld [vmem:[%s813 + $0x40] sm:$0xff]
  %v823 = vld [vmem:[%s813 + $0x48] sm:$0xff]
  %v824 = vld [vmem:[%s813 + $0x50] sm:$0xff]
  %v825 = vld [vmem:[%s813 + $0x58] sm:$0xff]
  %v826 = vld [vmem:[%s813 + $0x60] sm:$0xff]
  %v827 = vld [vmem:[%s813 + $0x68] sm:$0xff]
  %v828 = vld [vmem:[%s813 + $0x70] sm:$0xff]
  %v829 = vld [vmem:[%s813 + $0x78] sm:$0xff]
  %v830 = vld [vmem:[%s813 + $0x80] sm:$0xff]
  %v831 = vld [vmem:[%s813 + $0x88] sm:$0xff]
  %v833 = vsel %vm64, %v814, 0
  %v836 = vsel %vm64, %v815, 0
  %v839 = vsel %vm64, %v816, 0
  %v842 = vsel %vm64, %v817, 0
  %v845 = vsel %vm64, %v818, 0
  %v848 = vsel %vm64, %v819, 0
  %v851 = vsel %vm64, %v820, 0
  %v854 = vsel %vm64, %v821, 0
  %v857 = vsel %vm64, %v822, 0
  %v860 = vsel %vm64, %v823, 0
  %v863 = vsel %vm64, %v824, 0
  %v866 = vsel %vm64, %v825, 0
  %v869 = vsel %vm64, %v826, 0
  %v872 = vsel %vm64, %v827, 0
  %v875 = vsel %vm64, %v828, 0
  %v878 = vsel %vm64, %v829, 0
  %v881 = vsel %vm64, %v830, 0
  %v884 = vsel %vm64, %v831, 0
  %v887 = vsel %vm77, %v810, 0
  %889 = vmatprep.subr.mxu0 0.0
  %890 = vmatpush1.msra.mxu0 0.0
  %891 = vmatprep.subr.mxu0 0.0
  %892 = vmatpush1.msra.mxu0 0.0
  %893 = vmatprep.subr.mxu0 0.0
  %894 = vmatpush1.msra.mxu0 0.0
  %895 = vmatprep.subr.mxu0 0.0
  %896 = vmatpush1.msra.mxu0 0.0
  %897 = vmatprep.subr.mxu0 0.0
  %898 = vmatpush1.msra.mxu0 0.0
  %899 = vmatprep.subr.mxu0 0.0
  %900 = vmatpush1.msra.mxu0 0.0
  %901 = vmatprep.subr.mxu0 0.0
  %902 = vmatpush1.msra.mxu0 0.0
  %903 = vmatprep.subr.mxu0 0.0
  %904 = vmatpush1.msra.mxu0 0.0
  %905 = vmatprep.subr.mxu0 0.0
  %906 = vmatpush1.msra.mxu0 0.0
  %907 = vmatprep.subr.mxu0 0.0
  %908 = vmatpush1.msra.mxu0 0.0
  %909 = vmatprep.subr.mxu0 0.0
  %910 = vmatpush1.msra.mxu0 0.0
  %911 = vmatprep.subr.mxu0 0.0
  %912 = vmatpush1.msra.mxu0 0.0
  %913 = vmatprep.subr.mxu0 0.0
  %914 = vmatpush1.msra.mxu0 %v887
  %915 = vmatprep.subr.mxu0 0.0
  %916 = vmatpush1.msra.mxu0 %v805
  %917 = vmatprep.subr.mxu0 0.0
  %918 = vmatpush1.msra.mxu0 %v800
  %919 = vmatprep.subr.mxu0 0.0
  %920 = vmatpush1.msra.mxu0 %v795
  %921 = vmatprep.subr.mxu0 0.0
  %922 = vmatpush2.msra.mxu0 0.0
  %923 = vmatprep.subr.mxu0 0.0
  %924 = vmatpush2.msra.mxu0 0.0
  %925 = vmatprep.subr.mxu0 0.0
  %926 = vmatpush2.msra.mxu0 0.0
  %927 = vmatprep.subr.mxu0 0.0
  %928 = vmatpush2.msra.mxu0 0.0
  %929 = vmatprep.subr.mxu0 0.0
  %930 = vmatpush2.msra.mxu0 0.0
  %931 = vmatprep.subr.mxu0 0.0
  %932 = vmatpush2.msra.mxu0 0.0
  %933 = vmatprep.subr.mxu0 0.0
  %934 = vmatpush2.msra.mxu0 0.0
  %935 = vmatprep.subr.mxu0 0.0
  %936 = vmatpush2.msra.mxu0 0.0
  %937 = vmatprep.subr.mxu0 0.0
  %938 = vmatpush2.msra.mxu0 0.0
  %939 = vmatprep.subr.mxu0 0.0
  %940 = vmatpush2.msra.mxu0 0.0
  %941 = vmatprep.subr.mxu0 0.0
  %942 = vmatpush2.msra.mxu0 0.0
  %943 = vmatprep.subr.mxu0 0.0
  %944 = vmatpush2.msra.mxu0 0.0
  %945 = vmatprep.subr.mxu0 0.0
  %946 = vmatpush2.msra.mxu0 0.0
  %947 = vmatprep.subr.mxu0 0.0
  %948 = vmatpush2.msra.mxu0 0.0
  %949 = vmatprep.subr.mxu0 0.0
  %950 = vmatpush2.msra.mxu0 0.0
  %951 = vmatprep.subr.mxu0 0.0
  %952 = vmatpush2.msra.mxu0 0.0
  %953 = vmatprep.mubr.f32.mxu0 0.0
  %954 = vmatmul.mubr.f32.gmra.mxu0 %v833
  %v955 = vpop.f32.mrf.mxu0
  %v956 = vadd.f32 0.0, %v955
  %v957 = vpop.f32.mrf.mxu0
  %958 = vmatprep.mubr.f32.mxu0 0.0
  %959 = vmatmul.mubr.f32.gmra.mxu0 %v836
  %v960 = vpop.f32.mrf.mxu0
  %v961 = vadd.f32 0.0, %v960
  %v962 = vpop.f32.mrf.mxu0
  %963 = vmatprep.mubr.f32.mxu0 0.0
  %964 = vmatmul.mubr.f32.gmra.mxu0 %v839
  %v965 = vpop.f32.mrf.mxu0
  %v966 = vadd.f32 0.0, %v965
  %v967 = vpop.f32.mrf.mxu0
  %968 = vmatprep.mubr.f32.mxu0 0.0
  %969 = vmatmul.mubr.f32.gmra.mxu0 %v842
  %v970 = vpop.f32.mrf.mxu0
  %v971 = vadd.f32 0.0, %v970
  %v972 = vpop.f32.mrf.mxu0
  %973 = vmatprep.mubr.f32.mxu0 0.0
  %974 = vmatmul.mubr.f32.gmra.mxu0 %v845
  %v975 = vpop.f32.mrf.mxu0
  %v976 = vadd.f32 0.0, %v975
  %v977 = vpop.f32.mrf.mxu0
  %978 = vmatprep.mubr.f32.mxu0 0.0
  %979 = vmatmul.mubr.f32.gmra.mxu0 %v848
  %v980 = vpop.f32.mrf.mxu0
  %v981 = vadd.f32 0.0, %v980
  %v982 = vpop.f32.mrf.mxu0
  %983 = vmatprep.mubr.f32.mxu0 0.0
  %984 = vmatmul.mubr.f32.gmra.mxu0 %v851
  %v985 = vpop.f32.mrf.mxu0
  %v986 = vadd.f32 0.0, %v985
  %v987 = vpop.f32.mrf.mxu0
  %988 = vmatprep.mubr.f32.mxu0 0.0
  %989 = vmatmul.mubr.f32.gmra.mxu0 %v854
  %v990 = vpop.f32.mrf.mxu0
  %v991 = vadd.f32 0.0, %v990
  %v992 = vpop.f32.mrf.mxu0
  %993 = vmatprep.mubr.f32.mxu0 0.0
  %994 = vmatmul.mubr.f32.gmra.mxu0 %v857
  %v995 = vpop.f32.mrf.mxu0
  %v996 = vadd.f32 0.0, %v995
  %v997 = vpop.f32.mrf.mxu0
  %998 = vmatprep.mubr.f32.mxu0 0.0
  %999 = vmatmul.mubr.f32.gmra.mxu0 %v860
  %v1000 = vpop.f32.mrf.mxu0
  %v1001 = vadd.f32 0.0, %v1000
  %v1002 = vpop.f32.mrf.mxu0
  %1003 = vmatprep.mubr.f32.mxu0 0.0
  %1004 = vmatmul.mubr.f32.gmra.mxu0 %v863
  %v1005 = vpop.f32.mrf.mxu0
  %v1006 = vadd.f32 0.0, %v1005
  %v1007 = vpop.f32.mrf.mxu0
  %1008 = vmatprep.mubr.f32.mxu0 0.0
  %1009 = vmatmul.mubr.f32.gmra.mxu0 %v866
  %v1010 = vpop.f32.mrf.mxu0
  %v1011 = vadd.f32 0.0, %v1010
  %v1012 = vpop.f32.mrf.mxu0
  %1013 = vmatprep.mubr.f32.mxu0 0.0
  %1014 = vmatmul.mubr.f32.gmra.mxu0 %v869
  %v1015 = vpop.f32.mrf.mxu0
  %v1016 = vadd.f32 0.0, %v1015
  %v1017 = vpop.f32.mrf.mxu0
  %1018 = vmatprep.mubr.f32.mxu0 0.0
  %1019 = vmatmul.mubr.f32.gmra.mxu0 %v872
  %v1020 = vpop.f32.mrf.mxu0
  %v1021 = vadd.f32 0.0, %v1020
  %v1022 = vpop.f32.mrf.mxu0
  %1023 = vmatprep.mubr.f32.mxu0 0.0
  %1024 = vmatmul.mubr.f32.gmra.mxu0 %v875
  %v1025 = vpop.f32.mrf.mxu0
  %v1026 = vadd.f32 0.0, %v1025
  %v1027 = vpop.f32.mrf.mxu0
  %1028 = vmatprep.mubr.f32.mxu0 0.0
  %1029 = vmatmul.mubr.f32.gmra.mxu0 %v878
  %v1030 = vpop.f32.mrf.mxu0
  %v1031 = vadd.f32 0.0, %v1030
  %v1032 = vpop.f32.mrf.mxu0
  %1033 = vmatprep.mubr.f32.mxu0 0.0
  %1034 = vmatmul.mubr.f32.gmra.mxu0 %v881
  %v1035 = vpop.f32.mrf.mxu0
  %v1036 = vadd.f32 0.0, %v1035
  %v1037 = vpop.f32.mrf.mxu0
  %1038 = vmatprep.mubr.f32.mxu0 0.0
  %1039 = vmatmul.mubr.f32.gmra.mxu0 %v884
  %v1040 = vpop.f32.mrf.mxu0
  %v1041 = vadd.f32 0.0, %v1040
  %v1042 = vpop.f32.mrf.mxu0
  %1043 = vdwg.mxu0
  %v1044 = vadd.f32 %v632, %v956
  %v1045 = vadd.f32 %v637, %v961
  %v1046 = vadd.f32 %v642, %v966
  %v1047 = vadd.f32 %v647, %v971
  %v1048 = vadd.f32 %v652, %v976
  %v1049 = vadd.f32 %v657, %v981
  %v1050 = vadd.f32 %v662, %v986
  %v1051 = vadd.f32 %v667, %v991
  %v1052 = vadd.f32 %v672, %v996
  %v1053 = vadd.f32 %v677, %v1001
  %v1054 = vadd.f32 %v682, %v1006
  %v1055 = vadd.f32 %v687, %v1011
  %v1056 = vadd.f32 %v692, %v1016
  %v1057 = vadd.f32 %v697, %v1021
  %v1058 = vadd.f32 %v702, %v1026
  %v1059 = vadd.f32 %v707, %v1031
  %v1060 = vadd.f32 %v712, %v1036
  %v1061 = vadd.f32 %v717, %v1041
  %s1062 = scalar_lea.vmem %s2, 96
  %v1063 = vld [vmem:[%s1062] sm:$0xff]
  %v1064 = vld [vmem:[%s1062 + $0x8] sm:$0xff]
  %v1065 = vld [vmem:[%s1062 + $0x10] sm:$0xff]
  %v1066 = vld [vmem:[%s1062 + $0x18] sm:$0xf]
  %v1068 = vsel %vm77, %v1066, 0
  %1070 = vmatprep.subr.mxu0 0.0
  %1071 = vmatpush1.msra.mxu0 0.0
  %1072 = vmatprep.subr.mxu0 0.0
  %1073 = vmatpush1.msra.mxu0 0.0
  %1074 = vmatprep.subr.mxu0 0.0
  %1075 = vmatpush1.msra.mxu0 0.0
  %1076 = vmatprep.subr.mxu0 0.0
  %1077 = vmatpush1.msra.mxu0 0.0
  %1078 = vmatprep.subr.mxu0 0.0
  %1079 = vmatpush1.msra.mxu0 0.0
  %1080 = vmatprep.subr.mxu0 0.0
  %1081 = vmatpush1.msra.mxu0 0.0
  %1082 = vmatprep.subr.mxu0 0.0
  %1083 = vmatpush1.msra.mxu0 0.0
  %1084 = vmatprep.subr.mxu0 0.0
  %1085 = vmatpush1.msra.mxu0 0.0
  %1086 = vmatprep.subr.mxu0 0.0
  %1087 = vmatpush1.msra.mxu0 0.0
  %1088 = vmatprep.subr.mxu0 0.0
  %1089 = vmatpush1.msra.mxu0 0.0
  %1090 = vmatprep.subr.mxu0 0.0
  %1091 = vmatpush1.msra.mxu0 0.0
  %1092 = vmatprep.subr.mxu0 0.0
  %1093 = vmatpush1.msra.mxu0 0.0
  %1094 = vmatprep.subr.mxu0 0.0
  %1095 = vmatpush1.msra.mxu0 %v1068
  %1096 = vmatprep.subr.mxu0 0.0
  %1097 = vmatpush1.msra.mxu0 %v1065
  %1098 = vmatprep.subr.mxu0 0.0
  %1099 = vmatpush1.msra.mxu0 %v1064
  %1100 = vmatprep.subr.mxu0 0.0
  %1101 = vmatpush1.msra.mxu0 %v1063
  %1102 = vmatprep.subr.mxu0 0.0
  %1103 = vmatpush2.msra.mxu0 0.0
  %1104 = vmatprep.subr.mxu0 0.0
  %1105 = vmatpush2.msra.mxu0 0.0
  %1106 = vmatprep.subr.mxu0 0.0
  %1107 = vmatpush2.msra.mxu0 0.0
  %1108 = vmatprep.subr.mxu0 0.0
  %1109 = vmatpush2.msra.mxu0 0.0
  %1110 = vmatprep.subr.mxu0 0.0
  %1111 = vmatpush2.msra.mxu0 0.0
  %1112 = vmatprep.subr.mxu0 0.0
  %1113 = vmatpush2.msra.mxu0 0.0
  %1114 = vmatprep.subr.mxu0 0.0
  %1115 = vmatpush2.msra.mxu0 0.0
  %1116 = vmatprep.subr.mxu0 0.0
  %1117 = vmatpush2.msra.mxu0 0.0
  %1118 = vmatprep.subr.mxu0 0.0
  %1119 = vmatpush2.msra.mxu0 0.0
  %1120 = vmatprep.subr.mxu0 0.0
  %1121 = vmatpush2.msra.mxu0 0.0
  %1122 = vmatprep.subr.mxu0 0.0
  %1123 = vmatpush2.msra.mxu0 0.0
  %1124 = vmatprep.subr.mxu0 0.0
  %1125 = vmatpush2.msra.mxu0 0.0
  %1126 = vmatprep.subr.mxu0 0.0
  %1127 = vmatpush2.msra.mxu0 0.0
  %1128 = vmatprep.subr.mxu0 0.0
  %1129 = vmatpush2.msra.mxu0 0.0
  %1130 = vmatprep.subr.mxu0 0.0
  %1131 = vmatpush2.msra.mxu0 0.0
  %1132 = vmatprep.subr.mxu0 0.0
  %1133 = vmatpush2.msra.mxu0 0.0
  %1134 = vmatprep.mubr.f32.mxu0 0.0
  %1135 = vmatmul.mubr.f32.gmra.mxu0 %v66
  %v1136 = vpop.f32.mrf.mxu0
  %v1137 = vadd.f32 0.0, %v1136
  %v1138 = vpop.f32.mrf.mxu0
  %1139 = vmatprep.mubr.f32.mxu0 0.0
  %1140 = vmatmul.mubr.f32.gmra.mxu0 %v69
  %v1141 = vpop.f32.mrf.mxu0
  %v1142 = vadd.f32 0.0, %v1141
  %v1143 = vpop.f32.mrf.mxu0
  %1144 = vmatprep.mubr.f32.mxu0 0.0
  %1145 = vmatmul.mubr.f32.gmra.mxu0 %v72
  %v1146 = vpop.f32.mrf.mxu0
  %v1147 = vadd.f32 0.0, %v1146
  %v1148 = vpop.f32.mrf.mxu0
  %1149 = vmatprep.mubr.f32.mxu0 0.0
  %1150 = vmatmul.mubr.f32.gmra.mxu0 %v75
  %v1151 = vpop.f32.mrf.mxu0
  %v1152 = vadd.f32 0.0, %v1151
  %v1153 = vpop.f32.mrf.mxu0
  %1154 = vdwg.mxu0
  %s1155 = scalar_lea.vmem %s1, 432
  %v1156 = vld [vmem:[%s1155] sm:$0xff]
  %v1157 = vld [vmem:[%s1155 + $0x8] sm:$0xff]
  %v1158 = vld [vmem:[%s1155 + $0x10] sm:$0xff]
  %v1159 = vld [vmem:[%s1155 + $0x18] sm:$0xff]
  %v1160 = vld [vmem:[%s1155 + $0x20] sm:$0xff]
  %v1161 = vld [vmem:[%s1155 + $0x28] sm:$0xff]
  %v1162 = vld [vmem:[%s1155 + $0x30] sm:$0xff]
  %v1163 = vld [vmem:[%s1155 + $0x38] sm:$0xff]
  %v1164 = vld [vmem:[%s1155 + $0x40] sm:$0xff]
  %v1165 = vld [vmem:[%s1155 + $0x48] sm:$0xff]
  %v1166 = vld [vmem:[%s1155 + $0x50] sm:$0xff]
  %v1167 = vld [vmem:[%s1155 + $0x58] sm:$0xff]
  %v1168 = vld [vmem:[%s1155 + $0x60] sm:$0xff]
  %v1169 = vld [vmem:[%s1155 + $0x68] sm:$0xff]
  %v1170 = vld [vmem:[%s1155 + $0x70] sm:$0xff]
  %v1171 = vld [vmem:[%s1155 + $0x78] sm:$0xff]
  %v1172 = vld [vmem:[%s1155 + $0x80] sm:$0xff]
  %v1173 = vld [vmem:[%s1155 + $0x88] sm:$0xff]
  %v1175 = vsel %vm64, %v1156, 0
  %v1178 = vsel %vm64, %v1157, 0
  %v1181 = vsel %vm64, %v1158, 0
  %v1184 = vsel %vm64, %v1159, 0
  %v1187 = vsel %vm64, %v1160, 0
  %v1190 = vsel %vm64, %v1161, 0
  %v1193 = vsel %vm64, %v1162, 0
  %v1196 = vsel %vm64, %v1163, 0
  %v1199 = vsel %vm64, %v1164, 0
  %v1202 = vsel %vm64, %v1165, 0
  %v1205 = vsel %vm64, %v1166, 0
  %v1208 = vsel %vm64, %v1167, 0
  %v1211 = vsel %vm64, %v1168, 0
  %v1214 = vsel %vm64, %v1169, 0
  %v1217 = vsel %vm64, %v1170, 0
  %v1220 = vsel %vm64, %v1171, 0
  %v1223 = vsel %vm64, %v1172, 0
  %v1226 = vsel %vm64, %v1173, 0
  %v1229 = vsel %vm77, %v1152, 0
  %1231 = vmatprep.subr.mxu0 0.0
  %1232 = vmatpush1.msra.mxu0 0.0
  %1233 = vmatprep.subr.mxu0 0.0
  %1234 = vmatpush1.msra.mxu0 0.0
  %1235 = vmatprep.subr.mxu0 0.0
  %1236 = vmatpush1.msra.mxu0 0.0
  %1237 = vmatprep.subr.mxu0 0.0
  %1238 = vmatpush1.msra.mxu0 0.0
  %1239 = vmatprep.subr.mxu0 0.0
  %1240 = vmatpush1.msra.mxu0 0.0
  %1241 = vmatprep.subr.mxu0 0.0
  %1242 = vmatpush1.msra.mxu0 0.0
  %1243 = vmatprep.subr.mxu0 0.0
  %1244 = vmatpush1.msra.mxu0 0.0
  %1245 = vmatprep.subr.mxu0 0.0
  %1246 = vmatpush1.msra.mxu0 0.0
  %1247 = vmatprep.subr.mxu0 0.0
  %1248 = vmatpush1.msra.mxu0 0.0
  %1249 = vmatprep.subr.mxu0 0.0
  %1250 = vmatpush1.msra.mxu0 0.0
  %1251 = vmatprep.subr.mxu0 0.0
  %1252 = vmatpush1.msra.mxu0 0.0
  %1253 = vmatprep.subr.mxu0 0.0
  %1254 = vmatpush1.msra.mxu0 0.0
  %1255 = vmatprep.subr.mxu0 0.0
  %1256 = vmatpush1.msra.mxu0 %v1229
  %1257 = vmatprep.subr.mxu0 0.0
  %1258 = vmatpush1.msra.mxu0 %v1147
  %1259 = vmatprep.subr.mxu0 0.0
  %1260 = vmatpush1.msra.mxu0 %v1142
  %1261 = vmatprep.subr.mxu0 0.0
  %1262 = vmatpush1.msra.mxu0 %v1137
  %1263 = vmatprep.subr.mxu0 0.0
  %1264 = vmatpush2.msra.mxu0 0.0
  %1265 = vmatprep.subr.mxu0 0.0
  %1266 = vmatpush2.msra.mxu0 0.0
  %1267 = vmatprep.subr.mxu0 0.0
  %1268 = vmatpush2.msra.mxu0 0.0
  %1269 = vmatprep.subr.mxu0 0.0
  %1270 = vmatpush2.msra.mxu0 0.0
  %1271 = vmatprep.subr.mxu0 0.0
  %1272 = vmatpush2.msra.mxu0 0.0
  %1273 = vmatprep.subr.mxu0 0.0
  %1274 = vmatpush2.msra.mxu0 0.0
  %1275 = vmatprep.subr.mxu0 0.0
  %1276 = vmatpush2.msra.mxu0 0.0
  %1277 = vmatprep.subr.mxu0 0.0
  %1278 = vmatpush2.msra.mxu0 0.0
  %1279 = vmatprep.subr.mxu0 0.0
  %1280 = vmatpush2.msra.mxu0 0.0
  %1281 = vmatprep.subr.mxu0 0.0
  %1282 = vmatpush2.msra.mxu0 0.0
  %1283 = vmatprep.subr.mxu0 0.0
  %1284 = vmatpush2.msra.mxu0 0.0
  %1285 = vmatprep.subr.mxu0 0.0
  %1286 = vmatpush2.msra.mxu0 0.0
  %1287 = vmatprep.subr.mxu0 0.0
  %1288 = vmatpush2.msra.mxu0 0.0
  %1289 = vmatprep.subr.mxu0 0.0
  %1290 = vmatpush2.msra.mxu0 0.0
  %1291 = vmatprep.subr.mxu0 0.0
  %1292 = vmatpush2.msra.mxu0 0.0
  %1293 = vmatprep.subr.mxu0 0.0
  %1294 = vmatpush2.msra.mxu0 0.0
  %1295 = vmatprep.mubr.f32.mxu0 0.0
  %1296 = vmatmul.mubr.f32.gmra.mxu0 %v1175
  %v1297 = vpop.f32.mrf.mxu0
  %v1298 = vadd.f32 0.0, %v1297
  %v1299 = vpop.f32.mrf.mxu0
  %1300 = vmatprep.mubr.f32.mxu0 0.0
  %1301 = vmatmul.mubr.f32.gmra.mxu0 %v1178
  %v1302 = vpop.f32.mrf.mxu0
  %v1303 = vadd.f32 0.0, %v1302
  %v1304 = vpop.f32.mrf.mxu0
  %1305 = vmatprep.mubr.f32.mxu0 0.0
  %1306 = vmatmul.mubr.f32.gmra.mxu0 %v1181
  %v1307 = vpop.f32.mrf.mxu0
  %v1308 = vadd.f32 0.0, %v1307
  %v1309 = vpop.f32.mrf.mxu0
  %1310 = vmatprep.mubr.f32.mxu0 0.0
  %1311 = vmatmul.mubr.f32.gmra.mxu0 %v1184
  %v1312 = vpop.f32.mrf.mxu0
  %v1313 = vadd.f32 0.0, %v1312
  %v1314 = vpop.f32.mrf.mxu0
  %1315 = vmatprep.mubr.f32.mxu0 0.0
  %1316 = vmatmul.mubr.f32.gmra.mxu0 %v1187
  %v1317 = vpop.f32.mrf.mxu0
  %v1318 = vadd.f32 0.0, %v1317
  %v1319 = vpop.f32.mrf.mxu0
  %1320 = vmatprep.mubr.f32.mxu0 0.0
  %1321 = vmatmul.mubr.f32.gmra.mxu0 %v1190
  %v1322 = vpop.f32.mrf.mxu0
  %v1323 = vadd.f32 0.0, %v1322
  %v1324 = vpop.f32.mrf.mxu0
  %1325 = vmatprep.mubr.f32.mxu0 0.0
  %1326 = vmatmul.mubr.f32.gmra.mxu0 %v1193
  %v1327 = vpop.f32.mrf.mxu0
  %v1328 = vadd.f32 0.0, %v1327
  %v1329 = vpop.f32.mrf.mxu0
  %1330 = vmatprep.mubr.f32.mxu0 0.0
  %1331 = vmatmul.mubr.f32.gmra.mxu0 %v1196
  %v1332 = vpop.f32.mrf.mxu0
  %v1333 = vadd.f32 0.0, %v1332
  %v1334 = vpop.f32.mrf.mxu0
  %1335 = vmatprep.mubr.f32.mxu0 0.0
  %1336 = vmatmul.mubr.f32.gmra.mxu0 %v1199
  %v1337 = vpop.f32.mrf.mxu0
  %v1338 = vadd.f32 0.0, %v1337
  %v1339 = vpop.f32.mrf.mxu0
  %1340 = vmatprep.mubr.f32.mxu0 0.0
  %1341 = vmatmul.mubr.f32.gmra.mxu0 %v1202
  %v1342 = vpop.f32.mrf.mxu0
  %v1343 = vadd.f32 0.0, %v1342
  %v1344 = vpop.f32.mrf.mxu0
  %1345 = vmatprep.mubr.f32.mxu0 0.0
  %1346 = vmatmul.mubr.f32.gmra.mxu0 %v1205
  %v1347 = vpop.f32.mrf.mxu0
  %v1348 = vadd.f32 0.0, %v1347
  %v1349 = vpop.f32.mrf.mxu0
  %1350 = vmatprep.mubr.f32.mxu0 0.0
  %1351 = vmatmul.mubr.f32.gmra.mxu0 %v1208
  %v1352 = vpop.f32.mrf.mxu0
  %v1353 = vadd.f32 0.0, %v1352
  %v1354 = vpop.f32.mrf.mxu0
  %1355 = vmatprep.mubr.f32.mxu0 0.0
  %1356 = vmatmul.mubr.f32.gmra.mxu0 %v1211
  %v1357 = vpop.f32.mrf.mxu0
  %v1358 = vadd.f32 0.0, %v1357
  %v1359 = vpop.f32.mrf.mxu0
  %1360 = vmatprep.mubr.f32.mxu0 0.0
  %1361 = vmatmul.mubr.f32.gmra.mxu0 %v1214
  %v1362 = vpop.f32.mrf.mxu0
  %v1363 = vadd.f32 0.0, %v1362
  %v1364 = vpop.f32.mrf.mxu0
  %1365 = vmatprep.mubr.f32.mxu0 0.0
  %1366 = vmatmul.mubr.f32.gmra.mxu0 %v1217
  %v1367 = vpop.f32.mrf.mxu0
  %v1368 = vadd.f32 0.0, %v1367
  %v1369 = vpop.f32.mrf.mxu0
  %1370 = vmatprep.mubr.f32.mxu0 0.0
  %1371 = vmatmul.mubr.f32.gmra.mxu0 %v1220
  %v1372 = vpop.f32.mrf.mxu0
  %v1373 = vadd.f32 0.0, %v1372
  %v1374 = vpop.f32.mrf.mxu0
  %1375 = vmatprep.mubr.f32.mxu0 0.0
  %1376 = vmatmul.mubr.f32.gmra.mxu0 %v1223
  %v1377 = vpop.f32.mrf.mxu0
  %v1378 = vadd.f32 0.0, %v1377
  %v1379 = vpop.f32.mrf.mxu0
  %1380 = vmatprep.mubr.f32.mxu0 0.0
  %1381 = vmatmul.mubr.f32.gmra.mxu0 %v1226
  %v1382 = vpop.f32.mrf.mxu0
  %v1383 = vadd.f32 0.0, %v1382
  %v1384 = vpop.f32.mrf.mxu0
  %1385 = vdwg.mxu0
  %v1386 = vadd.f32 %v1044, %v1298
  %v1387 = vadd.f32 %v1045, %v1303
  %v1388 = vadd.f32 %v1046, %v1308
  %v1389 = vadd.f32 %v1047, %v1313
  %v1390 = vadd.f32 %v1048, %v1318
  %v1391 = vadd.f32 %v1049, %v1323
  %v1392 = vadd.f32 %v1050, %v1328
  %v1393 = vadd.f32 %v1051, %v1333
  %v1394 = vadd.f32 %v1052, %v1338
  %v1395 = vadd.f32 %v1053, %v1343
  %v1396 = vadd.f32 %v1054, %v1348
  %v1397 = vadd.f32 %v1055, %v1353
  %v1398 = vadd.f32 %v1056, %v1358
  %v1399 = vadd.f32 %v1057, %v1363
  %v1400 = vadd.f32 %v1058, %v1368
  %v1401 = vadd.f32 %v1059, %v1373
  %v1402 = vadd.f32 %v1060, %v1378
  %v1403 = vadd.f32 %v1061, %v1383
  %s1404 = scalar_lea.vmem %s2, 128
  %v1405 = vld [vmem:[%s1404] sm:$0xff]
  %v1406 = vld [vmem:[%s1404 + $0x8] sm:$0xff]
  %v1407 = vld [vmem:[%s1404 + $0x10] sm:$0xff]
  %v1408 = vld [vmem:[%s1404 + $0x18] sm:$0xf]
  %v1410 = vsel %vm77, %v1408, 0
  %1412 = vmatprep.subr.mxu0 0.0
  %1413 = vmatpush1.msra.mxu0 0.0
  %1414 = vmatprep.subr.mxu0 0.0
  %1415 = vmatpush1.msra.mxu0 0.0
  %1416 = vmatprep.subr.mxu0 0.0
  %1417 = vmatpush1.msra.mxu0 0.0
  %1418 = vmatprep.subr.mxu0 0.0
  %1419 = vmatpush1.msra.mxu0 0.0
  %1420 = vmatprep.subr.mxu0 0.0
  %1421 = vmatpush1.msra.mxu0 0.0
  %1422 = vmatprep.subr.mxu0 0.0
  %1423 = vmatpush1.msra.mxu0 0.0
  %1424 = vmatprep.subr.mxu0 0.0
  %1425 = vmatpush1.msra.mxu0 0.0
  %1426 = vmatprep.subr.mxu0 0.0
  %1427 = vmatpush1.msra.mxu0 0.0
  %1428 = vmatprep.subr.mxu0 0.0
  %1429 = vmatpush1.msra.mxu0 0.0
  %1430 = vmatprep.subr.mxu0 0.0
  %1431 = vmatpush1.msra.mxu0 0.0
  %1432 = vmatprep.subr.mxu0 0.0
  %1433 = vmatpush1.msra.mxu0 0.0
  %1434 = vmatprep.subr.mxu0 0.0
  %1435 = vmatpush1.msra.mxu0 0.0
  %1436 = vmatprep.subr.mxu0 0.0
  %1437 = vmatpush1.msra.mxu0 %v1410
  %1438 = vmatprep.subr.mxu0 0.0
  %1439 = vmatpush1.msra.mxu0 %v1407
  %1440 = vmatprep.subr.mxu0 0.0
  %1441 = vmatpush1.msra.mxu0 %v1406
  %1442 = vmatprep.subr.mxu0 0.0
  %1443 = vmatpush1.msra.mxu0 %v1405
  %1444 = vmatprep.subr.mxu0 0.0
  %1445 = vmatpush2.msra.mxu0 0.0
  %1446 = vmatprep.subr.mxu0 0.0
  %1447 = vmatpush2.msra.mxu0 0.0
  %1448 = vmatprep.subr.mxu0 0.0
  %1449 = vmatpush2.msra.mxu0 0.0
  %1450 = vmatprep.subr.mxu0 0.0
  %1451 = vmatpush2.msra.mxu0 0.0
  %1452 = vmatprep.subr.mxu0 0.0
  %1453 = vmatpush2.msra.mxu0 0.0
  %1454 = vmatprep.subr.mxu0 0.0
  %1455 = vmatpush2.msra.mxu0 0.0
  %1456 = vmatprep.subr.mxu0 0.0
  %1457 = vmatpush2.msra.mxu0 0.0
  %1458 = vmatprep.subr.mxu0 0.0
  %1459 = vmatpush2.msra.mxu0 0.0
  %1460 = vmatprep.subr.mxu0 0.0
  %1461 = vmatpush2.msra.mxu0 0.0
  %1462 = vmatprep.subr.mxu0 0.0
  %1463 = vmatpush2.msra.mxu0 0.0
  %1464 = vmatprep.subr.mxu0 0.0
  %1465 = vmatpush2.msra.mxu0 0.0
  %1466 = vmatprep.subr.mxu0 0.0
  %1467 = vmatpush2.msra.mxu0 0.0
  %1468 = vmatprep.subr.mxu0 0.0
  %1469 = vmatpush2.msra.mxu0 0.0
  %1470 = vmatprep.subr.mxu0 0.0
  %1471 = vmatpush2.msra.mxu0 0.0
  %1472 = vmatprep.subr.mxu0 0.0
  %1473 = vmatpush2.msra.mxu0 0.0
  %1474 = vmatprep.subr.mxu0 0.0
  %1475 = vmatpush2.msra.mxu0 0.0
  %1476 = vmatprep.mubr.f32.mxu0 0.0
  %1477 = vmatmul.mubr.f32.gmra.mxu0 %v66
  %v1478 = vpop.f32.mrf.mxu0
  %v1479 = vadd.f32 0.0, %v1478
  %v1480 = vpop.f32.mrf.mxu0
  %1481 = vmatprep.mubr.f32.mxu0 0.0
  %1482 = vmatmul.mubr.f32.gmra.mxu0 %v69
  %v1483 = vpop.f32.mrf.mxu0
  %v1484 = vadd.f32 0.0, %v1483
  %v1485 = vpop.f32.mrf.mxu0
  %1486 = vmatprep.mubr.f32.mxu0 0.0
  %1487 = vmatmul.mubr.f32.gmra.mxu0 %v72
  %v1488 = vpop.f32.mrf.mxu0
  %v1489 = vadd.f32 0.0, %v1488
  %v1490 = vpop.f32.mrf.mxu0
  %1491 = vmatprep.mubr.f32.mxu0 0.0
  %1492 = vmatmul.mubr.f32.gmra.mxu0 %v75
  %v1493 = vpop.f32.mrf.mxu0
  %v1494 = vadd.f32 0.0, %v1493
  %v1495 = vpop.f32.mrf.mxu0
  %1496 = vdwg.mxu0
  %s1497 = scalar_lea.vmem %s1, 576
  %v1498 = vld [vmem:[%s1497] sm:$0xff]
  %v1499 = vld [vmem:[%s1497 + $0x8] sm:$0xff]
  %v1500 = vld [vmem:[%s1497 + $0x10] sm:$0xff]
  %v1501 = vld [vmem:[%s1497 + $0x18] sm:$0xff]
  %v1502 = vld [vmem:[%s1497 + $0x20] sm:$0xff]
  %v1503 = vld [vmem:[%s1497 + $0x28] sm:$0xff]
  %v1504 = vld [vmem:[%s1497 + $0x30] sm:$0xff]
  %v1505 = vld [vmem:[%s1497 + $0x38] sm:$0xff]
  %v1506 = vld [vmem:[%s1497 + $0x40] sm:$0xff]
  %v1507 = vld [vmem:[%s1497 + $0x48] sm:$0xff]
  %v1508 = vld [vmem:[%s1497 + $0x50] sm:$0xff]
  %v1509 = vld [vmem:[%s1497 + $0x58] sm:$0xff]
  %v1510 = vld [vmem:[%s1497 + $0x60] sm:$0xff]
  %v1511 = vld [vmem:[%s1497 + $0x68] sm:$0xff]
  %v1512 = vld [vmem:[%s1497 + $0x70] sm:$0xff]
  %v1513 = vld [vmem:[%s1497 + $0x78] sm:$0xff]
  %v1514 = vld [vmem:[%s1497 + $0x80] sm:$0xff]
  %v1515 = vld [vmem:[%s1497 + $0x88] sm:$0xff]
  %v1517 = vsel %vm64, %v1498, 0
  %v1520 = vsel %vm64, %v1499, 0
  %v1523 = vsel %vm64, %v1500, 0
  %v1526 = vsel %vm64, %v1501, 0
  %v1529 = vsel %vm64, %v1502, 0
  %v1532 = vsel %vm64, %v1503, 0
  %v1535 = vsel %vm64, %v1504, 0
  %v1538 = vsel %vm64, %v1505, 0
  %v1541 = vsel %vm64, %v1506, 0
  %v1544 = vsel %vm64, %v1507, 0
  %v1547 = vsel %vm64, %v1508, 0
  %v1550 = vsel %vm64, %v1509, 0
  %v1553 = vsel %vm64, %v1510, 0
  %v1556 = vsel %vm64, %v1511, 0
  %v1559 = vsel %vm64, %v1512, 0
  %v1562 = vsel %vm64, %v1513, 0
  %v1565 = vsel %vm64, %v1514, 0
  %v1568 = vsel %vm64, %v1515, 0
  %v1571 = vsel %vm77, %v1494, 0
  %1573 = vmatprep.subr.mxu0 0.0
  %1574 = vmatpush1.msra.mxu0 0.0
  %1575 = vmatprep.subr.mxu0 0.0
  %1576 = vmatpush1.msra.mxu0 0.0
  %1577 = vmatprep.subr.mxu0 0.0
  %1578 = vmatpush1.msra.mxu0 0.0
  %1579 = vmatprep.subr.mxu0 0.0
  %1580 = vmatpush1.msra.mxu0 0.0
  %1581 = vmatprep.subr.mxu0 0.0
  %1582 = vmatpush1.msra.mxu0 0.0
  %1583 = vmatprep.subr.mxu0 0.0
  %1584 = vmatpush1.msra.mxu0 0.0
  %1585 = vmatprep.subr.mxu0 0.0
  %1586 = vmatpush1.msra.mxu0 0.0
  %1587 = vmatprep.subr.mxu0 0.0
  %1588 = vmatpush1.msra.mxu0 0.0
  %1589 = vmatprep.subr.mxu0 0.0
  %1590 = vmatpush1.msra.mxu0 0.0
  %1591 = vmatprep.subr.mxu0 0.0
  %1592 = vmatpush1.msra.mxu0 0.0
  %1593 = vmatprep.subr.mxu0 0.0
  %1594 = vmatpush1.msra.mxu0 0.0
  %1595 = vmatprep.subr.mxu0 0.0
  %1596 = vmatpush1.msra.mxu0 0.0
  %1597 = vmatprep.subr.mxu0 0.0
  %1598 = vmatpush1.msra.mxu0 %v1571
  %1599 = vmatprep.subr.mxu0 0.0
  %1600 = vmatpush1.msra.mxu0 %v1489
  %1601 = vmatprep.subr.mxu0 0.0
  %1602 = vmatpush1.msra.mxu0 %v1484
  %1603 = vmatprep.subr.mxu0 0.0
  %1604 = vmatpush1.msra.mxu0 %v1479
  %1605 = vmatprep.subr.mxu0 0.0
  %1606 = vmatpush2.msra.mxu0 0.0
  %1607 = vmatprep.subr.mxu0 0.0
  %1608 = vmatpush2.msra.mxu0 0.0
  %1609 = vmatprep.subr.mxu0 0.0
  %1610 = vmatpush2.msra.mxu0 0.0
  %1611 = vmatprep.subr.mxu0 0.0
  %1612 = vmatpush2.msra.mxu0 0.0
  %1613 = vmatprep.subr.mxu0 0.0
  %1614 = vmatpush2.msra.mxu0 0.0
  %1615 = vmatprep.subr.mxu0 0.0
  %1616 = vmatpush2.msra.mxu0 0.0
  %1617 = vmatprep.subr.mxu0 0.0
  %1618 = vmatpush2.msra.mxu0 0.0
  %1619 = vmatprep.subr.mxu0 0.0
  %1620 = vmatpush2.msra.mxu0 0.0
  %1621 = vmatprep.subr.mxu0 0.0
  %1622 = vmatpush2.msra.mxu0 0.0
  %1623 = vmatprep.subr.mxu0 0.0
  %1624 = vmatpush2.msra.mxu0 0.0
  %1625 = vmatprep.subr.mxu0 0.0
  %1626 = vmatpush2.msra.mxu0 0.0
  %1627 = vmatprep.subr.mxu0 0.0
  %1628 = vmatpush2.msra.mxu0 0.0
  %1629 = vmatprep.subr.mxu0 0.0
  %1630 = vmatpush2.msra.mxu0 0.0
  %1631 = vmatprep.subr.mxu0 0.0
  %1632 = vmatpush2.msra.mxu0 0.0
  %1633 = vmatprep.subr.mxu0 0.0
  %1634 = vmatpush2.msra.mxu0 0.0
  %1635 = vmatprep.subr.mxu0 0.0
  %1636 = vmatpush2.msra.mxu0 0.0
  %1637 = vmatprep.mubr.f32.mxu0 0.0
  %1638 = vmatmul.mubr.f32.gmra.mxu0 %v1517
  %v1639 = vpop.f32.mrf.mxu0
  %v1640 = vadd.f32 0.0, %v1639
  %v1641 = vpop.f32.mrf.mxu0
  %1642 = vmatprep.mubr.f32.mxu0 0.0
  %1643 = vmatmul.mubr.f32.gmra.mxu0 %v1520
  %v1644 = vpop.f32.mrf.mxu0
  %v1645 = vadd.f32 0.0, %v1644
  %v1646 = vpop.f32.mrf.mxu0
  %1647 = vmatprep.mubr.f32.mxu0 0.0
  %1648 = vmatmul.mubr.f32.gmra.mxu0 %v1523
  %v1649 = vpop.f32.mrf.mxu0
  %v1650 = vadd.f32 0.0, %v1649
  %v1651 = vpop.f32.mrf.mxu0
  %1652 = vmatprep.mubr.f32.mxu0 0.0
  %1653 = vmatmul.mubr.f32.gmra.mxu0 %v1526
  %v1654 = vpop.f32.mrf.mxu0
  %v1655 = vadd.f32 0.0, %v1654
  %v1656 = vpop.f32.mrf.mxu0
  %1657 = vmatprep.mubr.f32.mxu0 0.0
  %1658 = vmatmul.mubr.f32.gmra.mxu0 %v1529
  %v1659 = vpop.f32.mrf.mxu0
  %v1660 = vadd.f32 0.0, %v1659
  %v1661 = vpop.f32.mrf.mxu0
  %1662 = vmatprep.mubr.f32.mxu0 0.0
  %1663 = vmatmul.mubr.f32.gmra.mxu0 %v1532
  %v1664 = vpop.f32.mrf.mxu0
  %v1665 = vadd.f32 0.0, %v1664
  %v1666 = vpop.f32.mrf.mxu0
  %1667 = vmatprep.mubr.f32.mxu0 0.0
  %1668 = vmatmul.mubr.f32.gmra.mxu0 %v1535
  %v1669 = vpop.f32.mrf.mxu0
  %v1670 = vadd.f32 0.0, %v1669
  %v1671 = vpop.f32.mrf.mxu0
  %1672 = vmatprep.mubr.f32.mxu0 0.0
  %1673 = vmatmul.mubr.f32.gmra.mxu0 %v1538
  %v1674 = vpop.f32.mrf.mxu0
  %v1675 = vadd.f32 0.0, %v1674
  %v1676 = vpop.f32.mrf.mxu0
  %1677 = vmatprep.mubr.f32.mxu0 0.0
  %1678 = vmatmul.mubr.f32.gmra.mxu0 %v1541
  %v1679 = vpop.f32.mrf.mxu0
  %v1680 = vadd.f32 0.0, %v1679
  %v1681 = vpop.f32.mrf.mxu0
  %1682 = vmatprep.mubr.f32.mxu0 0.0
  %1683 = vmatmul.mubr.f32.gmra.mxu0 %v1544
  %v1684 = vpop.f32.mrf.mxu0
  %v1685 = vadd.f32 0.0, %v1684
  %v1686 = vpop.f32.mrf.mxu0
  %1687 = vmatprep.mubr.f32.mxu0 0.0
  %1688 = vmatmul.mubr.f32.gmra.mxu0 %v1547
  %v1689 = vpop.f32.mrf.mxu0
  %v1690 = vadd.f32 0.0, %v1689
  %v1691 = vpop.f32.mrf.mxu0
  %1692 = vmatprep.mubr.f32.mxu0 0.0
  %1693 = vmatmul.mubr.f32.gmra.mxu0 %v1550
  %v1694 = vpop.f32.mrf.mxu0
  %v1695 = vadd.f32 0.0, %v1694
  %v1696 = vpop.f32.mrf.mxu0
  %1697 = vmatprep.mubr.f32.mxu0 0.0
  %1698 = vmatmul.mubr.f32.gmra.mxu0 %v1553
  %v1699 = vpop.f32.mrf.mxu0
  %v1700 = vadd.f32 0.0, %v1699
  %v1701 = vpop.f32.mrf.mxu0
  %1702 = vmatprep.mubr.f32.mxu0 0.0
  %1703 = vmatmul.mubr.f32.gmra.mxu0 %v1556
  %v1704 = vpop.f32.mrf.mxu0
  %v1705 = vadd.f32 0.0, %v1704
  %v1706 = vpop.f32.mrf.mxu0
  %1707 = vmatprep.mubr.f32.mxu0 0.0
  %1708 = vmatmul.mubr.f32.gmra.mxu0 %v1559
  %v1709 = vpop.f32.mrf.mxu0
  %v1710 = vadd.f32 0.0, %v1709
  %v1711 = vpop.f32.mrf.mxu0
  %1712 = vmatprep.mubr.f32.mxu0 0.0
  %1713 = vmatmul.mubr.f32.gmra.mxu0 %v1562
  %v1714 = vpop.f32.mrf.mxu0
  %v1715 = vadd.f32 0.0, %v1714
  %v1716 = vpop.f32.mrf.mxu0
  %1717 = vmatprep.mubr.f32.mxu0 0.0
  %1718 = vmatmul.mubr.f32.gmra.mxu0 %v1565
  %v1719 = vpop.f32.mrf.mxu0
  %v1720 = vadd.f32 0.0, %v1719
  %v1721 = vpop.f32.mrf.mxu0
  %1722 = vmatprep.mubr.f32.mxu0 0.0
  %1723 = vmatmul.mubr.f32.gmra.mxu0 %v1568
  %v1724 = vpop.f32.mrf.mxu0
  %v1725 = vadd.f32 0.0, %v1724
  %v1726 = vpop.f32.mrf.mxu0
  %1727 = vdwg.mxu0
  %v1728 = vadd.f32 %v1386, %v1640
  %v1729 = vadd.f32 %v1387, %v1645
  %v1730 = vadd.f32 %v1388, %v1650
  %v1731 = vadd.f32 %v1389, %v1655
  %v1732 = vadd.f32 %v1390, %v1660
  %v1733 = vadd.f32 %v1391, %v1665
  %v1734 = vadd.f32 %v1392, %v1670
  %v1735 = vadd.f32 %v1393, %v1675
  %v1736 = vadd.f32 %v1394, %v1680
  %v1737 = vadd.f32 %v1395, %v1685
  %v1738 = vadd.f32 %v1396, %v1690
  %v1739 = vadd.f32 %v1397, %v1695
  %v1740 = vadd.f32 %v1398, %v1700
  %v1741 = vadd.f32 %v1399, %v1705
  %v1742 = vadd.f32 %v1400, %v1710
  %v1743 = vadd.f32 %v1401, %v1715
  %v1744 = vadd.f32 %v1402, %v1720
  %v1745 = vadd.f32 %v1403, %v1725
  %v1746 = vld [vmem:[%s3] sm:$0xff]
  %v1747 = vld [vmem:[%s3 + $0x8] sm:$0xff]
  %v1748 = vld [vmem:[%s3 + $0x10] sm:$0xff]
  %v1749 = vld [vmem:[%s3 + $0x18] sm:$0xff]
  %v1750 = vld [vmem:[%s3 + $0x20] sm:$0xff]
  %v1751 = vld [vmem:[%s3 + $0x28] sm:$0xff]
  %v1752 = vld [vmem:[%s3 + $0x30] sm:$0xff]
  %v1753 = vld [vmem:[%s3 + $0x38] sm:$0xff]
  %v1754 = vld [vmem:[%s3 + $0x40] sm:$0xff]
  %v1755 = vld [vmem:[%s3 + $0x48] sm:$0xff]
  %v1756 = vld [vmem:[%s3 + $0x50] sm:$0xff]
  %v1757 = vld [vmem:[%s3 + $0x58] sm:$0xff]
  %v1758 = vld [vmem:[%s3 + $0x60] sm:$0xff]
  %v1759 = vld [vmem:[%s3 + $0x68] sm:$0xff]
  %v1760 = vld [vmem:[%s3 + $0x70] sm:$0xff]
  %v1761 = vld [vmem:[%s3 + $0x78] sm:$0xff]
  %v1762 = vld [vmem:[%s3 + $0x80] sm:$0xff]
  %v1763 = vld [vmem:[%s3 + $0x88] sm:$0xff]
  %vm1764 = vcmask 130048
  %v1766 = vsel %vm1764, %v1747, 0
  %v1769 = vsel %vm1764, %v1749, 0
  %v1772 = vsel %vm1764, %v1751, 0
  %v1775 = vsel %vm1764, %v1753, 0
  %v1778 = vsel %vm1764, %v1755, 0
  %v1781 = vsel %vm1764, %v1757, 0
  %v1784 = vsel %vm1764, %v1759, 0
  %v1787 = vsel %vm1764, %v1761, 0
  %v1790 = vsel %vm1764, %v1763, 0
  %1792 = vmatprep.subr.mxu0 0.0
  %1793 = vmatpush1.msra.mxu0 %v1743
  %1794 = vmatprep.subr.mxu0 0.0
  %1795 = vmatpush1.msra.mxu0 %v1742
  %1796 = vmatprep.subr.mxu0 0.0
  %1797 = vmatpush1.msra.mxu0 %v1741
  %1798 = vmatprep.subr.mxu0 0.0
  %1799 = vmatpush1.msra.mxu0 %v1740
  %1800 = vmatprep.subr.mxu0 0.0
  %1801 = vmatpush1.msra.mxu0 %v1739
  %1802 = vmatprep.subr.mxu0 0.0
  %1803 = vmatpush1.msra.mxu0 %v1738
  %1804 = vmatprep.subr.mxu0 0.0
  %1805 = vmatpush1.msra.mxu0 %v1737
  %1806 = vmatprep.subr.mxu0 0.0
  %1807 = vmatpush1.msra.mxu0 %v1736
  %1808 = vmatprep.subr.mxu0 0.0
  %1809 = vmatpush1.msra.mxu0 %v1735
  %1810 = vmatprep.subr.mxu0 0.0
  %1811 = vmatpush1.msra.mxu0 %v1734
  %1812 = vmatprep.subr.mxu0 0.0
  %1813 = vmatpush1.msra.mxu0 %v1733
  %1814 = vmatprep.subr.mxu0 0.0
  %1815 = vmatpush1.msra.mxu0 %v1732
  %1816 = vmatprep.subr.mxu0 0.0
  %1817 = vmatpush1.msra.mxu0 %v1731
  %1818 = vmatprep.subr.mxu0 0.0
  %1819 = vmatpush1.msra.mxu0 %v1730
  %1820 = vmatprep.subr.mxu0 0.0
  %1821 = vmatpush1.msra.mxu0 %v1729
  %1822 = vmatprep.subr.mxu0 0.0
  %1823 = vmatpush1.msra.mxu0 %v1728
  %1824 = vmatprep.subr.mxu0 0.0
  %1825 = vmatpush2.msra.mxu0 0.0
  %1826 = vmatprep.subr.mxu0 0.0
  %1827 = vmatpush2.msra.mxu0 0.0
  %1828 = vmatprep.subr.mxu0 0.0
  %1829 = vmatpush2.msra.mxu0 0.0
  %1830 = vmatprep.subr.mxu0 0.0
  %1831 = vmatpush2.msra.mxu0 0.0
  %1832 = vmatprep.subr.mxu0 0.0
  %1833 = vmatpush2.msra.mxu0 0.0
  %1834 = vmatprep.subr.mxu0 0.0
  %1835 = vmatpush2.msra.mxu0 0.0
  %1836 = vmatprep.subr.mxu0 0.0
  %1837 = vmatpush2.msra.mxu0 0.0
  %1838 = vmatprep.subr.mxu0 0.0
  %1839 = vmatpush2.msra.mxu0 0.0
  %1840 = vmatprep.subr.mxu0 0.0
  %1841 = vmatpush2.msra.mxu0 0.0
  %1842 = vmatprep.subr.mxu0 0.0
  %1843 = vmatpush2.msra.mxu0 0.0
  %1844 = vmatprep.subr.mxu0 0.0
  %1845 = vmatpush2.msra.mxu0 0.0
  %1846 = vmatprep.subr.mxu0 0.0
  %1847 = vmatpush2.msra.mxu0 0.0
  %1848 = vmatprep.subr.mxu0 0.0
  %1849 = vmatpush2.msra.mxu0 0.0
  %1850 = vmatprep.subr.mxu0 0.0
  %1851 = vmatpush2.msra.mxu0 0.0
  %1852 = vmatprep.subr.mxu0 0.0
  %1853 = vmatpush2.msra.mxu0 %v1745
  %1854 = vmatprep.subr.mxu0 0.0
  %1855 = vmatpush2.msra.mxu0 %v1744
  %1856 = vmatprep.mubr.f32.mxu0 %v1766
  %1857 = vmatmul.mubr.f32.gmra.mxu0 %v1746
  %v1858 = vpop.f32.mrf.mxu0
  %v1859 = vadd.f32 0.0, %v1858
  %v1860 = vpop.f32.mrf.mxu0
  %1861 = vmatprep.mubr.f32.mxu0 %v1769
  %1862 = vmatmul.mubr.f32.gmra.mxu0 %v1748
  %v1863 = vpop.f32.mrf.mxu0
  %v1864 = vadd.f32 0.0, %v1863
  %v1865 = vpop.f32.mrf.mxu0
  %1866 = vmatprep.mubr.f32.mxu0 %v1772
  %1867 = vmatmul.mubr.f32.gmra.mxu0 %v1750
  %v1868 = vpop.f32.mrf.mxu0
  %v1869 = vadd.f32 0.0, %v1868
  %v1870 = vpop.f32.mrf.mxu0
  %1871 = vmatprep.mubr.f32.mxu0 %v1775
  %1872 = vmatmul.mubr.f32.gmra.mxu0 %v1752
  %v1873 = vpop.f32.mrf.mxu0
  %v1874 = vadd.f32 0.0, %v1873
  %v1875 = vpop.f32.mrf.mxu0
  %1876 = vmatprep.mubr.f32.mxu0 %v1778
  %1877 = vmatmul.mubr.f32.gmra.mxu0 %v1754
  %v1878 = vpop.f32.mrf.mxu0
  %v1879 = vadd.f32 0.0, %v1878
  %v1880 = vpop.f32.mrf.mxu0
  %1881 = vmatprep.mubr.f32.mxu0 %v1781
  %1882 = vmatmul.mubr.f32.gmra.mxu0 %v1756
  %v1883 = vpop.f32.mrf.mxu0
  %v1884 = vadd.f32 0.0, %v1883
  %v1885 = vpop.f32.mrf.mxu0
  %1886 = vmatprep.mubr.f32.mxu0 %v1784
  %1887 = vmatmul.mubr.f32.gmra.mxu0 %v1758
  %v1888 = vpop.f32.mrf.mxu0
  %v1889 = vadd.f32 0.0, %v1888
  %v1890 = vpop.f32.mrf.mxu0
  %1891 = vmatprep.mubr.f32.mxu0 %v1787
  %1892 = vmatmul.mubr.f32.gmra.mxu0 %v1760
  %v1893 = vpop.f32.mrf.mxu0
  %v1894 = vadd.f32 0.0, %v1893
  %v1895 = vpop.f32.mrf.mxu0
  %1896 = vmatprep.mubr.f32.mxu0 %v1790
  %1897 = vmatmul.mubr.f32.gmra.mxu0 %v1762
  %v1898 = vpop.f32.mrf.mxu0
  %v1899 = vadd.f32 0.0, %v1898
  %v1900 = vpop.f32.mrf.mxu0
  %1901 = vdwg.mxu0
  %s1902 = scalar_lea.vmem %s3, 144
  %v1903 = vld [vmem:[%s1902] sm:$0xff]
  %v1904 = vld [vmem:[%s1902 + $0x8] sm:$0xff]
  %v1905 = vld [vmem:[%s1902 + $0x10] sm:$0xff]
  %v1906 = vld [vmem:[%s1902 + $0x18] sm:$0xff]
  %v1907 = vld [vmem:[%s1902 + $0x20] sm:$0xff]
  %v1908 = vld [vmem:[%s1902 + $0x28] sm:$0xff]
  %v1909 = vld [vmem:[%s1902 + $0x30] sm:$0xff]
  %v1910 = vld [vmem:[%s1902 + $0x38] sm:$0xff]
  %v1911 = vld [vmem:[%s1902 + $0x40] sm:$0xff]
  %v1912 = vld [vmem:[%s1902 + $0x48] sm:$0xff]
  %v1913 = vld [vmem:[%s1902 + $0x50] sm:$0xff]
  %v1914 = vld [vmem:[%s1902 + $0x58] sm:$0xff]
  %v1915 = vld [vmem:[%s1902 + $0x60] sm:$0xff]
  %v1916 = vld [vmem:[%s1902 + $0x68] sm:$0xff]
  %v1917 = vld [vmem:[%s1902 + $0x70] sm:$0xff]
  %v1918 = vld [vmem:[%s1902 + $0x78] sm:$0xff]
  %v1919 = vld [vmem:[%s1902 + $0x80] sm:$0xff]
  %v1920 = vld [vmem:[%s1902 + $0x88] sm:$0xff]
  %v1922 = vsel %vm1764, %v1904, 0
  %v1925 = vsel %vm1764, %v1906, 0
  %v1928 = vsel %vm1764, %v1908, 0
  %v1931 = vsel %vm1764, %v1910, 0
  %v1934 = vsel %vm1764, %v1912, 0
  %v1937 = vsel %vm1764, %v1914, 0
  %v1940 = vsel %vm1764, %v1916, 0
  %v1943 = vsel %vm1764, %v1918, 0
  %v1946 = vsel %vm1764, %v1920, 0
  %1948 = vmatprep.subr.mxu0 0.0
  %1949 = vmatpush1.msra.mxu0 %v1743
  %1950 = vmatprep.subr.mxu0 0.0
  %1951 = vmatpush1.msra.mxu0 %v1742
  %1952 = vmatprep.subr.mxu0 0.0
  %1953 = vmatpush1.msra.mxu0 %v1741
  %1954 = vmatprep.subr.mxu0 0.0
  %1955 = vmatpush1.msra.mxu0 %v1740
  %1956 = vmatprep.subr.mxu0 0.0
  %1957 = vmatpush1.msra.mxu0 %v1739
  %1958 = vmatprep.subr.mxu0 0.0
  %1959 = vmatpush1.msra.mxu0 %v1738
  %1960 = vmatprep.subr.mxu0 0.0
  %1961 = vmatpush1.msra.mxu0 %v1737
  %1962 = vmatprep.subr.mxu0 0.0
  %1963 = vmatpush1.msra.mxu0 %v1736
  %1964 = vmatprep.subr.mxu0 0.0
  %1965 = vmatpush1.msra.mxu0 %v1735
  %1966 = vmatprep.subr.mxu0 0.0
  %1967 = vmatpush1.msra.mxu0 %v1734
  %1968 = vmatprep.subr.mxu0 0.0
  %1969 = vmatpush1.msra.mxu0 %v1733
  %1970 = vmatprep.subr.mxu0 0.0
  %1971 = vmatpush1.msra.mxu0 %v1732
  %1972 = vmatprep.subr.mxu0 0.0
  %1973 = vmatpush1.msra.mxu0 %v1731
  %1974 = vmatprep.subr.mxu0 0.0
  %1975 = vmatpush1.msra.mxu0 %v1730
  %1976 = vmatprep.subr.mxu0 0.0
  %1977 = vmatpush1.msra.mxu0 %v1729
  %1978 = vmatprep.subr.mxu0 0.0
  %1979 = vmatpush1.msra.mxu0 %v1728
  %1980 = vmatprep.subr.mxu0 0.0
  %1981 = vmatpush2.msra.mxu0 0.0
  %1982 = vmatprep.subr.mxu0 0.0
  %1983 = vmatpush2.msra.mxu0 0.0
  %1984 = vmatprep.subr.mxu0 0.0
  %1985 = vmatpush2.msra.mxu0 0.0
  %1986 = vmatprep.subr.mxu0 0.0
  %1987 = vmatpush2.msra.mxu0 0.0
  %1988 = vmatprep.subr.mxu0 0.0
  %1989 = vmatpush2.msra.mxu0 0.0
  %1990 = vmatprep.subr.mxu0 0.0
  %1991 = vmatpush2.msra.mxu0 0.0
  %1992 = vmatprep.subr.mxu0 0.0
  %1993 = vmatpush2.msra.mxu0 0.0
  %1994 = vmatprep.subr.mxu0 0.0
  %1995 = vmatpush2.msra.mxu0 0.0
  %1996 = vmatprep.subr.mxu0 0.0
  %1997 = vmatpush2.msra.mxu0 0.0
  %1998 = vmatprep.subr.mxu0 0.0
  %1999 = vmatpush2.msra.mxu0 0.0
  %2000 = vmatprep.subr.mxu0 0.0
  %2001 = vmatpush2.msra.mxu0 0.0
  %2002 = vmatprep.subr.mxu0 0.0
  %2003 = vmatpush2.msra.mxu0 0.0
  %2004 = vmatprep.subr.mxu0 0.0
  %2005 = vmatpush2.msra.mxu0 0.0
  %2006 = vmatprep.subr.mxu0 0.0
  %2007 = vmatpush2.msra.mxu0 0.0
  %2008 = vmatprep.subr.mxu0 0.0
  %2009 = vmatpush2.msra.mxu0 %v1745
  %2010 = vmatprep.subr.mxu0 0.0
  %2011 = vmatpush2.msra.mxu0 %v1744
  %2012 = vmatprep.mubr.f32.mxu0 %v1922
  %2013 = vmatmul.mubr.f32.gmra.mxu0 %v1903
  %v2014 = vpop.f32.mrf.mxu0
  %v2015 = vadd.f32 0.0, %v2014
  %v2016 = vpop.f32.mrf.mxu0
  %2017 = vmatprep.mubr.f32.mxu0 %v1925
  %2018 = vmatmul.mubr.f32.gmra.mxu0 %v1905
  %v2019 = vpop.f32.mrf.mxu0
  %v2020 = vadd.f32 0.0, %v2019
  %v2021 = vpop.f32.mrf.mxu0
  %2022 = vmatprep.mubr.f32.mxu0 %v1928
  %2023 = vmatmul.mubr.f32.gmra.mxu0 %v1907
  %v2024 = vpop.f32.mrf.mxu0
  %v2025 = vadd.f32 0.0, %v2024
  %v2026 = vpop.f32.mrf.mxu0
  %2027 = vmatprep.mubr.f32.mxu0 %v1931
  %2028 = vmatmul.mubr.f32.gmra.mxu0 %v1909
  %v2029 = vpop.f32.mrf.mxu0
  %v2030 = vadd.f32 0.0, %v2029
  %v2031 = vpop.f32.mrf.mxu0
  %2032 = vmatprep.mubr.f32.mxu0 %v1934
  %2033 = vmatmul.mubr.f32.gmra.mxu0 %v1911
  %v2034 = vpop.f32.mrf.mxu0
  %v2035 = vadd.f32 0.0, %v2034
  %v2036 = vpop.f32.mrf.mxu0
  %2037 = vmatprep.mubr.f32.mxu0 %v1937
  %2038 = vmatmul.mubr.f32.gmra.mxu0 %v1913
  %v2039 = vpop.f32.mrf.mxu0
  %v2040 = vadd.f32 0.0, %v2039
  %v2041 = vpop.f32.mrf.mxu0
  %2042 = vmatprep.mubr.f32.mxu0 %v1940
  %2043 = vmatmul.mubr.f32.gmra.mxu0 %v1915
  %v2044 = vpop.f32.mrf.mxu0
  %v2045 = vadd.f32 0.0, %v2044
  %v2046 = vpop.f32.mrf.mxu0
  %2047 = vmatprep.mubr.f32.mxu0 %v1943
  %2048 = vmatmul.mubr.f32.gmra.mxu0 %v1917
  %v2049 = vpop.f32.mrf.mxu0
  %v2050 = vadd.f32 0.0, %v2049
  %v2051 = vpop.f32.mrf.mxu0
  %2052 = vmatprep.mubr.f32.mxu0 %v1946
  %2053 = vmatmul.mubr.f32.gmra.mxu0 %v1919
  %v2054 = vpop.f32.mrf.mxu0
  %v2055 = vadd.f32 0.0, %v2054
  %v2056 = vpop.f32.mrf.mxu0
  %2057 = vdwg.mxu0
  %v2058 = vld [vmem:[%s4] sm:$0xff]
  %v2059 = vld [vmem:[%s4 + $0x8] sm:$0xff]
  %v2060 = vld [vmem:[%s4 + $0x10] sm:$0xff]
  %vm2061 = vcmask 195584
  %v2063 = vsel %vm2061, %v1859, 0
  %v2066 = vsel %vm2061, %v1864, 0
  %v2069 = vsel %vm2061, %v1869, 0
  %v2072 = vsel %vm2061, %v1874, 0
  %v2075 = vsel %vm2061, %v1879, 0
  %v2078 = vsel %vm2061, %v1884, 0
  %v2081 = vsel %vm2061, %v1889, 0
  %v2084 = vsel %vm2061, %v1894, 0
  %v2087 = vsel %vm2061, %v1899, 0
  %2089 = vmatprep.subr.mxu0 0.0
  %2090 = vmatpush1.msra.mxu0 0.0
  %2091 = vmatprep.subr.mxu0 0.0
  %2092 = vmatpush1.msra.mxu0 0.0
  %2093 = vmatprep.subr.mxu0 0.0
  %2094 = vmatpush1.msra.mxu0 0.0
  %2095 = vmatprep.subr.mxu0 0.0
  %2096 = vmatpush1.msra.mxu0 0.0
  %2097 = vmatprep.subr.mxu0 0.0
  %2098 = vmatpush1.msra.mxu0 0.0
  %2099 = vmatprep.subr.mxu0 0.0
  %2100 = vmatpush1.msra.mxu0 0.0
  %2101 = vmatprep.subr.mxu0 0.0
  %2102 = vmatpush1.msra.mxu0 0.0
  %2103 = vmatprep.subr.mxu0 0.0
  %2104 = vmatpush1.msra.mxu0 0.0
  %2105 = vmatprep.subr.mxu0 0.0
  %2106 = vmatpush1.msra.mxu0 0.0
  %2107 = vmatprep.subr.mxu0 0.0
  %2108 = vmatpush1.msra.mxu0 0.0
  %2109 = vmatprep.subr.mxu0 0.0
  %2110 = vmatpush1.msra.mxu0 0.0
  %2111 = vmatprep.subr.mxu0 0.0
  %2112 = vmatpush1.msra.mxu0 0.0
  %2113 = vmatprep.subr.mxu0 0.0
  %2114 = vmatpush1.msra.mxu0 0.0
  %2115 = vmatprep.subr.mxu0 0.0
  %2116 = vmatpush1.msra.mxu0 %v2060
  %2117 = vmatprep.subr.mxu0 0.0
  %2118 = vmatpush1.msra.mxu0 %v2059
  %2119 = vmatprep.subr.mxu0 0.0
  %2120 = vmatpush1.msra.mxu0 %v2058
  %2121 = vmatprep.subr.mxu0 0.0
  %2122 = vmatpush2.msra.mxu0 0.0
  %2123 = vmatprep.subr.mxu0 0.0
  %2124 = vmatpush2.msra.mxu0 0.0
  %2125 = vmatprep.subr.mxu0 0.0
  %2126 = vmatpush2.msra.mxu0 0.0
  %2127 = vmatprep.subr.mxu0 0.0
  %2128 = vmatpush2.msra.mxu0 0.0
  %2129 = vmatprep.subr.mxu0 0.0
  %2130 = vmatpush2.msra.mxu0 0.0
  %2131 = vmatprep.subr.mxu0 0.0
  %2132 = vmatpush2.msra.mxu0 0.0
  %2133 = vmatprep.subr.mxu0 0.0
  %2134 = vmatpush2.msra.mxu0 0.0
  %2135 = vmatprep.subr.mxu0 0.0
  %2136 = vmatpush2.msra.mxu0 0.0
  %2137 = vmatprep.subr.mxu0 0.0
  %2138 = vmatpush2.msra.mxu0 0.0
  %2139 = vmatprep.subr.mxu0 0.0
  %2140 = vmatpush2.msra.mxu0 0.0
  %2141 = vmatprep.subr.mxu0 0.0
  %2142 = vmatpush2.msra.mxu0 0.0
  %2143 = vmatprep.subr.mxu0 0.0
  %2144 = vmatpush2.msra.mxu0 0.0
  %2145 = vmatprep.subr.mxu0 0.0
  %2146 = vmatpush2.msra.mxu0 0.0
  %2147 = vmatprep.subr.mxu0 0.0
  %2148 = vmatpush2.msra.mxu0 0.0
  %2149 = vmatprep.subr.mxu0 0.0
  %2150 = vmatpush2.msra.mxu0 0.0
  %2151 = vmatprep.subr.mxu0 0.0
  %2152 = vmatpush2.msra.mxu0 0.0
  %2153 = vmatprep.mubr.f32.mxu0 0.0
  %2154 = vmatmul.mubr.f32.gmra.mxu0 %v2063
  %v2155 = vpop.f32.mrf.mxu0
  %v2156 = vadd.f32 0.0, %v2155
  %v2157 = vpop.f32.mrf.mxu0
  %2158 = vmatprep.mubr.f32.mxu0 0.0
  %2159 = vmatmul.mubr.f32.gmra.mxu0 %v2066
  %v2160 = vpop.f32.mrf.mxu0
  %v2161 = vadd.f32 0.0, %v2160
  %v2162 = vpop.f32.mrf.mxu0
  %2163 = vmatprep.mubr.f32.mxu0 0.0
  %2164 = vmatmul.mubr.f32.gmra.mxu0 %v2069
  %v2165 = vpop.f32.mrf.mxu0
  %v2166 = vadd.f32 0.0, %v2165
  %v2167 = vpop.f32.mrf.mxu0
  %2168 = vmatprep.mubr.f32.mxu0 0.0
  %2169 = vmatmul.mubr.f32.gmra.mxu0 %v2072
  %v2170 = vpop.f32.mrf.mxu0
  %v2171 = vadd.f32 0.0, %v2170
  %v2172 = vpop.f32.mrf.mxu0
  %2173 = vmatprep.mubr.f32.mxu0 0.0
  %2174 = vmatmul.mubr.f32.gmra.mxu0 %v2075
  %v2175 = vpop.f32.mrf.mxu0
  %v2176 = vadd.f32 0.0, %v2175
  %v2177 = vpop.f32.mrf.mxu0
  %2178 = vmatprep.mubr.f32.mxu0 0.0
  %2179 = vmatmul.mubr.f32.gmra.mxu0 %v2078
  %v2180 = vpop.f32.mrf.mxu0
  %v2181 = vadd.f32 0.0, %v2180
  %v2182 = vpop.f32.mrf.mxu0
  %2183 = vmatprep.mubr.f32.mxu0 0.0
  %2184 = vmatmul.mubr.f32.gmra.mxu0 %v2081
  %v2185 = vpop.f32.mrf.mxu0
  %v2186 = vadd.f32 0.0, %v2185
  %v2187 = vpop.f32.mrf.mxu0
  %2188 = vmatprep.mubr.f32.mxu0 0.0
  %2189 = vmatmul.mubr.f32.gmra.mxu0 %v2084
  %v2190 = vpop.f32.mrf.mxu0
  %v2191 = vadd.f32 0.0, %v2190
  %v2192 = vpop.f32.mrf.mxu0
  %2193 = vmatprep.mubr.f32.mxu0 0.0
  %2194 = vmatmul.mubr.f32.gmra.mxu0 %v2087
  %v2195 = vpop.f32.mrf.mxu0
  %v2196 = vadd.f32 0.0, %v2195
  %v2197 = vpop.f32.mrf.mxu0
  %2198 = vdwg.mxu0
  %s2199 = scalar_lea.vmem %s4, 24
  %v2200 = vld [vmem:[%s2199] sm:$0xff]
  %v2201 = vld [vmem:[%s2199 + $0x8] sm:$0xff]
  %v2202 = vld [vmem:[%s2199 + $0x10] sm:$0xff]
  %2203 = vmatprep.subr.mxu0 0.0
  %2204 = vmatpush1.msra.mxu0 0.0
  %2205 = vmatprep.subr.mxu0 0.0
  %2206 = vmatpush1.msra.mxu0 0.0
  %2207 = vmatprep.subr.mxu0 0.0
  %2208 = vmatpush1.msra.mxu0 0.0
  %2209 = vmatprep.subr.mxu0 0.0
  %2210 = vmatpush1.msra.mxu0 0.0
  %2211 = vmatprep.subr.mxu0 0.0
  %2212 = vmatpush1.msra.mxu0 0.0
  %2213 = vmatprep.subr.mxu0 0.0
  %2214 = vmatpush1.msra.mxu0 0.0
  %2215 = vmatprep.subr.mxu0 0.0
  %2216 = vmatpush1.msra.mxu0 0.0
  %2217 = vmatprep.subr.mxu0 0.0
  %2218 = vmatpush1.msra.mxu0 0.0
  %2219 = vmatprep.subr.mxu0 0.0
  %2220 = vmatpush1.msra.mxu0 0.0
  %2221 = vmatprep.subr.mxu0 0.0
  %2222 = vmatpush1.msra.mxu0 0.0
  %2223 = vmatprep.subr.mxu0 0.0
  %2224 = vmatpush1.msra.mxu0 0.0
  %2225 = vmatprep.subr.mxu0 0.0
  %2226 = vmatpush1.msra.mxu0 0.0
  %2227 = vmatprep.subr.mxu0 0.0
  %2228 = vmatpush1.msra.mxu0 0.0
  %2229 = vmatprep.subr.mxu0 0.0
  %2230 = vmatpush1.msra.mxu0 %v2202
  %2231 = vmatprep.subr.mxu0 0.0
  %2232 = vmatpush1.msra.mxu0 %v2201
  %2233 = vmatprep.subr.mxu0 0.0
  %2234 = vmatpush1.msra.mxu0 %v2200
  %2235 = vmatprep.subr.mxu0 0.0
  %2236 = vmatpush2.msra.mxu0 0.0
  %2237 = vmatprep.subr.mxu0 0.0
  %2238 = vmatpush2.msra.mxu0 0.0
  %2239 = vmatprep.subr.mxu0 0.0
  %2240 = vmatpush2.msra.mxu0 0.0
  %2241 = vmatprep.subr.mxu0 0.0
  %2242 = vmatpush2.msra.mxu0 0.0
  %2243 = vmatprep.subr.mxu0 0.0
  %2244 = vmatpush2.msra.mxu0 0.0
  %2245 = vmatprep.subr.mxu0 0.0
  %2246 = vmatpush2.msra.mxu0 0.0
  %2247 = vmatprep.subr.mxu0 0.0
  %2248 = vmatpush2.msra.mxu0 0.0
  %2249 = vmatprep.subr.mxu0 0.0
  %2250 = vmatpush2.msra.mxu0 0.0
  %2251 = vmatprep.subr.mxu0 0.0
  %2252 = vmatpush2.msra.mxu0 0.0
  %2253 = vmatprep.subr.mxu0 0.0
  %2254 = vmatpush2.msra.mxu0 0.0
  %2255 = vmatprep.subr.mxu0 0.0
  %2256 = vmatpush2.msra.mxu0 0.0
  %2257 = vmatprep.subr.mxu0 0.0
  %2258 = vmatpush2.msra.mxu0 0.0
  %2259 = vmatprep.subr.mxu0 0.0
  %2260 = vmatpush2.msra.mxu0 0.0
  %2261 = vmatprep.subr.mxu0 0.0
  %2262 = vmatpush2.msra.mxu0 0.0
  %2263 = vmatprep.subr.mxu0 0.0
  %2264 = vmatpush2.msra.mxu0 0.0
  %2265 = vmatprep.subr.mxu0 0.0
  %2266 = vmatpush2.msra.mxu0 0.0
  %2267 = vmatprep.mubr.f32.mxu0 0.0
  %2268 = vmatmul.mubr.f32.gmra.mxu0 %v2063
  %v2269 = vpop.f32.mrf.mxu0
  %v2270 = vadd.f32 0.0, %v2269
  %v2271 = vpop.f32.mrf.mxu0
  %2272 = vmatprep.mubr.f32.mxu0 0.0
  %2273 = vmatmul.mubr.f32.gmra.mxu0 %v2066
  %v2274 = vpop.f32.mrf.mxu0
  %v2275 = vadd.f32 0.0, %v2274
  %v2276 = vpop.f32.mrf.mxu0
  %2277 = vmatprep.mubr.f32.mxu0 0.0
  %2278 = vmatmul.mubr.f32.gmra.mxu0 %v2069
  %v2279 = vpop.f32.mrf.mxu0
  %v2280 = vadd.f32 0.0, %v2279
  %v2281 = vpop.f32.mrf.mxu0
  %2282 = vmatprep.mubr.f32.mxu0 0.0
  %2283 = vmatmul.mubr.f32.gmra.mxu0 %v2072
  %v2284 = vpop.f32.mrf.mxu0
  %v2285 = vadd.f32 0.0, %v2284
  %v2286 = vpop.f32.mrf.mxu0
  %2287 = vmatprep.mubr.f32.mxu0 0.0
  %2288 = vmatmul.mubr.f32.gmra.mxu0 %v2075
  %v2289 = vpop.f32.mrf.mxu0
  %v2290 = vadd.f32 0.0, %v2289
  %v2291 = vpop.f32.mrf.mxu0
  %2292 = vmatprep.mubr.f32.mxu0 0.0
  %2293 = vmatmul.mubr.f32.gmra.mxu0 %v2078
  %v2294 = vpop.f32.mrf.mxu0
  %v2295 = vadd.f32 0.0, %v2294
  %v2296 = vpop.f32.mrf.mxu0
  %2297 = vmatprep.mubr.f32.mxu0 0.0
  %2298 = vmatmul.mubr.f32.gmra.mxu0 %v2081
  %v2299 = vpop.f32.mrf.mxu0
  %v2300 = vadd.f32 0.0, %v2299
  %v2301 = vpop.f32.mrf.mxu0
  %2302 = vmatprep.mubr.f32.mxu0 0.0
  %2303 = vmatmul.mubr.f32.gmra.mxu0 %v2084
  %v2304 = vpop.f32.mrf.mxu0
  %v2305 = vadd.f32 0.0, %v2304
  %v2306 = vpop.f32.mrf.mxu0
  %2307 = vmatprep.mubr.f32.mxu0 0.0
  %2308 = vmatmul.mubr.f32.gmra.mxu0 %v2087
  %v2309 = vpop.f32.mrf.mxu0
  %v2310 = vadd.f32 0.0, %v2309
  %v2311 = vpop.f32.mrf.mxu0
  %2312 = vdwg.mxu0
  %v2314 = vsel %vm2061, %v2015, 0
  %v2317 = vsel %vm2061, %v2020, 0
  %v2320 = vsel %vm2061, %v2025, 0
  %v2323 = vsel %vm2061, %v2030, 0
  %v2326 = vsel %vm2061, %v2035, 0
  %v2329 = vsel %vm2061, %v2040, 0
  %v2332 = vsel %vm2061, %v2045, 0
  %v2335 = vsel %vm2061, %v2050, 0
  %v2338 = vsel %vm2061, %v2055, 0
  %2340 = vmatprep.subr.mxu0 0.0
  %2341 = vmatpush1.msra.mxu0 0.0
  %2342 = vmatprep.subr.mxu0 0.0
  %2343 = vmatpush1.msra.mxu0 0.0
  %2344 = vmatprep.subr.mxu0 0.0
  %2345 = vmatpush1.msra.mxu0 0.0
  %2346 = vmatprep.subr.mxu0 0.0
  %2347 = vmatpush1.msra.mxu0 0.0
  %2348 = vmatprep.subr.mxu0 0.0
  %2349 = vmatpush1.msra.mxu0 0.0
  %2350 = vmatprep.subr.mxu0 0.0
  %2351 = vmatpush1.msra.mxu0 0.0
  %2352 = vmatprep.subr.mxu0 0.0
  %2353 = vmatpush1.msra.mxu0 0.0
  %2354 = vmatprep.subr.mxu0 0.0
  %2355 = vmatpush1.msra.mxu0 0.0
  %2356 = vmatprep.subr.mxu0 0.0
  %2357 = vmatpush1.msra.mxu0 0.0
  %2358 = vmatprep.subr.mxu0 0.0
  %2359 = vmatpush1.msra.mxu0 0.0
  %2360 = vmatprep.subr.mxu0 0.0
  %2361 = vmatpush1.msra.mxu0 0.0
  %2362 = vmatprep.subr.mxu0 0.0
  %2363 = vmatpush1.msra.mxu0 0.0
  %2364 = vmatprep.subr.mxu0 0.0
  %2365 = vmatpush1.msra.mxu0 0.0
  %2366 = vmatprep.subr.mxu0 0.0
  %2367 = vmatpush1.msra.mxu0 %v2060
  %2368 = vmatprep.subr.mxu0 0.0
  %2369 = vmatpush1.msra.mxu0 %v2059
  %2370 = vmatprep.subr.mxu0 0.0
  %2371 = vmatpush1.msra.mxu0 %v2058
  %2372 = vmatprep.subr.mxu0 0.0
  %2373 = vmatpush2.msra.mxu0 0.0
  %2374 = vmatprep.subr.mxu0 0.0
  %2375 = vmatpush2.msra.mxu0 0.0
  %2376 = vmatprep.subr.mxu0 0.0
  %2377 = vmatpush2.msra.mxu0 0.0
  %2378 = vmatprep.subr.mxu0 0.0
  %2379 = vmatpush2.msra.mxu0 0.0
  %2380 = vmatprep.subr.mxu0 0.0
  %2381 = vmatpush2.msra.mxu0 0.0
  %2382 = vmatprep.subr.mxu0 0.0
  %2383 = vmatpush2.msra.mxu0 0.0
  %2384 = vmatprep.subr.mxu0 0.0
  %2385 = vmatpush2.msra.mxu0 0.0
  %2386 = vmatprep.subr.mxu0 0.0
  %2387 = vmatpush2.msra.mxu0 0.0
  %2388 = vmatprep.subr.mxu0 0.0
  %2389 = vmatpush2.msra.mxu0 0.0
  %2390 = vmatprep.subr.mxu0 0.0
  %2391 = vmatpush2.msra.mxu0 0.0
  %2392 = vmatprep.subr.mxu0 0.0
  %2393 = vmatpush2.msra.mxu0 0.0
  %2394 = vmatprep.subr.mxu0 0.0
  %2395 = vmatpush2.msra.mxu0 0.0
  %2396 = vmatprep.subr.mxu0 0.0
  %2397 = vmatpush2.msra.mxu0 0.0
  %2398 = vmatprep.subr.mxu0 0.0
  %2399 = vmatpush2.msra.mxu0 0.0
  %2400 = vmatprep.subr.mxu0 0.0
  %2401 = vmatpush2.msra.mxu0 0.0
  %2402 = vmatprep.subr.mxu0 0.0
  %2403 = vmatpush2.msra.mxu0 0.0
  %2404 = vmatprep.mubr.f32.mxu0 0.0
  %2405 = vmatmul.mubr.f32.gmra.mxu0 %v2314
  %v2406 = vpop.f32.mrf.mxu0
  %v2407 = vadd.f32 0.0, %v2406
  %v2408 = vpop.f32.mrf.mxu0
  %2409 = vmatprep.mubr.f32.mxu0 0.0
  %2410 = vmatmul.mubr.f32.gmra.mxu0 %v2317
  %v2411 = vpop.f32.mrf.mxu0
  %v2412 = vadd.f32 0.0, %v2411
  %v2413 = vpop.f32.mrf.mxu0
  %2414 = vmatprep.mubr.f32.mxu0 0.0
  %2415 = vmatmul.mubr.f32.gmra.mxu0 %v2320
  %v2416 = vpop.f32.mrf.mxu0
  %v2417 = vadd.f32 0.0, %v2416
  %v2418 = vpop.f32.mrf.mxu0
  %2419 = vmatprep.mubr.f32.mxu0 0.0
  %2420 = vmatmul.mubr.f32.gmra.mxu0 %v2323
  %v2421 = vpop.f32.mrf.mxu0
  %v2422 = vadd.f32 0.0, %v2421
  %v2423 = vpop.f32.mrf.mxu0
  %2424 = vmatprep.mubr.f32.mxu0 0.0
  %2425 = vmatmul.mubr.f32.gmra.mxu0 %v2326
  %v2426 = vpop.f32.mrf.mxu0
  %v2427 = vadd.f32 0.0, %v2426
  %v2428 = vpop.f32.mrf.mxu0
  %2429 = vmatprep.mubr.f32.mxu0 0.0
  %2430 = vmatmul.mubr.f32.gmra.mxu0 %v2329
  %v2431 = vpop.f32.mrf.mxu0
  %v2432 = vadd.f32 0.0, %v2431
  %v2433 = vpop.f32.mrf.mxu0
  %2434 = vmatprep.mubr.f32.mxu0 0.0
  %2435 = vmatmul.mubr.f32.gmra.mxu0 %v2332
  %v2436 = vpop.f32.mrf.mxu0
  %v2437 = vadd.f32 0.0, %v2436
  %v2438 = vpop.f32.mrf.mxu0
  %2439 = vmatprep.mubr.f32.mxu0 0.0
  %2440 = vmatmul.mubr.f32.gmra.mxu0 %v2335
  %v2441 = vpop.f32.mrf.mxu0
  %v2442 = vadd.f32 0.0, %v2441
  %v2443 = vpop.f32.mrf.mxu0
  %2444 = vmatprep.mubr.f32.mxu0 0.0
  %2445 = vmatmul.mubr.f32.gmra.mxu0 %v2338
  %v2446 = vpop.f32.mrf.mxu0
  %v2447 = vadd.f32 0.0, %v2446
  %v2448 = vpop.f32.mrf.mxu0
  %2449 = vdwg.mxu0
  %2450 = vmatprep.subr.mxu0 0.0
  %2451 = vmatpush1.msra.mxu0 0.0
  %2452 = vmatprep.subr.mxu0 0.0
  %2453 = vmatpush1.msra.mxu0 0.0
  %2454 = vmatprep.subr.mxu0 0.0
  %2455 = vmatpush1.msra.mxu0 0.0
  %2456 = vmatprep.subr.mxu0 0.0
  %2457 = vmatpush1.msra.mxu0 0.0
  %2458 = vmatprep.subr.mxu0 0.0
  %2459 = vmatpush1.msra.mxu0 0.0
  %2460 = vmatprep.subr.mxu0 0.0
  %2461 = vmatpush1.msra.mxu0 0.0
  %2462 = vmatprep.subr.mxu0 0.0
  %2463 = vmatpush1.msra.mxu0 0.0
  %2464 = vmatprep.subr.mxu0 0.0
  %2465 = vmatpush1.msra.mxu0 0.0
  %2466 = vmatprep.subr.mxu0 0.0
  %2467 = vmatpush1.msra.mxu0 0.0
  %2468 = vmatprep.subr.mxu0 0.0
  %2469 = vmatpush1.msra.mxu0 0.0
  %2470 = vmatprep.subr.mxu0 0.0
  %2471 = vmatpush1.msra.mxu0 0.0
  %2472 = vmatprep.subr.mxu0 0.0
  %2473 = vmatpush1.msra.mxu0 0.0
  %2474 = vmatprep.subr.mxu0 0.0
  %2475 = vmatpush1.msra.mxu0 0.0
  %2476 = vmatprep.subr.mxu0 0.0
  %2477 = vmatpush1.msra.mxu0 %v2202
  %2478 = vmatprep.subr.mxu0 0.0
  %2479 = vmatpush1.msra.mxu0 %v2201
  %2480 = vmatprep.subr.mxu0 0.0
  %2481 = vmatpush1.msra.mxu0 %v2200
  %2482 = vmatprep.subr.mxu0 0.0
  %2483 = vmatpush2.msra.mxu0 0.0
  %2484 = vmatprep.subr.mxu0 0.0
  %2485 = vmatpush2.msra.mxu0 0.0
  %2486 = vmatprep.subr.mxu0 0.0
  %2487 = vmatpush2.msra.mxu0 0.0
  %2488 = vmatprep.subr.mxu0 0.0
  %2489 = vmatpush2.msra.mxu0 0.0
  %2490 = vmatprep.subr.mxu0 0.0
  %2491 = vmatpush2.msra.mxu0 0.0
  %2492 = vmatprep.subr.mxu0 0.0
  %2493 = vmatpush2.msra.mxu0 0.0
  %2494 = vmatprep.subr.mxu0 0.0
  %2495 = vmatpush2.msra.mxu0 0.0
  %2496 = vmatprep.subr.mxu0 0.0
  %2497 = vmatpush2.msra.mxu0 0.0
  %2498 = vmatprep.subr.mxu0 0.0
  %2499 = vmatpush2.msra.mxu0 0.0
  %2500 = vmatprep.subr.mxu0 0.0
  %2501 = vmatpush2.msra.mxu0 0.0
  %2502 = vmatprep.subr.mxu0 0.0
  %2503 = vmatpush2.msra.mxu0 0.0
  %2504 = vmatprep.subr.mxu0 0.0
  %2505 = vmatpush2.msra.mxu0 0.0
  %2506 = vmatprep.subr.mxu0 0.0
  %2507 = vmatpush2.msra.mxu0 0.0
  %2508 = vmatprep.subr.mxu0 0.0
  %2509 = vmatpush2.msra.mxu0 0.0
  %2510 = vmatprep.subr.mxu0 0.0
  %2511 = vmatpush2.msra.mxu0 0.0
  %2512 = vmatprep.subr.mxu0 0.0
  %2513 = vmatpush2.msra.mxu0 0.0
  %2514 = vmatprep.mubr.f32.mxu0 0.0
  %2515 = vmatmul.mubr.f32.gmra.mxu0 %v2314
  %v2516 = vpop.f32.mrf.mxu0
  %v2517 = vadd.f32 0.0, %v2516
  %v2518 = vpop.f32.mrf.mxu0
  %2519 = vmatprep.mubr.f32.mxu0 0.0
  %2520 = vmatmul.mubr.f32.gmra.mxu0 %v2317
  %v2521 = vpop.f32.mrf.mxu0
  %v2522 = vadd.f32 0.0, %v2521
  %v2523 = vpop.f32.mrf.mxu0
  %2524 = vmatprep.mubr.f32.mxu0 0.0
  %2525 = vmatmul.mubr.f32.gmra.mxu0 %v2320
  %v2526 = vpop.f32.mrf.mxu0
  %v2527 = vadd.f32 0.0, %v2526
  %v2528 = vpop.f32.mrf.mxu0
  %2529 = vmatprep.mubr.f32.mxu0 0.0
  %2530 = vmatmul.mubr.f32.gmra.mxu0 %v2323
  %v2531 = vpop.f32.mrf.mxu0
  %v2532 = vadd.f32 0.0, %v2531
  %v2533 = vpop.f32.mrf.mxu0
  %2534 = vmatprep.mubr.f32.mxu0 0.0
  %2535 = vmatmul.mubr.f32.gmra.mxu0 %v2326
  %v2536 = vpop.f32.mrf.mxu0
  %v2537 = vadd.f32 0.0, %v2536
  %v2538 = vpop.f32.mrf.mxu0
  %2539 = vmatprep.mubr.f32.mxu0 0.0
  %2540 = vmatmul.mubr.f32.gmra.mxu0 %v2329
  %v2541 = vpop.f32.mrf.mxu0
  %v2542 = vadd.f32 0.0, %v2541
  %v2543 = vpop.f32.mrf.mxu0
  %2544 = vmatprep.mubr.f32.mxu0 0.0
  %2545 = vmatmul.mubr.f32.gmra.mxu0 %v2332
  %v2546 = vpop.f32.mrf.mxu0
  %v2547 = vadd.f32 0.0, %v2546
  %v2548 = vpop.f32.mrf.mxu0
  %2549 = vmatprep.mubr.f32.mxu0 0.0
  %2550 = vmatmul.mubr.f32.gmra.mxu0 %v2335
  %v2551 = vpop.f32.mrf.mxu0
  %v2552 = vadd.f32 0.0, %v2551
  %v2553 = vpop.f32.mrf.mxu0
  %2554 = vmatprep.mubr.f32.mxu0 0.0
  %2555 = vmatmul.mubr.f32.gmra.mxu0 %v2338
  %v2556 = vpop.f32.mrf.mxu0
  %v2557 = vadd.f32 0.0, %v2556
  %v2558 = vpop.f32.mrf.mxu0
  %2559 = vdwg.mxu0
  %v2560 = vmax.f32 %v2156, %v2270
  %v2561 = vmax.f32 %v2161, %v2275
  %v2562 = vmax.f32 %v2166, %v2280
  %v2563 = vmax.f32 %v2171, %v2285
  %v2564 = vmax.f32 %v2176, %v2290
  %v2565 = vmax.f32 %v2181, %v2295
  %v2566 = vmax.f32 %v2186, %v2300
  %v2567 = vmax.f32 %v2191, %v2305
  %v2568 = vmax.f32 %v2196, %v2310
  %v2569 = vmax.f32 %v2407, %v2517
  %v2570 = vmax.f32 %v2412, %v2522
  %v2571 = vmax.f32 %v2417, %v2527
  %v2572 = vmax.f32 %v2422, %v2532
  %v2573 = vmax.f32 %v2427, %v2537
  %v2574 = vmax.f32 %v2432, %v2542
  %v2575 = vmax.f32 %v2437, %v2547
  %v2576 = vmax.f32 %v2442, %v2552
  %v2577 = vmax.f32 %v2447, %v2557
  %v2578 = vmax.f32 %v2560, %v2569
  %v2579 = vmax.f32 %v2561, %v2570
  %v2580 = vmax.f32 %v2562, %v2571
  %v2581 = vmax.f32 %v2563, %v2572
  %v2582 = vmax.f32 %v2564, %v2573
  %v2583 = vmax.f32 %v2565, %v2574
  %v2584 = vmax.f32 %v2566, %v2575
  %v2585 = vmax.f32 %v2567, %v2576
  %v2586 = vmax.f32 %v2568, %v2577
  %v2587 = vld [vmem:[%s5] sm:$0xff]
  %v2588 = vld [vmem:[%s5 + $0x8] sm:$0xff]
  %v2589 = vld [vmem:[%s5 + $0x10] sm:$0xff]
  %v2590 = vld [vmem:[%s5 + $0x18] sm:$0xff]
  %v2591 = vld [vmem:[%s5 + $0x20] sm:$0xff]
  %v2592 = vld [vmem:[%s5 + $0x28] sm:$0xff]
  %v2593 = vld [vmem:[%s5 + $0x30] sm:$0xff]
  %v2594 = vld [vmem:[%s5 + $0x38] sm:$0xff]
  %v2595 = vld [vmem:[%s5 + $0x40] sm:$0xff]
  %2597 = vset.pattern.permute.xlu0 0
  %2598 = vperm.xlu0 %2597, %v2587
  %v2599 = vpop.permute.xlu0 %2598
  %2602 = vset.pattern.permute.xlu0 0
  %2603 = vperm.xlu0 %2602, %v2588
  %v2604 = vpop.permute.xlu0 %2603
  %2607 = vset.pattern.permute.xlu0 0
  %2608 = vperm.xlu0 %2607, %v2589
  %v2609 = vpop.permute.xlu0 %2608
  %2612 = vset.pattern.permute.xlu0 0
  %2613 = vperm.xlu0 %2612, %v2590
  %v2614 = vpop.permute.xlu0 %2613
  %2617 = vset.pattern.permute.xlu0 0
  %2618 = vperm.xlu0 %2617, %v2591
  %v2619 = vpop.permute.xlu0 %2618
  %2622 = vset.pattern.permute.xlu0 0
  %2623 = vperm.xlu0 %2622, %v2592
  %v2624 = vpop.permute.xlu0 %2623
  %2627 = vset.pattern.permute.xlu0 0
  %2628 = vperm.xlu0 %2627, %v2593
  %v2629 = vpop.permute.xlu0 %2628
  %2632 = vset.pattern.permute.xlu0 0
  %2633 = vperm.xlu0 %2632, %v2594
  %v2634 = vpop.permute.xlu0 %2633
  %2637 = vset.pattern.permute.xlu0 0
  %2638 = vperm.xlu0 %2637, %v2595
  %v2639 = vpop.permute.xlu0 %2638
  %v2641 = vadd.f32 %v2578, %v2599
  %v2642 = vadd.f32 %v2579, %v2604
  %v2643 = vadd.f32 %v2580, %v2609
  %v2644 = vadd.f32 %v2581, %v2614
  %v2645 = vadd.f32 %v2582, %v2619
  %v2646 = vadd.f32 %v2583, %v2624
  %v2647 = vadd.f32 %v2584, %v2629
  %v2648 = vadd.f32 %v2585, %v2634
  %v2649 = vadd.f32 %v2586, %v2639
  %v2650 = vmax.f32 %v2641, 0.0
  %v2651 = vmax.f32 %v2642, 0.0
  %v2652 = vmax.f32 %v2643, 0.0
  %v2653 = vmax.f32 %v2644, 0.0
  %v2654 = vmax.f32 %v2645, 0.0
  %v2655 = vmax.f32 %v2646, 0.0
  %v2656 = vmax.f32 %v2647, 0.0
  %v2657 = vmax.f32 %v2648, 0.0
  %v2658 = vmax.f32 %v2649, 0.0
  %v2659 = vld [vmem:[%s7] sm:$0xff]
  %v2660 = vld [vmem:[%s7 + $0x8] sm:$0xf]
  %vm2661 = vcmask 97280
  %v2663 = vsel %vm2661, %v2650, 0
  %v2666 = vsel %vm2661, %v2651, 0
  %v2669 = vsel %vm2661, %v2652, 0
  %v2672 = vsel %vm2661, %v2653, 0
  %v2675 = vsel %vm2661, %v2654, 0
  %v2678 = vsel %vm2661, %v2655, 0
  %v2681 = vsel %vm2661, %v2656, 0
  %v2684 = vsel %vm2661, %v2657, 0
  %v2687 = vsel %vm2661, %v2658, 0
  %v2690 = vsel %vm77, %v2660, 0
  %2692 = vmatprep.subr.mxu0 0.0
  %2693 = vmatpush1.msra.mxu0 0.0
  %2694 = vmatprep.subr.mxu0 0.0
  %2695 = vmatpush1.msra.mxu0 0.0
  %2696 = vmatprep.subr.mxu0 0.0
  %2697 = vmatpush1.msra.mxu0 0.0
  %2698 = vmatprep.subr.mxu0 0.0
  %2699 = vmatpush1.msra.mxu0 0.0
  %2700 = vmatprep.subr.mxu0 0.0
  %2701 = vmatpush1.msra.mxu0 0.0
  %2702 = vmatprep.subr.mxu0 0.0
  %2703 = vmatpush1.msra.mxu0 0.0
  %2704 = vmatprep.subr.mxu0 0.0
  %2705 = vmatpush1.msra.mxu0 0.0
  %2706 = vmatprep.subr.mxu0 0.0
  %2707 = vmatpush1.msra.mxu0 0.0
  %2708 = vmatprep.subr.mxu0 0.0
  %2709 = vmatpush1.msra.mxu0 0.0
  %2710 = vmatprep.subr.mxu0 0.0
  %2711 = vmatpush1.msra.mxu0 0.0
  %2712 = vmatprep.subr.mxu0 0.0
  %2713 = vmatpush1.msra.mxu0 0.0
  %2714 = vmatprep.subr.mxu0 0.0
  %2715 = vmatpush1.msra.mxu0 0.0
  %2716 = vmatprep.subr.mxu0 0.0
  %2717 = vmatpush1.msra.mxu0 0.0
  %2718 = vmatprep.subr.mxu0 0.0
  %2719 = vmatpush1.msra.mxu0 0.0
  %2720 = vmatprep.subr.mxu0 0.0
  %2721 = vmatpush1.msra.mxu0 %v2690
  %2722 = vmatprep.subr.mxu0 0.0
  %2723 = vmatpush1.msra.mxu0 %v2659
  %2724 = vmatprep.subr.mxu0 0.0
  %2725 = vmatpush2.msra.mxu0 0.0
  %2726 = vmatprep.subr.mxu0 0.0
  %2727 = vmatpush2.msra.mxu0 0.0
  %2728 = vmatprep.subr.mxu0 0.0
  %2729 = vmatpush2.msra.mxu0 0.0
  %2730 = vmatprep.subr.mxu0 0.0
  %2731 = vmatpush2.msra.mxu0 0.0
  %2732 = vmatprep.subr.mxu0 0.0
  %2733 = vmatpush2.msra.mxu0 0.0
  %2734 = vmatprep.subr.mxu0 0.0
  %2735 = vmatpush2.msra.mxu0 0.0
  %2736 = vmatprep.subr.mxu0 0.0
  %2737 = vmatpush2.msra.mxu0 0.0
  %2738 = vmatprep.subr.mxu0 0.0
  %2739 = vmatpush2.msra.mxu0 0.0
  %2740 = vmatprep.subr.mxu0 0.0
  %2741 = vmatpush2.msra.mxu0 0.0
  %2742 = vmatprep.subr.mxu0 0.0
  %2743 = vmatpush2.msra.mxu0 0.0
  %2744 = vmatprep.subr.mxu0 0.0
  %2745 = vmatpush2.msra.mxu0 0.0
  %2746 = vmatprep.subr.mxu0 0.0
  %2747 = vmatpush2.msra.mxu0 0.0
  %2748 = vmatprep.subr.mxu0 0.0
  %2749 = vmatpush2.msra.mxu0 0.0
  %2750 = vmatprep.subr.mxu0 0.0
  %2751 = vmatpush2.msra.mxu0 0.0
  %2752 = vmatprep.subr.mxu0 0.0
  %2753 = vmatpush2.msra.mxu0 0.0
  %2754 = vmatprep.subr.mxu0 0.0
  %2755 = vmatpush2.msra.mxu0 0.0
  %2756 = vmatprep.mubr.f32.mxu0 0.0
  %2757 = vmatmul.mubr.f32.gmra.mxu0 %v2663
  %v2758 = vpop.f32.mrf.mxu0
  %v2759 = vadd.f32 0.0, %v2758
  %v2760 = vpop.f32.mrf.mxu0
  %2761 = vmatprep.mubr.f32.mxu0 0.0
  %2762 = vmatmul.mubr.f32.gmra.mxu0 %v2666
  %v2763 = vpop.f32.mrf.mxu0
  %v2764 = vadd.f32 0.0, %v2763
  %v2765 = vpop.f32.mrf.mxu0
  %2766 = vmatprep.mubr.f32.mxu0 0.0
  %2767 = vmatmul.mubr.f32.gmra.mxu0 %v2669
  %v2768 = vpop.f32.mrf.mxu0
  %v2769 = vadd.f32 0.0, %v2768
  %v2770 = vpop.f32.mrf.mxu0
  %2771 = vmatprep.mubr.f32.mxu0 0.0
  %2772 = vmatmul.mubr.f32.gmra.mxu0 %v2672
  %v2773 = vpop.f32.mrf.mxu0
  %v2774 = vadd.f32 0.0, %v2773
  %v2775 = vpop.f32.mrf.mxu0
  %2776 = vmatprep.mubr.f32.mxu0 0.0
  %2777 = vmatmul.mubr.f32.gmra.mxu0 %v2675
  %v2778 = vpop.f32.mrf.mxu0
  %v2779 = vadd.f32 0.0, %v2778
  %v2780 = vpop.f32.mrf.mxu0
  %2781 = vmatprep.mubr.f32.mxu0 0.0
  %2782 = vmatmul.mubr.f32.gmra.mxu0 %v2678
  %v2783 = vpop.f32.mrf.mxu0
  %v2784 = vadd.f32 0.0, %v2783
  %v2785 = vpop.f32.mrf.mxu0
  %2786 = vmatprep.mubr.f32.mxu0 0.0
  %2787 = vmatmul.mubr.f32.gmra.mxu0 %v2681
  %v2788 = vpop.f32.mrf.mxu0
  %v2789 = vadd.f32 0.0, %v2788
  %v2790 = vpop.f32.mrf.mxu0
  %2791 = vmatprep.mubr.f32.mxu0 0.0
  %2792 = vmatmul.mubr.f32.gmra.mxu0 %v2684
  %v2793 = vpop.f32.mrf.mxu0
  %v2794 = vadd.f32 0.0, %v2793
  %v2795 = vpop.f32.mrf.mxu0
  %2796 = vmatprep.mubr.f32.mxu0 0.0
  %2797 = vmatmul.mubr.f32.gmra.mxu0 %v2687
  %v2798 = vpop.f32.mrf.mxu0
  %v2799 = vadd.f32 0.0, %v2798
  %v2800 = vpop.f32.mrf.mxu0
  %2801 = vdwg.mxu0
  %v2802 = vld [vmem:[%s6] sm:$0xff]
  %v2803 = vld [vmem:[%s6 + $0x8] sm:$0xff]
  %v2804 = vld [vmem:[%s6 + $0x10] sm:$0xff]
  %v2805 = vld [vmem:[%s6 + $0x18] sm:$0xff]
  %v2806 = vld [vmem:[%s6 + $0x20] sm:$0xff]
  %v2807 = vld [vmem:[%s6 + $0x28] sm:$0xff]
  %v2808 = vld [vmem:[%s6 + $0x30] sm:$0xff]
  %v2809 = vld [vmem:[%s6 + $0x38] sm:$0xff]
  %v2810 = vld [vmem:[%s6 + $0x40] sm:$0xff]
  %v2811 = vld [vmem:[%s6 + $0x48] sm:$0xff]
  %v2812 = vld [vmem:[%s6 + $0x50] sm:$0xff]
  %v2813 = vld [vmem:[%s6 + $0x58] sm:$0xff]
  %v2814 = vld [vmem:[%s6 + $0x60] sm:$0xff]
  %v2815 = vld [vmem:[%s6 + $0x68] sm:$0xff]
  %v2816 = vld [vmem:[%s6 + $0x70] sm:$0xff]
  %v2817 = vld [vmem:[%s6 + $0x78] sm:$0xff]
  %s2818 = scalar_lea.vmem %s7, 16
  %v2819 = vld [vmem:[%s2818] sm:$0xff]
  %v2820 = vld [vmem:[%s2818 + $0x8] sm:$0xf]
  %v2822 = vsel %vm77, %v2820, 0
  %2824 = vmatprep.subr.mxu0 0.0
  %2825 = vmatpush1.msra.mxu0 0.0
  %2826 = vmatprep.subr.mxu0 0.0
  %2827 = vmatpush1.msra.mxu0 0.0
  %2828 = vmatprep.subr.mxu0 0.0
  %2829 = vmatpush1.msra.mxu0 0.0
  %2830 = vmatprep.subr.mxu0 0.0
  %2831 = vmatpush1.msra.mxu0 0.0
  %2832 = vmatprep.subr.mxu0 0.0
  %2833 = vmatpush1.msra.mxu0 0.0
  %2834 = vmatprep.subr.mxu0 0.0
  %2835 = vmatpush1.msra.mxu0 0.0
  %2836 = vmatprep.subr.mxu0 0.0
  %2837 = vmatpush1.msra.mxu0 0.0
  %2838 = vmatprep.subr.mxu0 0.0
  %2839 = vmatpush1.msra.mxu0 0.0
  %2840 = vmatprep.subr.mxu0 0.0
  %2841 = vmatpush1.msra.mxu0 0.0
  %2842 = vmatprep.subr.mxu0 0.0
  %2843 = vmatpush1.msra.mxu0 0.0
  %2844 = vmatprep.subr.mxu0 0.0
  %2845 = vmatpush1.msra.mxu0 0.0
  %2846 = vmatprep.subr.mxu0 0.0
  %2847 = vmatpush1.msra.mxu0 0.0
  %2848 = vmatprep.subr.mxu0 0.0
  %2849 = vmatpush1.msra.mxu0 0.0
  %2850 = vmatprep.subr.mxu0 0.0
  %2851 = vmatpush1.msra.mxu0 0.0
  %2852 = vmatprep.subr.mxu0 0.0
  %2853 = vmatpush1.msra.mxu0 %v2822
  %2854 = vmatprep.subr.mxu0 0.0
  %2855 = vmatpush1.msra.mxu0 %v2819
  %2856 = vmatprep.subr.mxu0 0.0
  %2857 = vmatpush2.msra.mxu0 0.0
  %2858 = vmatprep.subr.mxu0 0.0
  %2859 = vmatpush2.msra.mxu0 0.0
  %2860 = vmatprep.subr.mxu0 0.0
  %2861 = vmatpush2.msra.mxu0 0.0
  %2862 = vmatprep.subr.mxu0 0.0
  %2863 = vmatpush2.msra.mxu0 0.0
  %2864 = vmatprep.subr.mxu0 0.0
  %2865 = vmatpush2.msra.mxu0 0.0
  %2866 = vmatprep.subr.mxu0 0.0
  %2867 = vmatpush2.msra.mxu0 0.0
  %2868 = vmatprep.subr.mxu0 0.0
  %2869 = vmatpush2.msra.mxu0 0.0
  %2870 = vmatprep.subr.mxu0 0.0
  %2871 = vmatpush2.msra.mxu0 0.0
  %2872 = vmatprep.subr.mxu0 0.0
  %2873 = vmatpush2.msra.mxu0 0.0
  %2874 = vmatprep.subr.mxu0 0.0
  %2875 = vmatpush2.msra.mxu0 0.0
  %2876 = vmatprep.subr.mxu0 0.0
  %2877 = vmatpush2.msra.mxu0 0.0
  %2878 = vmatprep.subr.mxu0 0.0
  %2879 = vmatpush2.msra.mxu0 0.0
  %2880 = vmatprep.subr.mxu0 0.0
  %2881 = vmatpush2.msra.mxu0 0.0
  %2882 = vmatprep.subr.mxu0 0.0
  %2883 = vmatpush2.msra.mxu0 0.0
  %2884 = vmatprep.subr.mxu0 0.0
  %2885 = vmatpush2.msra.mxu0 0.0
  %2886 = vmatprep.subr.mxu0 0.0
  %2887 = vmatpush2.msra.mxu0 0.0
  %2888 = vmatprep.mubr.f32.mxu0 0.0
  %2889 = vmatmul.mubr.f32.gmra.mxu0 %v2663
  %v2890 = vpop.f32.mrf.mxu0
  %v2891 = vadd.f32 0.0, %v2890
  %v2892 = vpop.f32.mrf.mxu0
  %2893 = vmatprep.mubr.f32.mxu0 0.0
  %2894 = vmatmul.mubr.f32.gmra.mxu0 %v2666
  %v2895 = vpop.f32.mrf.mxu0
  %v2896 = vadd.f32 0.0, %v2895
  %v2897 = vpop.f32.mrf.mxu0
  %2898 = vmatprep.mubr.f32.mxu0 0.0
  %2899 = vmatmul.mubr.f32.gmra.mxu0 %v2669
  %v2900 = vpop.f32.mrf.mxu0
  %v2901 = vadd.f32 0.0, %v2900
  %v2902 = vpop.f32.mrf.mxu0
  %2903 = vmatprep.mubr.f32.mxu0 0.0
  %2904 = vmatmul.mubr.f32.gmra.mxu0 %v2672
  %v2905 = vpop.f32.mrf.mxu0
  %v2906 = vadd.f32 0.0, %v2905
  %v2907 = vpop.f32.mrf.mxu0
  %2908 = vmatprep.mubr.f32.mxu0 0.0
  %2909 = vmatmul.mubr.f32.gmra.mxu0 %v2675
  %v2910 = vpop.f32.mrf.mxu0
  %v2911 = vadd.f32 0.0, %v2910
  %v2912 = vpop.f32.mrf.mxu0
  %2913 = vmatprep.mubr.f32.mxu0 0.0
  %2914 = vmatmul.mubr.f32.gmra.mxu0 %v2678
  %v2915 = vpop.f32.mrf.mxu0
  %v2916 = vadd.f32 0.0, %v2915
  %v2917 = vpop.f32.mrf.mxu0
  %2918 = vmatprep.mubr.f32.mxu0 0.0
  %2919 = vmatmul.mubr.f32.gmra.mxu0 %v2681
  %v2920 = vpop.f32.mrf.mxu0
  %v2921 = vadd.f32 0.0, %v2920
  %v2922 = vpop.f32.mrf.mxu0
  %2923 = vmatprep.mubr.f32.mxu0 0.0
  %2924 = vmatmul.mubr.f32.gmra.mxu0 %v2684
  %v2925 = vpop.f32.mrf.mxu0
  %v2926 = vadd.f32 0.0, %v2925
  %v2927 = vpop.f32.mrf.mxu0
  %2928 = vmatprep.mubr.f32.mxu0 0.0
  %2929 = vmatmul.mubr.f32.gmra.mxu0 %v2687
  %v2930 = vpop.f32.mrf.mxu0
  %v2931 = vadd.f32 0.0, %v2930
  %v2932 = vpop.f32.mrf.mxu0
  %2933 = vdwg.mxu0
  %s2934 = scalar_lea.vmem %s6, 128
  %v2935 = vld [vmem:[%s2934] sm:$0xff]
  %v2936 = vld [vmem:[%s2934 + $0x8] sm:$0xff]
  %v2937 = vld [vmem:[%s2934 + $0x10] sm:$0xff]
  %v2938 = vld [vmem:[%s2934 + $0x18] sm:$0xff]
  %v2939 = vld [vmem:[%s2934 + $0x20] sm:$0xff]
  %v2940 = vld [vmem:[%s2934 + $0x28] sm:$0xff]
  %v2941 = vld [vmem:[%s2934 + $0x30] sm:$0xff]
  %v2942 = vld [vmem:[%s2934 + $0x38] sm:$0xff]
  %v2943 = vld [vmem:[%s2934 + $0x40] sm:$0xff]
  %v2944 = vld [vmem:[%s2934 + $0x48] sm:$0xff]
  %v2945 = vld [vmem:[%s2934 + $0x50] sm:$0xff]
  %v2946 = vld [vmem:[%s2934 + $0x58] sm:$0xff]
  %v2947 = vld [vmem:[%s2934 + $0x60] sm:$0xff]
  %v2948 = vld [vmem:[%s2934 + $0x68] sm:$0xff]
  %v2949 = vld [vmem:[%s2934 + $0x70] sm:$0xff]
  %v2950 = vld [vmem:[%s2934 + $0x78] sm:$0xff]
  %vm2951 = vcmask 588800
  %v2953 = vsel %vm2951, %v2935, 0
  %v2956 = vsel %vm2951, %v2936, 0
  %v2959 = vsel %vm2951, %v2937, 0
  %v2962 = vsel %vm2951, %v2938, 0
  %v2965 = vsel %vm2951, %v2939, 0
  %v2968 = vsel %vm2951, %v2940, 0
  %v2971 = vsel %vm2951, %v2941, 0
  %v2974 = vsel %vm2951, %v2942, 0
  %v2977 = vsel %vm2951, %v2943, 0
  %v2980 = vsel %vm2951, %v2944, 0
  %v2983 = vsel %vm2951, %v2945, 0
  %v2986 = vsel %vm2951, %v2946, 0
  %v2989 = vsel %vm2951, %v2947, 0
  %v2992 = vsel %vm2951, %v2948, 0
  %v2995 = vsel %vm2951, %v2949, 0
  %v2998 = vsel %vm2951, %v2950, 0
  %3000 = vmatprep.subr.mxu0 0.0
  %3001 = vmatpush1.msra.mxu0 0.0
  %3002 = vmatprep.subr.mxu0 0.0
  %3003 = vmatpush1.msra.mxu0 0.0
  %3004 = vmatprep.subr.mxu0 0.0
  %3005 = vmatpush1.msra.mxu0 0.0
  %3006 = vmatprep.subr.mxu0 0.0
  %3007 = vmatpush1.msra.mxu0 0.0
  %3008 = vmatprep.subr.mxu0 0.0
  %3009 = vmatpush1.msra.mxu0 0.0
  %3010 = vmatprep.subr.mxu0 0.0
  %3011 = vmatpush1.msra.mxu0 0.0
  %3012 = vmatprep.subr.mxu0 0.0
  %3013 = vmatpush1.msra.mxu0 0.0
  %3014 = vmatprep.subr.mxu0 0.0
  %3015 = vmatpush1.msra.mxu0 %v2931
  %3016 = vmatprep.subr.mxu0 0.0
  %3017 = vmatpush1.msra.mxu0 %v2926
  %3018 = vmatprep.subr.mxu0 0.0
  %3019 = vmatpush1.msra.mxu0 %v2921
  %3020 = vmatprep.subr.mxu0 0.0
  %3021 = vmatpush1.msra.mxu0 %v2916
  %3022 = vmatprep.subr.mxu0 0.0
  %3023 = vmatpush1.msra.mxu0 %v2911
  %3024 = vmatprep.subr.mxu0 0.0
  %3025 = vmatpush1.msra.mxu0 %v2906
  %3026 = vmatprep.subr.mxu0 0.0
  %3027 = vmatpush1.msra.mxu0 %v2901
  %3028 = vmatprep.subr.mxu0 0.0
  %3029 = vmatpush1.msra.mxu0 %v2896
  %3030 = vmatprep.subr.mxu0 0.0
  %3031 = vmatpush1.msra.mxu0 %v2891
  %3032 = vmatprep.subr.mxu0 0.0
  %3033 = vmatpush2.msra.mxu0 0.0
  %3034 = vmatprep.subr.mxu0 0.0
  %3035 = vmatpush2.msra.mxu0 0.0
  %3036 = vmatprep.subr.mxu0 0.0
  %3037 = vmatpush2.msra.mxu0 0.0
  %3038 = vmatprep.subr.mxu0 0.0
  %3039 = vmatpush2.msra.mxu0 0.0
  %3040 = vmatprep.subr.mxu0 0.0
  %3041 = vmatpush2.msra.mxu0 0.0
  %3042 = vmatprep.subr.mxu0 0.0
  %3043 = vmatpush2.msra.mxu0 0.0
  %3044 = vmatprep.subr.mxu0 0.0
  %3045 = vmatpush2.msra.mxu0 0.0
  %3046 = vmatprep.subr.mxu0 0.0
  %3047 = vmatpush2.msra.mxu0 0.0
  %3048 = vmatprep.subr.mxu0 0.0
  %3049 = vmatpush2.msra.mxu0 0.0
  %3050 = vmatprep.subr.mxu0 0.0
  %3051 = vmatpush2.msra.mxu0 0.0
  %3052 = vmatprep.subr.mxu0 0.0
  %3053 = vmatpush2.msra.mxu0 0.0
  %3054 = vmatprep.subr.mxu0 0.0
  %3055 = vmatpush2.msra.mxu0 0.0
  %3056 = vmatprep.subr.mxu0 0.0
  %3057 = vmatpush2.msra.mxu0 0.0
  %3058 = vmatprep.subr.mxu0 0.0
  %3059 = vmatpush2.msra.mxu0 0.0
  %3060 = vmatprep.subr.mxu0 0.0
  %3061 = vmatpush2.msra.mxu0 0.0
  %3062 = vmatprep.subr.mxu0 0.0
  %3063 = vmatpush2.msra.mxu0 0.0
  %3064 = vmatprep.mubr.f32.mxu0 0.0
  %3065 = vmatmul.mubr.f32.gmra.mxu0 %v2953
  %v3066 = vpop.f32.mrf.mxu0
  %v3067 = vadd.f32 0.0, %v3066
  %v3068 = vpop.f32.mrf.mxu0
  %3069 = vmatprep.mubr.f32.mxu0 0.0
  %3070 = vmatmul.mubr.f32.gmra.mxu0 %v2956
  %v3071 = vpop.f32.mrf.mxu0
  %v3072 = vadd.f32 0.0, %v3071
  %v3073 = vpop.f32.mrf.mxu0
  %3074 = vmatprep.mubr.f32.mxu0 0.0
  %3075 = vmatmul.mubr.f32.gmra.mxu0 %v2959
  %v3076 = vpop.f32.mrf.mxu0
  %v3077 = vadd.f32 0.0, %v3076
  %v3078 = vpop.f32.mrf.mxu0
  %3079 = vmatprep.mubr.f32.mxu0 0.0
  %3080 = vmatmul.mubr.f32.gmra.mxu0 %v2962
  %v3081 = vpop.f32.mrf.mxu0
  %v3082 = vadd.f32 0.0, %v3081
  %v3083 = vpop.f32.mrf.mxu0
  %3084 = vmatprep.mubr.f32.mxu0 0.0
  %3085 = vmatmul.mubr.f32.gmra.mxu0 %v2965
  %v3086 = vpop.f32.mrf.mxu0
  %v3087 = vadd.f32 0.0, %v3086
  %v3088 = vpop.f32.mrf.mxu0
  %3089 = vmatprep.mubr.f32.mxu0 0.0
  %3090 = vmatmul.mubr.f32.gmra.mxu0 %v2968
  %v3091 = vpop.f32.mrf.mxu0
  %v3092 = vadd.f32 0.0, %v3091
  %v3093 = vpop.f32.mrf.mxu0
  %3094 = vmatprep.mubr.f32.mxu0 0.0
  %3095 = vmatmul.mubr.f32.gmra.mxu0 %v2971
  %v3096 = vpop.f32.mrf.mxu0
  %v3097 = vadd.f32 0.0, %v3096
  %v3098 = vpop.f32.mrf.mxu0
  %3099 = vmatprep.mubr.f32.mxu0 0.0
  %3100 = vmatmul.mubr.f32.gmra.mxu0 %v2974
  %v3101 = vpop.f32.mrf.mxu0
  %v3102 = vadd.f32 0.0, %v3101
  %v3103 = vpop.f32.mrf.mxu0
  %3104 = vmatprep.mubr.f32.mxu0 0.0
  %3105 = vmatmul.mubr.f32.gmra.mxu0 %v2977
  %v3106 = vpop.f32.mrf.mxu0
  %v3107 = vadd.f32 0.0, %v3106
  %v3108 = vpop.f32.mrf.mxu0
  %3109 = vmatprep.mubr.f32.mxu0 0.0
  %3110 = vmatmul.mubr.f32.gmra.mxu0 %v2980
  %v3111 = vpop.f32.mrf.mxu0
  %v3112 = vadd.f32 0.0, %v3111
  %v3113 = vpop.f32.mrf.mxu0
  %3114 = vmatprep.mubr.f32.mxu0 0.0
  %3115 = vmatmul.mubr.f32.gmra.mxu0 %v2983
  %v3116 = vpop.f32.mrf.mxu0
  %v3117 = vadd.f32 0.0, %v3116
  %v3118 = vpop.f32.mrf.mxu0
  %3119 = vmatprep.mubr.f32.mxu0 0.0
  %3120 = vmatmul.mubr.f32.gmra.mxu0 %v2986
  %v3121 = vpop.f32.mrf.mxu0
  %v3122 = vadd.f32 0.0, %v3121
  %v3123 = vpop.f32.mrf.mxu0
  %3124 = vmatprep.mubr.f32.mxu0 0.0
  %3125 = vmatmul.mubr.f32.gmra.mxu0 %v2989
  %v3126 = vpop.f32.mrf.mxu0
  %v3127 = vadd.f32 0.0, %v3126
  %v3128 = vpop.f32.mrf.mxu0
  %3129 = vmatprep.mubr.f32.mxu0 0.0
  %3130 = vmatmul.mubr.f32.gmra.mxu0 %v2992
  %v3131 = vpop.f32.mrf.mxu0
  %v3132 = vadd.f32 0.0, %v3131
  %v3133 = vpop.f32.mrf.mxu0
  %3134 = vmatprep.mubr.f32.mxu0 0.0
  %3135 = vmatmul.mubr.f32.gmra.mxu0 %v2995
  %v3136 = vpop.f32.mrf.mxu0
  %v3137 = vadd.f32 0.0, %v3136
  %v3138 = vpop.f32.mrf.mxu0
  %3139 = vmatprep.mubr.f32.mxu0 0.0
  %3140 = vmatmul.mubr.f32.gmra.mxu0 %v2998
  %v3141 = vpop.f32.mrf.mxu0
  %v3142 = vadd.f32 0.0, %v3141
  %v3143 = vpop.f32.mrf.mxu0
  %3144 = vdwg.mxu0
  %v3146 = vsel %vm2951, %v2802, 0
  %v3149 = vsel %vm2951, %v2803, 0
  %v3152 = vsel %vm2951, %v2804, 0
  %v3155 = vsel %vm2951, %v2805, 0
  %v3158 = vsel %vm2951, %v2806, 0
  %v3161 = vsel %vm2951, %v2807, 0
  %v3164 = vsel %vm2951, %v2808, 0
  %v3167 = vsel %vm2951, %v2809, 0
  %v3170 = vsel %vm2951, %v2810, 0
  %v3173 = vsel %vm2951, %v2811, 0
  %v3176 = vsel %vm2951, %v2812, 0
  %v3179 = vsel %vm2951, %v2813, 0
  %v3182 = vsel %vm2951, %v2814, 0
  %v3185 = vsel %vm2951, %v2815, 0
  %v3188 = vsel %vm2951, %v2816, 0
  %v3191 = vsel %vm2951, %v2817, 0
  %3193 = vmatprep.subr.mxu0 0.0
  %3194 = vmatpush1.msra.mxu0 0.0
  %3195 = vmatprep.subr.mxu0 0.0
  %3196 = vmatpush1.msra.mxu0 0.0
  %3197 = vmatprep.subr.mxu0 0.0
  %3198 = vmatpush1.msra.mxu0 0.0
  %3199 = vmatprep.subr.mxu0 0.0
  %3200 = vmatpush1.msra.mxu0 0.0
  %3201 = vmatprep.subr.mxu0 0.0
  %3202 = vmatpush1.msra.mxu0 0.0
  %3203 = vmatprep.subr.mxu0 0.0
  %3204 = vmatpush1.msra.mxu0 0.0
  %3205 = vmatprep.subr.mxu0 0.0
  %3206 = vmatpush1.msra.mxu0 0.0
  %3207 = vmatprep.subr.mxu0 0.0
  %3208 = vmatpush1.msra.mxu0 %v2799
  %3209 = vmatprep.subr.mxu0 0.0
  %3210 = vmatpush1.msra.mxu0 %v2794
  %3211 = vmatprep.subr.mxu0 0.0
  %3212 = vmatpush1.msra.mxu0 %v2789
  %3213 = vmatprep.subr.mxu0 0.0
  %3214 = vmatpush1.msra.mxu0 %v2784
  %3215 = vmatprep.subr.mxu0 0.0
  %3216 = vmatpush1.msra.mxu0 %v2779
  %3217 = vmatprep.subr.mxu0 0.0
  %3218 = vmatpush1.msra.mxu0 %v2774
  %3219 = vmatprep.subr.mxu0 0.0
  %3220 = vmatpush1.msra.mxu0 %v2769
  %3221 = vmatprep.subr.mxu0 0.0
  %3222 = vmatpush1.msra.mxu0 %v2764
  %3223 = vmatprep.subr.mxu0 0.0
  %3224 = vmatpush1.msra.mxu0 %v2759
  %3225 = vmatprep.subr.mxu0 0.0
  %3226 = vmatpush2.msra.mxu0 0.0
  %3227 = vmatprep.subr.mxu0 0.0
  %3228 = vmatpush2.msra.mxu0 0.0
  %3229 = vmatprep.subr.mxu0 0.0
  %3230 = vmatpush2.msra.mxu0 0.0
  %3231 = vmatprep.subr.mxu0 0.0
  %3232 = vmatpush2.msra.mxu0 0.0
  %3233 = vmatprep.subr.mxu0 0.0
  %3234 = vmatpush2.msra.mxu0 0.0
  %3235 = vmatprep.subr.mxu0 0.0
  %3236 = vmatpush2.msra.mxu0 0.0
  %3237 = vmatprep.subr.mxu0 0.0
  %3238 = vmatpush2.msra.mxu0 0.0
  %3239 = vmatprep.subr.mxu0 0.0
  %3240 = vmatpush2.msra.mxu0 0.0
  %3241 = vmatprep.subr.mxu0 0.0
  %3242 = vmatpush2.msra.mxu0 0.0
  %3243 = vmatprep.subr.mxu0 0.0
  %3244 = vmatpush2.msra.mxu0 0.0
  %3245 = vmatprep.subr.mxu0 0.0
  %3246 = vmatpush2.msra.mxu0 0.0
  %3247 = vmatprep.subr.mxu0 0.0
  %3248 = vmatpush2.msra.mxu0 0.0
  %3249 = vmatprep.subr.mxu0 0.0
  %3250 = vmatpush2.msra.mxu0 0.0
  %3251 = vmatprep.subr.mxu0 0.0
  %3252 = vmatpush2.msra.mxu0 0.0
  %3253 = vmatprep.subr.mxu0 0.0
  %3254 = vmatpush2.msra.mxu0 0.0
  %3255 = vmatprep.subr.mxu0 0.0
  %3256 = vmatpush2.msra.mxu0 0.0
  %3257 = vmatprep.mubr.f32.mxu0 0.0
  %3258 = vmatmul.mubr.f32.gmra.mxu0 %v3146
  %v3259 = vpop.f32.mrf.mxu0
  %v3260 = vadd.f32 %v3067, %v3259
  %v3261 = vpop.f32.mrf.mxu0
  %3262 = vmatprep.mubr.f32.mxu0 0.0
  %3263 = vmatmul.mubr.f32.gmra.mxu0 %v3149
  %v3264 = vpop.f32.mrf.mxu0
  %v3265 = vadd.f32 %v3072, %v3264
  %v3266 = vpop.f32.mrf.mxu0
  %3267 = vmatprep.mubr.f32.mxu0 0.0
  %3268 = vmatmul.mubr.f32.gmra.mxu0 %v3152
  %v3269 = vpop.f32.mrf.mxu0
  %v3270 = vadd.f32 %v3077, %v3269
  %v3271 = vpop.f32.mrf.mxu0
  %3272 = vmatprep.mubr.f32.mxu0 0.0
  %3273 = vmatmul.mubr.f32.gmra.mxu0 %v3155
  %v3274 = vpop.f32.mrf.mxu0
  %v3275 = vadd.f32 %v3082, %v3274
  %v3276 = vpop.f32.mrf.mxu0
  %3277 = vmatprep.mubr.f32.mxu0 0.0
  %3278 = vmatmul.mubr.f32.gmra.mxu0 %v3158
  %v3279 = vpop.f32.mrf.mxu0
  %v3280 = vadd.f32 %v3087, %v3279
  %v3281 = vpop.f32.mrf.mxu0
  %3282 = vmatprep.mubr.f32.mxu0 0.0
  %3283 = vmatmul.mubr.f32.gmra.mxu0 %v3161
  %v3284 = vpop.f32.mrf.mxu0
  %v3285 = vadd.f32 %v3092, %v3284
  %v3286 = vpop.f32.mrf.mxu0
  %3287 = vmatprep.mubr.f32.mxu0 0.0
  %3288 = vmatmul.mubr.f32.gmra.mxu0 %v3164
  %v3289 = vpop.f32.mrf.mxu0
  %v3290 = vadd.f32 %v3097, %v3289
  %v3291 = vpop.f32.mrf.mxu0
  %3292 = vmatprep.mubr.f32.mxu0 0.0
  %3293 = vmatmul.mubr.f32.gmra.mxu0 %v3167
  %v3294 = vpop.f32.mrf.mxu0
  %v3295 = vadd.f32 %v3102, %v3294
  %v3296 = vpop.f32.mrf.mxu0
  %3297 = vmatprep.mubr.f32.mxu0 0.0
  %3298 = vmatmul.mubr.f32.gmra.mxu0 %v3170
  %v3299 = vpop.f32.mrf.mxu0
  %v3300 = vadd.f32 %v3107, %v3299
  %v3301 = vpop.f32.mrf.mxu0
  %3302 = vmatprep.mubr.f32.mxu0 0.0
  %3303 = vmatmul.mubr.f32.gmra.mxu0 %v3173
  %v3304 = vpop.f32.mrf.mxu0
  %v3305 = vadd.f32 %v3112, %v3304
  %v3306 = vpop.f32.mrf.mxu0
  %3307 = vmatprep.mubr.f32.mxu0 0.0
  %3308 = vmatmul.mubr.f32.gmra.mxu0 %v3176
  %v3309 = vpop.f32.mrf.mxu0
  %v3310 = vadd.f32 %v3117, %v3309
  %v3311 = vpop.f32.mrf.mxu0
  %3312 = vmatprep.mubr.f32.mxu0 0.0
  %3313 = vmatmul.mubr.f32.gmra.mxu0 %v3179
  %v3314 = vpop.f32.mrf.mxu0
  %v3315 = vadd.f32 %v3122, %v3314
  %v3316 = vpop.f32.mrf.mxu0
  %3317 = vmatprep.mubr.f32.mxu0 0.0
  %3318 = vmatmul.mubr.f32.gmra.mxu0 %v3182
  %v3319 = vpop.f32.mrf.mxu0
  %v3320 = vadd.f32 %v3127, %v3319
  %v3321 = vpop.f32.mrf.mxu0
  %3322 = vmatprep.mubr.f32.mxu0 0.0
  %3323 = vmatmul.mubr.f32.gmra.mxu0 %v3185
  %v3324 = vpop.f32.mrf.mxu0
  %v3325 = vadd.f32 %v3132, %v3324
  %v3326 = vpop.f32.mrf.mxu0
  %3327 = vmatprep.mubr.f32.mxu0 0.0
  %3328 = vmatmul.mubr.f32.gmra.mxu0 %v3188
  %v3329 = vpop.f32.mrf.mxu0
  %v3330 = vadd.f32 %v3137, %v3329
  %v3331 = vpop.f32.mrf.mxu0
  %3332 = vmatprep.mubr.f32.mxu0 0.0
  %3333 = vmatmul.mubr.f32.gmra.mxu0 %v3191
  %v3334 = vpop.f32.mrf.mxu0
  %v3335 = vadd.f32 %v3142, %v3334
  %v3336 = vpop.f32.mrf.mxu0
  %3337 = vdwg.mxu0
  %s3338 = scalar_lea.vmem %s7, 32
  %v3339 = vld [vmem:[%s3338] sm:$0xff]
  %v3340 = vld [vmem:[%s3338 + $0x8] sm:$0xf]
  %v3342 = vsel %vm77, %v3340, 0
  %3344 = vmatprep.subr.mxu0 0.0
  %3345 = vmatpush1.msra.mxu0 0.0
  %3346 = vmatprep.subr.mxu0 0.0
  %3347 = vmatpush1.msra.mxu0 0.0
  %3348 = vmatprep.subr.mxu0 0.0
  %3349 = vmatpush1.msra.mxu0 0.0
  %3350 = vmatprep.subr.mxu0 0.0
  %3351 = vmatpush1.msra.mxu0 0.0
  %3352 = vmatprep.subr.mxu0 0.0
  %3353 = vmatpush1.msra.mxu0 0.0
  %3354 = vmatprep.subr.mxu0 0.0
  %3355 = vmatpush1.msra.mxu0 0.0
  %3356 = vmatprep.subr.mxu0 0.0
  %3357 = vmatpush1.msra.mxu0 0.0
  %3358 = vmatprep.subr.mxu0 0.0
  %3359 = vmatpush1.msra.mxu0 0.0
  %3360 = vmatprep.subr.mxu0 0.0
  %3361 = vmatpush1.msra.mxu0 0.0
  %3362 = vmatprep.subr.mxu0 0.0
  %3363 = vmatpush1.msra.mxu0 0.0
  %3364 = vmatprep.subr.mxu0 0.0
  %3365 = vmatpush1.msra.mxu0 0.0
  %3366 = vmatprep.subr.mxu0 0.0
  %3367 = vmatpush1.msra.mxu0 0.0
  %3368 = vmatprep.subr.mxu0 0.0
  %3369 = vmatpush1.msra.mxu0 0.0
  %3370 = vmatprep.subr.mxu0 0.0
  %3371 = vmatpush1.msra.mxu0 0.0
  %3372 = vmatprep.subr.mxu0 0.0
  %3373 = vmatpush1.msra.mxu0 %v3342
  %3374 = vmatprep.subr.mxu0 0.0
  %3375 = vmatpush1.msra.mxu0 %v3339
  %3376 = vmatprep.subr.mxu0 0.0
  %3377 = vmatpush2.msra.mxu0 0.0
  %3378 = vmatprep.subr.mxu0 0.0
  %3379 = vmatpush2.msra.mxu0 0.0
  %3380 = vmatprep.subr.mxu0 0.0
  %3381 = vmatpush2.msra.mxu0 0.0
  %3382 = vmatprep.subr.mxu0 0.0
  %3383 = vmatpush2.msra.mxu0 0.0
  %3384 = vmatprep.subr.mxu0 0.0
  %3385 = vmatpush2.msra.mxu0 0.0
  %3386 = vmatprep.subr.mxu0 0.0
  %3387 = vmatpush2.msra.mxu0 0.0
  %3388 = vmatprep.subr.mxu0 0.0
  %3389 = vmatpush2.msra.mxu0 0.0
  %3390 = vmatprep.subr.mxu0 0.0
  %3391 = vmatpush2.msra.mxu0 0.0
  %3392 = vmatprep.subr.mxu0 0.0
  %3393 = vmatpush2.msra.mxu0 0.0
  %3394 = vmatprep.subr.mxu0 0.0
  %3395 = vmatpush2.msra.mxu0 0.0
  %3396 = vmatprep.subr.mxu0 0.0
  %3397 = vmatpush2.msra.mxu0 0.0
  %3398 = vmatprep.subr.mxu0 0.0
  %3399 = vmatpush2.msra.mxu0 0.0
  %3400 = vmatprep.subr.mxu0 0.0
  %3401 = vmatpush2.msra.mxu0 0.0
  %3402 = vmatprep.subr.mxu0 0.0
  %3403 = vmatpush2.msra.mxu0 0.0
  %3404 = vmatprep.subr.mxu0 0.0
  %3405 = vmatpush2.msra.mxu0 0.0
  %3406 = vmatprep.subr.mxu0 0.0
  %3407 = vmatpush2.msra.mxu0 0.0
  %3408 = vmatprep.mubr.f32.mxu0 0.0
  %3409 = vmatmul.mubr.f32.gmra.mxu0 %v2663
  %v3410 = vpop.f32.mrf.mxu0
  %v3411 = vadd.f32 0.0, %v3410
  %v3412 = vpop.f32.mrf.mxu0
  %3413 = vmatprep.mubr.f32.mxu0 0.0
  %3414 = vmatmul.mubr.f32.gmra.mxu0 %v2666
  %v3415 = vpop.f32.mrf.mxu0
  %v3416 = vadd.f32 0.0, %v3415
  %v3417 = vpop.f32.mrf.mxu0
  %3418 = vmatprep.mubr.f32.mxu0 0.0
  %3419 = vmatmul.mubr.f32.gmra.mxu0 %v2669
  %v3420 = vpop.f32.mrf.mxu0
  %v3421 = vadd.f32 0.0, %v3420
  %v3422 = vpop.f32.mrf.mxu0
  %3423 = vmatprep.mubr.f32.mxu0 0.0
  %3424 = vmatmul.mubr.f32.gmra.mxu0 %v2672
  %v3425 = vpop.f32.mrf.mxu0
  %v3426 = vadd.f32 0.0, %v3425
  %v3427 = vpop.f32.mrf.mxu0
  %3428 = vmatprep.mubr.f32.mxu0 0.0
  %3429 = vmatmul.mubr.f32.gmra.mxu0 %v2675
  %v3430 = vpop.f32.mrf.mxu0
  %v3431 = vadd.f32 0.0, %v3430
  %v3432 = vpop.f32.mrf.mxu0
  %3433 = vmatprep.mubr.f32.mxu0 0.0
  %3434 = vmatmul.mubr.f32.gmra.mxu0 %v2678
  %v3435 = vpop.f32.mrf.mxu0
  %v3436 = vadd.f32 0.0, %v3435
  %v3437 = vpop.f32.mrf.mxu0
  %3438 = vmatprep.mubr.f32.mxu0 0.0
  %3439 = vmatmul.mubr.f32.gmra.mxu0 %v2681
  %v3440 = vpop.f32.mrf.mxu0
  %v3441 = vadd.f32 0.0, %v3440
  %v3442 = vpop.f32.mrf.mxu0
  %3443 = vmatprep.mubr.f32.mxu0 0.0
  %3444 = vmatmul.mubr.f32.gmra.mxu0 %v2684
  %v3445 = vpop.f32.mrf.mxu0
  %v3446 = vadd.f32 0.0, %v3445
  %v3447 = vpop.f32.mrf.mxu0
  %3448 = vmatprep.mubr.f32.mxu0 0.0
  %3449 = vmatmul.mubr.f32.gmra.mxu0 %v2687
  %v3450 = vpop.f32.mrf.mxu0
  %v3451 = vadd.f32 0.0, %v3450
  %v3452 = vpop.f32.mrf.mxu0
  %3453 = vdwg.mxu0
  %s3454 = scalar_lea.vmem %s6, 256
  %v3455 = vld [vmem:[%s3454] sm:$0xff]
  %v3456 = vld [vmem:[%s3454 + $0x8] sm:$0xff]
  %v3457 = vld [vmem:[%s3454 + $0x10] sm:$0xff]
  %v3458 = vld [vmem:[%s3454 + $0x18] sm:$0xff]
  %v3459 = vld [vmem:[%s3454 + $0x20] sm:$0xff]
  %v3460 = vld [vmem:[%s3454 + $0x28] sm:$0xff]
  %v3461 = vld [vmem:[%s3454 + $0x30] sm:$0xff]
  %v3462 = vld [vmem:[%s3454 + $0x38] sm:$0xff]
  %v3463 = vld [vmem:[%s3454 + $0x40] sm:$0xff]
  %v3464 = vld [vmem:[%s3454 + $0x48] sm:$0xff]
  %v3465 = vld [vmem:[%s3454 + $0x50] sm:$0xff]
  %v3466 = vld [vmem:[%s3454 + $0x58] sm:$0xff]
  %v3467 = vld [vmem:[%s3454 + $0x60] sm:$0xff]
  %v3468 = vld [vmem:[%s3454 + $0x68] sm:$0xff]
  %v3469 = vld [vmem:[%s3454 + $0x70] sm:$0xff]
  %v3470 = vld [vmem:[%s3454 + $0x78] sm:$0xff]
  %v3472 = vsel %vm2951, %v3455, 0
  %v3475 = vsel %vm2951, %v3456, 0
  %v3478 = vsel %vm2951, %v3457, 0
  %v3481 = vsel %vm2951, %v3458, 0
  %v3484 = vsel %vm2951, %v3459, 0
  %v3487 = vsel %vm2951, %v3460, 0
  %v3490 = vsel %vm2951, %v3461, 0
  %v3493 = vsel %vm2951, %v3462, 0
  %v3496 = vsel %vm2951, %v3463, 0
  %v3499 = vsel %vm2951, %v3464, 0
  %v3502 = vsel %vm2951, %v3465, 0
  %v3505 = vsel %vm2951, %v3466, 0
  %v3508 = vsel %vm2951, %v3467, 0
  %v3511 = vsel %vm2951, %v3468, 0
  %v3514 = vsel %vm2951, %v3469, 0
  %v3517 = vsel %vm2951, %v3470, 0
  %3519 = vmatprep.subr.mxu0 0.0
  %3520 = vmatpush1.msra.mxu0 0.0
  %3521 = vmatprep.subr.mxu0 0.0
  %3522 = vmatpush1.msra.mxu0 0.0
  %3523 = vmatprep.subr.mxu0 0.0
  %3524 = vmatpush1.msra.mxu0 0.0
  %3525 = vmatprep.subr.mxu0 0.0
  %3526 = vmatpush1.msra.mxu0 0.0
  %3527 = vmatprep.subr.mxu0 0.0
  %3528 = vmatpush1.msra.mxu0 0.0
  %3529 = vmatprep.subr.mxu0 0.0
  %3530 = vmatpush1.msra.mxu0 0.0
  %3531 = vmatprep.subr.mxu0 0.0
  %3532 = vmatpush1.msra.mxu0 0.0
  %3533 = vmatprep.subr.mxu0 0.0
  %3534 = vmatpush1.msra.mxu0 %v3451
  %3535 = vmatprep.subr.mxu0 0.0
  %3536 = vmatpush1.msra.mxu0 %v3446
  %3537 = vmatprep.subr.mxu0 0.0
  %3538 = vmatpush1.msra.mxu0 %v3441
  %3539 = vmatprep.subr.mxu0 0.0
  %3540 = vmatpush1.msra.mxu0 %v3436
  %3541 = vmatprep.subr.mxu0 0.0
  %3542 = vmatpush1.msra.mxu0 %v3431
  %3543 = vmatprep.subr.mxu0 0.0
  %3544 = vmatpush1.msra.mxu0 %v3426
  %3545 = vmatprep.subr.mxu0 0.0
  %3546 = vmatpush1.msra.mxu0 %v3421
  %3547 = vmatprep.subr.mxu0 0.0
  %3548 = vmatpush1.msra.mxu0 %v3416
  %3549 = vmatprep.subr.mxu0 0.0
  %3550 = vmatpush1.msra.mxu0 %v3411
  %3551 = vmatprep.subr.mxu0 0.0
  %3552 = vmatpush2.msra.mxu0 0.0
  %3553 = vmatprep.subr.mxu0 0.0
  %3554 = vmatpush2.msra.mxu0 0.0
  %3555 = vmatprep.subr.mxu0 0.0
  %3556 = vmatpush2.msra.mxu0 0.0
  %3557 = vmatprep.subr.mxu0 0.0
  %3558 = vmatpush2.msra.mxu0 0.0
  %3559 = vmatprep.subr.mxu0 0.0
  %3560 = vmatpush2.msra.mxu0 0.0
  %3561 = vmatprep.subr.mxu0 0.0
  %3562 = vmatpush2.msra.mxu0 0.0
  %3563 = vmatprep.subr.mxu0 0.0
  %3564 = vmatpush2.msra.mxu0 0.0
  %3565 = vmatprep.subr.mxu0 0.0
  %3566 = vmatpush2.msra.mxu0 0.0
  %3567 = vmatprep.subr.mxu0 0.0
  %3568 = vmatpush2.msra.mxu0 0.0
  %3569 = vmatprep.subr.mxu0 0.0
  %3570 = vmatpush2.msra.mxu0 0.0
  %3571 = vmatprep.subr.mxu0 0.0
  %3572 = vmatpush2.msra.mxu0 0.0
  %3573 = vmatprep.subr.mxu0 0.0
  %3574 = vmatpush2.msra.mxu0 0.0
  %3575 = vmatprep.subr.mxu0 0.0
  %3576 = vmatpush2.msra.mxu0 0.0
  %3577 = vmatprep.subr.mxu0 0.0
  %3578 = vmatpush2.msra.mxu0 0.0
  %3579 = vmatprep.subr.mxu0 0.0
  %3580 = vmatpush2.msra.mxu0 0.0
  %3581 = vmatprep.subr.mxu0 0.0
  %3582 = vmatpush2.msra.mxu0 0.0
  %3583 = vmatprep.mubr.f32.mxu0 0.0
  %3584 = vmatmul.mubr.f32.gmra.mxu0 %v3472
  %v3585 = vpop.f32.mrf.mxu0
  %v3586 = vadd.f32 0.0, %v3585
  %v3587 = vpop.f32.mrf.mxu0
  %3588 = vmatprep.mubr.f32.mxu0 0.0
  %3589 = vmatmul.mubr.f32.gmra.mxu0 %v3475
  %v3590 = vpop.f32.mrf.mxu0
  %v3591 = vadd.f32 0.0, %v3590
  %v3592 = vpop.f32.mrf.mxu0
  %3593 = vmatprep.mubr.f32.mxu0 0.0
  %3594 = vmatmul.mubr.f32.gmra.mxu0 %v3478
  %v3595 = vpop.f32.mrf.mxu0
  %v3596 = vadd.f32 0.0, %v3595
  %v3597 = vpop.f32.mrf.mxu0
  %3598 = vmatprep.mubr.f32.mxu0 0.0
  %3599 = vmatmul.mubr.f32.gmra.mxu0 %v3481
  %v3600 = vpop.f32.mrf.mxu0
  %v3601 = vadd.f32 0.0, %v3600
  %v3602 = vpop.f32.mrf.mxu0
  %3603 = vmatprep.mubr.f32.mxu0 0.0
  %3604 = vmatmul.mubr.f32.gmra.mxu0 %v3484
  %v3605 = vpop.f32.mrf.mxu0
  %v3606 = vadd.f32 0.0, %v3605
  %v3607 = vpop.f32.mrf.mxu0
  %3608 = vmatprep.mubr.f32.mxu0 0.0
  %3609 = vmatmul.mubr.f32.gmra.mxu0 %v3487
  %v3610 = vpop.f32.mrf.mxu0
  %v3611 = vadd.f32 0.0, %v3610
  %v3612 = vpop.f32.mrf.mxu0
  %3613 = vmatprep.mubr.f32.mxu0 0.0
  %3614 = vmatmul.mubr.f32.gmra.mxu0 %v3490
  %v3615 = vpop.f32.mrf.mxu0
  %v3616 = vadd.f32 0.0, %v3615
  %v3617 = vpop.f32.mrf.mxu0
  %3618 = vmatprep.mubr.f32.mxu0 0.0
  %3619 = vmatmul.mubr.f32.gmra.mxu0 %v3493
  %v3620 = vpop.f32.mrf.mxu0
  %v3621 = vadd.f32 0.0, %v3620
  %v3622 = vpop.f32.mrf.mxu0
  %3623 = vmatprep.mubr.f32.mxu0 0.0
  %3624 = vmatmul.mubr.f32.gmra.mxu0 %v3496
  %v3625 = vpop.f32.mrf.mxu0
  %v3626 = vadd.f32 0.0, %v3625
  %v3627 = vpop.f32.mrf.mxu0
  %3628 = vmatprep.mubr.f32.mxu0 0.0
  %3629 = vmatmul.mubr.f32.gmra.mxu0 %v3499
  %v3630 = vpop.f32.mrf.mxu0
  %v3631 = vadd.f32 0.0, %v3630
  %v3632 = vpop.f32.mrf.mxu0
  %3633 = vmatprep.mubr.f32.mxu0 0.0
  %3634 = vmatmul.mubr.f32.gmra.mxu0 %v3502
  %v3635 = vpop.f32.mrf.mxu0
  %v3636 = vadd.f32 0.0, %v3635
  %v3637 = vpop.f32.mrf.mxu0
  %3638 = vmatprep.mubr.f32.mxu0 0.0
  %3639 = vmatmul.mubr.f32.gmra.mxu0 %v3505
  %v3640 = vpop.f32.mrf.mxu0
  %v3641 = vadd.f32 0.0, %v3640
  %v3642 = vpop.f32.mrf.mxu0
  %3643 = vmatprep.mubr.f32.mxu0 0.0
  %3644 = vmatmul.mubr.f32.gmra.mxu0 %v3508
  %v3645 = vpop.f32.mrf.mxu0
  %v3646 = vadd.f32 0.0, %v3645
  %v3647 = vpop.f32.mrf.mxu0
  %3648 = vmatprep.mubr.f32.mxu0 0.0
  %3649 = vmatmul.mubr.f32.gmra.mxu0 %v3511
  %v3650 = vpop.f32.mrf.mxu0
  %v3651 = vadd.f32 0.0, %v3650
  %v3652 = vpop.f32.mrf.mxu0
  %3653 = vmatprep.mubr.f32.mxu0 0.0
  %3654 = vmatmul.mubr.f32.gmra.mxu0 %v3514
  %v3655 = vpop.f32.mrf.mxu0
  %v3656 = vadd.f32 0.0, %v3655
  %v3657 = vpop.f32.mrf.mxu0
  %3658 = vmatprep.mubr.f32.mxu0 0.0
  %3659 = vmatmul.mubr.f32.gmra.mxu0 %v3517
  %v3660 = vpop.f32.mrf.mxu0
  %v3661 = vadd.f32 0.0, %v3660
  %v3662 = vpop.f32.mrf.mxu0
  %3663 = vdwg.mxu0
  %v3664 = vadd.f32 %v3260, %v3586
  %v3665 = vadd.f32 %v3265, %v3591
  %v3666 = vadd.f32 %v3270, %v3596
  %v3667 = vadd.f32 %v3275, %v3601
  %v3668 = vadd.f32 %v3280, %v3606
  %v3669 = vadd.f32 %v3285, %v3611
  %v3670 = vadd.f32 %v3290, %v3616
  %v3671 = vadd.f32 %v3295, %v3621
  %v3672 = vadd.f32 %v3300, %v3626
  %v3673 = vadd.f32 %v3305, %v3631
  %v3674 = vadd.f32 %v3310, %v3636
  %v3675 = vadd.f32 %v3315, %v3641
  %v3676 = vadd.f32 %v3320, %v3646
  %v3677 = vadd.f32 %v3325, %v3651
  %v3678 = vadd.f32 %v3330, %v3656
  %v3679 = vadd.f32 %v3335, %v3661
  %s3680 = scalar_lea.vmem %s7, 48
  %v3681 = vld [vmem:[%s3680] sm:$0xff]
  %v3682 = vld [vmem:[%s3680 + $0x8] sm:$0xf]
  %v3684 = vsel %vm77, %v3682, 0
  %3686 = vmatprep.subr.mxu0 0.0
  %3687 = vmatpush1.msra.mxu0 0.0
  %3688 = vmatprep.subr.mxu0 0.0
  %3689 = vmatpush1.msra.mxu0 0.0
  %3690 = vmatprep.subr.mxu0 0.0
  %3691 = vmatpush1.msra.mxu0 0.0
  %3692 = vmatprep.subr.mxu0 0.0
  %3693 = vmatpush1.msra.mxu0 0.0
  %3694 = vmatprep.subr.mxu0 0.0
  %3695 = vmatpush1.msra.mxu0 0.0
  %3696 = vmatprep.subr.mxu0 0.0
  %3697 = vmatpush1.msra.mxu0 0.0
  %3698 = vmatprep.subr.mxu0 0.0
  %3699 = vmatpush1.msra.mxu0 0.0
  %3700 = vmatprep.subr.mxu0 0.0
  %3701 = vmatpush1.msra.mxu0 0.0
  %3702 = vmatprep.subr.mxu0 0.0
  %3703 = vmatpush1.msra.mxu0 0.0
  %3704 = vmatprep.subr.mxu0 0.0
  %3705 = vmatpush1.msra.mxu0 0.0
  %3706 = vmatprep.subr.mxu0 0.0
  %3707 = vmatpush1.msra.mxu0 0.0
  %3708 = vmatprep.subr.mxu0 0.0
  %3709 = vmatpush1.msra.mxu0 0.0
  %3710 = vmatprep.subr.mxu0 0.0
  %3711 = vmatpush1.msra.mxu0 0.0
  %3712 = vmatprep.subr.mxu0 0.0
  %3713 = vmatpush1.msra.mxu0 0.0
  %3714 = vmatprep.subr.mxu0 0.0
  %3715 = vmatpush1.msra.mxu0 %v3684
  %3716 = vmatprep.subr.mxu0 0.0
  %3717 = vmatpush1.msra.mxu0 %v3681
  %3718 = vmatprep.subr.mxu0 0.0
  %3719 = vmatpush2.msra.mxu0 0.0
  %3720 = vmatprep.subr.mxu0 0.0
  %3721 = vmatpush2.msra.mxu0 0.0
  %3722 = vmatprep.subr.mxu0 0.0
  %3723 = vmatpush2.msra.mxu0 0.0
  %3724 = vmatprep.subr.mxu0 0.0
  %3725 = vmatpush2.msra.mxu0 0.0
  %3726 = vmatprep.subr.mxu0 0.0
  %3727 = vmatpush2.msra.mxu0 0.0
  %3728 = vmatprep.subr.mxu0 0.0
  %3729 = vmatpush2.msra.mxu0 0.0
  %3730 = vmatprep.subr.mxu0 0.0
  %3731 = vmatpush2.msra.mxu0 0.0
  %3732 = vmatprep.subr.mxu0 0.0
  %3733 = vmatpush2.msra.mxu0 0.0
  %3734 = vmatprep.subr.mxu0 0.0
  %3735 = vmatpush2.msra.mxu0 0.0
  %3736 = vmatprep.subr.mxu0 0.0
  %3737 = vmatpush2.msra.mxu0 0.0
  %3738 = vmatprep.subr.mxu0 0.0
  %3739 = vmatpush2.msra.mxu0 0.0
  %3740 = vmatprep.subr.mxu0 0.0
  %3741 = vmatpush2.msra.mxu0 0.0
  %3742 = vmatprep.subr.mxu0 0.0
  %3743 = vmatpush2.msra.mxu0 0.0
  %3744 = vmatprep.subr.mxu0 0.0
  %3745 = vmatpush2.msra.mxu0 0.0
  %3746 = vmatprep.subr.mxu0 0.0
  %3747 = vmatpush2.msra.mxu0 0.0
  %3748 = vmatprep.subr.mxu0 0.0
  %3749 = vmatpush2.msra.mxu0 0.0
  %3750 = vmatprep.mubr.f32.mxu0 0.0
  %3751 = vmatmul.mubr.f32.gmra.mxu0 %v2663
  %v3752 = vpop.f32.mrf.mxu0
  %v3753 = vadd.f32 0.0, %v3752
  %v3754 = vpop.f32.mrf.mxu0
  %3755 = vmatprep.mubr.f32.mxu0 0.0
  %3756 = vmatmul.mubr.f32.gmra.mxu0 %v2666
  %v3757 = vpop.f32.mrf.mxu0
  %v3758 = vadd.f32 0.0, %v3757
  %v3759 = vpop.f32.mrf.mxu0
  %3760 = vmatprep.mubr.f32.mxu0 0.0
  %3761 = vmatmul.mubr.f32.gmra.mxu0 %v2669
  %v3762 = vpop.f32.mrf.mxu0
  %v3763 = vadd.f32 0.0, %v3762
  %v3764 = vpop.f32.mrf.mxu0
  %3765 = vmatprep.mubr.f32.mxu0 0.0
  %3766 = vmatmul.mubr.f32.gmra.mxu0 %v2672
  %v3767 = vpop.f32.mrf.mxu0
  %v3768 = vadd.f32 0.0, %v3767
  %v3769 = vpop.f32.mrf.mxu0
  %3770 = vmatprep.mubr.f32.mxu0 0.0
  %3771 = vmatmul.mubr.f32.gmra.mxu0 %v2675
  %v3772 = vpop.f32.mrf.mxu0
  %v3773 = vadd.f32 0.0, %v3772
  %v3774 = vpop.f32.mrf.mxu0
  %3775 = vmatprep.mubr.f32.mxu0 0.0
  %3776 = vmatmul.mubr.f32.gmra.mxu0 %v2678
  %v3777 = vpop.f32.mrf.mxu0
  %v3778 = vadd.f32 0.0, %v3777
  %v3779 = vpop.f32.mrf.mxu0
  %3780 = vmatprep.mubr.f32.mxu0 0.0
  %3781 = vmatmul.mubr.f32.gmra.mxu0 %v2681
  %v3782 = vpop.f32.mrf.mxu0
  %v3783 = vadd.f32 0.0, %v3782
  %v3784 = vpop.f32.mrf.mxu0
  %3785 = vmatprep.mubr.f32.mxu0 0.0
  %3786 = vmatmul.mubr.f32.gmra.mxu0 %v2684
  %v3787 = vpop.f32.mrf.mxu0
  %v3788 = vadd.f32 0.0, %v3787
  %v3789 = vpop.f32.mrf.mxu0
  %3790 = vmatprep.mubr.f32.mxu0 0.0
  %3791 = vmatmul.mubr.f32.gmra.mxu0 %v2687
  %v3792 = vpop.f32.mrf.mxu0
  %v3793 = vadd.f32 0.0, %v3792
  %v3794 = vpop.f32.mrf.mxu0
  %3795 = vdwg.mxu0
  %s3796 = scalar_lea.vmem %s6, 384
  %v3797 = vld [vmem:[%s3796] sm:$0xff]
  %v3798 = vld [vmem:[%s3796 + $0x8] sm:$0xff]
  %v3799 = vld [vmem:[%s3796 + $0x10] sm:$0xff]
  %v3800 = vld [vmem:[%s3796 + $0x18] sm:$0xff]
  %v3801 = vld [vmem:[%s3796 + $0x20] sm:$0xff]
  %v3802 = vld [vmem:[%s3796 + $0x28] sm:$0xff]
  %v3803 = vld [vmem:[%s3796 + $0x30] sm:$0xff]
  %v3804 = vld [vmem:[%s3796 + $0x38] sm:$0xff]
  %v3805 = vld [vmem:[%s3796 + $0x40] sm:$0xff]
  %v3806 = vld [vmem:[%s3796 + $0x48] sm:$0xff]
  %v3807 = vld [vmem:[%s3796 + $0x50] sm:$0xff]
  %v3808 = vld [vmem:[%s3796 + $0x58] sm:$0xff]
  %v3809 = vld [vmem:[%s3796 + $0x60] sm:$0xff]
  %v3810 = vld [vmem:[%s3796 + $0x68] sm:$0xff]
  %v3811 = vld [vmem:[%s3796 + $0x70] sm:$0xff]
  %v3812 = vld [vmem:[%s3796 + $0x78] sm:$0xff]
  %v3814 = vsel %vm2951, %v3797, 0
  %v3817 = vsel %vm2951, %v3798, 0
  %v3820 = vsel %vm2951, %v3799, 0
  %v3823 = vsel %vm2951, %v3800, 0
  %v3826 = vsel %vm2951, %v3801, 0
  %v3829 = vsel %vm2951, %v3802, 0
  %v3832 = vsel %vm2951, %v3803, 0
  %v3835 = vsel %vm2951, %v3804, 0
  %v3838 = vsel %vm2951, %v3805, 0
  %v3841 = vsel %vm2951, %v3806, 0
  %v3844 = vsel %vm2951, %v3807, 0
  %v3847 = vsel %vm2951, %v3808, 0
  %v3850 = vsel %vm2951, %v3809, 0
  %v3853 = vsel %vm2951, %v3810, 0
  %v3856 = vsel %vm2951, %v3811, 0
  %v3859 = vsel %vm2951, %v3812, 0
  %3861 = vmatprep.subr.mxu0 0.0
  %3862 = vmatpush1.msra.mxu0 0.0
  %3863 = vmatprep.subr.mxu0 0.0
  %3864 = vmatpush1.msra.mxu0 0.0
  %3865 = vmatprep.subr.mxu0 0.0
  %3866 = vmatpush1.msra.mxu0 0.0
  %3867 = vmatprep.subr.mxu0 0.0
  %3868 = vmatpush1.msra.mxu0 0.0
  %3869 = vmatprep.subr.mxu0 0.0
  %3870 = vmatpush1.msra.mxu0 0.0
  %3871 = vmatprep.subr.mxu0 0.0
  %3872 = vmatpush1.msra.mxu0 0.0
  %3873 = vmatprep.subr.mxu0 0.0
  %3874 = vmatpush1.msra.mxu0 0.0
  %3875 = vmatprep.subr.mxu0 0.0
  %3876 = vmatpush1.msra.mxu0 %v3793
  %3877 = vmatprep.subr.mxu0 0.0
  %3878 = vmatpush1.msra.mxu0 %v3788
  %3879 = vmatprep.subr.mxu0 0.0
  %3880 = vmatpush1.msra.mxu0 %v3783
  %3881 = vmatprep.subr.mxu0 0.0
  %3882 = vmatpush1.msra.mxu0 %v3778
  %3883 = vmatprep.subr.mxu0 0.0
  %3884 = vmatpush1.msra.mxu0 %v3773
  %3885 = vmatprep.subr.mxu0 0.0
  %3886 = vmatpush1.msra.mxu0 %v3768
  %3887 = vmatprep.subr.mxu0 0.0
  %3888 = vmatpush1.msra.mxu0 %v3763
  %3889 = vmatprep.subr.mxu0 0.0
  %3890 = vmatpush1.msra.mxu0 %v3758
  %3891 = vmatprep.subr.mxu0 0.0
  %3892 = vmatpush1.msra.mxu0 %v3753
  %3893 = vmatprep.subr.mxu0 0.0
  %3894 = vmatpush2.msra.mxu0 0.0
  %3895 = vmatprep.subr.mxu0 0.0
  %3896 = vmatpush2.msra.mxu0 0.0
  %3897 = vmatprep.subr.mxu0 0.0
  %3898 = vmatpush2.msra.mxu0 0.0
  %3899 = vmatprep.subr.mxu0 0.0
  %3900 = vmatpush2.msra.mxu0 0.0
  %3901 = vmatprep.subr.mxu0 0.0
  %3902 = vmatpush2.msra.mxu0 0.0
  %3903 = vmatprep.subr.mxu0 0.0
  %3904 = vmatpush2.msra.mxu0 0.0
  %3905 = vmatprep.subr.mxu0 0.0
  %3906 = vmatpush2.msra.mxu0 0.0
  %3907 = vmatprep.subr.mxu0 0.0
  %3908 = vmatpush2.msra.mxu0 0.0
  %3909 = vmatprep.subr.mxu0 0.0
  %3910 = vmatpush2.msra.mxu0 0.0
  %3911 = vmatprep.subr.mxu0 0.0
  %3912 = vmatpush2.msra.mxu0 0.0
  %3913 = vmatprep.subr.mxu0 0.0
  %3914 = vmatpush2.msra.mxu0 0.0
  %3915 = vmatprep.subr.mxu0 0.0
  %3916 = vmatpush2.msra.mxu0 0.0
  %3917 = vmatprep.subr.mxu0 0.0
  %3918 = vmatpush2.msra.mxu0 0.0
  %3919 = vmatprep.subr.mxu0 0.0
  %3920 = vmatpush2.msra.mxu0 0.0
  %3921 = vmatprep.subr.mxu0 0.0
  %3922 = vmatpush2.msra.mxu0 0.0
  %3923 = vmatprep.subr.mxu0 0.0
  %3924 = vmatpush2.msra.mxu0 0.0
  %3925 = vmatprep.mubr.f32.mxu0 0.0
  %3926 = vmatmul.mubr.f32.gmra.mxu0 %v3814
  %v3927 = vpop.f32.mrf.mxu0
  %v3928 = vadd.f32 0.0, %v3927
  %v3929 = vpop.f32.mrf.mxu0
  %3930 = vmatprep.mubr.f32.mxu0 0.0
  %3931 = vmatmul.mubr.f32.gmra.mxu0 %v3817
  %v3932 = vpop.f32.mrf.mxu0
  %v3933 = vadd.f32 0.0, %v3932
  %v3934 = vpop.f32.mrf.mxu0
  %3935 = vmatprep.mubr.f32.mxu0 0.0
  %3936 = vmatmul.mubr.f32.gmra.mxu0 %v3820
  %v3937 = vpop.f32.mrf.mxu0
  %v3938 = vadd.f32 0.0, %v3937
  %v3939 = vpop.f32.mrf.mxu0
  %3940 = vmatprep.mubr.f32.mxu0 0.0
  %3941 = vmatmul.mubr.f32.gmra.mxu0 %v3823
  %v3942 = vpop.f32.mrf.mxu0
  %v3943 = vadd.f32 0.0, %v3942
  %v3944 = vpop.f32.mrf.mxu0
  %3945 = vmatprep.mubr.f32.mxu0 0.0
  %3946 = vmatmul.mubr.f32.gmra.mxu0 %v3826
  %v3947 = vpop.f32.mrf.mxu0
  %v3948 = vadd.f32 0.0, %v3947
  %v3949 = vpop.f32.mrf.mxu0
  %3950 = vmatprep.mubr.f32.mxu0 0.0
  %3951 = vmatmul.mubr.f32.gmra.mxu0 %v3829
  %v3952 = vpop.f32.mrf.mxu0
  %v3953 = vadd.f32 0.0, %v3952
  %v3954 = vpop.f32.mrf.mxu0
  %3955 = vmatprep.mubr.f32.mxu0 0.0
  %3956 = vmatmul.mubr.f32.gmra.mxu0 %v3832
  %v3957 = vpop.f32.mrf.mxu0
  %v3958 = vadd.f32 0.0, %v3957
  %v3959 = vpop.f32.mrf.mxu0
  %3960 = vmatprep.mubr.f32.mxu0 0.0
  %3961 = vmatmul.mubr.f32.gmra.mxu0 %v3835
  %v3962 = vpop.f32.mrf.mxu0
  %v3963 = vadd.f32 0.0, %v3962
  %v3964 = vpop.f32.mrf.mxu0
  %3965 = vmatprep.mubr.f32.mxu0 0.0
  %3966 = vmatmul.mubr.f32.gmra.mxu0 %v3838
  %v3967 = vpop.f32.mrf.mxu0
  %v3968 = vadd.f32 0.0, %v3967
  %v3969 = vpop.f32.mrf.mxu0
  %3970 = vmatprep.mubr.f32.mxu0 0.0
  %3971 = vmatmul.mubr.f32.gmra.mxu0 %v3841
  %v3972 = vpop.f32.mrf.mxu0
  %v3973 = vadd.f32 0.0, %v3972
  %v3974 = vpop.f32.mrf.mxu0
  %3975 = vmatprep.mubr.f32.mxu0 0.0
  %3976 = vmatmul.mubr.f32.gmra.mxu0 %v3844
  %v3977 = vpop.f32.mrf.mxu0
  %v3978 = vadd.f32 0.0, %v3977
  %v3979 = vpop.f32.mrf.mxu0
  %3980 = vmatprep.mubr.f32.mxu0 0.0
  %3981 = vmatmul.mubr.f32.gmra.mxu0 %v3847
  %v3982 = vpop.f32.mrf.mxu0
  %v3983 = vadd.f32 0.0, %v3982
  %v3984 = vpop.f32.mrf.mxu0
  %3985 = vmatprep.mubr.f32.mxu0 0.0
  %3986 = vmatmul.mubr.f32.gmra.mxu0 %v3850
  %v3987 = vpop.f32.mrf.mxu0
  %v3988 = vadd.f32 0.0, %v3987
  %v3989 = vpop.f32.mrf.mxu0
  %3990 = vmatprep.mubr.f32.mxu0 0.0
  %3991 = vmatmul.mubr.f32.gmra.mxu0 %v3853
  %v3992 = vpop.f32.mrf.mxu0
  %v3993 = vadd.f32 0.0, %v3992
  %v3994 = vpop.f32.mrf.mxu0
  %3995 = vmatprep.mubr.f32.mxu0 0.0
  %3996 = vmatmul.mubr.f32.gmra.mxu0 %v3856
  %v3997 = vpop.f32.mrf.mxu0
  %v3998 = vadd.f32 0.0, %v3997
  %v3999 = vpop.f32.mrf.mxu0
  %4000 = vmatprep.mubr.f32.mxu0 0.0
  %4001 = vmatmul.mubr.f32.gmra.mxu0 %v3859
  %v4002 = vpop.f32.mrf.mxu0
  %v4003 = vadd.f32 0.0, %v4002
  %v4004 = vpop.f32.mrf.mxu0
  %4005 = vdwg.mxu0
  %v4006 = vadd.f32 %v3664, %v3928
  %v4007 = vadd.f32 %v3665, %v3933
  %v4008 = vadd.f32 %v3666, %v3938
  %v4009 = vadd.f32 %v3667, %v3943
  %v4010 = vadd.f32 %v3668, %v3948
  %v4011 = vadd.f32 %v3669, %v3953
  %v4012 = vadd.f32 %v3670, %v3958
  %v4013 = vadd.f32 %v3671, %v3963
  %v4014 = vadd.f32 %v3672, %v3968
  %v4015 = vadd.f32 %v3673, %v3973
  %v4016 = vadd.f32 %v3674, %v3978
  %v4017 = vadd.f32 %v3675, %v3983
  %v4018 = vadd.f32 %v3676, %v3988
  %v4019 = vadd.f32 %v3677, %v3993
  %v4020 = vadd.f32 %v3678, %v3998
  %v4021 = vadd.f32 %v3679, %v4003
  %s4022 = scalar_lea.vmem %s7, 64
  %v4023 = vld [vmem:[%s4022] sm:$0xff]
  %v4024 = vld [vmem:[%s4022 + $0x8] sm:$0xf]
  %v4026 = vsel %vm77, %v4024, 0
  %4028 = vmatprep.subr.mxu0 0.0
  %4029 = vmatpush1.msra.mxu0 0.0
  %4030 = vmatprep.subr.mxu0 0.0
  %4031 = vmatpush1.msra.mxu0 0.0
  %4032 = vmatprep.subr.mxu0 0.0
  %4033 = vmatpush1.msra.mxu0 0.0
  %4034 = vmatprep.subr.mxu0 0.0
  %4035 = vmatpush1.msra.mxu0 0.0
  %4036 = vmatprep.subr.mxu0 0.0
  %4037 = vmatpush1.msra.mxu0 0.0
  %4038 = vmatprep.subr.mxu0 0.0
  %4039 = vmatpush1.msra.mxu0 0.0
  %4040 = vmatprep.subr.mxu0 0.0
  %4041 = vmatpush1.msra.mxu0 0.0
  %4042 = vmatprep.subr.mxu0 0.0
  %4043 = vmatpush1.msra.mxu0 0.0
  %4044 = vmatprep.subr.mxu0 0.0
  %4045 = vmatpush1.msra.mxu0 0.0
  %4046 = vmatprep.subr.mxu0 0.0
  %4047 = vmatpush1.msra.mxu0 0.0
  %4048 = vmatprep.subr.mxu0 0.0
  %4049 = vmatpush1.msra.mxu0 0.0
  %4050 = vmatprep.subr.mxu0 0.0
  %4051 = vmatpush1.msra.mxu0 0.0
  %4052 = vmatprep.subr.mxu0 0.0
  %4053 = vmatpush1.msra.mxu0 0.0
  %4054 = vmatprep.subr.mxu0 0.0
  %4055 = vmatpush1.msra.mxu0 0.0
  %4056 = vmatprep.subr.mxu0 0.0
  %4057 = vmatpush1.msra.mxu0 %v4026
  %4058 = vmatprep.subr.mxu0 0.0
  %4059 = vmatpush1.msra.mxu0 %v4023
  %4060 = vmatprep.subr.mxu0 0.0
  %4061 = vmatpush2.msra.mxu0 0.0
  %4062 = vmatprep.subr.mxu0 0.0
  %4063 = vmatpush2.msra.mxu0 0.0
  %4064 = vmatprep.subr.mxu0 0.0
  %4065 = vmatpush2.msra.mxu0 0.0
  %4066 = vmatprep.subr.mxu0 0.0
  %4067 = vmatpush2.msra.mxu0 0.0
  %4068 = vmatprep.subr.mxu0 0.0
  %4069 = vmatpush2.msra.mxu0 0.0
  %4070 = vmatprep.subr.mxu0 0.0
  %4071 = vmatpush2.msra.mxu0 0.0
  %4072 = vmatprep.subr.mxu0 0.0
  %4073 = vmatpush2.msra.mxu0 0.0
  %4074 = vmatprep.subr.mxu0 0.0
  %4075 = vmatpush2.msra.mxu0 0.0
  %4076 = vmatprep.subr.mxu0 0.0
  %4077 = vmatpush2.msra.mxu0 0.0
  %4078 = vmatprep.subr.mxu0 0.0
  %4079 = vmatpush2.msra.mxu0 0.0
  %4080 = vmatprep.subr.mxu0 0.0
  %4081 = vmatpush2.msra.mxu0 0.0
  %4082 = vmatprep.subr.mxu0 0.0
  %4083 = vmatpush2.msra.mxu0 0.0
  %4084 = vmatprep.subr.mxu0 0.0
  %4085 = vmatpush2.msra.mxu0 0.0
  %4086 = vmatprep.subr.mxu0 0.0
  %4087 = vmatpush2.msra.mxu0 0.0
  %4088 = vmatprep.subr.mxu0 0.0
  %4089 = vmatpush2.msra.mxu0 0.0
  %4090 = vmatprep.subr.mxu0 0.0
  %4091 = vmatpush2.msra.mxu0 0.0
  %4092 = vmatprep.mubr.f32.mxu0 0.0
  %4093 = vmatmul.mubr.f32.gmra.mxu0 %v2663
  %v4094 = vpop.f32.mrf.mxu0
  %v4095 = vadd.f32 0.0, %v4094
  %v4096 = vpop.f32.mrf.mxu0
  %4097 = vmatprep.mubr.f32.mxu0 0.0
  %4098 = vmatmul.mubr.f32.gmra.mxu0 %v2666
  %v4099 = vpop.f32.mrf.mxu0
  %v4100 = vadd.f32 0.0, %v4099
  %v4101 = vpop.f32.mrf.mxu0
  %4102 = vmatprep.mubr.f32.mxu0 0.0
  %4103 = vmatmul.mubr.f32.gmra.mxu0 %v2669
  %v4104 = vpop.f32.mrf.mxu0
  %v4105 = vadd.f32 0.0, %v4104
  %v4106 = vpop.f32.mrf.mxu0
  %4107 = vmatprep.mubr.f32.mxu0 0.0
  %4108 = vmatmul.mubr.f32.gmra.mxu0 %v2672
  %v4109 = vpop.f32.mrf.mxu0
  %v4110 = vadd.f32 0.0, %v4109
  %v4111 = vpop.f32.mrf.mxu0
  %4112 = vmatprep.mubr.f32.mxu0 0.0
  %4113 = vmatmul.mubr.f32.gmra.mxu0 %v2675
  %v4114 = vpop.f32.mrf.mxu0
  %v4115 = vadd.f32 0.0, %v4114
  %v4116 = vpop.f32.mrf.mxu0
  %4117 = vmatprep.mubr.f32.mxu0 0.0
  %4118 = vmatmul.mubr.f32.gmra.mxu0 %v2678
  %v4119 = vpop.f32.mrf.mxu0
  %v4120 = vadd.f32 0.0, %v4119
  %v4121 = vpop.f32.mrf.mxu0
  %4122 = vmatprep.mubr.f32.mxu0 0.0
  %4123 = vmatmul.mubr.f32.gmra.mxu0 %v2681
  %v4124 = vpop.f32.mrf.mxu0
  %v4125 = vadd.f32 0.0, %v4124
  %v4126 = vpop.f32.mrf.mxu0
  %4127 = vmatprep.mubr.f32.mxu0 0.0
  %4128 = vmatmul.mubr.f32.gmra.mxu0 %v2684
  %v4129 = vpop.f32.mrf.mxu0
  %v4130 = vadd.f32 0.0, %v4129
  %v4131 = vpop.f32.mrf.mxu0
  %4132 = vmatprep.mubr.f32.mxu0 0.0
  %4133 = vmatmul.mubr.f32.gmra.mxu0 %v2687
  %v4134 = vpop.f32.mrf.mxu0
  %v4135 = vadd.f32 0.0, %v4134
  %v4136 = vpop.f32.mrf.mxu0
  %4137 = vdwg.mxu0
  %s4138 = scalar_lea.vmem %s6, 512
  %v4139 = vld [vmem:[%s4138] sm:$0xff]
  %v4140 = vld [vmem:[%s4138 + $0x8] sm:$0xff]
  %v4141 = vld [vmem:[%s4138 + $0x10] sm:$0xff]
  %v4142 = vld [vmem:[%s4138 + $0x18] sm:$0xff]
  %v4143 = vld [vmem:[%s4138 + $0x20] sm:$0xff]
  %v4144 = vld [vmem:[%s4138 + $0x28] sm:$0xff]
  %v4145 = vld [vmem:[%s4138 + $0x30] sm:$0xff]
  %v4146 = vld [vmem:[%s4138 + $0x38] sm:$0xff]
  %v4147 = vld [vmem:[%s4138 + $0x40] sm:$0xff]
  %v4148 = vld [vmem:[%s4138 + $0x48] sm:$0xff]
  %v4149 = vld [vmem:[%s4138 + $0x50] sm:$0xff]
  %v4150 = vld [vmem:[%s4138 + $0x58] sm:$0xff]
  %v4151 = vld [vmem:[%s4138 + $0x60] sm:$0xff]
  %v4152 = vld [vmem:[%s4138 + $0x68] sm:$0xff]
  %v4153 = vld [vmem:[%s4138 + $0x70] sm:$0xff]
  %v4154 = vld [vmem:[%s4138 + $0x78] sm:$0xff]
  %v4156 = vsel %vm2951, %v4139, 0
  %v4159 = vsel %vm2951, %v4140, 0
  %v4162 = vsel %vm2951, %v4141, 0
  %v4165 = vsel %vm2951, %v4142, 0
  %v4168 = vsel %vm2951, %v4143, 0
  %v4171 = vsel %vm2951, %v4144, 0
  %v4174 = vsel %vm2951, %v4145, 0
  %v4177 = vsel %vm2951, %v4146, 0
  %v4180 = vsel %vm2951, %v4147, 0
  %v4183 = vsel %vm2951, %v4148, 0
  %v4186 = vsel %vm2951, %v4149, 0
  %v4189 = vsel %vm2951, %v4150, 0
  %v4192 = vsel %vm2951, %v4151, 0
  %v4195 = vsel %vm2951, %v4152, 0
  %v4198 = vsel %vm2951, %v4153, 0
  %v4201 = vsel %vm2951, %v4154, 0
  %4203 = vmatprep.subr.mxu0 0.0
  %4204 = vmatpush1.msra.mxu0 0.0
  %4205 = vmatprep.subr.mxu0 0.0
  %4206 = vmatpush1.msra.mxu0 0.0
  %4207 = vmatprep.subr.mxu0 0.0
  %4208 = vmatpush1.msra.mxu0 0.0
  %4209 = vmatprep.subr.mxu0 0.0
  %4210 = vmatpush1.msra.mxu0 0.0
  %4211 = vmatprep.subr.mxu0 0.0
  %4212 = vmatpush1.msra.mxu0 0.0
  %4213 = vmatprep.subr.mxu0 0.0
  %4214 = vmatpush1.msra.mxu0 0.0
  %4215 = vmatprep.subr.mxu0 0.0
  %4216 = vmatpush1.msra.mxu0 0.0
  %4217 = vmatprep.subr.mxu0 0.0
  %4218 = vmatpush1.msra.mxu0 %v4135
  %4219 = vmatprep.subr.mxu0 0.0
  %4220 = vmatpush1.msra.mxu0 %v4130
  %4221 = vmatprep.subr.mxu0 0.0
  %4222 = vmatpush1.msra.mxu0 %v4125
  %4223 = vmatprep.subr.mxu0 0.0
  %4224 = vmatpush1.msra.mxu0 %v4120
  %4225 = vmatprep.subr.mxu0 0.0
  %4226 = vmatpush1.msra.mxu0 %v4115
  %4227 = vmatprep.subr.mxu0 0.0
  %4228 = vmatpush1.msra.mxu0 %v4110
  %4229 = vmatprep.subr.mxu0 0.0
  %4230 = vmatpush1.msra.mxu0 %v4105
  %4231 = vmatprep.subr.mxu0 0.0
  %4232 = vmatpush1.msra.mxu0 %v4100
  %4233 = vmatprep.subr.mxu0 0.0
  %4234 = vmatpush1.msra.mxu0 %v4095
  %4235 = vmatprep.subr.mxu0 0.0
  %4236 = vmatpush2.msra.mxu0 0.0
  %4237 = vmatprep.subr.mxu0 0.0
  %4238 = vmatpush2.msra.mxu0 0.0
  %4239 = vmatprep.subr.mxu0 0.0
  %4240 = vmatpush2.msra.mxu0 0.0
  %4241 = vmatprep.subr.mxu0 0.0
  %4242 = vmatpush2.msra.mxu0 0.0
  %4243 = vmatprep.subr.mxu0 0.0
  %4244 = vmatpush2.msra.mxu0 0.0
  %4245 = vmatprep.subr.mxu0 0.0
  %4246 = vmatpush2.msra.mxu0 0.0
  %4247 = vmatprep.subr.mxu0 0.0
  %4248 = vmatpush2.msra.mxu0 0.0
  %4249 = vmatprep.subr.mxu0 0.0
  %4250 = vmatpush2.msra.mxu0 0.0
  %4251 = vmatprep.subr.mxu0 0.0
  %4252 = vmatpush2.msra.mxu0 0.0
  %4253 = vmatprep.subr.mxu0 0.0
  %4254 = vmatpush2.msra.mxu0 0.0
  %4255 = vmatprep.subr.mxu0 0.0
  %4256 = vmatpush2.msra.mxu0 0.0
  %4257 = vmatprep.subr.mxu0 0.0
  %4258 = vmatpush2.msra.mxu0 0.0
  %4259 = vmatprep.subr.mxu0 0.0
  %4260 = vmatpush2.msra.mxu0 0.0
  %4261 = vmatprep.subr.mxu0 0.0
  %4262 = vmatpush2.msra.mxu0 0.0
  %4263 = vmatprep.subr.mxu0 0.0
  %4264 = vmatpush2.msra.mxu0 0.0
  %4265 = vmatprep.subr.mxu0 0.0
  %4266 = vmatpush2.msra.mxu0 0.0
  %4267 = vmatprep.mubr.f32.mxu0 0.0
  %4268 = vmatmul.mubr.f32.gmra.mxu0 %v4156
  %v4269 = vpop.f32.mrf.mxu0
  %v4270 = vadd.f32 0.0, %v4269
  %v4271 = vpop.f32.mrf.mxu0
  %4272 = vmatprep.mubr.f32.mxu0 0.0
  %4273 = vmatmul.mubr.f32.gmra.mxu0 %v4159
  %v4274 = vpop.f32.mrf.mxu0
  %v4275 = vadd.f32 0.0, %v4274
  %v4276 = vpop.f32.mrf.mxu0
  %4277 = vmatprep.mubr.f32.mxu0 0.0
  %4278 = vmatmul.mubr.f32.gmra.mxu0 %v4162
  %v4279 = vpop.f32.mrf.mxu0
  %v4280 = vadd.f32 0.0, %v4279
  %v4281 = vpop.f32.mrf.mxu0
  %4282 = vmatprep.mubr.f32.mxu0 0.0
  %4283 = vmatmul.mubr.f32.gmra.mxu0 %v4165
  %v4284 = vpop.f32.mrf.mxu0
  %v4285 = vadd.f32 0.0, %v4284
  %v4286 = vpop.f32.mrf.mxu0
  %4287 = vmatprep.mubr.f32.mxu0 0.0
  %4288 = vmatmul.mubr.f32.gmra.mxu0 %v4168
  %v4289 = vpop.f32.mrf.mxu0
  %v4290 = vadd.f32 0.0, %v4289
  %v4291 = vpop.f32.mrf.mxu0
  %4292 = vmatprep.mubr.f32.mxu0 0.0
  %4293 = vmatmul.mubr.f32.gmra.mxu0 %v4171
  %v4294 = vpop.f32.mrf.mxu0
  %v4295 = vadd.f32 0.0, %v4294
  %v4296 = vpop.f32.mrf.mxu0
  %4297 = vmatprep.mubr.f32.mxu0 0.0
  %4298 = vmatmul.mubr.f32.gmra.mxu0 %v4174
  %v4299 = vpop.f32.mrf.mxu0
  %v4300 = vadd.f32 0.0, %v4299
  %v4301 = vpop.f32.mrf.mxu0
  %4302 = vmatprep.mubr.f32.mxu0 0.0
  %4303 = vmatmul.mubr.f32.gmra.mxu0 %v4177
  %v4304 = vpop.f32.mrf.mxu0
  %v4305 = vadd.f32 0.0, %v4304
  %v4306 = vpop.f32.mrf.mxu0
  %4307 = vmatprep.mubr.f32.mxu0 0.0
  %4308 = vmatmul.mubr.f32.gmra.mxu0 %v4180
  %v4309 = vpop.f32.mrf.mxu0
  %v4310 = vadd.f32 0.0, %v4309
  %v4311 = vpop.f32.mrf.mxu0
  %4312 = vmatprep.mubr.f32.mxu0 0.0
  %4313 = vmatmul.mubr.f32.gmra.mxu0 %v4183
  %v4314 = vpop.f32.mrf.mxu0
  %v4315 = vadd.f32 0.0, %v4314
  %v4316 = vpop.f32.mrf.mxu0
  %4317 = vmatprep.mubr.f32.mxu0 0.0
  %4318 = vmatmul.mubr.f32.gmra.mxu0 %v4186
  %v4319 = vpop.f32.mrf.mxu0
  %v4320 = vadd.f32 0.0, %v4319
  %v4321 = vpop.f32.mrf.mxu0
  %4322 = vmatprep.mubr.f32.mxu0 0.0
  %4323 = vmatmul.mubr.f32.gmra.mxu0 %v4189
  %v4324 = vpop.f32.mrf.mxu0
  %v4325 = vadd.f32 0.0, %v4324
  %v4326 = vpop.f32.mrf.mxu0
  %4327 = vmatprep.mubr.f32.mxu0 0.0
  %4328 = vmatmul.mubr.f32.gmra.mxu0 %v4192
  %v4329 = vpop.f32.mrf.mxu0
  %v4330 = vadd.f32 0.0, %v4329
  %v4331 = vpop.f32.mrf.mxu0
  %4332 = vmatprep.mubr.f32.mxu0 0.0
  %4333 = vmatmul.mubr.f32.gmra.mxu0 %v4195
  %v4334 = vpop.f32.mrf.mxu0
  %v4335 = vadd.f32 0.0, %v4334
  %v4336 = vpop.f32.mrf.mxu0
  %4337 = vmatprep.mubr.f32.mxu0 0.0
  %4338 = vmatmul.mubr.f32.gmra.mxu0 %v4198
  %v4339 = vpop.f32.mrf.mxu0
  %v4340 = vadd.f32 0.0, %v4339
  %v4341 = vpop.f32.mrf.mxu0
  %4342 = vmatprep.mubr.f32.mxu0 0.0
  %4343 = vmatmul.mubr.f32.gmra.mxu0 %v4201
  %v4344 = vpop.f32.mrf.mxu0
  %v4345 = vadd.f32 0.0, %v4344
  %v4346 = vpop.f32.mrf.mxu0
  %4347 = vdwg.mxu0
  %v4348 = vadd.f32 %v4006, %v4270
  %v4349 = vadd.f32 %v4007, %v4275
  %v4350 = vadd.f32 %v4008, %v4280
  %v4351 = vadd.f32 %v4009, %v4285
  %v4352 = vadd.f32 %v4010, %v4290
  %v4353 = vadd.f32 %v4011, %v4295
  %v4354 = vadd.f32 %v4012, %v4300
  %v4355 = vadd.f32 %v4013, %v4305
  %v4356 = vadd.f32 %v4014, %v4310
  %v4357 = vadd.f32 %v4015, %v4315
  %v4358 = vadd.f32 %v4016, %v4320
  %v4359 = vadd.f32 %v4017, %v4325
  %v4360 = vadd.f32 %v4018, %v4330
  %v4361 = vadd.f32 %v4019, %v4335
  %v4362 = vadd.f32 %v4020, %v4340
  %v4363 = vadd.f32 %v4021, %v4345
  %v4364 = vld [vmem:[%s8] sm:$0xff]
  %v4365 = vld [vmem:[%s8 + $0x8] sm:$0xff]
  %v4366 = vld [vmem:[%s8 + $0x10] sm:$0xff]
  %v4367 = vld [vmem:[%s8 + $0x18] sm:$0xff]
  %v4368 = vld [vmem:[%s8 + $0x20] sm:$0xff]
  %v4369 = vld [vmem:[%s8 + $0x28] sm:$0xff]
  %v4370 = vld [vmem:[%s8 + $0x30] sm:$0xff]
  %v4371 = vld [vmem:[%s8 + $0x38] sm:$0xff]
  %4372 = vmatprep.subr.mxu0 0.0
  %4373 = vmatpush1.msra.mxu0 %v4363
  %4374 = vmatprep.subr.mxu0 0.0
  %4375 = vmatpush1.msra.mxu0 %v4362
  %4376 = vmatprep.subr.mxu0 0.0
  %4377 = vmatpush1.msra.mxu0 %v4361
  %4378 = vmatprep.subr.mxu0 0.0
  %4379 = vmatpush1.msra.mxu0 %v4360
  %4380 = vmatprep.subr.mxu0 0.0
  %4381 = vmatpush1.msra.mxu0 %v4359
  %4382 = vmatprep.subr.mxu0 0.0
  %4383 = vmatpush1.msra.mxu0 %v4358
  %4384 = vmatprep.subr.mxu0 0.0
  %4385 = vmatpush1.msra.mxu0 %v4357
  %4386 = vmatprep.subr.mxu0 0.0
  %4387 = vmatpush1.msra.mxu0 %v4356
  %4388 = vmatprep.subr.mxu0 0.0
  %4389 = vmatpush1.msra.mxu0 %v4355
  %4390 = vmatprep.subr.mxu0 0.0
  %4391 = vmatpush1.msra.mxu0 %v4354
  %4392 = vmatprep.subr.mxu0 0.0
  %4393 = vmatpush1.msra.mxu0 %v4353
  %4394 = vmatprep.subr.mxu0 0.0
  %4395 = vmatpush1.msra.mxu0 %v4352
  %4396 = vmatprep.subr.mxu0 0.0
  %4397 = vmatpush1.msra.mxu0 %v4351
  %4398 = vmatprep.subr.mxu0 0.0
  %4399 = vmatpush1.msra.mxu0 %v4350
  %4400 = vmatprep.subr.mxu0 0.0
  %4401 = vmatpush1.msra.mxu0 %v4349
  %4402 = vmatprep.subr.mxu0 0.0
  %4403 = vmatpush1.msra.mxu0 %v4348
  %4404 = vmatprep.subr.mxu0 0.0
  %4405 = vmatpush2.msra.mxu0 0.0
  %4406 = vmatprep.subr.mxu0 0.0
  %4407 = vmatpush2.msra.mxu0 0.0
  %4408 = vmatprep.subr.mxu0 0.0
  %4409 = vmatpush2.msra.mxu0 0.0
  %4410 = vmatprep.subr.mxu0 0.0
  %4411 = vmatpush2.msra.mxu0 0.0
  %4412 = vmatprep.subr.mxu0 0.0
  %4413 = vmatpush2.msra.mxu0 0.0
  %4414 = vmatprep.subr.mxu0 0.0
  %4415 = vmatpush2.msra.mxu0 0.0
  %4416 = vmatprep.subr.mxu0 0.0
  %4417 = vmatpush2.msra.mxu0 0.0
  %4418 = vmatprep.subr.mxu0 0.0
  %4419 = vmatpush2.msra.mxu0 0.0
  %4420 = vmatprep.subr.mxu0 0.0
  %4421 = vmatpush2.msra.mxu0 0.0
  %4422 = vmatprep.subr.mxu0 0.0
  %4423 = vmatpush2.msra.mxu0 0.0
  %4424 = vmatprep.subr.mxu0 0.0
  %4425 = vmatpush2.msra.mxu0 0.0
  %4426 = vmatprep.subr.mxu0 0.0
  %4427 = vmatpush2.msra.mxu0 0.0
  %4428 = vmatprep.subr.mxu0 0.0
  %4429 = vmatpush2.msra.mxu0 0.0
  %4430 = vmatprep.subr.mxu0 0.0
  %4431 = vmatpush2.msra.mxu0 0.0
  %4432 = vmatprep.subr.mxu0 0.0
  %4433 = vmatpush2.msra.mxu0 0.0
  %4434 = vmatprep.subr.mxu0 0.0
  %4435 = vmatpush2.msra.mxu0 0.0
  %4436 = vmatprep.mubr.f32.mxu0 0.0
  %4437 = vmatmul.mubr.f32.gmra.mxu0 %v4364
  %v4438 = vpop.f32.mrf.mxu0
  %v4439 = vadd.f32 0.0, %v4438
  %v4440 = vpop.f32.mrf.mxu0
  %4441 = vmatprep.mubr.f32.mxu0 0.0
  %4442 = vmatmul.mubr.f32.gmra.mxu0 %v4365
  %v4443 = vpop.f32.mrf.mxu0
  %v4444 = vadd.f32 0.0, %v4443
  %v4445 = vpop.f32.mrf.mxu0
  %4446 = vmatprep.mubr.f32.mxu0 0.0
  %4447 = vmatmul.mubr.f32.gmra.mxu0 %v4366
  %v4448 = vpop.f32.mrf.mxu0
  %v4449 = vadd.f32 0.0, %v4448
  %v4450 = vpop.f32.mrf.mxu0
  %4451 = vmatprep.mubr.f32.mxu0 0.0
  %4452 = vmatmul.mubr.f32.gmra.mxu0 %v4367
  %v4453 = vpop.f32.mrf.mxu0
  %v4454 = vadd.f32 0.0, %v4453
  %v4455 = vpop.f32.mrf.mxu0
  %4456 = vmatprep.mubr.f32.mxu0 0.0
  %4457 = vmatmul.mubr.f32.gmra.mxu0 %v4368
  %v4458 = vpop.f32.mrf.mxu0
  %v4459 = vadd.f32 0.0, %v4458
  %v4460 = vpop.f32.mrf.mxu0
  %4461 = vmatprep.mubr.f32.mxu0 0.0
  %4462 = vmatmul.mubr.f32.gmra.mxu0 %v4369
  %v4463 = vpop.f32.mrf.mxu0
  %v4464 = vadd.f32 0.0, %v4463
  %v4465 = vpop.f32.mrf.mxu0
  %4466 = vmatprep.mubr.f32.mxu0 0.0
  %4467 = vmatmul.mubr.f32.gmra.mxu0 %v4370
  %v4468 = vpop.f32.mrf.mxu0
  %v4469 = vadd.f32 0.0, %v4468
  %v4470 = vpop.f32.mrf.mxu0
  %4471 = vmatprep.mubr.f32.mxu0 0.0
  %4472 = vmatmul.mubr.f32.gmra.mxu0 %v4371
  %v4473 = vpop.f32.mrf.mxu0
  %v4474 = vadd.f32 0.0, %v4473
  %v4475 = vpop.f32.mrf.mxu0
  %4476 = vdwg.mxu0
  %s4477 = scalar_lea.vmem %s8, 64
  %v4478 = vld [vmem:[%s4477] sm:$0xff]
  %v4479 = vld [vmem:[%s4477 + $0x8] sm:$0xff]
  %v4480 = vld [vmem:[%s4477 + $0x10] sm:$0xff]
  %v4481 = vld [vmem:[%s4477 + $0x18] sm:$0xff]
  %v4482 = vld [vmem:[%s4477 + $0x20] sm:$0xff]
  %v4483 = vld [vmem:[%s4477 + $0x28] sm:$0xff]
  %v4484 = vld [vmem:[%s4477 + $0x30] sm:$0xff]
  %v4485 = vld [vmem:[%s4477 + $0x38] sm:$0xff]
  %4486 = vmatprep.subr.mxu0 0.0
  %4487 = vmatpush1.msra.mxu0 %v4363
  %4488 = vmatprep.subr.mxu0 0.0
  %4489 = vmatpush1.msra.mxu0 %v4362
  %4490 = vmatprep.subr.mxu0 0.0
  %4491 = vmatpush1.msra.mxu0 %v4361
  %4492 = vmatprep.subr.mxu0 0.0
  %4493 = vmatpush1.msra.mxu0 %v4360
  %4494 = vmatprep.subr.mxu0 0.0
  %4495 = vmatpush1.msra.mxu0 %v4359
  %4496 = vmatprep.subr.mxu0 0.0
  %4497 = vmatpush1.msra.mxu0 %v4358
  %4498 = vmatprep.subr.mxu0 0.0
  %4499 = vmatpush1.msra.mxu0 %v4357
  %4500 = vmatprep.subr.mxu0 0.0
  %4501 = vmatpush1.msra.mxu0 %v4356
  %4502 = vmatprep.subr.mxu0 0.0
  %4503 = vmatpush1.msra.mxu0 %v4355
  %4504 = vmatprep.subr.mxu0 0.0
  %4505 = vmatpush1.msra.mxu0 %v4354
  %4506 = vmatprep.subr.mxu0 0.0
  %4507 = vmatpush1.msra.mxu0 %v4353
  %4508 = vmatprep.subr.mxu0 0.0
  %4509 = vmatpush1.msra.mxu0 %v4352
  %4510 = vmatprep.subr.mxu0 0.0
  %4511 = vmatpush1.msra.mxu0 %v4351
  %4512 = vmatprep.subr.mxu0 0.0
  %4513 = vmatpush1.msra.mxu0 %v4350
  %4514 = vmatprep.subr.mxu0 0.0
  %4515 = vmatpush1.msra.mxu0 %v4349
  %4516 = vmatprep.subr.mxu0 0.0
  %4517 = vmatpush1.msra.mxu0 %v4348
  %4518 = vmatprep.subr.mxu0 0.0
  %4519 = vmatpush2.msra.mxu0 0.0
  %4520 = vmatprep.subr.mxu0 0.0
  %4521 = vmatpush2.msra.mxu0 0.0
  %4522 = vmatprep.subr.mxu0 0.0
  %4523 = vmatpush2.msra.mxu0 0.0
  %4524 = vmatprep.subr.mxu0 0.0
  %4525 = vmatpush2.msra.mxu0 0.0
  %4526 = vmatprep.subr.mxu0 0.0
  %4527 = vmatpush2.msra.mxu0 0.0
  %4528 = vmatprep.subr.mxu0 0.0
  %4529 = vmatpush2.msra.mxu0 0.0
  %4530 = vmatprep.subr.mxu0 0.0
  %4531 = vmatpush2.msra.mxu0 0.0
  %4532 = vmatprep.subr.mxu0 0.0
  %4533 = vmatpush2.msra.mxu0 0.0
  %4534 = vmatprep.subr.mxu0 0.0
  %4535 = vmatpush2.msra.mxu0 0.0
  %4536 = vmatprep.subr.mxu0 0.0
  %4537 = vmatpush2.msra.mxu0 0.0
  %4538 = vmatprep.subr.mxu0 0.0
  %4539 = vmatpush2.msra.mxu0 0.0
  %4540 = vmatprep.subr.mxu0 0.0
  %4541 = vmatpush2.msra.mxu0 0.0
  %4542 = vmatprep.subr.mxu0 0.0
  %4543 = vmatpush2.msra.mxu0 0.0
  %4544 = vmatprep.subr.mxu0 0.0
  %4545 = vmatpush2.msra.mxu0 0.0
  %4546 = vmatprep.subr.mxu0 0.0
  %4547 = vmatpush2.msra.mxu0 0.0
  %4548 = vmatprep.subr.mxu0 0.0
  %4549 = vmatpush2.msra.mxu0 0.0
  %4550 = vmatprep.mubr.f32.mxu0 0.0
  %4551 = vmatmul.mubr.f32.gmra.mxu0 %v4478
  %v4552 = vpop.f32.mrf.mxu0
  %v4553 = vadd.f32 0.0, %v4552
  %v4554 = vpop.f32.mrf.mxu0
  %4555 = vmatprep.mubr.f32.mxu0 0.0
  %4556 = vmatmul.mubr.f32.gmra.mxu0 %v4479
  %v4557 = vpop.f32.mrf.mxu0
  %v4558 = vadd.f32 0.0, %v4557
  %v4559 = vpop.f32.mrf.mxu0
  %4560 = vmatprep.mubr.f32.mxu0 0.0
  %4561 = vmatmul.mubr.f32.gmra.mxu0 %v4480
  %v4562 = vpop.f32.mrf.mxu0
  %v4563 = vadd.f32 0.0, %v4562
  %v4564 = vpop.f32.mrf.mxu0
  %4565 = vmatprep.mubr.f32.mxu0 0.0
  %4566 = vmatmul.mubr.f32.gmra.mxu0 %v4481
  %v4567 = vpop.f32.mrf.mxu0
  %v4568 = vadd.f32 0.0, %v4567
  %v4569 = vpop.f32.mrf.mxu0
  %4570 = vmatprep.mubr.f32.mxu0 0.0
  %4571 = vmatmul.mubr.f32.gmra.mxu0 %v4482
  %v4572 = vpop.f32.mrf.mxu0
  %v4573 = vadd.f32 0.0, %v4572
  %v4574 = vpop.f32.mrf.mxu0
  %4575 = vmatprep.mubr.f32.mxu0 0.0
  %4576 = vmatmul.mubr.f32.gmra.mxu0 %v4483
  %v4577 = vpop.f32.mrf.mxu0
  %v4578 = vadd.f32 0.0, %v4577
  %v4579 = vpop.f32.mrf.mxu0
  %4580 = vmatprep.mubr.f32.mxu0 0.0
  %4581 = vmatmul.mubr.f32.gmra.mxu0 %v4484
  %v4582 = vpop.f32.mrf.mxu0
  %v4583 = vadd.f32 0.0, %v4582
  %v4584 = vpop.f32.mrf.mxu0
  %4585 = vmatprep.mubr.f32.mxu0 0.0
  %4586 = vmatmul.mubr.f32.gmra.mxu0 %v4485
  %v4587 = vpop.f32.mrf.mxu0
  %v4588 = vadd.f32 0.0, %v4587
  %v4589 = vpop.f32.mrf.mxu0
  %4590 = vdwg.mxu0
  %v4591 = vld [vmem:[%s9] sm:$0xff]
  %vm4592 = vcmask 64512
  %v4594 = vsel %vm4592, %v4439, 0
  %v4597 = vsel %vm4592, %v4444, 0
  %v4600 = vsel %vm4592, %v4449, 0
  %v4603 = vsel %vm4592, %v4454, 0
  %v4606 = vsel %vm4592, %v4459, 0
  %v4609 = vsel %vm4592, %v4464, 0
  %v4612 = vsel %vm4592, %v4469, 0
  %v4615 = vsel %vm4592, %v4474, 0
  %4617 = vmatprep.subr.mxu0 0.0
  %4618 = vmatpush1.msra.mxu0 0.0
  %4619 = vmatprep.subr.mxu0 0.0
  %4620 = vmatpush1.msra.mxu0 0.0
  %4621 = vmatprep.subr.mxu0 0.0
  %4622 = vmatpush1.msra.mxu0 0.0
  %4623 = vmatprep.subr.mxu0 0.0
  %4624 = vmatpush1.msra.mxu0 0.0
  %4625 = vmatprep.subr.mxu0 0.0
  %4626 = vmatpush1.msra.mxu0 0.0
  %4627 = vmatprep.subr.mxu0 0.0
  %4628 = vmatpush1.msra.mxu0 0.0
  %4629 = vmatprep.subr.mxu0 0.0
  %4630 = vmatpush1.msra.mxu0 0.0
  %4631 = vmatprep.subr.mxu0 0.0
  %4632 = vmatpush1.msra.mxu0 0.0
  %4633 = vmatprep.subr.mxu0 0.0
  %4634 = vmatpush1.msra.mxu0 0.0
  %4635 = vmatprep.subr.mxu0 0.0
  %4636 = vmatpush1.msra.mxu0 0.0
  %4637 = vmatprep.subr.mxu0 0.0
  %4638 = vmatpush1.msra.mxu0 0.0
  %4639 = vmatprep.subr.mxu0 0.0
  %4640 = vmatpush1.msra.mxu0 0.0
  %4641 = vmatprep.subr.mxu0 0.0
  %4642 = vmatpush1.msra.mxu0 0.0
  %4643 = vmatprep.subr.mxu0 0.0
  %4644 = vmatpush1.msra.mxu0 0.0
  %4645 = vmatprep.subr.mxu0 0.0
  %4646 = vmatpush1.msra.mxu0 0.0
  %4647 = vmatprep.subr.mxu0 0.0
  %4648 = vmatpush1.msra.mxu0 %v4591
  %4649 = vmatprep.subr.mxu0 0.0
  %4650 = vmatpush2.msra.mxu0 0.0
  %4651 = vmatprep.subr.mxu0 0.0
  %4652 = vmatpush2.msra.mxu0 0.0
  %4653 = vmatprep.subr.mxu0 0.0
  %4654 = vmatpush2.msra.mxu0 0.0
  %4655 = vmatprep.subr.mxu0 0.0
  %4656 = vmatpush2.msra.mxu0 0.0
  %4657 = vmatprep.subr.mxu0 0.0
  %4658 = vmatpush2.msra.mxu0 0.0
  %4659 = vmatprep.subr.mxu0 0.0
  %4660 = vmatpush2.msra.mxu0 0.0
  %4661 = vmatprep.subr.mxu0 0.0
  %4662 = vmatpush2.msra.mxu0 0.0
  %4663 = vmatprep.subr.mxu0 0.0
  %4664 = vmatpush2.msra.mxu0 0.0
  %4665 = vmatprep.subr.mxu0 0.0
  %4666 = vmatpush2.msra.mxu0 0.0
  %4667 = vmatprep.subr.mxu0 0.0
  %4668 = vmatpush2.msra.mxu0 0.0
  %4669 = vmatprep.subr.mxu0 0.0
  %4670 = vmatpush2.msra.mxu0 0.0
  %4671 = vmatprep.subr.mxu0 0.0
  %4672 = vmatpush2.msra.mxu0 0.0
  %4673 = vmatprep.subr.mxu0 0.0
  %4674 = vmatpush2.msra.mxu0 0.0
  %4675 = vmatprep.subr.mxu0 0.0
  %4676 = vmatpush2.msra.mxu0 0.0
  %4677 = vmatprep.subr.mxu0 0.0
  %4678 = vmatpush2.msra.mxu0 0.0
  %4679 = vmatprep.subr.mxu0 0.0
  %4680 = vmatpush2.msra.mxu0 0.0
  %4681 = vmatprep.mubr.f32.mxu0 0.0
  %4682 = vmatmul.mubr.f32.gmra.mxu0 %v4594
  %v4683 = vpop.f32.mrf.mxu0
  %v4684 = vadd.f32 0.0, %v4683
  %v4685 = vpop.f32.mrf.mxu0
  %4686 = vmatprep.mubr.f32.mxu0 0.0
  %4687 = vmatmul.mubr.f32.gmra.mxu0 %v4597
  %v4688 = vpop.f32.mrf.mxu0
  %v4689 = vadd.f32 0.0, %v4688
  %v4690 = vpop.f32.mrf.mxu0
  %4691 = vmatprep.mubr.f32.mxu0 0.0
  %4692 = vmatmul.mubr.f32.gmra.mxu0 %v4600
  %v4693 = vpop.f32.mrf.mxu0
  %v4694 = vadd.f32 0.0, %v4693
  %v4695 = vpop.f32.mrf.mxu0
  %4696 = vmatprep.mubr.f32.mxu0 0.0
  %4697 = vmatmul.mubr.f32.gmra.mxu0 %v4603
  %v4698 = vpop.f32.mrf.mxu0
  %v4699 = vadd.f32 0.0, %v4698
  %v4700 = vpop.f32.mrf.mxu0
  %4701 = vmatprep.mubr.f32.mxu0 0.0
  %4702 = vmatmul.mubr.f32.gmra.mxu0 %v4606
  %v4703 = vpop.f32.mrf.mxu0
  %v4704 = vadd.f32 0.0, %v4703
  %v4705 = vpop.f32.mrf.mxu0
  %4706 = vmatprep.mubr.f32.mxu0 0.0
  %4707 = vmatmul.mubr.f32.gmra.mxu0 %v4609
  %v4708 = vpop.f32.mrf.mxu0
  %v4709 = vadd.f32 0.0, %v4708
  %v4710 = vpop.f32.mrf.mxu0
  %4711 = vmatprep.mubr.f32.mxu0 0.0
  %4712 = vmatmul.mubr.f32.gmra.mxu0 %v4612
  %v4713 = vpop.f32.mrf.mxu0
  %v4714 = vadd.f32 0.0, %v4713
  %v4715 = vpop.f32.mrf.mxu0
  %4716 = vmatprep.mubr.f32.mxu0 0.0
  %4717 = vmatmul.mubr.f32.gmra.mxu0 %v4615
  %v4718 = vpop.f32.mrf.mxu0
  %v4719 = vadd.f32 0.0, %v4718
  %v4720 = vpop.f32.mrf.mxu0
  %4721 = vdwg.mxu0
  %s4722 = scalar_lea.vmem %s9, 8
  %v4723 = vld [vmem:[%s4722] sm:$0xff]
  %4724 = vmatprep.subr.mxu0 0.0
  %4725 = vmatpush1.msra.mxu0 0.0
  %4726 = vmatprep.subr.mxu0 0.0
  %4727 = vmatpush1.msra.mxu0 0.0
  %4728 = vmatprep.subr.mxu0 0.0
  %4729 = vmatpush1.msra.mxu0 0.0
  %4730 = vmatprep.subr.mxu0 0.0
  %4731 = vmatpush1.msra.mxu0 0.0
  %4732 = vmatprep.subr.mxu0 0.0
  %4733 = vmatpush1.msra.mxu0 0.0
  %4734 = vmatprep.subr.mxu0 0.0
  %4735 = vmatpush1.msra.mxu0 0.0
  %4736 = vmatprep.subr.mxu0 0.0
  %4737 = vmatpush1.msra.mxu0 0.0
  %4738 = vmatprep.subr.mxu0 0.0
  %4739 = vmatpush1.msra.mxu0 0.0
  %4740 = vmatprep.subr.mxu0 0.0
  %4741 = vmatpush1.msra.mxu0 0.0
  %4742 = vmatprep.subr.mxu0 0.0
  %4743 = vmatpush1.msra.mxu0 0.0
  %4744 = vmatprep.subr.mxu0 0.0
  %4745 = vmatpush1.msra.mxu0 0.0
  %4746 = vmatprep.subr.mxu0 0.0
  %4747 = vmatpush1.msra.mxu0 0.0
  %4748 = vmatprep.subr.mxu0 0.0
  %4749 = vmatpush1.msra.mxu0 0.0
  %4750 = vmatprep.subr.mxu0 0.0
  %4751 = vmatpush1.msra.mxu0 0.0
  %4752 = vmatprep.subr.mxu0 0.0
  %4753 = vmatpush1.msra.mxu0 0.0
  %4754 = vmatprep.subr.mxu0 0.0
  %4755 = vmatpush1.msra.mxu0 %v4723
  %4756 = vmatprep.subr.mxu0 0.0
  %4757 = vmatpush2.msra.mxu0 0.0
  %4758 = vmatprep.subr.mxu0 0.0
  %4759 = vmatpush2.msra.mxu0 0.0
  %4760 = vmatprep.subr.mxu0 0.0
  %4761 = vmatpush2.msra.mxu0 0.0
  %4762 = vmatprep.subr.mxu0 0.0
  %4763 = vmatpush2.msra.mxu0 0.0
  %4764 = vmatprep.subr.mxu0 0.0
  %4765 = vmatpush2.msra.mxu0 0.0
  %4766 = vmatprep.subr.mxu0 0.0
  %4767 = vmatpush2.msra.mxu0 0.0
  %4768 = vmatprep.subr.mxu0 0.0
  %4769 = vmatpush2.msra.mxu0 0.0
  %4770 = vmatprep.subr.mxu0 0.0
  %4771 = vmatpush2.msra.mxu0 0.0
  %4772 = vmatprep.subr.mxu0 0.0
  %4773 = vmatpush2.msra.mxu0 0.0
  %4774 = vmatprep.subr.mxu0 0.0
  %4775 = vmatpush2.msra.mxu0 0.0
  %4776 = vmatprep.subr.mxu0 0.0
  %4777 = vmatpush2.msra.mxu0 0.0
  %4778 = vmatprep.subr.mxu0 0.0
  %4779 = vmatpush2.msra.mxu0 0.0
  %4780 = vmatprep.subr.mxu0 0.0
  %4781 = vmatpush2.msra.mxu0 0.0
  %4782 = vmatprep.subr.mxu0 0.0
  %4783 = vmatpush2.msra.mxu0 0.0
  %4784 = vmatprep.subr.mxu0 0.0
  %4785 = vmatpush2.msra.mxu0 0.0
  %4786 = vmatprep.subr.mxu0 0.0
  %4787 = vmatpush2.msra.mxu0 0.0
  %4788 = vmatprep.mubr.f32.mxu0 0.0
  %4789 = vmatmul.mubr.f32.gmra.mxu0 %v4594
  %v4790 = vpop.f32.mrf.mxu0
  %v4791 = vadd.f32 0.0, %v4790
  %v4792 = vpop.f32.mrf.mxu0
  %4793 = vmatprep.mubr.f32.mxu0 0.0
  %4794 = vmatmul.mubr.f32.gmra.mxu0 %v4597
  %v4795 = vpop.f32.mrf.mxu0
  %v4796 = vadd.f32 0.0, %v4795
  %v4797 = vpop.f32.mrf.mxu0
  %4798 = vmatprep.mubr.f32.mxu0 0.0
  %4799 = vmatmul.mubr.f32.gmra.mxu0 %v4600
  %v4800 = vpop.f32.mrf.mxu0
  %v4801 = vadd.f32 0.0, %v4800
  %v4802 = vpop.f32.mrf.mxu0
  %4803 = vmatprep.mubr.f32.mxu0 0.0
  %4804 = vmatmul.mubr.f32.gmra.mxu0 %v4603
  %v4805 = vpop.f32.mrf.mxu0
  %v4806 = vadd.f32 0.0, %v4805
  %v4807 = vpop.f32.mrf.mxu0
  %4808 = vmatprep.mubr.f32.mxu0 0.0
  %4809 = vmatmul.mubr.f32.gmra.mxu0 %v4606
  %v4810 = vpop.f32.mrf.mxu0
  %v4811 = vadd.f32 0.0, %v4810
  %v4812 = vpop.f32.mrf.mxu0
  %4813 = vmatprep.mubr.f32.mxu0 0.0
  %4814 = vmatmul.mubr.f32.gmra.mxu0 %v4609
  %v4815 = vpop.f32.mrf.mxu0
  %v4816 = vadd.f32 0.0, %v4815
  %v4817 = vpop.f32.mrf.mxu0
  %4818 = vmatprep.mubr.f32.mxu0 0.0
  %4819 = vmatmul.mubr.f32.gmra.mxu0 %v4612
  %v4820 = vpop.f32.mrf.mxu0
  %v4821 = vadd.f32 0.0, %v4820
  %v4822 = vpop.f32.mrf.mxu0
  %4823 = vmatprep.mubr.f32.mxu0 0.0
  %4824 = vmatmul.mubr.f32.gmra.mxu0 %v4615
  %v4825 = vpop.f32.mrf.mxu0
  %v4826 = vadd.f32 0.0, %v4825
  %v4827 = vpop.f32.mrf.mxu0
  %4828 = vdwg.mxu0
  %v4830 = vsel %vm4592, %v4553, 0
  %v4833 = vsel %vm4592, %v4558, 0
  %v4836 = vsel %vm4592, %v4563, 0
  %v4839 = vsel %vm4592, %v4568, 0
  %v4842 = vsel %vm4592, %v4573, 0
  %v4845 = vsel %vm4592, %v4578, 0
  %v4848 = vsel %vm4592, %v4583, 0
  %v4851 = vsel %vm4592, %v4588, 0
  %4853 = vmatprep.subr.mxu0 0.0
  %4854 = vmatpush1.msra.mxu0 0.0
  %4855 = vmatprep.subr.mxu0 0.0
  %4856 = vmatpush1.msra.mxu0 0.0
  %4857 = vmatprep.subr.mxu0 0.0
  %4858 = vmatpush1.msra.mxu0 0.0
  %4859 = vmatprep.subr.mxu0 0.0
  %4860 = vmatpush1.msra.mxu0 0.0
  %4861 = vmatprep.subr.mxu0 0.0
  %4862 = vmatpush1.msra.mxu0 0.0
  %4863 = vmatprep.subr.mxu0 0.0
  %4864 = vmatpush1.msra.mxu0 0.0
  %4865 = vmatprep.subr.mxu0 0.0
  %4866 = vmatpush1.msra.mxu0 0.0
  %4867 = vmatprep.subr.mxu0 0.0
  %4868 = vmatpush1.msra.mxu0 0.0
  %4869 = vmatprep.subr.mxu0 0.0
  %4870 = vmatpush1.msra.mxu0 0.0
  %4871 = vmatprep.subr.mxu0 0.0
  %4872 = vmatpush1.msra.mxu0 0.0
  %4873 = vmatprep.subr.mxu0 0.0
  %4874 = vmatpush1.msra.mxu0 0.0
  %4875 = vmatprep.subr.mxu0 0.0
  %4876 = vmatpush1.msra.mxu0 0.0
  %4877 = vmatprep.subr.mxu0 0.0
  %4878 = vmatpush1.msra.mxu0 0.0
  %4879 = vmatprep.subr.mxu0 0.0
  %4880 = vmatpush1.msra.mxu0 0.0
  %4881 = vmatprep.subr.mxu0 0.0
  %4882 = vmatpush1.msra.mxu0 0.0
  %4883 = vmatprep.subr.mxu0 0.0
  %4884 = vmatpush1.msra.mxu0 %v4591
  %4885 = vmatprep.subr.mxu0 0.0
  %4886 = vmatpush2.msra.mxu0 0.0
  %4887 = vmatprep.subr.mxu0 0.0
  %4888 = vmatpush2.msra.mxu0 0.0
  %4889 = vmatprep.subr.mxu0 0.0
  %4890 = vmatpush2.msra.mxu0 0.0
  %4891 = vmatprep.subr.mxu0 0.0
  %4892 = vmatpush2.msra.mxu0 0.0
  %4893 = vmatprep.subr.mxu0 0.0
  %4894 = vmatpush2.msra.mxu0 0.0
  %4895 = vmatprep.subr.mxu0 0.0
  %4896 = vmatpush2.msra.mxu0 0.0
  %4897 = vmatprep.subr.mxu0 0.0
  %4898 = vmatpush2.msra.mxu0 0.0
  %4899 = vmatprep.subr.mxu0 0.0
  %4900 = vmatpush2.msra.mxu0 0.0
  %4901 = vmatprep.subr.mxu0 0.0
  %4902 = vmatpush2.msra.mxu0 0.0
  %4903 = vmatprep.subr.mxu0 0.0
  %4904 = vmatpush2.msra.mxu0 0.0
  %4905 = vmatprep.subr.mxu0 0.0
  %4906 = vmatpush2.msra.mxu0 0.0
  %4907 = vmatprep.subr.mxu0 0.0
  %4908 = vmatpush2.msra.mxu0 0.0
  %4909 = vmatprep.subr.mxu0 0.0
  %4910 = vmatpush2.msra.mxu0 0.0
  %4911 = vmatprep.subr.mxu0 0.0
  %4912 = vmatpush2.msra.mxu0 0.0
  %4913 = vmatprep.subr.mxu0 0.0
  %4914 = vmatpush2.msra.mxu0 0.0
  %4915 = vmatprep.subr.mxu0 0.0
  %4916 = vmatpush2.msra.mxu0 0.0
  %4917 = vmatprep.mubr.f32.mxu0 0.0
  %4918 = vmatmul.mubr.f32.gmra.mxu0 %v4830
  %v4919 = vpop.f32.mrf.mxu0
  %v4920 = vadd.f32 0.0, %v4919
  %v4921 = vpop.f32.mrf.mxu0
  %4922 = vmatprep.mubr.f32.mxu0 0.0
  %4923 = vmatmul.mubr.f32.gmra.mxu0 %v4833
  %v4924 = vpop.f32.mrf.mxu0
  %v4925 = vadd.f32 0.0, %v4924
  %v4926 = vpop.f32.mrf.mxu0
  %4927 = vmatprep.mubr.f32.mxu0 0.0
  %4928 = vmatmul.mubr.f32.gmra.mxu0 %v4836
  %v4929 = vpop.f32.mrf.mxu0
  %v4930 = vadd.f32 0.0, %v4929
  %v4931 = vpop.f32.mrf.mxu0
  %4932 = vmatprep.mubr.f32.mxu0 0.0
  %4933 = vmatmul.mubr.f32.gmra.mxu0 %v4839
  %v4934 = vpop.f32.mrf.mxu0
  %v4935 = vadd.f32 0.0, %v4934
  %v4936 = vpop.f32.mrf.mxu0
  %4937 = vmatprep.mubr.f32.mxu0 0.0
  %4938 = vmatmul.mubr.f32.gmra.mxu0 %v4842
  %v4939 = vpop.f32.mrf.mxu0
  %v4940 = vadd.f32 0.0, %v4939
  %v4941 = vpop.f32.mrf.mxu0
  %4942 = vmatprep.mubr.f32.mxu0 0.0
  %4943 = vmatmul.mubr.f32.gmra.mxu0 %v4845
  %v4944 = vpop.f32.mrf.mxu0
  %v4945 = vadd.f32 0.0, %v4944
  %v4946 = vpop.f32.mrf.mxu0
  %4947 = vmatprep.mubr.f32.mxu0 0.0
  %4948 = vmatmul.mubr.f32.gmra.mxu0 %v4848
  %v4949 = vpop.f32.mrf.mxu0
  %v4950 = vadd.f32 0.0, %v4949
  %v4951 = vpop.f32.mrf.mxu0
  %4952 = vmatprep.mubr.f32.mxu0 0.0
  %4953 = vmatmul.mubr.f32.gmra.mxu0 %v4851
  %v4954 = vpop.f32.mrf.mxu0
  %v4955 = vadd.f32 0.0, %v4954
  %v4956 = vpop.f32.mrf.mxu0
  %4957 = vdwg.mxu0
  %4958 = vmatprep.subr.mxu0 0.0
  %4959 = vmatpush1.msra.mxu0 0.0
  %4960 = vmatprep.subr.mxu0 0.0
  %4961 = vmatpush1.msra.mxu0 0.0
  %4962 = vmatprep.subr.mxu0 0.0
  %4963 = vmatpush1.msra.mxu0 0.0
  %4964 = vmatprep.subr.mxu0 0.0
  %4965 = vmatpush1.msra.mxu0 0.0
  %4966 = vmatprep.subr.mxu0 0.0
  %4967 = vmatpush1.msra.mxu0 0.0
  %4968 = vmatprep.subr.mxu0 0.0
  %4969 = vmatpush1.msra.mxu0 0.0
  %4970 = vmatprep.subr.mxu0 0.0
  %4971 = vmatpush1.msra.mxu0 0.0
  %4972 = vmatprep.subr.mxu0 0.0
  %4973 = vmatpush1.msra.mxu0 0.0
  %4974 = vmatprep.subr.mxu0 0.0
  %4975 = vmatpush1.msra.mxu0 0.0
  %4976 = vmatprep.subr.mxu0 0.0
  %4977 = vmatpush1.msra.mxu0 0.0
  %4978 = vmatprep.subr.mxu0 0.0
  %4979 = vmatpush1.msra.mxu0 0.0
  %4980 = vmatprep.subr.mxu0 0.0
  %4981 = vmatpush1.msra.mxu0 0.0
  %4982 = vmatprep.subr.mxu0 0.0
  %4983 = vmatpush1.msra.mxu0 0.0
  %4984 = vmatprep.subr.mxu0 0.0
  %4985 = vmatpush1.msra.mxu0 0.0
  %4986 = vmatprep.subr.mxu0 0.0
  %4987 = vmatpush1.msra.mxu0 0.0
  %4988 = vmatprep.subr.mxu0 0.0
  %4989 = vmatpush1.msra.mxu0 %v4723
  %4990 = vmatprep.subr.mxu0 0.0
  %4991 = vmatpush2.msra.mxu0 0.0
  %4992 = vmatprep.subr.mxu0 0.0
  %4993 = vmatpush2.msra.mxu0 0.0
  %4994 = vmatprep.subr.mxu0 0.0
  %4995 = vmatpush2.msra.mxu0 0.0
  %4996 = vmatprep.subr.mxu0 0.0
  %4997 = vmatpush2.msra.mxu0 0.0
  %4998 = vmatprep.subr.mxu0 0.0
  %4999 = vmatpush2.msra.mxu0 0.0
  %5000 = vmatprep.subr.mxu0 0.0
  %5001 = vmatpush2.msra.mxu0 0.0
  %5002 = vmatprep.subr.mxu0 0.0
  %5003 = vmatpush2.msra.mxu0 0.0
  %5004 = vmatprep.subr.mxu0 0.0
  %5005 = vmatpush2.msra.mxu0 0.0
  %5006 = vmatprep.subr.mxu0 0.0
  %5007 = vmatpush2.msra.mxu0 0.0
  %5008 = vmatprep.subr.mxu0 0.0
  %5009 = vmatpush2.msra.mxu0 0.0
  %5010 = vmatprep.subr.mxu0 0.0
  %5011 = vmatpush2.msra.mxu0 0.0
  %5012 = vmatprep.subr.mxu0 0.0
  %5013 = vmatpush2.msra.mxu0 0.0
  %5014 = vmatprep.subr.mxu0 0.0
  %5015 = vmatpush2.msra.mxu0 0.0
  %5016 = vmatprep.subr.mxu0 0.0
  %5017 = vmatpush2.msra.mxu0 0.0
  %5018 = vmatprep.subr.mxu0 0.0
  %5019 = vmatpush2.msra.mxu0 0.0
  %5020 = vmatprep.subr.mxu0 0.0
  %5021 = vmatpush2.msra.mxu0 0.0
  %5022 = vmatprep.mubr.f32.mxu0 0.0
  %5023 = vmatmul.mubr.f32.gmra.mxu0 %v4830
  %v5024 = vpop.f32.mrf.mxu0
  %v5025 = vadd.f32 0.0, %v5024
  %v5026 = vpop.f32.mrf.mxu0
  %5027 = vmatprep.mubr.f32.mxu0 0.0
  %5028 = vmatmul.mubr.f32.gmra.mxu0 %v4833
  %v5029 = vpop.f32.mrf.mxu0
  %v5030 = vadd.f32 0.0, %v5029
  %v5031 = vpop.f32.mrf.mxu0
  %5032 = vmatprep.mubr.f32.mxu0 0.0
  %5033 = vmatmul.mubr.f32.gmra.mxu0 %v4836
  %v5034 = vpop.f32.mrf.mxu0
  %v5035 = vadd.f32 0.0, %v5034
  %v5036 = vpop.f32.mrf.mxu0
  %5037 = vmatprep.mubr.f32.mxu0 0.0
  %5038 = vmatmul.mubr.f32.gmra.mxu0 %v4839
  %v5039 = vpop.f32.mrf.mxu0
  %v5040 = vadd.f32 0.0, %v5039
  %v5041 = vpop.f32.mrf.mxu0
  %5042 = vmatprep.mubr.f32.mxu0 0.0
  %5043 = vmatmul.mubr.f32.gmra.mxu0 %v4842
  %v5044 = vpop.f32.mrf.mxu0
  %v5045 = vadd.f32 0.0, %v5044
  %v5046 = vpop.f32.mrf.mxu0
  %5047 = vmatprep.mubr.f32.mxu0 0.0
  %5048 = vmatmul.mubr.f32.gmra.mxu0 %v4845
  %v5049 = vpop.f32.mrf.mxu0
  %v5050 = vadd.f32 0.0, %v5049
  %v5051 = vpop.f32.mrf.mxu0
  %5052 = vmatprep.mubr.f32.mxu0 0.0
  %5053 = vmatmul.mubr.f32.gmra.mxu0 %v4848
  %v5054 = vpop.f32.mrf.mxu0
  %v5055 = vadd.f32 0.0, %v5054
  %v5056 = vpop.f32.mrf.mxu0
  %5057 = vmatprep.mubr.f32.mxu0 0.0
  %5058 = vmatmul.mubr.f32.gmra.mxu0 %v4851
  %v5059 = vpop.f32.mrf.mxu0
  %v5060 = vadd.f32 0.0, %v5059
  %v5061 = vpop.f32.mrf.mxu0
  %5062 = vdwg.mxu0
  %v5063 = vmax.f32 %v4684, %v4791
  %v5064 = vmax.f32 %v4689, %v4796
  %v5065 = vmax.f32 %v4694, %v4801
  %v5066 = vmax.f32 %v4699, %v4806
  %v5067 = vmax.f32 %v4704, %v4811
  %v5068 = vmax.f32 %v4709, %v4816
  %v5069 = vmax.f32 %v4714, %v4821
  %v5070 = vmax.f32 %v4719, %v4826
  %v5071 = vmax.f32 %v4920, %v5025
  %v5072 = vmax.f32 %v4925, %v5030
  %v5073 = vmax.f32 %v4930, %v5035
  %v5074 = vmax.f32 %v4935, %v5040
  %v5075 = vmax.f32 %v4940, %v5045
  %v5076 = vmax.f32 %v4945, %v5050
  %v5077 = vmax.f32 %v4950, %v5055
  %v5078 = vmax.f32 %v4955, %v5060
  %v5079 = vmax.f32 %v5063, %v5071
  %v5080 = vmax.f32 %v5064, %v5072
  %v5081 = vmax.f32 %v5065, %v5073
  %v5082 = vmax.f32 %v5066, %v5074
  %v5083 = vmax.f32 %v5067, %v5075
  %v5084 = vmax.f32 %v5068, %v5076
  %v5085 = vmax.f32 %v5069, %v5077
  %v5086 = vmax.f32 %v5070, %v5078
  %v5087 = vld [vmem:[%s10] sm:$0xff]
  %v5088 = vld [vmem:[%s10 + $0x8] sm:$0xff]
  %v5089 = vld [vmem:[%s10 + $0x10] sm:$0xff]
  %v5090 = vld [vmem:[%s10 + $0x18] sm:$0xff]
  %v5091 = vld [vmem:[%s10 + $0x20] sm:$0xff]
  %v5092 = vld [vmem:[%s10 + $0x28] sm:$0xff]
  %v5093 = vld [vmem:[%s10 + $0x30] sm:$0xff]
  %v5094 = vld [vmem:[%s10 + $0x38] sm:$0xff]
  %5096 = vset.pattern.permute.xlu0 0
  %5097 = vperm.xlu0 %5096, %v5087
  %v5098 = vpop.permute.xlu0 %5097
  %5101 = vset.pattern.permute.xlu0 0
  %5102 = vperm.xlu0 %5101, %v5088
  %v5103 = vpop.permute.xlu0 %5102
  %5106 = vset.pattern.permute.xlu0 0
  %5107 = vperm.xlu0 %5106, %v5089
  %v5108 = vpop.permute.xlu0 %5107
  %5111 = vset.pattern.permute.xlu0 0
  %5112 = vperm.xlu0 %5111, %v5090
  %v5113 = vpop.permute.xlu0 %5112
  %5116 = vset.pattern.permute.xlu0 0
  %5117 = vperm.xlu0 %5116, %v5091
  %v5118 = vpop.permute.xlu0 %5117
  %5121 = vset.pattern.permute.xlu0 0
  %5122 = vperm.xlu0 %5121, %v5092
  %v5123 = vpop.permute.xlu0 %5122
  %5126 = vset.pattern.permute.xlu0 0
  %5127 = vperm.xlu0 %5126, %v5093
  %v5128 = vpop.permute.xlu0 %5127
  %5131 = vset.pattern.permute.xlu0 0
  %5132 = vperm.xlu0 %5131, %v5094
  %v5133 = vpop.permute.xlu0 %5132
  %v5135 = vadd.f32 %v5079, %v5098
  %v5136 = vadd.f32 %v5080, %v5103
  %v5137 = vadd.f32 %v5081, %v5108
  %v5138 = vadd.f32 %v5082, %v5113
  %v5139 = vadd.f32 %v5083, %v5118
  %v5140 = vadd.f32 %v5084, %v5123
  %v5141 = vadd.f32 %v5085, %v5128
  %v5142 = vadd.f32 %v5086, %v5133
  %v5143 = vmax.f32 %v5135, 0.0
  %v5144 = vmax.f32 %v5136, 0.0
  %v5145 = vmax.f32 %v5137, 0.0
  %v5146 = vmax.f32 %v5138, 0.0
  %v5147 = vmax.f32 %v5139, 0.0
  %v5148 = vmax.f32 %v5140, 0.0
  %v5149 = vmax.f32 %v5141, 0.0
  %v5150 = vmax.f32 %v5142, 0.0
  %v5151 = vld [vmem:[%s11] sm:$0xff]
  %v5152 = vld [vmem:[%s11 + $0x8] sm:$0xff]
  %v5153 = vld [vmem:[%s11 + $0x10] sm:$0xff]
  %v5154 = vld [vmem:[%s11 + $0x18] sm:$0xff]
  %v5155 = vld [vmem:[%s11 + $0x20] sm:$0xff]
  %v5156 = vld [vmem:[%s11 + $0x28] sm:$0xff]
  %v5157 = vld [vmem:[%s11 + $0x30] sm:$0xff]
  %v5158 = vld [vmem:[%s11 + $0x38] sm:$0xff]
  %v5159 = vld [vmem:[%s11 + $0x40] sm:$0xff]
  %v5160 = vld [vmem:[%s11 + $0x48] sm:$0xff]
  %v5161 = vld [vmem:[%s11 + $0x50] sm:$0xff]
  %v5162 = vld [vmem:[%s11 + $0x58] sm:$0xff]
  %v5163 = vld [vmem:[%s11 + $0x60] sm:$0xff]
  %v5164 = vld [vmem:[%s11 + $0x68] sm:$0xff]
  %v5165 = vld [vmem:[%s11 + $0x70] sm:$0xff]
  %s5166 = scalar_lea.vmem %s11, 120
  %v5167 = vld [vmem:[%s5166] sm:$0xff]
  %v5168 = vld [vmem:[%s5166 + $0x8] sm:$0xff]
  %v5169 = vld [vmem:[%s5166 + $0x10] sm:$0xff]
  %v5170 = vld [vmem:[%s5166 + $0x18] sm:$0xff]
  %v5171 = vld [vmem:[%s5166 + $0x20] sm:$0xff]
  %v5172 = vld [vmem:[%s5166 + $0x28] sm:$0xff]
  %v5173 = vld [vmem:[%s5166 + $0x30] sm:$0xff]
  %v5174 = vld [vmem:[%s5166 + $0x38] sm:$0xff]
  %v5175 = vld [vmem:[%s5166 + $0x40] sm:$0xff]
  %v5176 = vld [vmem:[%s5166 + $0x48] sm:$0xff]
  %v5177 = vld [vmem:[%s5166 + $0x50] sm:$0xff]
  %v5178 = vld [vmem:[%s5166 + $0x58] sm:$0xff]
  %v5179 = vld [vmem:[%s5166 + $0x60] sm:$0xff]
  %v5180 = vld [vmem:[%s5166 + $0x68] sm:$0xff]
  %v5181 = vld [vmem:[%s5166 + $0x70] sm:$0xff]
  %5190 = vrot.lane.b32.xlu0 %v5143, 127
  %v5191 = vpop.permute.xlu0 %5190
  %5192 = vrot.lane.b32.xlu0 %v5144, 127
  %v5193 = vpop.permute.xlu0 %5192
  %5194 = vrot.lane.b32.xlu0 %v5145, 127
  %v5195 = vpop.permute.xlu0 %5194
  %5196 = vrot.lane.b32.xlu0 %v5146, 127
  %v5197 = vpop.permute.xlu0 %5196
  %5198 = vrot.lane.b32.xlu0 %v5147, 127
  %v5199 = vpop.permute.xlu0 %5198
  %5200 = vrot.lane.b32.xlu0 %v5148, 127
  %v5201 = vpop.permute.xlu0 %5200
  %5202 = vrot.lane.b32.xlu0 %v5149, 127
  %v5203 = vpop.permute.xlu0 %5202
  %5204 = vrot.lane.b32.xlu0 %v5150, 127
  %v5205 = vpop.permute.xlu0 %5204
  %vm5214 = vcmask 523264
  %v5216 = vsel %vm5214, %v5167, 0
  %v5219 = vsel %vm5214, %v5168, 0
  %v5222 = vsel %vm5214, %v5169, 0
  %v5225 = vsel %vm5214, %v5170, 0
  %v5228 = vsel %vm5214, %v5171, 0
  %v5231 = vsel %vm5214, %v5172, 0
  %v5234 = vsel %vm5214, %v5173, 0
  %v5237 = vsel %vm5214, %v5174, 0
  %v5240 = vsel %vm5214, %v5175, 0
  %v5243 = vsel %vm5214, %v5176, 0
  %v5246 = vsel %vm5214, %v5177, 0
  %v5249 = vsel %vm5214, %v5178, 0
  %v5252 = vsel %vm5214, %v5179, 0
  %v5255 = vsel %vm5214, %v5180, 0
  %v5258 = vsel %vm5214, %v5181, 0
  %5260 = vmatprep.subr.mxu0 0.0
  %5261 = vmatpush1.msra.mxu0 0.0
  %5262 = vmatprep.subr.mxu0 0.0
  %5263 = vmatpush1.msra.mxu0 0.0
  %5264 = vmatprep.subr.mxu0 0.0
  %5265 = vmatpush1.msra.mxu0 0.0
  %5266 = vmatprep.subr.mxu0 0.0
  %5267 = vmatpush1.msra.mxu0 0.0
  %5268 = vmatprep.subr.mxu0 0.0
  %5269 = vmatpush1.msra.mxu0 0.0
  %5270 = vmatprep.subr.mxu0 0.0
  %5271 = vmatpush1.msra.mxu0 0.0
  %5272 = vmatprep.subr.mxu0 0.0
  %5273 = vmatpush1.msra.mxu0 0.0
  %5274 = vmatprep.subr.mxu0 0.0
  %5275 = vmatpush1.msra.mxu0 0.0
  %5276 = vmatprep.subr.mxu0 0.0
  %5277 = vmatpush1.msra.mxu0 %v5205
  %5278 = vmatprep.subr.mxu0 0.0
  %5279 = vmatpush1.msra.mxu0 %v5203
  %5280 = vmatprep.subr.mxu0 0.0
  %5281 = vmatpush1.msra.mxu0 %v5201
  %5282 = vmatprep.subr.mxu0 0.0
  %5283 = vmatpush1.msra.mxu0 %v5199
  %5284 = vmatprep.subr.mxu0 0.0
  %5285 = vmatpush1.msra.mxu0 %v5197
  %5286 = vmatprep.subr.mxu0 0.0
  %5287 = vmatpush1.msra.mxu0 %v5195
  %5288 = vmatprep.subr.mxu0 0.0
  %5289 = vmatpush1.msra.mxu0 %v5193
  %5290 = vmatprep.subr.mxu0 0.0
  %5291 = vmatpush1.msra.mxu0 %v5191
  %5292 = vmatprep.subr.mxu0 0.0
  %5293 = vmatpush2.msra.mxu0 0.0
  %5294 = vmatprep.subr.mxu0 0.0
  %5295 = vmatpush2.msra.mxu0 0.0
  %5296 = vmatprep.subr.mxu0 0.0
  %5297 = vmatpush2.msra.mxu0 0.0
  %5298 = vmatprep.subr.mxu0 0.0
  %5299 = vmatpush2.msra.mxu0 0.0
  %5300 = vmatprep.subr.mxu0 0.0
  %5301 = vmatpush2.msra.mxu0 0.0
  %5302 = vmatprep.subr.mxu0 0.0
  %5303 = vmatpush2.msra.mxu0 0.0
  %5304 = vmatprep.subr.mxu0 0.0
  %5305 = vmatpush2.msra.mxu0 0.0
  %5306 = vmatprep.subr.mxu0 0.0
  %5307 = vmatpush2.msra.mxu0 0.0
  %5308 = vmatprep.subr.mxu0 0.0
  %5309 = vmatpush2.msra.mxu0 0.0
  %5310 = vmatprep.subr.mxu0 0.0
  %5311 = vmatpush2.msra.mxu0 0.0
  %5312 = vmatprep.subr.mxu0 0.0
  %5313 = vmatpush2.msra.mxu0 0.0
  %5314 = vmatprep.subr.mxu0 0.0
  %5315 = vmatpush2.msra.mxu0 0.0
  %5316 = vmatprep.subr.mxu0 0.0
  %5317 = vmatpush2.msra.mxu0 0.0
  %5318 = vmatprep.subr.mxu0 0.0
  %5319 = vmatpush2.msra.mxu0 0.0
  %5320 = vmatprep.subr.mxu0 0.0
  %5321 = vmatpush2.msra.mxu0 0.0
  %5322 = vmatprep.subr.mxu0 0.0
  %5323 = vmatpush2.msra.mxu0 0.0
  %5324 = vmatprep.mubr.f32.mxu0 0.0
  %5325 = vmatmul.mubr.f32.gmra.mxu0 %v5216
  %v5326 = vpop.f32.mrf.mxu0
  %v5327 = vadd.f32 0.0, %v5326
  %v5328 = vpop.f32.mrf.mxu0
  %5329 = vmatprep.mubr.f32.mxu0 0.0
  %5330 = vmatmul.mubr.f32.gmra.mxu0 %v5219
  %v5331 = vpop.f32.mrf.mxu0
  %v5332 = vadd.f32 0.0, %v5331
  %v5333 = vpop.f32.mrf.mxu0
  %5334 = vmatprep.mubr.f32.mxu0 0.0
  %5335 = vmatmul.mubr.f32.gmra.mxu0 %v5222
  %v5336 = vpop.f32.mrf.mxu0
  %v5337 = vadd.f32 0.0, %v5336
  %v5338 = vpop.f32.mrf.mxu0
  %5339 = vmatprep.mubr.f32.mxu0 0.0
  %5340 = vmatmul.mubr.f32.gmra.mxu0 %v5225
  %v5341 = vpop.f32.mrf.mxu0
  %v5342 = vadd.f32 0.0, %v5341
  %v5343 = vpop.f32.mrf.mxu0
  %5344 = vmatprep.mubr.f32.mxu0 0.0
  %5345 = vmatmul.mubr.f32.gmra.mxu0 %v5228
  %v5346 = vpop.f32.mrf.mxu0
  %v5347 = vadd.f32 0.0, %v5346
  %v5348 = vpop.f32.mrf.mxu0
  %5349 = vmatprep.mubr.f32.mxu0 0.0
  %5350 = vmatmul.mubr.f32.gmra.mxu0 %v5231
  %v5351 = vpop.f32.mrf.mxu0
  %v5352 = vadd.f32 0.0, %v5351
  %v5353 = vpop.f32.mrf.mxu0
  %5354 = vmatprep.mubr.f32.mxu0 0.0
  %5355 = vmatmul.mubr.f32.gmra.mxu0 %v5234
  %v5356 = vpop.f32.mrf.mxu0
  %v5357 = vadd.f32 0.0, %v5356
  %v5358 = vpop.f32.mrf.mxu0
  %5359 = vmatprep.mubr.f32.mxu0 0.0
  %5360 = vmatmul.mubr.f32.gmra.mxu0 %v5237
  %v5361 = vpop.f32.mrf.mxu0
  %v5362 = vadd.f32 0.0, %v5361
  %v5363 = vpop.f32.mrf.mxu0
  %5364 = vmatprep.mubr.f32.mxu0 0.0
  %5365 = vmatmul.mubr.f32.gmra.mxu0 %v5240
  %v5366 = vpop.f32.mrf.mxu0
  %v5367 = vadd.f32 0.0, %v5366
  %v5368 = vpop.f32.mrf.mxu0
  %5369 = vmatprep.mubr.f32.mxu0 0.0
  %5370 = vmatmul.mubr.f32.gmra.mxu0 %v5243
  %v5371 = vpop.f32.mrf.mxu0
  %v5372 = vadd.f32 0.0, %v5371
  %v5373 = vpop.f32.mrf.mxu0
  %5374 = vmatprep.mubr.f32.mxu0 0.0
  %5375 = vmatmul.mubr.f32.gmra.mxu0 %v5246
  %v5376 = vpop.f32.mrf.mxu0
  %v5377 = vadd.f32 0.0, %v5376
  %v5378 = vpop.f32.mrf.mxu0
  %5379 = vmatprep.mubr.f32.mxu0 0.0
  %5380 = vmatmul.mubr.f32.gmra.mxu0 %v5249
  %v5381 = vpop.f32.mrf.mxu0
  %v5382 = vadd.f32 0.0, %v5381
  %v5383 = vpop.f32.mrf.mxu0
  %5384 = vmatprep.mubr.f32.mxu0 0.0
  %5385 = vmatmul.mubr.f32.gmra.mxu0 %v5252
  %v5386 = vpop.f32.mrf.mxu0
  %v5387 = vadd.f32 0.0, %v5386
  %v5388 = vpop.f32.mrf.mxu0
  %5389 = vmatprep.mubr.f32.mxu0 0.0
  %5390 = vmatmul.mubr.f32.gmra.mxu0 %v5255
  %v5391 = vpop.f32.mrf.mxu0
  %v5392 = vadd.f32 0.0, %v5391
  %v5393 = vpop.f32.mrf.mxu0
  %5394 = vmatprep.mubr.f32.mxu0 0.0
  %5395 = vmatmul.mubr.f32.gmra.mxu0 %v5258
  %v5396 = vpop.f32.mrf.mxu0
  %v5397 = vadd.f32 0.0, %v5396
  %v5398 = vpop.f32.mrf.mxu0
  %5399 = vdwg.mxu0
  %v5401 = vsel %vm5214, %v5151, 0
  %v5404 = vsel %vm5214, %v5152, 0
  %v5407 = vsel %vm5214, %v5153, 0
  %v5410 = vsel %vm5214, %v5154, 0
  %v5413 = vsel %vm5214, %v5155, 0
  %v5416 = vsel %vm5214, %v5156, 0
  %v5419 = vsel %vm5214, %v5157, 0
  %v5422 = vsel %vm5214, %v5158, 0
  %v5425 = vsel %vm5214, %v5159, 0
  %v5428 = vsel %vm5214, %v5160, 0
  %v5431 = vsel %vm5214, %v5161, 0
  %v5434 = vsel %vm5214, %v5162, 0
  %v5437 = vsel %vm5214, %v5163, 0
  %v5440 = vsel %vm5214, %v5164, 0
  %v5443 = vsel %vm5214, %v5165, 0
  %5445 = vmatprep.subr.mxu0 0.0
  %5446 = vmatpush1.msra.mxu0 0.0
  %5447 = vmatprep.subr.mxu0 0.0
  %5448 = vmatpush1.msra.mxu0 0.0
  %5449 = vmatprep.subr.mxu0 0.0
  %5450 = vmatpush1.msra.mxu0 0.0
  %5451 = vmatprep.subr.mxu0 0.0
  %5452 = vmatpush1.msra.mxu0 0.0
  %5453 = vmatprep.subr.mxu0 0.0
  %5454 = vmatpush1.msra.mxu0 0.0
  %5455 = vmatprep.subr.mxu0 0.0
  %5456 = vmatpush1.msra.mxu0 0.0
  %5457 = vmatprep.subr.mxu0 0.0
  %5458 = vmatpush1.msra.mxu0 0.0
  %5459 = vmatprep.subr.mxu0 0.0
  %5460 = vmatpush1.msra.mxu0 0.0
  %5461 = vmatprep.subr.mxu0 0.0
  %5462 = vmatpush1.msra.mxu0 %v5150
  %5463 = vmatprep.subr.mxu0 0.0
  %5464 = vmatpush1.msra.mxu0 %v5149
  %5465 = vmatprep.subr.mxu0 0.0
  %5466 = vmatpush1.msra.mxu0 %v5148
  %5467 = vmatprep.subr.mxu0 0.0
  %5468 = vmatpush1.msra.mxu0 %v5147
  %5469 = vmatprep.subr.mxu0 0.0
  %5470 = vmatpush1.msra.mxu0 %v5146
  %5471 = vmatprep.subr.mxu0 0.0
  %5472 = vmatpush1.msra.mxu0 %v5145
  %5473 = vmatprep.subr.mxu0 0.0
  %5474 = vmatpush1.msra.mxu0 %v5144
  %5475 = vmatprep.subr.mxu0 0.0
  %5476 = vmatpush1.msra.mxu0 %v5143
  %5477 = vmatprep.subr.mxu0 0.0
  %5478 = vmatpush2.msra.mxu0 0.0
  %5479 = vmatprep.subr.mxu0 0.0
  %5480 = vmatpush2.msra.mxu0 0.0
  %5481 = vmatprep.subr.mxu0 0.0
  %5482 = vmatpush2.msra.mxu0 0.0
  %5483 = vmatprep.subr.mxu0 0.0
  %5484 = vmatpush2.msra.mxu0 0.0
  %5485 = vmatprep.subr.mxu0 0.0
  %5486 = vmatpush2.msra.mxu0 0.0
  %5487 = vmatprep.subr.mxu0 0.0
  %5488 = vmatpush2.msra.mxu0 0.0
  %5489 = vmatprep.subr.mxu0 0.0
  %5490 = vmatpush2.msra.mxu0 0.0
  %5491 = vmatprep.subr.mxu0 0.0
  %5492 = vmatpush2.msra.mxu0 0.0
  %5493 = vmatprep.subr.mxu0 0.0
  %5494 = vmatpush2.msra.mxu0 0.0
  %5495 = vmatprep.subr.mxu0 0.0
  %5496 = vmatpush2.msra.mxu0 0.0
  %5497 = vmatprep.subr.mxu0 0.0
  %5498 = vmatpush2.msra.mxu0 0.0
  %5499 = vmatprep.subr.mxu0 0.0
  %5500 = vmatpush2.msra.mxu0 0.0
  %5501 = vmatprep.subr.mxu0 0.0
  %5502 = vmatpush2.msra.mxu0 0.0
  %5503 = vmatprep.subr.mxu0 0.0
  %5504 = vmatpush2.msra.mxu0 0.0
  %5505 = vmatprep.subr.mxu0 0.0
  %5506 = vmatpush2.msra.mxu0 0.0
  %5507 = vmatprep.subr.mxu0 0.0
  %5508 = vmatpush2.msra.mxu0 0.0
  %5509 = vmatprep.mubr.f32.mxu0 0.0
  %5510 = vmatmul.mubr.f32.gmra.mxu0 %v5401
  %v5511 = vpop.f32.mrf.mxu0
  %v5512 = vadd.f32 %v5327, %v5511
  %v5513 = vpop.f32.mrf.mxu0
  %5514 = vmatprep.mubr.f32.mxu0 0.0
  %5515 = vmatmul.mubr.f32.gmra.mxu0 %v5404
  %v5516 = vpop.f32.mrf.mxu0
  %v5517 = vadd.f32 %v5332, %v5516
  %v5518 = vpop.f32.mrf.mxu0
  %5519 = vmatprep.mubr.f32.mxu0 0.0
  %5520 = vmatmul.mubr.f32.gmra.mxu0 %v5407
  %v5521 = vpop.f32.mrf.mxu0
  %v5522 = vadd.f32 %v5337, %v5521
  %v5523 = vpop.f32.mrf.mxu0
  %5524 = vmatprep.mubr.f32.mxu0 0.0
  %5525 = vmatmul.mubr.f32.gmra.mxu0 %v5410
  %v5526 = vpop.f32.mrf.mxu0
  %v5527 = vadd.f32 %v5342, %v5526
  %v5528 = vpop.f32.mrf.mxu0
  %5529 = vmatprep.mubr.f32.mxu0 0.0
  %5530 = vmatmul.mubr.f32.gmra.mxu0 %v5413
  %v5531 = vpop.f32.mrf.mxu0
  %v5532 = vadd.f32 %v5347, %v5531
  %v5533 = vpop.f32.mrf.mxu0
  %5534 = vmatprep.mubr.f32.mxu0 0.0
  %5535 = vmatmul.mubr.f32.gmra.mxu0 %v5416
  %v5536 = vpop.f32.mrf.mxu0
  %v5537 = vadd.f32 %v5352, %v5536
  %v5538 = vpop.f32.mrf.mxu0
  %5539 = vmatprep.mubr.f32.mxu0 0.0
  %5540 = vmatmul.mubr.f32.gmra.mxu0 %v5419
  %v5541 = vpop.f32.mrf.mxu0
  %v5542 = vadd.f32 %v5357, %v5541
  %v5543 = vpop.f32.mrf.mxu0
  %5544 = vmatprep.mubr.f32.mxu0 0.0
  %5545 = vmatmul.mubr.f32.gmra.mxu0 %v5422
  %v5546 = vpop.f32.mrf.mxu0
  %v5547 = vadd.f32 %v5362, %v5546
  %v5548 = vpop.f32.mrf.mxu0
  %5549 = vmatprep.mubr.f32.mxu0 0.0
  %5550 = vmatmul.mubr.f32.gmra.mxu0 %v5425
  %v5551 = vpop.f32.mrf.mxu0
  %v5552 = vadd.f32 %v5367, %v5551
  %v5553 = vpop.f32.mrf.mxu0
  %5554 = vmatprep.mubr.f32.mxu0 0.0
  %5555 = vmatmul.mubr.f32.gmra.mxu0 %v5428
  %v5556 = vpop.f32.mrf.mxu0
  %v5557 = vadd.f32 %v5372, %v5556
  %v5558 = vpop.f32.mrf.mxu0
  %5559 = vmatprep.mubr.f32.mxu0 0.0
  %5560 = vmatmul.mubr.f32.gmra.mxu0 %v5431
  %v5561 = vpop.f32.mrf.mxu0
  %v5562 = vadd.f32 %v5377, %v5561
  %v5563 = vpop.f32.mrf.mxu0
  %5564 = vmatprep.mubr.f32.mxu0 0.0
  %5565 = vmatmul.mubr.f32.gmra.mxu0 %v5434
  %v5566 = vpop.f32.mrf.mxu0
  %v5567 = vadd.f32 %v5382, %v5566
  %v5568 = vpop.f32.mrf.mxu0
  %5569 = vmatprep.mubr.f32.mxu0 0.0
  %5570 = vmatmul.mubr.f32.gmra.mxu0 %v5437
  %v5571 = vpop.f32.mrf.mxu0
  %v5572 = vadd.f32 %v5387, %v5571
  %v5573 = vpop.f32.mrf.mxu0
  %5574 = vmatprep.mubr.f32.mxu0 0.0
  %5575 = vmatmul.mubr.f32.gmra.mxu0 %v5440
  %v5576 = vpop.f32.mrf.mxu0
  %v5577 = vadd.f32 %v5392, %v5576
  %v5578 = vpop.f32.mrf.mxu0
  %5579 = vmatprep.mubr.f32.mxu0 0.0
  %5580 = vmatmul.mubr.f32.gmra.mxu0 %v5443
  %v5581 = vpop.f32.mrf.mxu0
  %v5582 = vadd.f32 %v5397, %v5581
  %v5583 = vpop.f32.mrf.mxu0
  %5584 = vdwg.mxu0
  %s5585 = scalar_lea.vmem %s11, 240
  %v5586 = vld [vmem:[%s5585] sm:$0xff]
  %v5587 = vld [vmem:[%s5585 + $0x8] sm:$0xff]
  %v5588 = vld [vmem:[%s5585 + $0x10] sm:$0xff]
  %v5589 = vld [vmem:[%s5585 + $0x18] sm:$0xff]
  %v5590 = vld [vmem:[%s5585 + $0x20] sm:$0xff]
  %v5591 = vld [vmem:[%s5585 + $0x28] sm:$0xff]
  %v5592 = vld [vmem:[%s5585 + $0x30] sm:$0xff]
  %v5593 = vld [vmem:[%s5585 + $0x38] sm:$0xff]
  %v5594 = vld [vmem:[%s5585 + $0x40] sm:$0xff]
  %v5595 = vld [vmem:[%s5585 + $0x48] sm:$0xff]
  %v5596 = vld [vmem:[%s5585 + $0x50] sm:$0xff]
  %v5597 = vld [vmem:[%s5585 + $0x58] sm:$0xff]
  %v5598 = vld [vmem:[%s5585 + $0x60] sm:$0xff]
  %v5599 = vld [vmem:[%s5585 + $0x68] sm:$0xff]
  %v5600 = vld [vmem:[%s5585 + $0x70] sm:$0xff]
  %5601 = vrot.lane.b32.xlu0 %v5143, 126
  %v5602 = vpop.permute.xlu0 %5601
  %5603 = vrot.lane.b32.xlu0 %v5144, 126
  %v5604 = vpop.permute.xlu0 %5603
  %5605 = vrot.lane.b32.xlu0 %v5145, 126
  %v5606 = vpop.permute.xlu0 %5605
  %5607 = vrot.lane.b32.xlu0 %v5146, 126
  %v5608 = vpop.permute.xlu0 %5607
  %5609 = vrot.lane.b32.xlu0 %v5147, 126
  %v5610 = vpop.permute.xlu0 %5609
  %5611 = vrot.lane.b32.xlu0 %v5148, 126
  %v5612 = vpop.permute.xlu0 %5611
  %5613 = vrot.lane.b32.xlu0 %v5149, 126
  %v5614 = vpop.permute.xlu0 %5613
  %5615 = vrot.lane.b32.xlu0 %v5150, 126
  %v5616 = vpop.permute.xlu0 %5615
  %v5626 = vsel %vm5214, %v5586, 0
  %v5629 = vsel %vm5214, %v5587, 0
  %v5632 = vsel %vm5214, %v5588, 0
  %v5635 = vsel %vm5214, %v5589, 0
  %v5638 = vsel %vm5214, %v5590, 0
  %v5641 = vsel %vm5214, %v5591, 0
  %v5644 = vsel %vm5214, %v5592, 0
  %v5647 = vsel %vm5214, %v5593, 0
  %v5650 = vsel %vm5214, %v5594, 0
  %v5653 = vsel %vm5214, %v5595, 0
  %v5656 = vsel %vm5214, %v5596, 0
  %v5659 = vsel %vm5214, %v5597, 0
  %v5662 = vsel %vm5214, %v5598, 0
  %v5665 = vsel %vm5214, %v5599, 0
  %v5668 = vsel %vm5214, %v5600, 0
  %5670 = vmatprep.subr.mxu0 0.0
  %5671 = vmatpush1.msra.mxu0 0.0
  %5672 = vmatprep.subr.mxu0 0.0
  %5673 = vmatpush1.msra.mxu0 0.0
  %5674 = vmatprep.subr.mxu0 0.0
  %5675 = vmatpush1.msra.mxu0 0.0
  %5676 = vmatprep.subr.mxu0 0.0
  %5677 = vmatpush1.msra.mxu0 0.0
  %5678 = vmatprep.subr.mxu0 0.0
  %5679 = vmatpush1.msra.mxu0 0.0
  %5680 = vmatprep.subr.mxu0 0.0
  %5681 = vmatpush1.msra.mxu0 0.0
  %5682 = vmatprep.subr.mxu0 0.0
  %5683 = vmatpush1.msra.mxu0 0.0
  %5684 = vmatprep.subr.mxu0 0.0
  %5685 = vmatpush1.msra.mxu0 0.0
  %5686 = vmatprep.subr.mxu0 0.0
  %5687 = vmatpush1.msra.mxu0 %v5616
  %5688 = vmatprep.subr.mxu0 0.0
  %5689 = vmatpush1.msra.mxu0 %v5614
  %5690 = vmatprep.subr.mxu0 0.0
  %5691 = vmatpush1.msra.mxu0 %v5612
  %5692 = vmatprep.subr.mxu0 0.0
  %5693 = vmatpush1.msra.mxu0 %v5610
  %5694 = vmatprep.subr.mxu0 0.0
  %5695 = vmatpush1.msra.mxu0 %v5608
  %5696 = vmatprep.subr.mxu0 0.0
  %5697 = vmatpush1.msra.mxu0 %v5606
  %5698 = vmatprep.subr.mxu0 0.0
  %5699 = vmatpush1.msra.mxu0 %v5604
  %5700 = vmatprep.subr.mxu0 0.0
  %5701 = vmatpush1.msra.mxu0 %v5602
  %5702 = vmatprep.subr.mxu0 0.0
  %5703 = vmatpush2.msra.mxu0 0.0
  %5704 = vmatprep.subr.mxu0 0.0
  %5705 = vmatpush2.msra.mxu0 0.0
  %5706 = vmatprep.subr.mxu0 0.0
  %5707 = vmatpush2.msra.mxu0 0.0
  %5708 = vmatprep.subr.mxu0 0.0
  %5709 = vmatpush2.msra.mxu0 0.0
  %5710 = vmatprep.subr.mxu0 0.0
  %5711 = vmatpush2.msra.mxu0 0.0
  %5712 = vmatprep.subr.mxu0 0.0
  %5713 = vmatpush2.msra.mxu0 0.0
  %5714 = vmatprep.subr.mxu0 0.0
  %5715 = vmatpush2.msra.mxu0 0.0
  %5716 = vmatprep.subr.mxu0 0.0
  %5717 = vmatpush2.msra.mxu0 0.0
  %5718 = vmatprep.subr.mxu0 0.0
  %5719 = vmatpush2.msra.mxu0 0.0
  %5720 = vmatprep.subr.mxu0 0.0
  %5721 = vmatpush2.msra.mxu0 0.0
  %5722 = vmatprep.subr.mxu0 0.0
  %5723 = vmatpush2.msra.mxu0 0.0
  %5724 = vmatprep.subr.mxu0 0.0
  %5725 = vmatpush2.msra.mxu0 0.0
  %5726 = vmatprep.subr.mxu0 0.0
  %5727 = vmatpush2.msra.mxu0 0.0
  %5728 = vmatprep.subr.mxu0 0.0
  %5729 = vmatpush2.msra.mxu0 0.0
  %5730 = vmatprep.subr.mxu0 0.0
  %5731 = vmatpush2.msra.mxu0 0.0
  %5732 = vmatprep.subr.mxu0 0.0
  %5733 = vmatpush2.msra.mxu0 0.0
  %5734 = vmatprep.mubr.f32.mxu0 0.0
  %5735 = vmatmul.mubr.f32.gmra.mxu0 %v5626
  %v5736 = vpop.f32.mrf.mxu0
  %v5737 = vadd.f32 0.0, %v5736
  %v5738 = vpop.f32.mrf.mxu0
  %5739 = vmatprep.mubr.f32.mxu0 0.0
  %5740 = vmatmul.mubr.f32.gmra.mxu0 %v5629
  %v5741 = vpop.f32.mrf.mxu0
  %v5742 = vadd.f32 0.0, %v5741
  %v5743 = vpop.f32.mrf.mxu0
  %5744 = vmatprep.mubr.f32.mxu0 0.0
  %5745 = vmatmul.mubr.f32.gmra.mxu0 %v5632
  %v5746 = vpop.f32.mrf.mxu0
  %v5747 = vadd.f32 0.0, %v5746
  %v5748 = vpop.f32.mrf.mxu0
  %5749 = vmatprep.mubr.f32.mxu0 0.0
  %5750 = vmatmul.mubr.f32.gmra.mxu0 %v5635
  %v5751 = vpop.f32.mrf.mxu0
  %v5752 = vadd.f32 0.0, %v5751
  %v5753 = vpop.f32.mrf.mxu0
  %5754 = vmatprep.mubr.f32.mxu0 0.0
  %5755 = vmatmul.mubr.f32.gmra.mxu0 %v5638
  %v5756 = vpop.f32.mrf.mxu0
  %v5757 = vadd.f32 0.0, %v5756
  %v5758 = vpop.f32.mrf.mxu0
  %5759 = vmatprep.mubr.f32.mxu0 0.0
  %5760 = vmatmul.mubr.f32.gmra.mxu0 %v5641
  %v5761 = vpop.f32.mrf.mxu0
  %v5762 = vadd.f32 0.0, %v5761
  %v5763 = vpop.f32.mrf.mxu0
  %5764 = vmatprep.mubr.f32.mxu0 0.0
  %5765 = vmatmul.mubr.f32.gmra.mxu0 %v5644
  %v5766 = vpop.f32.mrf.mxu0
  %v5767 = vadd.f32 0.0, %v5766
  %v5768 = vpop.f32.mrf.mxu0
  %5769 = vmatprep.mubr.f32.mxu0 0.0
  %5770 = vmatmul.mubr.f32.gmra.mxu0 %v5647
  %v5771 = vpop.f32.mrf.mxu0
  %v5772 = vadd.f32 0.0, %v5771
  %v5773 = vpop.f32.mrf.mxu0
  %5774 = vmatprep.mubr.f32.mxu0 0.0
  %5775 = vmatmul.mubr.f32.gmra.mxu0 %v5650
  %v5776 = vpop.f32.mrf.mxu0
  %v5777 = vadd.f32 0.0, %v5776
  %v5778 = vpop.f32.mrf.mxu0
  %5779 = vmatprep.mubr.f32.mxu0 0.0
  %5780 = vmatmul.mubr.f32.gmra.mxu0 %v5653
  %v5781 = vpop.f32.mrf.mxu0
  %v5782 = vadd.f32 0.0, %v5781
  %v5783 = vpop.f32.mrf.mxu0
  %5784 = vmatprep.mubr.f32.mxu0 0.0
  %5785 = vmatmul.mubr.f32.gmra.mxu0 %v5656
  %v5786 = vpop.f32.mrf.mxu0
  %v5787 = vadd.f32 0.0, %v5786
  %v5788 = vpop.f32.mrf.mxu0
  %5789 = vmatprep.mubr.f32.mxu0 0.0
  %5790 = vmatmul.mubr.f32.gmra.mxu0 %v5659
  %v5791 = vpop.f32.mrf.mxu0
  %v5792 = vadd.f32 0.0, %v5791
  %v5793 = vpop.f32.mrf.mxu0
  %5794 = vmatprep.mubr.f32.mxu0 0.0
  %5795 = vmatmul.mubr.f32.gmra.mxu0 %v5662
  %v5796 = vpop.f32.mrf.mxu0
  %v5797 = vadd.f32 0.0, %v5796
  %v5798 = vpop.f32.mrf.mxu0
  %5799 = vmatprep.mubr.f32.mxu0 0.0
  %5800 = vmatmul.mubr.f32.gmra.mxu0 %v5665
  %v5801 = vpop.f32.mrf.mxu0
  %v5802 = vadd.f32 0.0, %v5801
  %v5803 = vpop.f32.mrf.mxu0
  %5804 = vmatprep.mubr.f32.mxu0 0.0
  %5805 = vmatmul.mubr.f32.gmra.mxu0 %v5668
  %v5806 = vpop.f32.mrf.mxu0
  %v5807 = vadd.f32 0.0, %v5806
  %v5808 = vpop.f32.mrf.mxu0
  %5809 = vdwg.mxu0
  %v5810 = vadd.f32 %v5512, %v5737
  %v5811 = vadd.f32 %v5517, %v5742
  %v5812 = vadd.f32 %v5522, %v5747
  %v5813 = vadd.f32 %v5527, %v5752
  %v5814 = vadd.f32 %v5532, %v5757
  %v5815 = vadd.f32 %v5537, %v5762
  %v5816 = vadd.f32 %v5542, %v5767
  %v5817 = vadd.f32 %v5547, %v5772
  %v5818 = vadd.f32 %v5552, %v5777
  %v5819 = vadd.f32 %v5557, %v5782
  %v5820 = vadd.f32 %v5562, %v5787
  %v5821 = vadd.f32 %v5567, %v5792
  %v5822 = vadd.f32 %v5572, %v5797
  %v5823 = vadd.f32 %v5577, %v5802
  %v5824 = vadd.f32 %v5582, %v5807
  %s5825 = scalar_lea.vmem %s11, 360
  %v5826 = vld [vmem:[%s5825] sm:$0xff]
  %v5827 = vld [vmem:[%s5825 + $0x8] sm:$0xff]
  %v5828 = vld [vmem:[%s5825 + $0x10] sm:$0xff]
  %v5829 = vld [vmem:[%s5825 + $0x18] sm:$0xff]
  %v5830 = vld [vmem:[%s5825 + $0x20] sm:$0xff]
  %v5831 = vld [vmem:[%s5825 + $0x28] sm:$0xff]
  %v5832 = vld [vmem:[%s5825 + $0x30] sm:$0xff]
  %v5833 = vld [vmem:[%s5825 + $0x38] sm:$0xff]
  %v5834 = vld [vmem:[%s5825 + $0x40] sm:$0xff]
  %v5835 = vld [vmem:[%s5825 + $0x48] sm:$0xff]
  %v5836 = vld [vmem:[%s5825 + $0x50] sm:$0xff]
  %v5837 = vld [vmem:[%s5825 + $0x58] sm:$0xff]
  %v5838 = vld [vmem:[%s5825 + $0x60] sm:$0xff]
  %v5839 = vld [vmem:[%s5825 + $0x68] sm:$0xff]
  %v5840 = vld [vmem:[%s5825 + $0x70] sm:$0xff]
  %5841 = vrot.lane.b32.xlu0 %v5143, 125
  %v5842 = vpop.permute.xlu0 %5841
  %5843 = vrot.lane.b32.xlu0 %v5144, 125
  %v5844 = vpop.permute.xlu0 %5843
  %5845 = vrot.lane.b32.xlu0 %v5145, 125
  %v5846 = vpop.permute.xlu0 %5845
  %5847 = vrot.lane.b32.xlu0 %v5146, 125
  %v5848 = vpop.permute.xlu0 %5847
  %5849 = vrot.lane.b32.xlu0 %v5147, 125
  %v5850 = vpop.permute.xlu0 %5849
  %5851 = vrot.lane.b32.xlu0 %v5148, 125
  %v5852 = vpop.permute.xlu0 %5851
  %5853 = vrot.lane.b32.xlu0 %v5149, 125
  %v5854 = vpop.permute.xlu0 %5853
  %5855 = vrot.lane.b32.xlu0 %v5150, 125
  %v5856 = vpop.permute.xlu0 %5855
  %v5866 = vsel %vm5214, %v5826, 0
  %v5869 = vsel %vm5214, %v5827, 0
  %v5872 = vsel %vm5214, %v5828, 0
  %v5875 = vsel %vm5214, %v5829, 0
  %v5878 = vsel %vm5214, %v5830, 0
  %v5881 = vsel %vm5214, %v5831, 0
  %v5884 = vsel %vm5214, %v5832, 0
  %v5887 = vsel %vm5214, %v5833, 0
  %v5890 = vsel %vm5214, %v5834, 0
  %v5893 = vsel %vm5214, %v5835, 0
  %v5896 = vsel %vm5214, %v5836, 0
  %v5899 = vsel %vm5214, %v5837, 0
  %v5902 = vsel %vm5214, %v5838, 0
  %v5905 = vsel %vm5214, %v5839, 0
  %v5908 = vsel %vm5214, %v5840, 0
  %5910 = vmatprep.subr.mxu0 0.0
  %5911 = vmatpush1.msra.mxu0 0.0
  %5912 = vmatprep.subr.mxu0 0.0
  %5913 = vmatpush1.msra.mxu0 0.0
  %5914 = vmatprep.subr.mxu0 0.0
  %5915 = vmatpush1.msra.mxu0 0.0
  %5916 = vmatprep.subr.mxu0 0.0
  %5917 = vmatpush1.msra.mxu0 0.0
  %5918 = vmatprep.subr.mxu0 0.0
  %5919 = vmatpush1.msra.mxu0 0.0
  %5920 = vmatprep.subr.mxu0 0.0
  %5921 = vmatpush1.msra.mxu0 0.0
  %5922 = vmatprep.subr.mxu0 0.0
  %5923 = vmatpush1.msra.mxu0 0.0
  %5924 = vmatprep.subr.mxu0 0.0
  %5925 = vmatpush1.msra.mxu0 0.0
  %5926 = vmatprep.subr.mxu0 0.0
  %5927 = vmatpush1.msra.mxu0 %v5856
  %5928 = vmatprep.subr.mxu0 0.0
  %5929 = vmatpush1.msra.mxu0 %v5854
  %5930 = vmatprep.subr.mxu0 0.0
  %5931 = vmatpush1.msra.mxu0 %v5852
  %5932 = vmatprep.subr.mxu0 0.0
  %5933 = vmatpush1.msra.mxu0 %v5850
  %5934 = vmatprep.subr.mxu0 0.0
  %5935 = vmatpush1.msra.mxu0 %v5848
  %5936 = vmatprep.subr.mxu0 0.0
  %5937 = vmatpush1.msra.mxu0 %v5846
  %5938 = vmatprep.subr.mxu0 0.0
  %5939 = vmatpush1.msra.mxu0 %v5844
  %5940 = vmatprep.subr.mxu0 0.0
  %5941 = vmatpush1.msra.mxu0 %v5842
  %5942 = vmatprep.subr.mxu0 0.0
  %5943 = vmatpush2.msra.mxu0 0.0
  %5944 = vmatprep.subr.mxu0 0.0
  %5945 = vmatpush2.msra.mxu0 0.0
  %5946 = vmatprep.subr.mxu0 0.0
  %5947 = vmatpush2.msra.mxu0 0.0
  %5948 = vmatprep.subr.mxu0 0.0
  %5949 = vmatpush2.msra.mxu0 0.0
  %5950 = vmatprep.subr.mxu0 0.0
  %5951 = vmatpush2.msra.mxu0 0.0
  %5952 = vmatprep.subr.mxu0 0.0
  %5953 = vmatpush2.msra.mxu0 0.0
  %5954 = vmatprep.subr.mxu0 0.0
  %5955 = vmatpush2.msra.mxu0 0.0
  %5956 = vmatprep.subr.mxu0 0.0
  %5957 = vmatpush2.msra.mxu0 0.0
  %5958 = vmatprep.subr.mxu0 0.0
  %5959 = vmatpush2.msra.mxu0 0.0
  %5960 = vmatprep.subr.mxu0 0.0
  %5961 = vmatpush2.msra.mxu0 0.0
  %5962 = vmatprep.subr.mxu0 0.0
  %5963 = vmatpush2.msra.mxu0 0.0
  %5964 = vmatprep.subr.mxu0 0.0
  %5965 = vmatpush2.msra.mxu0 0.0
  %5966 = vmatprep.subr.mxu0 0.0
  %5967 = vmatpush2.msra.mxu0 0.0
  %5968 = vmatprep.subr.mxu0 0.0
  %5969 = vmatpush2.msra.mxu0 0.0
  %5970 = vmatprep.subr.mxu0 0.0
  %5971 = vmatpush2.msra.mxu0 0.0
  %5972 = vmatprep.subr.mxu0 0.0
  %5973 = vmatpush2.msra.mxu0 0.0
  %5974 = vmatprep.mubr.f32.mxu0 0.0
  %5975 = vmatmul.mubr.f32.gmra.mxu0 %v5866
  %v5976 = vpop.f32.mrf.mxu0
  %v5977 = vadd.f32 0.0, %v5976
  %v5978 = vpop.f32.mrf.mxu0
  %5979 = vmatprep.mubr.f32.mxu0 0.0
  %5980 = vmatmul.mubr.f32.gmra.mxu0 %v5869
  %v5981 = vpop.f32.mrf.mxu0
  %v5982 = vadd.f32 0.0, %v5981
  %v5983 = vpop.f32.mrf.mxu0
  %5984 = vmatprep.mubr.f32.mxu0 0.0
  %5985 = vmatmul.mubr.f32.gmra.mxu0 %v5872
  %v5986 = vpop.f32.mrf.mxu0
  %v5987 = vadd.f32 0.0, %v5986
  %v5988 = vpop.f32.mrf.mxu0
  %5989 = vmatprep.mubr.f32.mxu0 0.0
  %5990 = vmatmul.mubr.f32.gmra.mxu0 %v5875
  %v5991 = vpop.f32.mrf.mxu0
  %v5992 = vadd.f32 0.0, %v5991
  %v5993 = vpop.f32.mrf.mxu0
  %5994 = vmatprep.mubr.f32.mxu0 0.0
  %5995 = vmatmul.mubr.f32.gmra.mxu0 %v5878
  %v5996 = vpop.f32.mrf.mxu0
  %v5997 = vadd.f32 0.0, %v5996
  %v5998 = vpop.f32.mrf.mxu0
  %5999 = vmatprep.mubr.f32.mxu0 0.0
  %6000 = vmatmul.mubr.f32.gmra.mxu0 %v5881
  %v6001 = vpop.f32.mrf.mxu0
  %v6002 = vadd.f32 0.0, %v6001
  %v6003 = vpop.f32.mrf.mxu0
  %6004 = vmatprep.mubr.f32.mxu0 0.0
  %6005 = vmatmul.mubr.f32.gmra.mxu0 %v5884
  %v6006 = vpop.f32.mrf.mxu0
  %v6007 = vadd.f32 0.0, %v6006
  %v6008 = vpop.f32.mrf.mxu0
  %6009 = vmatprep.mubr.f32.mxu0 0.0
  %6010 = vmatmul.mubr.f32.gmra.mxu0 %v5887
  %v6011 = vpop.f32.mrf.mxu0
  %v6012 = vadd.f32 0.0, %v6011
  %v6013 = vpop.f32.mrf.mxu0
  %6014 = vmatprep.mubr.f32.mxu0 0.0
  %6015 = vmatmul.mubr.f32.gmra.mxu0 %v5890
  %v6016 = vpop.f32.mrf.mxu0
  %v6017 = vadd.f32 0.0, %v6016
  %v6018 = vpop.f32.mrf.mxu0
  %6019 = vmatprep.mubr.f32.mxu0 0.0
  %6020 = vmatmul.mubr.f32.gmra.mxu0 %v5893
  %v6021 = vpop.f32.mrf.mxu0
  %v6022 = vadd.f32 0.0, %v6021
  %v6023 = vpop.f32.mrf.mxu0
  %6024 = vmatprep.mubr.f32.mxu0 0.0
  %6025 = vmatmul.mubr.f32.gmra.mxu0 %v5896
  %v6026 = vpop.f32.mrf.mxu0
  %v6027 = vadd.f32 0.0, %v6026
  %v6028 = vpop.f32.mrf.mxu0
  %6029 = vmatprep.mubr.f32.mxu0 0.0
  %6030 = vmatmul.mubr.f32.gmra.mxu0 %v5899
  %v6031 = vpop.f32.mrf.mxu0
  %v6032 = vadd.f32 0.0, %v6031
  %v6033 = vpop.f32.mrf.mxu0
  %6034 = vmatprep.mubr.f32.mxu0 0.0
  %6035 = vmatmul.mubr.f32.gmra.mxu0 %v5902
  %v6036 = vpop.f32.mrf.mxu0
  %v6037 = vadd.f32 0.0, %v6036
  %v6038 = vpop.f32.mrf.mxu0
  %6039 = vmatprep.mubr.f32.mxu0 0.0
  %6040 = vmatmul.mubr.f32.gmra.mxu0 %v5905
  %v6041 = vpop.f32.mrf.mxu0
  %v6042 = vadd.f32 0.0, %v6041
  %v6043 = vpop.f32.mrf.mxu0
  %6044 = vmatprep.mubr.f32.mxu0 0.0
  %6045 = vmatmul.mubr.f32.gmra.mxu0 %v5908
  %v6046 = vpop.f32.mrf.mxu0
  %v6047 = vadd.f32 0.0, %v6046
  %v6048 = vpop.f32.mrf.mxu0
  %6049 = vdwg.mxu0
  %v6050 = vadd.f32 %v5810, %v5977
  %v6051 = vadd.f32 %v5811, %v5982
  %v6052 = vadd.f32 %v5812, %v5987
  %v6053 = vadd.f32 %v5813, %v5992
  %v6054 = vadd.f32 %v5814, %v5997
  %v6055 = vadd.f32 %v5815, %v6002
  %v6056 = vadd.f32 %v5816, %v6007
  %v6057 = vadd.f32 %v5817, %v6012
  %v6058 = vadd.f32 %v5818, %v6017
  %v6059 = vadd.f32 %v5819, %v6022
  %v6060 = vadd.f32 %v5820, %v6027
  %v6061 = vadd.f32 %v5821, %v6032
  %v6062 = vadd.f32 %v5822, %v6037
  %v6063 = vadd.f32 %v5823, %v6042
  %v6064 = vadd.f32 %v5824, %v6047
  %v6065 = vld [vmem:[%s12] sm:$0xff]
  %v6066 = vld [vmem:[%s12 + $0x8] sm:$0xff]
  %v6067 = vld [vmem:[%s12 + $0x10] sm:$0xff]
  %v6068 = vld [vmem:[%s12 + $0x18] sm:$0xff]
  %v6069 = vld [vmem:[%s12 + $0x20] sm:$0xff]
  %v6070 = vld [vmem:[%s12 + $0x28] sm:$0xff]
  %v6071 = vld [vmem:[%s12 + $0x30] sm:$0xff]
  %v6072 = vld [vmem:[%s12 + $0x38] sm:$0xff]
  %v6073 = vld [vmem:[%s12 + $0x40] sm:$0xff]
  %v6074 = vld [vmem:[%s12 + $0x48] sm:$0xff]
  %v6075 = vld [vmem:[%s12 + $0x50] sm:$0xff]
  %v6076 = vld [vmem:[%s12 + $0x58] sm:$0xff]
  %v6077 = vld [vmem:[%s12 + $0x60] sm:$0xff]
  %v6078 = vld [vmem:[%s12 + $0x68] sm:$0xff]
  %v6079 = vld [vmem:[%s12 + $0x70] sm:$0xff]
  %v6080 = vadd.f32 %v6050, %v6065
  %v6081 = vadd.f32 %v6051, %v6066
  %v6082 = vadd.f32 %v6052, %v6067
  %v6083 = vadd.f32 %v6053, %v6068
  %v6084 = vadd.f32 %v6054, %v6069
  %v6085 = vadd.f32 %v6055, %v6070
  %v6086 = vadd.f32 %v6056, %v6071
  %v6087 = vadd.f32 %v6057, %v6072
  %v6088 = vadd.f32 %v6058, %v6073
  %v6089 = vadd.f32 %v6059, %v6074
  %v6090 = vadd.f32 %v6060, %v6075
  %v6091 = vadd.f32 %v6061, %v6076
  %v6092 = vadd.f32 %v6062, %v6077
  %v6093 = vadd.f32 %v6063, %v6078
  %v6094 = vadd.f32 %v6064, %v6079
  %v6095 = vmax.f32 %v6080, 0.0
  %v6096 = vmax.f32 %v6081, 0.0
  %v6097 = vmax.f32 %v6082, 0.0
  %v6098 = vmax.f32 %v6083, 0.0
  %v6099 = vmax.f32 %v6084, 0.0
  %v6100 = vmax.f32 %v6085, 0.0
  %v6101 = vmax.f32 %v6086, 0.0
  %v6102 = vmax.f32 %v6087, 0.0
  %v6103 = vmax.f32 %v6088, 0.0
  %v6104 = vmax.f32 %v6089, 0.0
  %v6105 = vmax.f32 %v6090, 0.0
  %v6106 = vmax.f32 %v6091, 0.0
  %v6107 = vmax.f32 %v6092, 0.0
  %v6108 = vmax.f32 %v6093, 0.0
  %v6109 = vmax.f32 %v6094, 0.0
  %v6110 = vld [vmem:[%s13] sm:$0xff]
  %v6111 = vld [vmem:[%s13 + $0x8] sm:$0xff]
  %v6112 = vld [vmem:[%s13 + $0x10] sm:$0xff]
  %v6113 = vld [vmem:[%s13 + $0x18] sm:$0xff]
  %v6114 = vld [vmem:[%s13 + $0x20] sm:$0xff]
  %v6115 = vld [vmem:[%s13 + $0x28] sm:$0xff]
  %v6116 = vld [vmem:[%s13 + $0x30] sm:$0xff]
  %v6117 = vld [vmem:[%s13 + $0x38] sm:$0xff]
  %v6118 = vld [vmem:[%s13 + $0x40] sm:$0xff]
  %v6119 = vld [vmem:[%s13 + $0x48] sm:$0xff]
  %v6120 = vld [vmem:[%s13 + $0x50] sm:$0xf]
  %v6121 = vld [vmem:[%s14] sm:$0xff]
  %v6122 = vld [vmem:[%s14 + $0x8] sm:$0xff]
  %v6123 = vld [vmem:[%s14 + $0x10] sm:$0xff]
  %v6124 = vld [vmem:[%s14 + $0x18] sm:$0xff]
  %v6125 = vld [vmem:[%s14 + $0x20] sm:$0xff]
  %v6126 = vld [vmem:[%s14 + $0x28] sm:$0xff]
  %v6127 = vld [vmem:[%s14 + $0x30] sm:$0xff]
  %v6128 = vld [vmem:[%s14 + $0x38] sm:$0xff]
  %v6129 = vld [vmem:[%s14 + $0x40] sm:$0xff]
  %v6130 = vld [vmem:[%s14 + $0x48] sm:$0xff]
  %v6131 = vld [vmem:[%s14 + $0x50] sm:$0xf]
  %vm6132 = vcmask 982016
  %v6134 = vsel %vm6132, %v6110, 0
  %v6137 = vsel %vm6132, %v6111, 0
  %v6140 = vsel %vm6132, %v6112, 0
  %v6143 = vsel %vm6132, %v6113, 0
  %v6146 = vsel %vm6132, %v6114, 0
  %v6149 = vsel %vm6132, %v6115, 0
  %v6152 = vsel %vm6132, %v6116, 0
  %v6155 = vsel %vm6132, %v6117, 0
  %v6158 = vsel %vm6132, %v6118, 0
  %v6161 = vsel %vm6132, %v6119, 0
  %v6164 = vsel %vm6132, %v6120, 0
  %6166 = vmatprep.subr.mxu0 0.0
  %6167 = vmatpush1.msra.mxu0 0.0
  %6168 = vmatprep.subr.mxu0 0.0
  %6169 = vmatpush1.msra.mxu0 %v6109
  %6170 = vmatprep.subr.mxu0 0.0
  %6171 = vmatpush1.msra.mxu0 %v6108
  %6172 = vmatprep.subr.mxu0 0.0
  %6173 = vmatpush1.msra.mxu0 %v6107
  %6174 = vmatprep.subr.mxu0 0.0
  %6175 = vmatpush1.msra.mxu0 %v6106
  %6176 = vmatprep.subr.mxu0 0.0
  %6177 = vmatpush1.msra.mxu0 %v6105
  %6178 = vmatprep.subr.mxu0 0.0
  %6179 = vmatpush1.msra.mxu0 %v6104
  %6180 = vmatprep.subr.mxu0 0.0
  %6181 = vmatpush1.msra.mxu0 %v6103
  %6182 = vmatprep.subr.mxu0 0.0
  %6183 = vmatpush1.msra.mxu0 %v6102
  %6184 = vmatprep.subr.mxu0 0.0
  %6185 = vmatpush1.msra.mxu0 %v6101
  %6186 = vmatprep.subr.mxu0 0.0
  %6187 = vmatpush1.msra.mxu0 %v6100
  %6188 = vmatprep.subr.mxu0 0.0
  %6189 = vmatpush1.msra.mxu0 %v6099
  %6190 = vmatprep.subr.mxu0 0.0
  %6191 = vmatpush1.msra.mxu0 %v6098
  %6192 = vmatprep.subr.mxu0 0.0
  %6193 = vmatpush1.msra.mxu0 %v6097
  %6194 = vmatprep.subr.mxu0 0.0
  %6195 = vmatpush1.msra.mxu0 %v6096
  %6196 = vmatprep.subr.mxu0 0.0
  %6197 = vmatpush1.msra.mxu0 %v6095
  %6198 = vmatprep.subr.mxu0 0.0
  %6199 = vmatpush2.msra.mxu0 0.0
  %6200 = vmatprep.subr.mxu0 0.0
  %6201 = vmatpush2.msra.mxu0 0.0
  %6202 = vmatprep.subr.mxu0 0.0
  %6203 = vmatpush2.msra.mxu0 0.0
  %6204 = vmatprep.subr.mxu0 0.0
  %6205 = vmatpush2.msra.mxu0 0.0
  %6206 = vmatprep.subr.mxu0 0.0
  %6207 = vmatpush2.msra.mxu0 0.0
  %6208 = vmatprep.subr.mxu0 0.0
  %6209 = vmatpush2.msra.mxu0 0.0
  %6210 = vmatprep.subr.mxu0 0.0
  %6211 = vmatpush2.msra.mxu0 0.0
  %6212 = vmatprep.subr.mxu0 0.0
  %6213 = vmatpush2.msra.mxu0 0.0
  %6214 = vmatprep.subr.mxu0 0.0
  %6215 = vmatpush2.msra.mxu0 0.0
  %6216 = vmatprep.subr.mxu0 0.0
  %6217 = vmatpush2.msra.mxu0 0.0
  %6218 = vmatprep.subr.mxu0 0.0
  %6219 = vmatpush2.msra.mxu0 0.0
  %6220 = vmatprep.subr.mxu0 0.0
  %6221 = vmatpush2.msra.mxu0 0.0
  %6222 = vmatprep.subr.mxu0 0.0
  %6223 = vmatpush2.msra.mxu0 0.0
  %6224 = vmatprep.subr.mxu0 0.0
  %6225 = vmatpush2.msra.mxu0 0.0
  %6226 = vmatprep.subr.mxu0 0.0
  %6227 = vmatpush2.msra.mxu0 0.0
  %6228 = vmatprep.subr.mxu0 0.0
  %6229 = vmatpush2.msra.mxu0 0.0
  %6230 = vmatprep.mubr.f32.mxu0 0.0
  %6231 = vmatmul.mubr.f32.gmra.mxu0 %v6134
  %v6232 = vpop.f32.mrf.mxu0
  %v6233 = vadd.f32 %v6121, %v6232
  %v6234 = vpop.f32.mrf.mxu0
  %6235 = vmatprep.mubr.f32.mxu0 0.0
  %6236 = vmatmul.mubr.f32.gmra.mxu0 %v6137
  %v6237 = vpop.f32.mrf.mxu0
  %v6238 = vadd.f32 %v6122, %v6237
  %v6239 = vpop.f32.mrf.mxu0
  %6240 = vmatprep.mubr.f32.mxu0 0.0
  %6241 = vmatmul.mubr.f32.gmra.mxu0 %v6140
  %v6242 = vpop.f32.mrf.mxu0
  %v6243 = vadd.f32 %v6123, %v6242
  %v6244 = vpop.f32.mrf.mxu0
  %6245 = vmatprep.mubr.f32.mxu0 0.0
  %6246 = vmatmul.mubr.f32.gmra.mxu0 %v6143
  %v6247 = vpop.f32.mrf.mxu0
  %v6248 = vadd.f32 %v6124, %v6247
  %v6249 = vpop.f32.mrf.mxu0
  %6250 = vmatprep.mubr.f32.mxu0 0.0
  %6251 = vmatmul.mubr.f32.gmra.mxu0 %v6146
  %v6252 = vpop.f32.mrf.mxu0
  %v6253 = vadd.f32 %v6125, %v6252
  %v6254 = vpop.f32.mrf.mxu0
  %6255 = vmatprep.mubr.f32.mxu0 0.0
  %6256 = vmatmul.mubr.f32.gmra.mxu0 %v6149
  %v6257 = vpop.f32.mrf.mxu0
  %v6258 = vadd.f32 %v6126, %v6257
  %v6259 = vpop.f32.mrf.mxu0
  %6260 = vmatprep.mubr.f32.mxu0 0.0
  %6261 = vmatmul.mubr.f32.gmra.mxu0 %v6152
  %v6262 = vpop.f32.mrf.mxu0
  %v6263 = vadd.f32 %v6127, %v6262
  %v6264 = vpop.f32.mrf.mxu0
  %6265 = vmatprep.mubr.f32.mxu0 0.0
  %6266 = vmatmul.mubr.f32.gmra.mxu0 %v6155
  %v6267 = vpop.f32.mrf.mxu0
  %v6268 = vadd.f32 %v6128, %v6267
  %v6269 = vpop.f32.mrf.mxu0
  %6270 = vmatprep.mubr.f32.mxu0 0.0
  %6271 = vmatmul.mubr.f32.gmra.mxu0 %v6158
  %v6272 = vpop.f32.mrf.mxu0
  %v6273 = vadd.f32 %v6129, %v6272
  %v6274 = vpop.f32.mrf.mxu0
  %6275 = vmatprep.mubr.f32.mxu0 0.0
  %6276 = vmatmul.mubr.f32.gmra.mxu0 %v6161
  %v6277 = vpop.f32.mrf.mxu0
  %v6278 = vadd.f32 %v6130, %v6277
  %v6279 = vpop.f32.mrf.mxu0
  %6280 = vmatprep.mubr.f32.mxu0 0.0
  %6281 = vmatmul.mubr.f32.gmra.mxu0 %v6164
  %v6282 = vpop.f32.mrf.mxu0
  %v6283 = vadd.f32 %v6131, %v6282
  %v6284 = vpop.f32.mrf.mxu0
  %6285 = vdwg.mxu0
  %v6286 = vmax.f32 %v6233, 0.0
  %v6287 = vmax.f32 %v6238, 0.0
  %v6288 = vmax.f32 %v6243, 0.0
  %v6289 = vmax.f32 %v6248, 0.0
  %v6290 = vmax.f32 %v6253, 0.0
  %v6291 = vmax.f32 %v6258, 0.0
  %v6292 = vmax.f32 %v6263, 0.0
  %v6293 = vmax.f32 %v6268, 0.0
  %v6294 = vmax.f32 %v6273, 0.0
  %v6295 = vmax.f32 %v6278, 0.0
  %v6296 = vmax.f32 %v6283, 0.0
  %v6297 = vld [vmem:[%s15] sm:$0xff]
  %v6298 = vld [vmem:[%s15 + $0x8] sm:$0x3]
  %v6299 = vld [vmem:[%s16] sm:$0xff]
  %v6300 = vld [vmem:[%s16 + $0x8] sm:$0x3]
  %vm6301 = vcmask 687104
  %v6303 = vsel %vm6301, %v6297, 0
  %v6306 = vsel %vm6301, %v6298, 0
  %v6309 = vsel %vm77, %v6296, 0
  %6311 = vmatprep.subr.mxu0 0.0
  %6312 = vmatpush1.msra.mxu0 0.0
  %6313 = vmatprep.subr.mxu0 0.0
  %6314 = vmatpush1.msra.mxu0 0.0
  %6315 = vmatprep.subr.mxu0 0.0
  %6316 = vmatpush1.msra.mxu0 0.0
  %6317 = vmatprep.subr.mxu0 0.0
  %6318 = vmatpush1.msra.mxu0 0.0
  %6319 = vmatprep.subr.mxu0 0.0
  %6320 = vmatpush1.msra.mxu0 0.0
  %6321 = vmatprep.subr.mxu0 0.0
  %6322 = vmatpush1.msra.mxu0 %v6309
  %6323 = vmatprep.subr.mxu0 0.0
  %6324 = vmatpush1.msra.mxu0 %v6295
  %6325 = vmatprep.subr.mxu0 0.0
  %6326 = vmatpush1.msra.mxu0 %v6294
  %6327 = vmatprep.subr.mxu0 0.0
  %6328 = vmatpush1.msra.mxu0 %v6293
  %6329 = vmatprep.subr.mxu0 0.0
  %6330 = vmatpush1.msra.mxu0 %v6292
  %6331 = vmatprep.subr.mxu0 0.0
  %6332 = vmatpush1.msra.mxu0 %v6291
  %6333 = vmatprep.subr.mxu0 0.0
  %6334 = vmatpush1.msra.mxu0 %v6290
  %6335 = vmatprep.subr.mxu0 0.0
  %6336 = vmatpush1.msra.mxu0 %v6289
  %6337 = vmatprep.subr.mxu0 0.0
  %6338 = vmatpush1.msra.mxu0 %v6288
  %6339 = vmatprep.subr.mxu0 0.0
  %6340 = vmatpush1.msra.mxu0 %v6287
  %6341 = vmatprep.subr.mxu0 0.0
  %6342 = vmatpush1.msra.mxu0 %v6286
  %6343 = vmatprep.subr.mxu0 0.0
  %6344 = vmatpush2.msra.mxu0 0.0
  %6345 = vmatprep.subr.mxu0 0.0
  %6346 = vmatpush2.msra.mxu0 0.0
  %6347 = vmatprep.subr.mxu0 0.0
  %6348 = vmatpush2.msra.mxu0 0.0
  %6349 = vmatprep.subr.mxu0 0.0
  %6350 = vmatpush2.msra.mxu0 0.0
  %6351 = vmatprep.subr.mxu0 0.0
  %6352 = vmatpush2.msra.mxu0 0.0
  %6353 = vmatprep.subr.mxu0 0.0
  %6354 = vmatpush2.msra.mxu0 0.0
  %6355 = vmatprep.subr.mxu0 0.0
  %6356 = vmatpush2.msra.mxu0 0.0
  %6357 = vmatprep.subr.mxu0 0.0
  %6358 = vmatpush2.msra.mxu0 0.0
  %6359 = vmatprep.subr.mxu0 0.0
  %6360 = vmatpush2.msra.mxu0 0.0
  %6361 = vmatprep.subr.mxu0 0.0
  %6362 = vmatpush2.msra.mxu0 0.0
  %6363 = vmatprep.subr.mxu0 0.0
  %6364 = vmatpush2.msra.mxu0 0.0
  %6365 = vmatprep.subr.mxu0 0.0
  %6366 = vmatpush2.msra.mxu0 0.0
  %6367 = vmatprep.subr.mxu0 0.0
  %6368 = vmatpush2.msra.mxu0 0.0
  %6369 = vmatprep.subr.mxu0 0.0
  %6370 = vmatpush2.msra.mxu0 0.0
  %6371 = vmatprep.subr.mxu0 0.0
  %6372 = vmatpush2.msra.mxu0 0.0
  %6373 = vmatprep.subr.mxu0 0.0
  %6374 = vmatpush2.msra.mxu0 0.0
  %6375 = vmatprep.mubr.f32.mxu0 0.0
  %6376 = vmatmul.mubr.f32.gmra.mxu0 %v6303
  %v6377 = vpop.f32.mrf.mxu0
  %v6378 = vadd.f32 %v6299, %v6377
  %v6379 = vpop.f32.mrf.mxu0
  %6380 = vmatprep.mubr.f32.mxu0 0.0
  %6381 = vmatmul.mubr.f32.gmra.mxu0 %v6306
  %v6382 = vpop.f32.mrf.mxu0
  %v6383 = vadd.f32 %v6300, %v6382
  %v6384 = vpop.f32.mrf.mxu0
  %6385 = vdwg.mxu0
  %vm6386 = vcmask 7168
  %6387 = vst.msk [vmem:[%s17] sm:$0xff] %vm6386, %v6378
  %vm6388 = vcmask 1024
  %6389 = vst.msk [vmem:[%s17 + $0x8] sm:$0x3] %vm6388, %v6383
  %s6390 = scalar_lea.vmem %s0, 32
  %v6391 = vld [vmem:[%s6390] sm:$0xff]
  %v6392 = vld [vmem:[%s6390 + $0x8] sm:$0xff]
  %v6393 = vld [vmem:[%s6390 + $0x10] sm:$0xff]
  %v6394 = vld [vmem:[%s6390 + $0x18] sm:$0xf]
  %v6395 = vld [vmem:[%s2] sm:$0xff]
  %v6396 = vld [vmem:[%s2 + $0x8] sm:$0xff]
  %v6397 = vld [vmem:[%s2 + $0x10] sm:$0xff]
  %v6398 = vld [vmem:[%s2 + $0x18] sm:$0xf]
  %v6400 = vsel %vm64, %v6391, 0
  %v6403 = vsel %vm64, %v6392, 0
  %v6406 = vsel %vm64, %v6393, 0
  %v6409 = vsel %vm64, %v6394, 0
  %v6412 = vsel %vm77, %v6398, 0
  %6414 = vmatprep.subr.mxu0 0.0
  %6415 = vmatpush1.msra.mxu0 0.0
  %6416 = vmatprep.subr.mxu0 0.0
  %6417 = vmatpush1.msra.mxu0 0.0
  %6418 = vmatprep.subr.mxu0 0.0
  %6419 = vmatpush1.msra.mxu0 0.0
  %6420 = vmatprep.subr.mxu0 0.0
  %6421 = vmatpush1.msra.mxu0 0.0
  %6422 = vmatprep.subr.mxu0 0.0
  %6423 = vmatpush1.msra.mxu0 0.0
  %6424 = vmatprep.subr.mxu0 0.0
  %6425 = vmatpush1.msra.mxu0 0.0
  %6426 = vmatprep.subr.mxu0 0.0
  %6427 = vmatpush1.msra.mxu0 0.0
  %6428 = vmatprep.subr.mxu0 0.0
  %6429 = vmatpush1.msra.mxu0 0.0
  %6430 = vmatprep.subr.mxu0 0.0
  %6431 = vmatpush1.msra.mxu0 0.0
  %6432 = vmatprep.subr.mxu0 0.0
  %6433 = vmatpush1.msra.mxu0 0.0
  %6434 = vmatprep.subr.mxu0 0.0
  %6435 = vmatpush1.msra.mxu0 0.0
  %6436 = vmatprep.subr.mxu0 0.0
  %6437 = vmatpush1.msra.mxu0 0.0
  %6438 = vmatprep.subr.mxu0 0.0
  %6439 = vmatpush1.msra.mxu0 %v6412
  %6440 = vmatprep.subr.mxu0 0.0
  %6441 = vmatpush1.msra.mxu0 %v6397
  %6442 = vmatprep.subr.mxu0 0.0
  %6443 = vmatpush1.msra.mxu0 %v6396
  %6444 = vmatprep.subr.mxu0 0.0
  %6445 = vmatpush1.msra.mxu0 %v6395
  %6446 = vmatprep.subr.mxu0 0.0
  %6447 = vmatpush2.msra.mxu0 0.0
  %6448 = vmatprep.subr.mxu0 0.0
  %6449 = vmatpush2.msra.mxu0 0.0
  %6450 = vmatprep.subr.mxu0 0.0
  %6451 = vmatpush2.msra.mxu0 0.0
  %6452 = vmatprep.subr.mxu0 0.0
  %6453 = vmatpush2.msra.mxu0 0.0
  %6454 = vmatprep.subr.mxu0 0.0
  %6455 = vmatpush2.msra.mxu0 0.0
  %6456 = vmatprep.subr.mxu0 0.0
  %6457 = vmatpush2.msra.mxu0 0.0
  %6458 = vmatprep.subr.mxu0 0.0
  %6459 = vmatpush2.msra.mxu0 0.0
  %6460 = vmatprep.subr.mxu0 0.0
  %6461 = vmatpush2.msra.mxu0 0.0
  %6462 = vmatprep.subr.mxu0 0.0
  %6463 = vmatpush2.msra.mxu0 0.0
  %6464 = vmatprep.subr.mxu0 0.0
  %6465 = vmatpush2.msra.mxu0 0.0
  %6466 = vmatprep.subr.mxu0 0.0
  %6467 = vmatpush2.msra.mxu0 0.0
  %6468 = vmatprep.subr.mxu0 0.0
  %6469 = vmatpush2.msra.mxu0 0.0
  %6470 = vmatprep.subr.mxu0 0.0
  %6471 = vmatpush2.msra.mxu0 0.0
  %6472 = vmatprep.subr.mxu0 0.0
  %6473 = vmatpush2.msra.mxu0 0.0
  %6474 = vmatprep.subr.mxu0 0.0
  %6475 = vmatpush2.msra.mxu0 0.0
  %6476 = vmatprep.subr.mxu0 0.0
  %6477 = vmatpush2.msra.mxu0 0.0
  %6478 = vmatprep.mubr.f32.mxu0 0.0
  %6479 = vmatmul.mubr.f32.gmra.mxu0 %v6400
  %v6480 = vpop.f32.mrf.mxu0
  %v6481 = vadd.f32 0.0, %v6480
  %v6482 = vpop.f32.mrf.mxu0
  %6483 = vmatprep.mubr.f32.mxu0 0.0
  %6484 = vmatmul.mubr.f32.gmra.mxu0 %v6403
  %v6485 = vpop.f32.mrf.mxu0
  %v6486 = vadd.f32 0.0, %v6485
  %v6487 = vpop.f32.mrf.mxu0
  %6488 = vmatprep.mubr.f32.mxu0 0.0
  %6489 = vmatmul.mubr.f32.gmra.mxu0 %v6406
  %v6490 = vpop.f32.mrf.mxu0
  %v6491 = vadd.f32 0.0, %v6490
  %v6492 = vpop.f32.mrf.mxu0
  %6493 = vmatprep.mubr.f32.mxu0 0.0
  %6494 = vmatmul.mubr.f32.gmra.mxu0 %v6409
  %v6495 = vpop.f32.mrf.mxu0
  %v6496 = vadd.f32 0.0, %v6495
  %v6497 = vpop.f32.mrf.mxu0
  %6498 = vdwg.mxu0
  %v6499 = vld [vmem:[%s1] sm:$0xff]
  %v6500 = vld [vmem:[%s1 + $0x8] sm:$0xff]
  %v6501 = vld [vmem:[%s1 + $0x10] sm:$0xff]
  %v6502 = vld [vmem:[%s1 + $0x18] sm:$0xff]
  %v6503 = vld [vmem:[%s1 + $0x20] sm:$0xff]
  %v6504 = vld [vmem:[%s1 + $0x28] sm:$0xff]
  %v6505 = vld [vmem:[%s1 + $0x30] sm:$0xff]
  %v6506 = vld [vmem:[%s1 + $0x38] sm:$0xff]
  %v6507 = vld [vmem:[%s1 + $0x40] sm:$0xff]
  %v6508 = vld [vmem:[%s1 + $0x48] sm:$0xff]
  %v6509 = vld [vmem:[%s1 + $0x50] sm:$0xff]
  %v6510 = vld [vmem:[%s1 + $0x58] sm:$0xff]
  %v6511 = vld [vmem:[%s1 + $0x60] sm:$0xff]
  %v6512 = vld [vmem:[%s1 + $0x68] sm:$0xff]
  %v6513 = vld [vmem:[%s1 + $0x70] sm:$0xff]
  %v6514 = vld [vmem:[%s1 + $0x78] sm:$0xff]
  %v6515 = vld [vmem:[%s1 + $0x80] sm:$0xff]
  %v6516 = vld [vmem:[%s1 + $0x88] sm:$0xff]
  %v6517 = vld [vmem:[%s184] sm:$0xff]
  %v6518 = vld [vmem:[%s184 + $0x8] sm:$0xff]
  %v6519 = vld [vmem:[%s184 + $0x10] sm:$0xff]
  %v6520 = vld [vmem:[%s184 + $0x18] sm:$0xf]
  %v6522 = vsel %vm77, %v6520, 0
  %6524 = vmatprep.subr.mxu0 0.0
  %6525 = vmatpush1.msra.mxu0 0.0
  %6526 = vmatprep.subr.mxu0 0.0
  %6527 = vmatpush1.msra.mxu0 0.0
  %6528 = vmatprep.subr.mxu0 0.0
  %6529 = vmatpush1.msra.mxu0 0.0
  %6530 = vmatprep.subr.mxu0 0.0
  %6531 = vmatpush1.msra.mxu0 0.0
  %6532 = vmatprep.subr.mxu0 0.0
  %6533 = vmatpush1.msra.mxu0 0.0
  %6534 = vmatprep.subr.mxu0 0.0
  %6535 = vmatpush1.msra.mxu0 0.0
  %6536 = vmatprep.subr.mxu0 0.0
  %6537 = vmatpush1.msra.mxu0 0.0
  %6538 = vmatprep.subr.mxu0 0.0
  %6539 = vmatpush1.msra.mxu0 0.0
  %6540 = vmatprep.subr.mxu0 0.0
  %6541 = vmatpush1.msra.mxu0 0.0
  %6542 = vmatprep.subr.mxu0 0.0
  %6543 = vmatpush1.msra.mxu0 0.0
  %6544 = vmatprep.subr.mxu0 0.0
  %6545 = vmatpush1.msra.mxu0 0.0
  %6546 = vmatprep.subr.mxu0 0.0
  %6547 = vmatpush1.msra.mxu0 0.0
  %6548 = vmatprep.subr.mxu0 0.0
  %6549 = vmatpush1.msra.mxu0 %v6522
  %6550 = vmatprep.subr.mxu0 0.0
  %6551 = vmatpush1.msra.mxu0 %v6519
  %6552 = vmatprep.subr.mxu0 0.0
  %6553 = vmatpush1.msra.mxu0 %v6518
  %6554 = vmatprep.subr.mxu0 0.0
  %6555 = vmatpush1.msra.mxu0 %v6517
  %6556 = vmatprep.subr.mxu0 0.0
  %6557 = vmatpush2.msra.mxu0 0.0
  %6558 = vmatprep.subr.mxu0 0.0
  %6559 = vmatpush2.msra.mxu0 0.0
  %6560 = vmatprep.subr.mxu0 0.0
  %6561 = vmatpush2.msra.mxu0 0.0
  %6562 = vmatprep.subr.mxu0 0.0
  %6563 = vmatpush2.msra.mxu0 0.0
  %6564 = vmatprep.subr.mxu0 0.0
  %6565 = vmatpush2.msra.mxu0 0.0
  %6566 = vmatprep.subr.mxu0 0.0
  %6567 = vmatpush2.msra.mxu0 0.0
  %6568 = vmatprep.subr.mxu0 0.0
  %6569 = vmatpush2.msra.mxu0 0.0
  %6570 = vmatprep.subr.mxu0 0.0
  %6571 = vmatpush2.msra.mxu0 0.0
  %6572 = vmatprep.subr.mxu0 0.0
  %6573 = vmatpush2.msra.mxu0 0.0
  %6574 = vmatprep.subr.mxu0 0.0
  %6575 = vmatpush2.msra.mxu0 0.0
  %6576 = vmatprep.subr.mxu0 0.0
  %6577 = vmatpush2.msra.mxu0 0.0
  %6578 = vmatprep.subr.mxu0 0.0
  %6579 = vmatpush2.msra.mxu0 0.0
  %6580 = vmatprep.subr.mxu0 0.0
  %6581 = vmatpush2.msra.mxu0 0.0
  %6582 = vmatprep.subr.mxu0 0.0
  %6583 = vmatpush2.msra.mxu0 0.0
  %6584 = vmatprep.subr.mxu0 0.0
  %6585 = vmatpush2.msra.mxu0 0.0
  %6586 = vmatprep.subr.mxu0 0.0
  %6587 = vmatpush2.msra.mxu0 0.0
  %6588 = vmatprep.mubr.f32.mxu0 0.0
  %6589 = vmatmul.mubr.f32.gmra.mxu0 %v6400
  %v6590 = vpop.f32.mrf.mxu0
  %v6591 = vadd.f32 0.0, %v6590
  %v6592 = vpop.f32.mrf.mxu0
  %6593 = vmatprep.mubr.f32.mxu0 0.0
  %6594 = vmatmul.mubr.f32.gmra.mxu0 %v6403
  %v6595 = vpop.f32.mrf.mxu0
  %v6596 = vadd.f32 0.0, %v6595
  %v6597 = vpop.f32.mrf.mxu0
  %6598 = vmatprep.mubr.f32.mxu0 0.0
  %6599 = vmatmul.mubr.f32.gmra.mxu0 %v6406
  %v6600 = vpop.f32.mrf.mxu0
  %v6601 = vadd.f32 0.0, %v6600
  %v6602 = vpop.f32.mrf.mxu0
  %6603 = vmatprep.mubr.f32.mxu0 0.0
  %6604 = vmatmul.mubr.f32.gmra.mxu0 %v6409
  %v6605 = vpop.f32.mrf.mxu0
  %v6606 = vadd.f32 0.0, %v6605
  %v6607 = vpop.f32.mrf.mxu0
  %6608 = vdwg.mxu0
  %v6609 = vld [vmem:[%s277] sm:$0xff]
  %v6610 = vld [vmem:[%s277 + $0x8] sm:$0xff]
  %v6611 = vld [vmem:[%s277 + $0x10] sm:$0xff]
  %v6612 = vld [vmem:[%s277 + $0x18] sm:$0xff]
  %v6613 = vld [vmem:[%s277 + $0x20] sm:$0xff]
  %v6614 = vld [vmem:[%s277 + $0x28] sm:$0xff]
  %v6615 = vld [vmem:[%s277 + $0x30] sm:$0xff]
  %v6616 = vld [vmem:[%s277 + $0x38] sm:$0xff]
  %v6617 = vld [vmem:[%s277 + $0x40] sm:$0xff]
  %v6618 = vld [vmem:[%s277 + $0x48] sm:$0xff]
  %v6619 = vld [vmem:[%s277 + $0x50] sm:$0xff]
  %v6620 = vld [vmem:[%s277 + $0x58] sm:$0xff]
  %v6621 = vld [vmem:[%s277 + $0x60] sm:$0xff]
  %v6622 = vld [vmem:[%s277 + $0x68] sm:$0xff]
  %v6623 = vld [vmem:[%s277 + $0x70] sm:$0xff]
  %v6624 = vld [vmem:[%s277 + $0x78] sm:$0xff]
  %v6625 = vld [vmem:[%s277 + $0x80] sm:$0xff]
  %v6626 = vld [vmem:[%s277 + $0x88] sm:$0xff]
  %v6628 = vsel %vm64, %v6609, 0
  %v6631 = vsel %vm64, %v6610, 0
  %v6634 = vsel %vm64, %v6611, 0
  %v6637 = vsel %vm64, %v6612, 0
  %v6640 = vsel %vm64, %v6613, 0
  %v6643 = vsel %vm64, %v6614, 0
  %v6646 = vsel %vm64, %v6615, 0
  %v6649 = vsel %vm64, %v6616, 0
  %v6652 = vsel %vm64, %v6617, 0
  %v6655 = vsel %vm64, %v6618, 0
  %v6658 = vsel %vm64, %v6619, 0
  %v6661 = vsel %vm64, %v6620, 0
  %v6664 = vsel %vm64, %v6621, 0
  %v6667 = vsel %vm64, %v6622, 0
  %v6670 = vsel %vm64, %v6623, 0
  %v6673 = vsel %vm64, %v6624, 0
  %v6676 = vsel %vm64, %v6625, 0
  %v6679 = vsel %vm64, %v6626, 0
  %v6682 = vsel %vm77, %v6606, 0
  %6684 = vmatprep.subr.mxu0 0.0
  %6685 = vmatpush1.msra.mxu0 0.0
  %6686 = vmatprep.subr.mxu0 0.0
  %6687 = vmatpush1.msra.mxu0 0.0
  %6688 = vmatprep.subr.mxu0 0.0
  %6689 = vmatpush1.msra.mxu0 0.0
  %6690 = vmatprep.subr.mxu0 0.0
  %6691 = vmatpush1.msra.mxu0 0.0
  %6692 = vmatprep.subr.mxu0 0.0
  %6693 = vmatpush1.msra.mxu0 0.0
  %6694 = vmatprep.subr.mxu0 0.0
  %6695 = vmatpush1.msra.mxu0 0.0
  %6696 = vmatprep.subr.mxu0 0.0
  %6697 = vmatpush1.msra.mxu0 0.0
  %6698 = vmatprep.subr.mxu0 0.0
  %6699 = vmatpush1.msra.mxu0 0.0
  %6700 = vmatprep.subr.mxu0 0.0
  %6701 = vmatpush1.msra.mxu0 0.0
  %6702 = vmatprep.subr.mxu0 0.0
  %6703 = vmatpush1.msra.mxu0 0.0
  %6704 = vmatprep.subr.mxu0 0.0
  %6705 = vmatpush1.msra.mxu0 0.0
  %6706 = vmatprep.subr.mxu0 0.0
  %6707 = vmatpush1.msra.mxu0 0.0
  %6708 = vmatprep.subr.mxu0 0.0
  %6709 = vmatpush1.msra.mxu0 %v6682
  %6710 = vmatprep.subr.mxu0 0.0
  %6711 = vmatpush1.msra.mxu0 %v6601
  %6712 = vmatprep.subr.mxu0 0.0
  %6713 = vmatpush1.msra.mxu0 %v6596
  %6714 = vmatprep.subr.mxu0 0.0
  %6715 = vmatpush1.msra.mxu0 %v6591
  %6716 = vmatprep.subr.mxu0 0.0
  %6717 = vmatpush2.msra.mxu0 0.0
  %6718 = vmatprep.subr.mxu0 0.0
  %6719 = vmatpush2.msra.mxu0 0.0
  %6720 = vmatprep.subr.mxu0 0.0
  %6721 = vmatpush2.msra.mxu0 0.0
  %6722 = vmatprep.subr.mxu0 0.0
  %6723 = vmatpush2.msra.mxu0 0.0
  %6724 = vmatprep.subr.mxu0 0.0
  %6725 = vmatpush2.msra.mxu0 0.0
  %6726 = vmatprep.subr.mxu0 0.0
  %6727 = vmatpush2.msra.mxu0 0.0
  %6728 = vmatprep.subr.mxu0 0.0
  %6729 = vmatpush2.msra.mxu0 0.0
  %6730 = vmatprep.subr.mxu0 0.0
  %6731 = vmatpush2.msra.mxu0 0.0
  %6732 = vmatprep.subr.mxu0 0.0
  %6733 = vmatpush2.msra.mxu0 0.0
  %6734 = vmatprep.subr.mxu0 0.0
  %6735 = vmatpush2.msra.mxu0 0.0
  %6736 = vmatprep.subr.mxu0 0.0
  %6737 = vmatpush2.msra.mxu0 0.0
  %6738 = vmatprep.subr.mxu0 0.0
  %6739 = vmatpush2.msra.mxu0 0.0
  %6740 = vmatprep.subr.mxu0 0.0
  %6741 = vmatpush2.msra.mxu0 0.0
  %6742 = vmatprep.subr.mxu0 0.0
  %6743 = vmatpush2.msra.mxu0 0.0
  %6744 = vmatprep.subr.mxu0 0.0
  %6745 = vmatpush2.msra.mxu0 0.0
  %6746 = vmatprep.subr.mxu0 0.0
  %6747 = vmatpush2.msra.mxu0 0.0
  %6748 = vmatprep.mubr.f32.mxu0 0.0
  %6749 = vmatmul.mubr.f32.gmra.mxu0 %v6628
  %v6750 = vpop.f32.mrf.mxu0
  %v6751 = vadd.f32 0.0, %v6750
  %v6752 = vpop.f32.mrf.mxu0
  %6753 = vmatprep.mubr.f32.mxu0 0.0
  %6754 = vmatmul.mubr.f32.gmra.mxu0 %v6631
  %v6755 = vpop.f32.mrf.mxu0
  %v6756 = vadd.f32 0.0, %v6755
  %v6757 = vpop.f32.mrf.mxu0
  %6758 = vmatprep.mubr.f32.mxu0 0.0
  %6759 = vmatmul.mubr.f32.gmra.mxu0 %v6634
  %v6760 = vpop.f32.mrf.mxu0
  %v6761 = vadd.f32 0.0, %v6760
  %v6762 = vpop.f32.mrf.mxu0
  %6763 = vmatprep.mubr.f32.mxu0 0.0
  %6764 = vmatmul.mubr.f32.gmra.mxu0 %v6637
  %v6765 = vpop.f32.mrf.mxu0
  %v6766 = vadd.f32 0.0, %v6765
  %v6767 = vpop.f32.mrf.mxu0
  %6768 = vmatprep.mubr.f32.mxu0 0.0
  %6769 = vmatmul.mubr.f32.gmra.mxu0 %v6640
  %v6770 = vpop.f32.mrf.mxu0
  %v6771 = vadd.f32 0.0, %v6770
  %v6772 = vpop.f32.mrf.mxu0
  %6773 = vmatprep.mubr.f32.mxu0 0.0
  %6774 = vmatmul.mubr.f32.gmra.mxu0 %v6643
  %v6775 = vpop.f32.mrf.mxu0
  %v6776 = vadd.f32 0.0, %v6775
  %v6777 = vpop.f32.mrf.mxu0
  %6778 = vmatprep.mubr.f32.mxu0 0.0
  %6779 = vmatmul.mubr.f32.gmra.mxu0 %v6646
  %v6780 = vpop.f32.mrf.mxu0
  %v6781 = vadd.f32 0.0, %v6780
  %v6782 = vpop.f32.mrf.mxu0
  %6783 = vmatprep.mubr.f32.mxu0 0.0
  %6784 = vmatmul.mubr.f32.gmra.mxu0 %v6649
  %v6785 = vpop.f32.mrf.mxu0
  %v6786 = vadd.f32 0.0, %v6785
  %v6787 = vpop.f32.mrf.mxu0
  %6788 = vmatprep.mubr.f32.mxu0 0.0
  %6789 = vmatmul.mubr.f32.gmra.mxu0 %v6652
  %v6790 = vpop.f32.mrf.mxu0
  %v6791 = vadd.f32 0.0, %v6790
  %v6792 = vpop.f32.mrf.mxu0
  %6793 = vmatprep.mubr.f32.mxu0 0.0
  %6794 = vmatmul.mubr.f32.gmra.mxu0 %v6655
  %v6795 = vpop.f32.mrf.mxu0
  %v6796 = vadd.f32 0.0, %v6795
  %v6797 = vpop.f32.mrf.mxu0
  %6798 = vmatprep.mubr.f32.mxu0 0.0
  %6799 = vmatmul.mubr.f32.gmra.mxu0 %v6658
  %v6800 = vpop.f32.mrf.mxu0
  %v6801 = vadd.f32 0.0, %v6800
  %v6802 = vpop.f32.mrf.mxu0
  %6803 = vmatprep.mubr.f32.mxu0 0.0
  %6804 = vmatmul.mubr.f32.gmra.mxu0 %v6661
  %v6805 = vpop.f32.mrf.mxu0
  %v6806 = vadd.f32 0.0, %v6805
  %v6807 = vpop.f32.mrf.mxu0
  %6808 = vmatprep.mubr.f32.mxu0 0.0
  %6809 = vmatmul.mubr.f32.gmra.mxu0 %v6664
  %v6810 = vpop.f32.mrf.mxu0
  %v6811 = vadd.f32 0.0, %v6810
  %v6812 = vpop.f32.mrf.mxu0
  %6813 = vmatprep.mubr.f32.mxu0 0.0
  %6814 = vmatmul.mubr.f32.gmra.mxu0 %v6667
  %v6815 = vpop.f32.mrf.mxu0
  %v6816 = vadd.f32 0.0, %v6815
  %v6817 = vpop.f32.mrf.mxu0
  %6818 = vmatprep.mubr.f32.mxu0 0.0
  %6819 = vmatmul.mubr.f32.gmra.mxu0 %v6670
  %v6820 = vpop.f32.mrf.mxu0
  %v6821 = vadd.f32 0.0, %v6820
  %v6822 = vpop.f32.mrf.mxu0
  %6823 = vmatprep.mubr.f32.mxu0 0.0
  %6824 = vmatmul.mubr.f32.gmra.mxu0 %v6673
  %v6825 = vpop.f32.mrf.mxu0
  %v6826 = vadd.f32 0.0, %v6825
  %v6827 = vpop.f32.mrf.mxu0
  %6828 = vmatprep.mubr.f32.mxu0 0.0
  %6829 = vmatmul.mubr.f32.gmra.mxu0 %v6676
  %v6830 = vpop.f32.mrf.mxu0
  %v6831 = vadd.f32 0.0, %v6830
  %v6832 = vpop.f32.mrf.mxu0
  %6833 = vmatprep.mubr.f32.mxu0 0.0
  %6834 = vmatmul.mubr.f32.gmra.mxu0 %v6679
  %v6835 = vpop.f32.mrf.mxu0
  %v6836 = vadd.f32 0.0, %v6835
  %v6837 = vpop.f32.mrf.mxu0
  %6838 = vdwg.mxu0
  %v6840 = vsel %vm64, %v6499, 0
  %v6843 = vsel %vm64, %v6500, 0
  %v6846 = vsel %vm64, %v6501, 0
  %v6849 = vsel %vm64, %v6502, 0
  %v6852 = vsel %vm64, %v6503, 0
  %v6855 = vsel %vm64, %v6504, 0
  %v6858 = vsel %vm64, %v6505, 0
  %v6861 = vsel %vm64, %v6506, 0
  %v6864 = vsel %vm64, %v6507, 0
  %v6867 = vsel %vm64, %v6508, 0
  %v6870 = vsel %vm64, %v6509, 0
  %v6873 = vsel %vm64, %v6510, 0
  %v6876 = vsel %vm64, %v6511, 0
  %v6879 = vsel %vm64, %v6512, 0
  %v6882 = vsel %vm64, %v6513, 0
  %v6885 = vsel %vm64, %v6514, 0
  %v6888 = vsel %vm64, %v6515, 0
  %v6891 = vsel %vm64, %v6516, 0
  %v6894 = vsel %vm77, %v6496, 0
  %6896 = vmatprep.subr.mxu0 0.0
  %6897 = vmatpush1.msra.mxu0 0.0
  %6898 = vmatprep.subr.mxu0 0.0
  %6899 = vmatpush1.msra.mxu0 0.0
  %6900 = vmatprep.subr.mxu0 0.0
  %6901 = vmatpush1.msra.mxu0 0.0
  %6902 = vmatprep.subr.mxu0 0.0
  %6903 = vmatpush1.msra.mxu0 0.0
  %6904 = vmatprep.subr.mxu0 0.0
  %6905 = vmatpush1.msra.mxu0 0.0
  %6906 = vmatprep.subr.mxu0 0.0
  %6907 = vmatpush1.msra.mxu0 0.0
  %6908 = vmatprep.subr.mxu0 0.0
  %6909 = vmatpush1.msra.mxu0 0.0
  %6910 = vmatprep.subr.mxu0 0.0
  %6911 = vmatpush1.msra.mxu0 0.0
  %6912 = vmatprep.subr.mxu0 0.0
  %6913 = vmatpush1.msra.mxu0 0.0
  %6914 = vmatprep.subr.mxu0 0.0
  %6915 = vmatpush1.msra.mxu0 0.0
  %6916 = vmatprep.subr.mxu0 0.0
  %6917 = vmatpush1.msra.mxu0 0.0
  %6918 = vmatprep.subr.mxu0 0.0
  %6919 = vmatpush1.msra.mxu0 0.0
  %6920 = vmatprep.subr.mxu0 0.0
  %6921 = vmatpush1.msra.mxu0 %v6894
  %6922 = vmatprep.subr.mxu0 0.0
  %6923 = vmatpush1.msra.mxu0 %v6491
  %6924 = vmatprep.subr.mxu0 0.0
  %6925 = vmatpush1.msra.mxu0 %v6486
  %6926 = vmatprep.subr.mxu0 0.0
  %6927 = vmatpush1.msra.mxu0 %v6481
  %6928 = vmatprep.subr.mxu0 0.0
  %6929 = vmatpush2.msra.mxu0 0.0
  %6930 = vmatprep.subr.mxu0 0.0
  %6931 = vmatpush2.msra.mxu0 0.0
  %6932 = vmatprep.subr.mxu0 0.0
  %6933 = vmatpush2.msra.mxu0 0.0
  %6934 = vmatprep.subr.mxu0 0.0
  %6935 = vmatpush2.msra.mxu0 0.0
  %6936 = vmatprep.subr.mxu0 0.0
  %6937 = vmatpush2.msra.mxu0 0.0
  %6938 = vmatprep.subr.mxu0 0.0
  %6939 = vmatpush2.msra.mxu0 0.0
  %6940 = vmatprep.subr.mxu0 0.0
  %6941 = vmatpush2.msra.mxu0 0.0
  %6942 = vmatprep.subr.mxu0 0.0
  %6943 = vmatpush2.msra.mxu0 0.0
  %6944 = vmatprep.subr.mxu0 0.0
  %6945 = vmatpush2.msra.mxu0 0.0
  %6946 = vmatprep.subr.mxu0 0.0
  %6947 = vmatpush2.msra.mxu0 0.0
  %6948 = vmatprep.subr.mxu0 0.0
  %6949 = vmatpush2.msra.mxu0 0.0
  %6950 = vmatprep.subr.mxu0 0.0
  %6951 = vmatpush2.msra.mxu0 0.0
  %6952 = vmatprep.subr.mxu0 0.0
  %6953 = vmatpush2.msra.mxu0 0.0
  %6954 = vmatprep.subr.mxu0 0.0
  %6955 = vmatpush2.msra.mxu0 0.0
  %6956 = vmatprep.subr.mxu0 0.0
  %6957 = vmatpush2.msra.mxu0 0.0
  %6958 = vmatprep.subr.mxu0 0.0
  %6959 = vmatpush2.msra.mxu0 0.0
  %6960 = vmatprep.mubr.f32.mxu0 0.0
  %6961 = vmatmul.mubr.f32.gmra.mxu0 %v6840
  %v6962 = vpop.f32.mrf.mxu0
  %v6963 = vadd.f32 %v6751, %v6962
  %v6964 = vpop.f32.mrf.mxu0
  %6965 = vmatprep.mubr.f32.mxu0 0.0
  %6966 = vmatmul.mubr.f32.gmra.mxu0 %v6843
  %v6967 = vpop.f32.mrf.mxu0
  %v6968 = vadd.f32 %v6756, %v6967
  %v6969 = vpop.f32.mrf.mxu0
  %6970 = vmatprep.mubr.f32.mxu0 0.0
  %6971 = vmatmul.mubr.f32.gmra.mxu0 %v6846
  %v6972 = vpop.f32.mrf.mxu0
  %v6973 = vadd.f32 %v6761, %v6972
  %v6974 = vpop.f32.mrf.mxu0
  %6975 = vmatprep.mubr.f32.mxu0 0.0
  %6976 = vmatmul.mubr.f32.gmra.mxu0 %v6849
  %v6977 = vpop.f32.mrf.mxu0
  %v6978 = vadd.f32 %v6766, %v6977
  %v6979 = vpop.f32.mrf.mxu0
  %6980 = vmatprep.mubr.f32.mxu0 0.0
  %6981 = vmatmul.mubr.f32.gmra.mxu0 %v6852
  %v6982 = vpop.f32.mrf.mxu0
  %v6983 = vadd.f32 %v6771, %v6982
  %v6984 = vpop.f32.mrf.mxu0
  %6985 = vmatprep.mubr.f32.mxu0 0.0
  %6986 = vmatmul.mubr.f32.gmra.mxu0 %v6855
  %v6987 = vpop.f32.mrf.mxu0
  %v6988 = vadd.f32 %v6776, %v6987
  %v6989 = vpop.f32.mrf.mxu0
  %6990 = vmatprep.mubr.f32.mxu0 0.0
  %6991 = vmatmul.mubr.f32.gmra.mxu0 %v6858
  %v6992 = vpop.f32.mrf.mxu0
  %v6993 = vadd.f32 %v6781, %v6992
  %v6994 = vpop.f32.mrf.mxu0
  %6995 = vmatprep.mubr.f32.mxu0 0.0
  %6996 = vmatmul.mubr.f32.gmra.mxu0 %v6861
  %v6997 = vpop.f32.mrf.mxu0
  %v6998 = vadd.f32 %v6786, %v6997
  %v6999 = vpop.f32.mrf.mxu0
  %7000 = vmatprep.mubr.f32.mxu0 0.0
  %7001 = vmatmul.mubr.f32.gmra.mxu0 %v6864
  %v7002 = vpop.f32.mrf.mxu0
  %v7003 = vadd.f32 %v6791, %v7002
  %v7004 = vpop.f32.mrf.mxu0
  %7005 = vmatprep.mubr.f32.mxu0 0.0
  %7006 = vmatmul.mubr.f32.gmra.mxu0 %v6867
  %v7007 = vpop.f32.mrf.mxu0
  %v7008 = vadd.f32 %v6796, %v7007
  %v7009 = vpop.f32.mrf.mxu0
  %7010 = vmatprep.mubr.f32.mxu0 0.0
  %7011 = vmatmul.mubr.f32.gmra.mxu0 %v6870
  %v7012 = vpop.f32.mrf.mxu0
  %v7013 = vadd.f32 %v6801, %v7012
  %v7014 = vpop.f32.mrf.mxu0
  %7015 = vmatprep.mubr.f32.mxu0 0.0
  %7016 = vmatmul.mubr.f32.gmra.mxu0 %v6873
  %v7017 = vpop.f32.mrf.mxu0
  %v7018 = vadd.f32 %v6806, %v7017
  %v7019 = vpop.f32.mrf.mxu0
  %7020 = vmatprep.mubr.f32.mxu0 0.0
  %7021 = vmatmul.mubr.f32.gmra.mxu0 %v6876
  %v7022 = vpop.f32.mrf.mxu0
  %v7023 = vadd.f32 %v6811, %v7022
  %v7024 = vpop.f32.mrf.mxu0
  %7025 = vmatprep.mubr.f32.mxu0 0.0
  %7026 = vmatmul.mubr.f32.gmra.mxu0 %v6879
  %v7027 = vpop.f32.mrf.mxu0
  %v7028 = vadd.f32 %v6816, %v7027
  %v7029 = vpop.f32.mrf.mxu0
  %7030 = vmatprep.mubr.f32.mxu0 0.0
  %7031 = vmatmul.mubr.f32.gmra.mxu0 %v6882
  %v7032 = vpop.f32.mrf.mxu0
  %v7033 = vadd.f32 %v6821, %v7032
  %v7034 = vpop.f32.mrf.mxu0
  %7035 = vmatprep.mubr.f32.mxu0 0.0
  %7036 = vmatmul.mubr.f32.gmra.mxu0 %v6885
  %v7037 = vpop.f32.mrf.mxu0
  %v7038 = vadd.f32 %v6826, %v7037
  %v7039 = vpop.f32.mrf.mxu0
  %7040 = vmatprep.mubr.f32.mxu0 0.0
  %7041 = vmatmul.mubr.f32.gmra.mxu0 %v6888
  %v7042 = vpop.f32.mrf.mxu0
  %v7043 = vadd.f32 %v6831, %v7042
  %v7044 = vpop.f32.mrf.mxu0
  %7045 = vmatprep.mubr.f32.mxu0 0.0
  %7046 = vmatmul.mubr.f32.gmra.mxu0 %v6891
  %v7047 = vpop.f32.mrf.mxu0
  %v7048 = vadd.f32 %v6836, %v7047
  %v7049 = vpop.f32.mrf.mxu0
  %7050 = vdwg.mxu0
  %v7051 = vld [vmem:[%s720] sm:$0xff]
  %v7052 = vld [vmem:[%s720 + $0x8] sm:$0xff]
  %v7053 = vld [vmem:[%s720 + $0x10] sm:$0xff]
  %v7054 = vld [vmem:[%s720 + $0x18] sm:$0xf]
  %v7056 = vsel %vm77, %v7054, 0
  %7058 = vmatprep.subr.mxu0 0.0
  %7059 = vmatpush1.msra.mxu0 0.0
  %7060 = vmatprep.subr.mxu0 0.0
  %7061 = vmatpush1.msra.mxu0 0.0
  %7062 = vmatprep.subr.mxu0 0.0
  %7063 = vmatpush1.msra.mxu0 0.0
  %7064 = vmatprep.subr.mxu0 0.0
  %7065 = vmatpush1.msra.mxu0 0.0
  %7066 = vmatprep.subr.mxu0 0.0
  %7067 = vmatpush1.msra.mxu0 0.0
  %7068 = vmatprep.subr.mxu0 0.0
  %7069 = vmatpush1.msra.mxu0 0.0
  %7070 = vmatprep.subr.mxu0 0.0
  %7071 = vmatpush1.msra.mxu0 0.0
  %7072 = vmatprep.subr.mxu0 0.0
  %7073 = vmatpush1.msra.mxu0 0.0
  %7074 = vmatprep.subr.mxu0 0.0
  %7075 = vmatpush1.msra.mxu0 0.0
  %7076 = vmatprep.subr.mxu0 0.0
  %7077 = vmatpush1.msra.mxu0 0.0
  %7078 = vmatprep.subr.mxu0 0.0
  %7079 = vmatpush1.msra.mxu0 0.0
  %7080 = vmatprep.subr.mxu0 0.0
  %7081 = vmatpush1.msra.mxu0 0.0
  %7082 = vmatprep.subr.mxu0 0.0
  %7083 = vmatpush1.msra.mxu0 %v7056
  %7084 = vmatprep.subr.mxu0 0.0
  %7085 = vmatpush1.msra.mxu0 %v7053
  %7086 = vmatprep.subr.mxu0 0.0
  %7087 = vmatpush1.msra.mxu0 %v7052
  %7088 = vmatprep.subr.mxu0 0.0
  %7089 = vmatpush1.msra.mxu0 %v7051
  %7090 = vmatprep.subr.mxu0 0.0
  %7091 = vmatpush2.msra.mxu0 0.0
  %7092 = vmatprep.subr.mxu0 0.0
  %7093 = vmatpush2.msra.mxu0 0.0
  %7094 = vmatprep.subr.mxu0 0.0
  %7095 = vmatpush2.msra.mxu0 0.0
  %7096 = vmatprep.subr.mxu0 0.0
  %7097 = vmatpush2.msra.mxu0 0.0
  %7098 = vmatprep.subr.mxu0 0.0
  %7099 = vmatpush2.msra.mxu0 0.0
  %7100 = vmatprep.subr.mxu0 0.0
  %7101 = vmatpush2.msra.mxu0 0.0
  %7102 = vmatprep.subr.mxu0 0.0
  %7103 = vmatpush2.msra.mxu0 0.0
  %7104 = vmatprep.subr.mxu0 0.0
  %7105 = vmatpush2.msra.mxu0 0.0
  %7106 = vmatprep.subr.mxu0 0.0
  %7107 = vmatpush2.msra.mxu0 0.0
  %7108 = vmatprep.subr.mxu0 0.0
  %7109 = vmatpush2.msra.mxu0 0.0
  %7110 = vmatprep.subr.mxu0 0.0
  %7111 = vmatpush2.msra.mxu0 0.0
  %7112 = vmatprep.subr.mxu0 0.0
  %7113 = vmatpush2.msra.mxu0 0.0
  %7114 = vmatprep.subr.mxu0 0.0
  %7115 = vmatpush2.msra.mxu0 0.0
  %7116 = vmatprep.subr.mxu0 0.0
  %7117 = vmatpush2.msra.mxu0 0.0
  %7118 = vmatprep.subr.mxu0 0.0
  %7119 = vmatpush2.msra.mxu0 0.0
  %7120 = vmatprep.subr.mxu0 0.0
  %7121 = vmatpush2.msra.mxu0 0.0
  %7122 = vmatprep.mubr.f32.mxu0 0.0
  %7123 = vmatmul.mubr.f32.gmra.mxu0 %v6400
  %v7124 = vpop.f32.mrf.mxu0
  %v7125 = vadd.f32 0.0, %v7124
  %v7126 = vpop.f32.mrf.mxu0
  %7127 = vmatprep.mubr.f32.mxu0 0.0
  %7128 = vmatmul.mubr.f32.gmra.mxu0 %v6403
  %v7129 = vpop.f32.mrf.mxu0
  %v7130 = vadd.f32 0.0, %v7129
  %v7131 = vpop.f32.mrf.mxu0
  %7132 = vmatprep.mubr.f32.mxu0 0.0
  %7133 = vmatmul.mubr.f32.gmra.mxu0 %v6406
  %v7134 = vpop.f32.mrf.mxu0
  %v7135 = vadd.f32 0.0, %v7134
  %v7136 = vpop.f32.mrf.mxu0
  %7137 = vmatprep.mubr.f32.mxu0 0.0
  %7138 = vmatmul.mubr.f32.gmra.mxu0 %v6409
  %v7139 = vpop.f32.mrf.mxu0
  %v7140 = vadd.f32 0.0, %v7139
  %v7141 = vpop.f32.mrf.mxu0
  %7142 = vdwg.mxu0
  %v7143 = vld [vmem:[%s813] sm:$0xff]
  %v7144 = vld [vmem:[%s813 + $0x8] sm:$0xff]
  %v7145 = vld [vmem:[%s813 + $0x10] sm:$0xff]
  %v7146 = vld [vmem:[%s813 + $0x18] sm:$0xff]
  %v7147 = vld [vmem:[%s813 + $0x20] sm:$0xff]
  %v7148 = vld [vmem:[%s813 + $0x28] sm:$0xff]
  %v7149 = vld [vmem:[%s813 + $0x30] sm:$0xff]
  %v7150 = vld [vmem:[%s813 + $0x38] sm:$0xff]
  %v7151 = vld [vmem:[%s813 + $0x40] sm:$0xff]
  %v7152 = vld [vmem:[%s813 + $0x48] sm:$0xff]
  %v7153 = vld [vmem:[%s813 + $0x50] sm:$0xff]
  %v7154 = vld [vmem:[%s813 + $0x58] sm:$0xff]
  %v7155 = vld [vmem:[%s813 + $0x60] sm:$0xff]
  %v7156 = vld [vmem:[%s813 + $0x68] sm:$0xff]
  %v7157 = vld [vmem:[%s813 + $0x70] sm:$0xff]
  %v7158 = vld [vmem:[%s813 + $0x78] sm:$0xff]
  %v7159 = vld [vmem:[%s813 + $0x80] sm:$0xff]
  %v7160 = vld [vmem:[%s813 + $0x88] sm:$0xff]
  %v7162 = vsel %vm64, %v7143, 0
  %v7165 = vsel %vm64, %v7144, 0
  %v7168 = vsel %vm64, %v7145, 0
  %v7171 = vsel %vm64, %v7146, 0
  %v7174 = vsel %vm64, %v7147, 0
  %v7177 = vsel %vm64, %v7148, 0
  %v7180 = vsel %vm64, %v7149, 0
  %v7183 = vsel %vm64, %v7150, 0
  %v7186 = vsel %vm64, %v7151, 0
  %v7189 = vsel %vm64, %v7152, 0
  %v7192 = vsel %vm64, %v7153, 0
  %v7195 = vsel %vm64, %v7154, 0
  %v7198 = vsel %vm64, %v7155, 0
  %v7201 = vsel %vm64, %v7156, 0
  %v7204 = vsel %vm64, %v7157, 0
  %v7207 = vsel %vm64, %v7158, 0
  %v7210 = vsel %vm64, %v7159, 0
  %v7213 = vsel %vm64, %v7160, 0
  %v7216 = vsel %vm77, %v7140, 0
  %7218 = vmatprep.subr.mxu0 0.0
  %7219 = vmatpush1.msra.mxu0 0.0
  %7220 = vmatprep.subr.mxu0 0.0
  %7221 = vmatpush1.msra.mxu0 0.0
  %7222 = vmatprep.subr.mxu0 0.0
  %7223 = vmatpush1.msra.mxu0 0.0
  %7224 = vmatprep.subr.mxu0 0.0
  %7225 = vmatpush1.msra.mxu0 0.0
  %7226 = vmatprep.subr.mxu0 0.0
  %7227 = vmatpush1.msra.mxu0 0.0
  %7228 = vmatprep.subr.mxu0 0.0
  %7229 = vmatpush1.msra.mxu0 0.0
  %7230 = vmatprep.subr.mxu0 0.0
  %7231 = vmatpush1.msra.mxu0 0.0
  %7232 = vmatprep.subr.mxu0 0.0
  %7233 = vmatpush1.msra.mxu0 0.0
  %7234 = vmatprep.subr.mxu0 0.0
  %7235 = vmatpush1.msra.mxu0 0.0
  %7236 = vmatprep.subr.mxu0 0.0
  %7237 = vmatpush1.msra.mxu0 0.0
  %7238 = vmatprep.subr.mxu0 0.0
  %7239 = vmatpush1.msra.mxu0 0.0
  %7240 = vmatprep.subr.mxu0 0.0
  %7241 = vmatpush1.msra.mxu0 0.0
  %7242 = vmatprep.subr.mxu0 0.0
  %7243 = vmatpush1.msra.mxu0 %v7216
  %7244 = vmatprep.subr.mxu0 0.0
  %7245 = vmatpush1.msra.mxu0 %v7135
  %7246 = vmatprep.subr.mxu0 0.0
  %7247 = vmatpush1.msra.mxu0 %v7130
  %7248 = vmatprep.subr.mxu0 0.0
  %7249 = vmatpush1.msra.mxu0 %v7125
  %7250 = vmatprep.subr.mxu0 0.0
  %7251 = vmatpush2.msra.mxu0 0.0
  %7252 = vmatprep.subr.mxu0 0.0
  %7253 = vmatpush2.msra.mxu0 0.0
  %7254 = vmatprep.subr.mxu0 0.0
  %7255 = vmatpush2.msra.mxu0 0.0
  %7256 = vmatprep.subr.mxu0 0.0
  %7257 = vmatpush2.msra.mxu0 0.0
  %7258 = vmatprep.subr.mxu0 0.0
  %7259 = vmatpush2.msra.mxu0 0.0
  %7260 = vmatprep.subr.mxu0 0.0
  %7261 = vmatpush2.msra.mxu0 0.0
  %7262 = vmatprep.subr.mxu0 0.0
  %7263 = vmatpush2.msra.mxu0 0.0
  %7264 = vmatprep.subr.mxu0 0.0
  %7265 = vmatpush2.msra.mxu0 0.0
  %7266 = vmatprep.subr.mxu0 0.0
  %7267 = vmatpush2.msra.mxu0 0.0
  %7268 = vmatprep.subr.mxu0 0.0
  %7269 = vmatpush2.msra.mxu0 0.0
  %7270 = vmatprep.subr.mxu0 0.0
  %7271 = vmatpush2.msra.mxu0 0.0
  %7272 = vmatprep.subr.mxu0 0.0
  %7273 = vmatpush2.msra.mxu0 0.0
  %7274 = vmatprep.subr.mxu0 0.0
  %7275 = vmatpush2.msra.mxu0 0.0
  %7276 = vmatprep.subr.mxu0 0.0
  %7277 = vmatpush2.msra.mxu0 0.0
  %7278 = vmatprep.subr.mxu0 0.0
  %7279 = vmatpush2.msra.mxu0 0.0
  %7280 = vmatprep.subr.mxu0 0.0
  %7281 = vmatpush2.msra.mxu0 0.0
  %7282 = vmatprep.mubr.f32.mxu0 0.0
  %7283 = vmatmul.mubr.f32.gmra.mxu0 %v7162
  %v7284 = vpop.f32.mrf.mxu0
  %v7285 = vadd.f32 0.0, %v7284
  %v7286 = vpop.f32.mrf.mxu0
  %7287 = vmatprep.mubr.f32.mxu0 0.0
  %7288 = vmatmul.mubr.f32.gmra.mxu0 %v7165
  %v7289 = vpop.f32.mrf.mxu0
  %v7290 = vadd.f32 0.0, %v7289
  %v7291 = vpop.f32.mrf.mxu0
  %7292 = vmatprep.mubr.f32.mxu0 0.0
  %7293 = vmatmul.mubr.f32.gmra.mxu0 %v7168
  %v7294 = vpop.f32.mrf.mxu0
  %v7295 = vadd.f32 0.0, %v7294
  %v7296 = vpop.f32.mrf.mxu0
  %7297 = vmatprep.mubr.f32.mxu0 0.0
  %7298 = vmatmul.mubr.f32.gmra.mxu0 %v7171
  %v7299 = vpop.f32.mrf.mxu0
  %v7300 = vadd.f32 0.0, %v7299
  %v7301 = vpop.f32.mrf.mxu0
  %7302 = vmatprep.mubr.f32.mxu0 0.0
  %7303 = vmatmul.mubr.f32.gmra.mxu0 %v7174
  %v7304 = vpop.f32.mrf.mxu0
  %v7305 = vadd.f32 0.0, %v7304
  %v7306 = vpop.f32.mrf.mxu0
  %7307 = vmatprep.mubr.f32.mxu0 0.0
  %7308 = vmatmul.mubr.f32.gmra.mxu0 %v7177
  %v7309 = vpop.f32.mrf.mxu0
  %v7310 = vadd.f32 0.0, %v7309
  %v7311 = vpop.f32.mrf.mxu0
  %7312 = vmatprep.mubr.f32.mxu0 0.0
  %7313 = vmatmul.mubr.f32.gmra.mxu0 %v7180
  %v7314 = vpop.f32.mrf.mxu0
  %v7315 = vadd.f32 0.0, %v7314
  %v7316 = vpop.f32.mrf.mxu0
  %7317 = vmatprep.mubr.f32.mxu0 0.0
  %7318 = vmatmul.mubr.f32.gmra.mxu0 %v7183
  %v7319 = vpop.f32.mrf.mxu0
  %v7320 = vadd.f32 0.0, %v7319
  %v7321 = vpop.f32.mrf.mxu0
  %7322 = vmatprep.mubr.f32.mxu0 0.0
  %7323 = vmatmul.mubr.f32.gmra.mxu0 %v7186
  %v7324 = vpop.f32.mrf.mxu0
  %v7325 = vadd.f32 0.0, %v7324
  %v7326 = vpop.f32.mrf.mxu0
  %7327 = vmatprep.mubr.f32.mxu0 0.0
  %7328 = vmatmul.mubr.f32.gmra.mxu0 %v7189
  %v7329 = vpop.f32.mrf.mxu0
  %v7330 = vadd.f32 0.0, %v7329
  %v7331 = vpop.f32.mrf.mxu0
  %7332 = vmatprep.mubr.f32.mxu0 0.0
  %7333 = vmatmul.mubr.f32.gmra.mxu0 %v7192
  %v7334 = vpop.f32.mrf.mxu0
  %v7335 = vadd.f32 0.0, %v7334
  %v7336 = vpop.f32.mrf.mxu0
  %7337 = vmatprep.mubr.f32.mxu0 0.0
  %7338 = vmatmul.mubr.f32.gmra.mxu0 %v7195
  %v7339 = vpop.f32.mrf.mxu0
  %v7340 = vadd.f32 0.0, %v7339
  %v7341 = vpop.f32.mrf.mxu0
  %7342 = vmatprep.mubr.f32.mxu0 0.0
  %7343 = vmatmul.mubr.f32.gmra.mxu0 %v7198
  %v7344 = vpop.f32.mrf.mxu0
  %v7345 = vadd.f32 0.0, %v7344
  %v7346 = vpop.f32.mrf.mxu0
  %7347 = vmatprep.mubr.f32.mxu0 0.0
  %7348 = vmatmul.mubr.f32.gmra.mxu0 %v7201
  %v7349 = vpop.f32.mrf.mxu0
  %v7350 = vadd.f32 0.0, %v7349
  %v7351 = vpop.f32.mrf.mxu0
  %7352 = vmatprep.mubr.f32.mxu0 0.0
  %7353 = vmatmul.mubr.f32.gmra.mxu0 %v7204
  %v7354 = vpop.f32.mrf.mxu0
  %v7355 = vadd.f32 0.0, %v7354
  %v7356 = vpop.f32.mrf.mxu0
  %7357 = vmatprep.mubr.f32.mxu0 0.0
  %7358 = vmatmul.mubr.f32.gmra.mxu0 %v7207
  %v7359 = vpop.f32.mrf.mxu0
  %v7360 = vadd.f32 0.0, %v7359
  %v7361 = vpop.f32.mrf.mxu0
  %7362 = vmatprep.mubr.f32.mxu0 0.0
  %7363 = vmatmul.mubr.f32.gmra.mxu0 %v7210
  %v7364 = vpop.f32.mrf.mxu0
  %v7365 = vadd.f32 0.0, %v7364
  %v7366 = vpop.f32.mrf.mxu0
  %7367 = vmatprep.mubr.f32.mxu0 0.0
  %7368 = vmatmul.mubr.f32.gmra.mxu0 %v7213
  %v7369 = vpop.f32.mrf.mxu0
  %v7370 = vadd.f32 0.0, %v7369
  %v7371 = vpop.f32.mrf.mxu0
  %7372 = vdwg.mxu0
  %v7373 = vadd.f32 %v6963, %v7285
  %v7374 = vadd.f32 %v6968, %v7290
  %v7375 = vadd.f32 %v6973, %v7295
  %v7376 = vadd.f32 %v6978, %v7300
  %v7377 = vadd.f32 %v6983, %v7305
  %v7378 = vadd.f32 %v6988, %v7310
  %v7379 = vadd.f32 %v6993, %v7315
  %v7380 = vadd.f32 %v6998, %v7320
  %v7381 = vadd.f32 %v7003, %v7325
  %v7382 = vadd.f32 %v7008, %v7330
  %v7383 = vadd.f32 %v7013, %v7335
  %v7384 = vadd.f32 %v7018, %v7340
  %v7385 = vadd.f32 %v7023, %v7345
  %v7386 = vadd.f32 %v7028, %v7350
  %v7387 = vadd.f32 %v7033, %v7355
  %v7388 = vadd.f32 %v7038, %v7360
  %v7389 = vadd.f32 %v7043, %v7365
  %v7390 = vadd.f32 %v7048, %v7370
  %v7391 = vld [vmem:[%s1062] sm:$0xff]
  %v7392 = vld [vmem:[%s1062 + $0x8] sm:$0xff]
  %v7393 = vld [vmem:[%s1062 + $0x10] sm:$0xff]
  %v7394 = vld [vmem:[%s1062 + $0x18] sm:$0xf]
  %v7396 = vsel %vm77, %v7394, 0
  %7398 = vmatprep.subr.mxu0 0.0
  %7399 = vmatpush1.msra.mxu0 0.0
  %7400 = vmatprep.subr.mxu0 0.0
  %7401 = vmatpush1.msra.mxu0 0.0
  %7402 = vmatprep.subr.mxu0 0.0
  %7403 = vmatpush1.msra.mxu0 0.0
  %7404 = vmatprep.subr.mxu0 0.0
  %7405 = vmatpush1.msra.mxu0 0.0
  %7406 = vmatprep.subr.mxu0 0.0
  %7407 = vmatpush1.msra.mxu0 0.0
  %7408 = vmatprep.subr.mxu0 0.0
  %7409 = vmatpush1.msra.mxu0 0.0
  %7410 = vmatprep.subr.mxu0 0.0
  %7411 = vmatpush1.msra.mxu0 0.0
  %7412 = vmatprep.subr.mxu0 0.0
  %7413 = vmatpush1.msra.mxu0 0.0
  %7414 = vmatprep.subr.mxu0 0.0
  %7415 = vmatpush1.msra.mxu0 0.0
  %7416 = vmatprep.subr.mxu0 0.0
  %7417 = vmatpush1.msra.mxu0 0.0
  %7418 = vmatprep.subr.mxu0 0.0
  %7419 = vmatpush1.msra.mxu0 0.0
  %7420 = vmatprep.subr.mxu0 0.0
  %7421 = vmatpush1.msra.mxu0 0.0
  %7422 = vmatprep.subr.mxu0 0.0
  %7423 = vmatpush1.msra.mxu0 %v7396
  %7424 = vmatprep.subr.mxu0 0.0
  %7425 = vmatpush1.msra.mxu0 %v7393
  %7426 = vmatprep.subr.mxu0 0.0
  %7427 = vmatpush1.msra.mxu0 %v7392
  %7428 = vmatprep.subr.mxu0 0.0
  %7429 = vmatpush1.msra.mxu0 %v7391
  %7430 = vmatprep.subr.mxu0 0.0
  %7431 = vmatpush2.msra.mxu0 0.0
  %7432 = vmatprep.subr.mxu0 0.0
  %7433 = vmatpush2.msra.mxu0 0.0
  %7434 = vmatprep.subr.mxu0 0.0
  %7435 = vmatpush2.msra.mxu0 0.0
  %7436 = vmatprep.subr.mxu0 0.0
  %7437 = vmatpush2.msra.mxu0 0.0
  %7438 = vmatprep.subr.mxu0 0.0
  %7439 = vmatpush2.msra.mxu0 0.0
  %7440 = vmatprep.subr.mxu0 0.0
  %7441 = vmatpush2.msra.mxu0 0.0
  %7442 = vmatprep.subr.mxu0 0.0
  %7443 = vmatpush2.msra.mxu0 0.0
  %7444 = vmatprep.subr.mxu0 0.0
  %7445 = vmatpush2.msra.mxu0 0.0
  %7446 = vmatprep.subr.mxu0 0.0
  %7447 = vmatpush2.msra.mxu0 0.0
  %7448 = vmatprep.subr.mxu0 0.0
  %7449 = vmatpush2.msra.mxu0 0.0
  %7450 = vmatprep.subr.mxu0 0.0
  %7451 = vmatpush2.msra.mxu0 0.0
  %7452 = vmatprep.subr.mxu0 0.0
  %7453 = vmatpush2.msra.mxu0 0.0
  %7454 = vmatprep.subr.mxu0 0.0
  %7455 = vmatpush2.msra.mxu0 0.0
  %7456 = vmatprep.subr.mxu0 0.0
  %7457 = vmatpush2.msra.mxu0 0.0
  %7458 = vmatprep.subr.mxu0 0.0
  %7459 = vmatpush2.msra.mxu0 0.0
  %7460 = vmatprep.subr.mxu0 0.0
  %7461 = vmatpush2.msra.mxu0 0.0
  %7462 = vmatprep.mubr.f32.mxu0 0.0
  %7463 = vmatmul.mubr.f32.gmra.mxu0 %v6400
  %v7464 = vpop.f32.mrf.mxu0
  %v7465 = vadd.f32 0.0, %v7464
  %v7466 = vpop.f32.mrf.mxu0
  %7467 = vmatprep.mubr.f32.mxu0 0.0
  %7468 = vmatmul.mubr.f32.gmra.mxu0 %v6403
  %v7469 = vpop.f32.mrf.mxu0
  %v7470 = vadd.f32 0.0, %v7469
  %v7471 = vpop.f32.mrf.mxu0
  %7472 = vmatprep.mubr.f32.mxu0 0.0
  %7473 = vmatmul.mubr.f32.gmra.mxu0 %v6406
  %v7474 = vpop.f32.mrf.mxu0
  %v7475 = vadd.f32 0.0, %v7474
  %v7476 = vpop.f32.mrf.mxu0
  %7477 = vmatprep.mubr.f32.mxu0 0.0
  %7478 = vmatmul.mubr.f32.gmra.mxu0 %v6409
  %v7479 = vpop.f32.mrf.mxu0
  %v7480 = vadd.f32 0.0, %v7479
  %v7481 = vpop.f32.mrf.mxu0
  %7482 = vdwg.mxu0
  %v7483 = vld [vmem:[%s1155] sm:$0xff]
  %v7484 = vld [vmem:[%s1155 + $0x8] sm:$0xff]
  %v7485 = vld [vmem:[%s1155 + $0x10] sm:$0xff]
  %v7486 = vld [vmem:[%s1155 + $0x18] sm:$0xff]
  %v7487 = vld [vmem:[%s1155 + $0x20] sm:$0xff]
  %v7488 = vld [vmem:[%s1155 + $0x28] sm:$0xff]
  %v7489 = vld [vmem:[%s1155 + $0x30] sm:$0xff]
  %v7490 = vld [vmem:[%s1155 + $0x38] sm:$0xff]
  %v7491 = vld [vmem:[%s1155 + $0x40] sm:$0xff]
  %v7492 = vld [vmem:[%s1155 + $0x48] sm:$0xff]
  %v7493 = vld [vmem:[%s1155 + $0x50] sm:$0xff]
  %v7494 = vld [vmem:[%s1155 + $0x58] sm:$0xff]
  %v7495 = vld [vmem:[%s1155 + $0x60] sm:$0xff]
  %v7496 = vld [vmem:[%s1155 + $0x68] sm:$0xff]
  %v7497 = vld [vmem:[%s1155 + $0x70] sm:$0xff]
  %v7498 = vld [vmem:[%s1155 + $0x78] sm:$0xff]
  %v7499 = vld [vmem:[%s1155 + $0x80] sm:$0xff]
  %v7500 = vld [vmem:[%s1155 + $0x88] sm:$0xff]
  %v7502 = vsel %vm64, %v7483, 0
  %v7505 = vsel %vm64, %v7484, 0
  %v7508 = vsel %vm64, %v7485, 0
  %v7511 = vsel %vm64, %v7486, 0
  %v7514 = vsel %vm64, %v7487, 0
  %v7517 = vsel %vm64, %v7488, 0
  %v7520 = vsel %vm64, %v7489, 0
  %v7523 = vsel %vm64, %v7490, 0
  %v7526 = vsel %vm64, %v7491, 0
  %v7529 = vsel %vm64, %v7492, 0
  %v7532 = vsel %vm64, %v7493, 0
  %v7535 = vsel %vm64, %v7494, 0
  %v7538 = vsel %vm64, %v7495, 0
  %v7541 = vsel %vm64, %v7496, 0
  %v7544 = vsel %vm64, %v7497, 0
  %v7547 = vsel %vm64, %v7498, 0
  %v7550 = vsel %vm64, %v7499, 0
  %v7553 = vsel %vm64, %v7500, 0
  %v7556 = vsel %vm77, %v7480, 0
  %7558 = vmatprep.subr.mxu0 0.0
  %7559 = vmatpush1.msra.mxu0 0.0
  %7560 = vmatprep.subr.mxu0 0.0
  %7561 = vmatpush1.msra.mxu0 0.0
  %7562 = vmatprep.subr.mxu0 0.0
  %7563 = vmatpush1.msra.mxu0 0.0
  %7564 = vmatprep.subr.mxu0 0.0
  %7565 = vmatpush1.msra.mxu0 0.0
  %7566 = vmatprep.subr.mxu0 0.0
  %7567 = vmatpush1.msra.mxu0 0.0
  %7568 = vmatprep.subr.mxu0 0.0
  %7569 = vmatpush1.msra.mxu0 0.0
  %7570 = vmatprep.subr.mxu0 0.0
  %7571 = vmatpush1.msra.mxu0 0.0
  %7572 = vmatprep.subr.mxu0 0.0
  %7573 = vmatpush1.msra.mxu0 0.0
  %7574 = vmatprep.subr.mxu0 0.0
  %7575 = vmatpush1.msra.mxu0 0.0
  %7576 = vmatprep.subr.mxu0 0.0
  %7577 = vmatpush1.msra.mxu0 0.0
  %7578 = vmatprep.subr.mxu0 0.0
  %7579 = vmatpush1.msra.mxu0 0.0
  %7580 = vmatprep.subr.mxu0 0.0
  %7581 = vmatpush1.msra.mxu0 0.0
  %7582 = vmatprep.subr.mxu0 0.0
  %7583 = vmatpush1.msra.mxu0 %v7556
  %7584 = vmatprep.subr.mxu0 0.0
  %7585 = vmatpush1.msra.mxu0 %v7475
  %7586 = vmatprep.subr.mxu0 0.0
  %7587 = vmatpush1.msra.mxu0 %v7470
  %7588 = vmatprep.subr.mxu0 0.0
  %7589 = vmatpush1.msra.mxu0 %v7465
  %7590 = vmatprep.subr.mxu0 0.0
  %7591 = vmatpush2.msra.mxu0 0.0
  %7592 = vmatprep.subr.mxu0 0.0
  %7593 = vmatpush2.msra.mxu0 0.0
  %7594 = vmatprep.subr.mxu0 0.0
  %7595 = vmatpush2.msra.mxu0 0.0
  %7596 = vmatprep.subr.mxu0 0.0
  %7597 = vmatpush2.msra.mxu0 0.0
  %7598 = vmatprep.subr.mxu0 0.0
  %7599 = vmatpush2.msra.mxu0 0.0
  %7600 = vmatprep.subr.mxu0 0.0
  %7601 = vmatpush2.msra.mxu0 0.0
  %7602 = vmatprep.subr.mxu0 0.0
  %7603 = vmatpush2.msra.mxu0 0.0
  %7604 = vmatprep.subr.mxu0 0.0
  %7605 = vmatpush2.msra.mxu0 0.0
  %7606 = vmatprep.subr.mxu0 0.0
  %7607 = vmatpush2.msra.mxu0 0.0
  %7608 = vmatprep.subr.mxu0 0.0
  %7609 = vmatpush2.msra.mxu0 0.0
  %7610 = vmatprep.subr.mxu0 0.0
  %7611 = vmatpush2.msra.mxu0 0.0
  %7612 = vmatprep.subr.mxu0 0.0
  %7613 = vmatpush2.msra.mxu0 0.0
  %7614 = vmatprep.subr.mxu0 0.0
  %7615 = vmatpush2.msra.mxu0 0.0
  %7616 = vmatprep.subr.mxu0 0.0
  %7617 = vmatpush2.msra.mxu0 0.0
  %7618 = vmatprep.subr.mxu0 0.0
  %7619 = vmatpush2.msra.mxu0 0.0
  %7620 = vmatprep.subr.mxu0 0.0
  %7621 = vmatpush2.msra.mxu0 0.0
  %7622 = vmatprep.mubr.f32.mxu0 0.0
  %7623 = vmatmul.mubr.f32.gmra.mxu0 %v7502
  %v7624 = vpop.f32.mrf.mxu0
  %v7625 = vadd.f32 0.0, %v7624
  %v7626 = vpop.f32.mrf.mxu0
  %7627 = vmatprep.mubr.f32.mxu0 0.0
  %7628 = vmatmul.mubr.f32.gmra.mxu0 %v7505
  %v7629 = vpop.f32.mrf.mxu0
  %v7630 = vadd.f32 0.0, %v7629
  %v7631 = vpop.f32.mrf.mxu0
  %7632 = vmatprep.mubr.f32.mxu0 0.0
  %7633 = vmatmul.mubr.f32.gmra.mxu0 %v7508
  %v7634 = vpop.f32.mrf.mxu0
  %v7635 = vadd.f32 0.0, %v7634
  %v7636 = vpop.f32.mrf.mxu0
  %7637 = vmatprep.mubr.f32.mxu0 0.0
  %7638 = vmatmul.mubr.f32.gmra.mxu0 %v7511
  %v7639 = vpop.f32.mrf.mxu0
  %v7640 = vadd.f32 0.0, %v7639
  %v7641 = vpop.f32.mrf.mxu0
  %7642 = vmatprep.mubr.f32.mxu0 0.0
  %7643 = vmatmul.mubr.f32.gmra.mxu0 %v7514
  %v7644 = vpop.f32.mrf.mxu0
  %v7645 = vadd.f32 0.0, %v7644
  %v7646 = vpop.f32.mrf.mxu0
  %7647 = vmatprep.mubr.f32.mxu0 0.0
  %7648 = vmatmul.mubr.f32.gmra.mxu0 %v7517
  %v7649 = vpop.f32.mrf.mxu0
  %v7650 = vadd.f32 0.0, %v7649
  %v7651 = vpop.f32.mrf.mxu0
  %7652 = vmatprep.mubr.f32.mxu0 0.0
  %7653 = vmatmul.mubr.f32.gmra.mxu0 %v7520
  %v7654 = vpop.f32.mrf.mxu0
  %v7655 = vadd.f32 0.0, %v7654
  %v7656 = vpop.f32.mrf.mxu0
  %7657 = vmatprep.mubr.f32.mxu0 0.0
  %7658 = vmatmul.mubr.f32.gmra.mxu0 %v7523
  %v7659 = vpop.f32.mrf.mxu0
  %v7660 = vadd.f32 0.0, %v7659
  %v7661 = vpop.f32.mrf.mxu0
  %7662 = vmatprep.mubr.f32.mxu0 0.0
  %7663 = vmatmul.mubr.f32.gmra.mxu0 %v7526
  %v7664 = vpop.f32.mrf.mxu0
  %v7665 = vadd.f32 0.0, %v7664
  %v7666 = vpop.f32.mrf.mxu0
  %7667 = vmatprep.mubr.f32.mxu0 0.0
  %7668 = vmatmul.mubr.f32.gmra.mxu0 %v7529
  %v7669 = vpop.f32.mrf.mxu0
  %v7670 = vadd.f32 0.0, %v7669
  %v7671 = vpop.f32.mrf.mxu0
  %7672 = vmatprep.mubr.f32.mxu0 0.0
  %7673 = vmatmul.mubr.f32.gmra.mxu0 %v7532
  %v7674 = vpop.f32.mrf.mxu0
  %v7675 = vadd.f32 0.0, %v7674
  %v7676 = vpop.f32.mrf.mxu0
  %7677 = vmatprep.mubr.f32.mxu0 0.0
  %7678 = vmatmul.mubr.f32.gmra.mxu0 %v7535
  %v7679 = vpop.f32.mrf.mxu0
  %v7680 = vadd.f32 0.0, %v7679
  %v7681 = vpop.f32.mrf.mxu0
  %7682 = vmatprep.mubr.f32.mxu0 0.0
  %7683 = vmatmul.mubr.f32.gmra.mxu0 %v7538
  %v7684 = vpop.f32.mrf.mxu0
  %v7685 = vadd.f32 0.0, %v7684
  %v7686 = vpop.f32.mrf.mxu0
  %7687 = vmatprep.mubr.f32.mxu0 0.0
  %7688 = vmatmul.mubr.f32.gmra.mxu0 %v7541
  %v7689 = vpop.f32.mrf.mxu0
  %v7690 = vadd.f32 0.0, %v7689
  %v7691 = vpop.f32.mrf.mxu0
  %7692 = vmatprep.mubr.f32.mxu0 0.0
  %7693 = vmatmul.mubr.f32.gmra.mxu0 %v7544
  %v7694 = vpop.f32.mrf.mxu0
  %v7695 = vadd.f32 0.0, %v7694
  %v7696 = vpop.f32.mrf.mxu0
  %7697 = vmatprep.mubr.f32.mxu0 0.0
  %7698 = vmatmul.mubr.f32.gmra.mxu0 %v7547
  %v7699 = vpop.f32.mrf.mxu0
  %v7700 = vadd.f32 0.0, %v7699
  %v7701 = vpop.f32.mrf.mxu0
  %7702 = vmatprep.mubr.f32.mxu0 0.0
  %7703 = vmatmul.mubr.f32.gmra.mxu0 %v7550
  %v7704 = vpop.f32.mrf.mxu0
  %v7705 = vadd.f32 0.0, %v7704
  %v7706 = vpop.f32.mrf.mxu0
  %7707 = vmatprep.mubr.f32.mxu0 0.0
  %7708 = vmatmul.mubr.f32.gmra.mxu0 %v7553
  %v7709 = vpop.f32.mrf.mxu0
  %v7710 = vadd.f32 0.0, %v7709
  %v7711 = vpop.f32.mrf.mxu0
  %7712 = vdwg.mxu0
  %v7713 = vadd.f32 %v7373, %v7625
  %v7714 = vadd.f32 %v7374, %v7630
  %v7715 = vadd.f32 %v7375, %v7635
  %v7716 = vadd.f32 %v7376, %v7640
  %v7717 = vadd.f32 %v7377, %v7645
  %v7718 = vadd.f32 %v7378, %v7650
  %v7719 = vadd.f32 %v7379, %v7655
  %v7720 = vadd.f32 %v7380, %v7660
  %v7721 = vadd.f32 %v7381, %v7665
  %v7722 = vadd.f32 %v7382, %v7670
  %v7723 = vadd.f32 %v7383, %v7675
  %v7724 = vadd.f32 %v7384, %v7680
  %v7725 = vadd.f32 %v7385, %v7685
  %v7726 = vadd.f32 %v7386, %v7690
  %v7727 = vadd.f32 %v7387, %v7695
  %v7728 = vadd.f32 %v7388, %v7700
  %v7729 = vadd.f32 %v7389, %v7705
  %v7730 = vadd.f32 %v7390, %v7710
  %v7731 = vld [vmem:[%s1404] sm:$0xff]
  %v7732 = vld [vmem:[%s1404 + $0x8] sm:$0xff]
  %v7733 = vld [vmem:[%s1404 + $0x10] sm:$0xff]
  %v7734 = vld [vmem:[%s1404 + $0x18] sm:$0xf]
  %v7736 = vsel %vm77, %v7734, 0
  %7738 = vmatprep.subr.mxu0 0.0
  %7739 = vmatpush1.msra.mxu0 0.0
  %7740 = vmatprep.subr.mxu0 0.0
  %7741 = vmatpush1.msra.mxu0 0.0
  %7742 = vmatprep.subr.mxu0 0.0
  %7743 = vmatpush1.msra.mxu0 0.0
  %7744 = vmatprep.subr.mxu0 0.0
  %7745 = vmatpush1.msra.mxu0 0.0
  %7746 = vmatprep.subr.mxu0 0.0
  %7747 = vmatpush1.msra.mxu0 0.0
  %7748 = vmatprep.subr.mxu0 0.0
  %7749 = vmatpush1.msra.mxu0 0.0
  %7750 = vmatprep.subr.mxu0 0.0
  %7751 = vmatpush1.msra.mxu0 0.0
  %7752 = vmatprep.subr.mxu0 0.0
  %7753 = vmatpush1.msra.mxu0 0.0
  %7754 = vmatprep.subr.mxu0 0.0
  %7755 = vmatpush1.msra.mxu0 0.0
  %7756 = vmatprep.subr.mxu0 0.0
  %7757 = vmatpush1.msra.mxu0 0.0
  %7758 = vmatprep.subr.mxu0 0.0
  %7759 = vmatpush1.msra.mxu0 0.0
  %7760 = vmatprep.subr.mxu0 0.0
  %7761 = vmatpush1.msra.mxu0 0.0
  %7762 = vmatprep.subr.mxu0 0.0
  %7763 = vmatpush1.msra.mxu0 %v7736
  %7764 = vmatprep.subr.mxu0 0.0
  %7765 = vmatpush1.msra.mxu0 %v7733
  %7766 = vmatprep.subr.mxu0 0.0
  %7767 = vmatpush1.msra.mxu0 %v7732
  %7768 = vmatprep.subr.mxu0 0.0
  %7769 = vmatpush1.msra.mxu0 %v7731
  %7770 = vmatprep.subr.mxu0 0.0
  %7771 = vmatpush2.msra.mxu0 0.0
  %7772 = vmatprep.subr.mxu0 0.0
  %7773 = vmatpush2.msra.mxu0 0.0
  %7774 = vmatprep.subr.mxu0 0.0
  %7775 = vmatpush2.msra.mxu0 0.0
  %7776 = vmatprep.subr.mxu0 0.0
  %7777 = vmatpush2.msra.mxu0 0.0
  %7778 = vmatprep.subr.mxu0 0.0
  %7779 = vmatpush2.msra.mxu0 0.0
  %7780 = vmatprep.subr.mxu0 0.0
  %7781 = vmatpush2.msra.mxu0 0.0
  %7782 = vmatprep.subr.mxu0 0.0
  %7783 = vmatpush2.msra.mxu0 0.0
  %7784 = vmatprep.subr.mxu0 0.0
  %7785 = vmatpush2.msra.mxu0 0.0
  %7786 = vmatprep.subr.mxu0 0.0
  %7787 = vmatpush2.msra.mxu0 0.0
  %7788 = vmatprep.subr.mxu0 0.0
  %7789 = vmatpush2.msra.mxu0 0.0
  %7790 = vmatprep.subr.mxu0 0.0
  %7791 = vmatpush2.msra.mxu0 0.0
  %7792 = vmatprep.subr.mxu0 0.0
  %7793 = vmatpush2.msra.mxu0 0.0
  %7794 = vmatprep.subr.mxu0 0.0
  %7795 = vmatpush2.msra.mxu0 0.0
  %7796 = vmatprep.subr.mxu0 0.0
  %7797 = vmatpush2.msra.mxu0 0.0
  %7798 = vmatprep.subr.mxu0 0.0
  %7799 = vmatpush2.msra.mxu0 0.0
  %7800 = vmatprep.subr.mxu0 0.0
  %7801 = vmatpush2.msra.mxu0 0.0
  %7802 = vmatprep.mubr.f32.mxu0 0.0
  %7803 = vmatmul.mubr.f32.gmra.mxu0 %v6400
  %v7804 = vpop.f32.mrf.mxu0
  %v7805 = vadd.f32 0.0, %v7804
  %v7806 = vpop.f32.mrf.mxu0
  %7807 = vmatprep.mubr.f32.mxu0 0.0
  %7808 = vmatmul.mubr.f32.gmra.mxu0 %v6403
  %v7809 = vpop.f32.mrf.mxu0
  %v7810 = vadd.f32 0.0, %v7809
  %v7811 = vpop.f32.mrf.mxu0
  %7812 = vmatprep.mubr.f32.mxu0 0.0
  %7813 = vmatmul.mubr.f32.gmra.mxu0 %v6406
  %v7814 = vpop.f32.mrf.mxu0
  %v7815 = vadd.f32 0.0, %v7814
  %v7816 = vpop.f32.mrf.mxu0
  %7817 = vmatprep.mubr.f32.mxu0 0.0
  %7818 = vmatmul.mubr.f32.gmra.mxu0 %v6409
  %v7819 = vpop.f32.mrf.mxu0
  %v7820 = vadd.f32 0.0, %v7819
  %v7821 = vpop.f32.mrf.mxu0
  %7822 = vdwg.mxu0
  %v7823 = vld [vmem:[%s1497] sm:$0xff]
  %v7824 = vld [vmem:[%s1497 + $0x8] sm:$0xff]
  %v7825 = vld [vmem:[%s1497 + $0x10] sm:$0xff]
  %v7826 = vld [vmem:[%s1497 + $0x18] sm:$0xff]
  %v7827 = vld [vmem:[%s1497 + $0x20] sm:$0xff]
  %v7828 = vld [vmem:[%s1497 + $0x28] sm:$0xff]
  %v7829 = vld [vmem:[%s1497 + $0x30] sm:$0xff]
  %v7830 = vld [vmem:[%s1497 + $0x38] sm:$0xff]
  %v7831 = vld [vmem:[%s1497 + $0x40] sm:$0xff]
  %v7832 = vld [vmem:[%s1497 + $0x48] sm:$0xff]
  %v7833 = vld [vmem:[%s1497 + $0x50] sm:$0xff]
  %v7834 = vld [vmem:[%s1497 + $0x58] sm:$0xff]
  %v7835 = vld [vmem:[%s1497 + $0x60] sm:$0xff]
  %v7836 = vld [vmem:[%s1497 + $0x68] sm:$0xff]
  %v7837 = vld [vmem:[%s1497 + $0x70] sm:$0xff]
  %v7838 = vld [vmem:[%s1497 + $0x78] sm:$0xff]
  %v7839 = vld [vmem:[%s1497 + $0x80] sm:$0xff]
  %v7840 = vld [vmem:[%s1497 + $0x88] sm:$0xff]
  %v7842 = vsel %vm64, %v7823, 0
  %v7845 = vsel %vm64, %v7824, 0
  %v7848 = vsel %vm64, %v7825, 0
  %v7851 = vsel %vm64, %v7826, 0
  %v7854 = vsel %vm64, %v7827, 0
  %v7857 = vsel %vm64, %v7828, 0
  %v7860 = vsel %vm64, %v7829, 0
  %v7863 = vsel %vm64, %v7830, 0
  %v7866 = vsel %vm64, %v7831, 0
  %v7869 = vsel %vm64, %v7832, 0
  %v7872 = vsel %vm64, %v7833, 0
  %v7875 = vsel %vm64, %v7834, 0
  %v7878 = vsel %vm64, %v7835, 0
  %v7881 = vsel %vm64, %v7836, 0
  %v7884 = vsel %vm64, %v7837, 0
  %v7887 = vsel %vm64, %v7838, 0
  %v7890 = vsel %vm64, %v7839, 0
  %v7893 = vsel %vm64, %v7840, 0
  %v7896 = vsel %vm77, %v7820, 0
  %7898 = vmatprep.subr.mxu0 0.0
  %7899 = vmatpush1.msra.mxu0 0.0
  %7900 = vmatprep.subr.mxu0 0.0
  %7901 = vmatpush1.msra.mxu0 0.0
  %7902 = vmatprep.subr.mxu0 0.0
  %7903 = vmatpush1.msra.mxu0 0.0
  %7904 = vmatprep.subr.mxu0 0.0
  %7905 = vmatpush1.msra.mxu0 0.0
  %7906 = vmatprep.subr.mxu0 0.0
  %7907 = vmatpush1.msra.mxu0 0.0
  %7908 = vmatprep.subr.mxu0 0.0
  %7909 = vmatpush1.msra.mxu0 0.0
  %7910 = vmatprep.subr.mxu0 0.0
  %7911 = vmatpush1.msra.mxu0 0.0
  %7912 = vmatprep.subr.mxu0 0.0
  %7913 = vmatpush1.msra.mxu0 0.0
  %7914 = vmatprep.subr.mxu0 0.0
  %7915 = vmatpush1.msra.mxu0 0.0
  %7916 = vmatprep.subr.mxu0 0.0
  %7917 = vmatpush1.msra.mxu0 0.0
  %7918 = vmatprep.subr.mxu0 0.0
  %7919 = vmatpush1.msra.mxu0 0.0
  %7920 = vmatprep.subr.mxu0 0.0
  %7921 = vmatpush1.msra.mxu0 0.0
  %7922 = vmatprep.subr.mxu0 0.0
  %7923 = vmatpush1.msra.mxu0 %v7896
  %7924 = vmatprep.subr.mxu0 0.0
  %7925 = vmatpush1.msra.mxu0 %v7815
  %7926 = vmatprep.subr.mxu0 0.0
  %7927 = vmatpush1.msra.mxu0 %v7810
  %7928 = vmatprep.subr.mxu0 0.0
  %7929 = vmatpush1.msra.mxu0 %v7805
  %7930 = vmatprep.subr.mxu0 0.0
  %7931 = vmatpush2.msra.mxu0 0.0
  %7932 = vmatprep.subr.mxu0 0.0
  %7933 = vmatpush2.msra.mxu0 0.0
  %7934 = vmatprep.subr.mxu0 0.0
  %7935 = vmatpush2.msra.mxu0 0.0
  %7936 = vmatprep.subr.mxu0 0.0
  %7937 = vmatpush2.msra.mxu0 0.0
  %7938 = vmatprep.subr.mxu0 0.0
  %7939 = vmatpush2.msra.mxu0 0.0
  %7940 = vmatprep.subr.mxu0 0.0
  %7941 = vmatpush2.msra.mxu0 0.0
  %7942 = vmatprep.subr.mxu0 0.0
  %7943 = vmatpush2.msra.mxu0 0.0
  %7944 = vmatprep.subr.mxu0 0.0
  %7945 = vmatpush2.msra.mxu0 0.0
  %7946 = vmatprep.subr.mxu0 0.0
  %7947 = vmatpush2.msra.mxu0 0.0
  %7948 = vmatprep.subr.mxu0 0.0
  %7949 = vmatpush2.msra.mxu0 0.0
  %7950 = vmatprep.subr.mxu0 0.0
  %7951 = vmatpush2.msra.mxu0 0.0
  %7952 = vmatprep.subr.mxu0 0.0
  %7953 = vmatpush2.msra.mxu0 0.0
  %7954 = vmatprep.subr.mxu0 0.0
  %7955 = vmatpush2.msra.mxu0 0.0
  %7956 = vmatprep.subr.mxu0 0.0
  %7957 = vmatpush2.msra.mxu0 0.0
  %7958 = vmatprep.subr.mxu0 0.0
  %7959 = vmatpush2.msra.mxu0 0.0
  %7960 = vmatprep.subr.mxu0 0.0
  %7961 = vmatpush2.msra.mxu0 0.0
  %7962 = vmatprep.mubr.f32.mxu0 0.0
  %7963 = vmatmul.mubr.f32.gmra.mxu0 %v7842
  %v7964 = vpop.f32.mrf.mxu0
  %v7965 = vadd.f32 0.0, %v7964
  %v7966 = vpop.f32.mrf.mxu0
  %7967 = vmatprep.mubr.f32.mxu0 0.0
  %7968 = vmatmul.mubr.f32.gmra.mxu0 %v7845
  %v7969 = vpop.f32.mrf.mxu0
  %v7970 = vadd.f32 0.0, %v7969
  %v7971 = vpop.f32.mrf.mxu0
  %7972 = vmatprep.mubr.f32.mxu0 0.0
  %7973 = vmatmul.mubr.f32.gmra.mxu0 %v7848
  %v7974 = vpop.f32.mrf.mxu0
  %v7975 = vadd.f32 0.0, %v7974
  %v7976 = vpop.f32.mrf.mxu0
  %7977 = vmatprep.mubr.f32.mxu0 0.0
  %7978 = vmatmul.mubr.f32.gmra.mxu0 %v7851
  %v7979 = vpop.f32.mrf.mxu0
  %v7980 = vadd.f32 0.0, %v7979
  %v7981 = vpop.f32.mrf.mxu0
  %7982 = vmatprep.mubr.f32.mxu0 0.0
  %7983 = vmatmul.mubr.f32.gmra.mxu0 %v7854
  %v7984 = vpop.f32.mrf.mxu0
  %v7985 = vadd.f32 0.0, %v7984
  %v7986 = vpop.f32.mrf.mxu0
  %7987 = vmatprep.mubr.f32.mxu0 0.0
  %7988 = vmatmul.mubr.f32.gmra.mxu0 %v7857
  %v7989 = vpop.f32.mrf.mxu0
  %v7990 = vadd.f32 0.0, %v7989
  %v7991 = vpop.f32.mrf.mxu0
  %7992 = vmatprep.mubr.f32.mxu0 0.0
  %7993 = vmatmul.mubr.f32.gmra.mxu0 %v7860
  %v7994 = vpop.f32.mrf.mxu0
  %v7995 = vadd.f32 0.0, %v7994
  %v7996 = vpop.f32.mrf.mxu0
  %7997 = vmatprep.mubr.f32.mxu0 0.0
  %7998 = vmatmul.mubr.f32.gmra.mxu0 %v7863
  %v7999 = vpop.f32.mrf.mxu0
  %v8000 = vadd.f32 0.0, %v7999
  %v8001 = vpop.f32.mrf.mxu0
  %8002 = vmatprep.mubr.f32.mxu0 0.0
  %8003 = vmatmul.mubr.f32.gmra.mxu0 %v7866
  %v8004 = vpop.f32.mrf.mxu0
  %v8005 = vadd.f32 0.0, %v8004
  %v8006 = vpop.f32.mrf.mxu0
  %8007 = vmatprep.mubr.f32.mxu0 0.0
  %8008 = vmatmul.mubr.f32.gmra.mxu0 %v7869
  %v8009 = vpop.f32.mrf.mxu0
  %v8010 = vadd.f32 0.0, %v8009
  %v8011 = vpop.f32.mrf.mxu0
  %8012 = vmatprep.mubr.f32.mxu0 0.0
  %8013 = vmatmul.mubr.f32.gmra.mxu0 %v7872
  %v8014 = vpop.f32.mrf.mxu0
  %v8015 = vadd.f32 0.0, %v8014
  %v8016 = vpop.f32.mrf.mxu0
  %8017 = vmatprep.mubr.f32.mxu0 0.0
  %8018 = vmatmul.mubr.f32.gmra.mxu0 %v7875
  %v8019 = vpop.f32.mrf.mxu0
  %v8020 = vadd.f32 0.0, %v8019
  %v8021 = vpop.f32.mrf.mxu0
  %8022 = vmatprep.mubr.f32.mxu0 0.0
  %8023 = vmatmul.mubr.f32.gmra.mxu0 %v7878
  %v8024 = vpop.f32.mrf.mxu0
  %v8025 = vadd.f32 0.0, %v8024
  %v8026 = vpop.f32.mrf.mxu0
  %8027 = vmatprep.mubr.f32.mxu0 0.0
  %8028 = vmatmul.mubr.f32.gmra.mxu0 %v7881
  %v8029 = vpop.f32.mrf.mxu0
  %v8030 = vadd.f32 0.0, %v8029
  %v8031 = vpop.f32.mrf.mxu0
  %8032 = vmatprep.mubr.f32.mxu0 0.0
  %8033 = vmatmul.mubr.f32.gmra.mxu0 %v7884
  %v8034 = vpop.f32.mrf.mxu0
  %v8035 = vadd.f32 0.0, %v8034
  %v8036 = vpop.f32.mrf.mxu0
  %8037 = vmatprep.mubr.f32.mxu0 0.0
  %8038 = vmatmul.mubr.f32.gmra.mxu0 %v7887
  %v8039 = vpop.f32.mrf.mxu0
  %v8040 = vadd.f32 0.0, %v8039
  %v8041 = vpop.f32.mrf.mxu0
  %8042 = vmatprep.mubr.f32.mxu0 0.0
  %8043 = vmatmul.mubr.f32.gmra.mxu0 %v7890
  %v8044 = vpop.f32.mrf.mxu0
  %v8045 = vadd.f32 0.0, %v8044
  %v8046 = vpop.f32.mrf.mxu0
  %8047 = vmatprep.mubr.f32.mxu0 0.0
  %8048 = vmatmul.mubr.f32.gmra.mxu0 %v7893
  %v8049 = vpop.f32.mrf.mxu0
  %v8050 = vadd.f32 0.0, %v8049
  %v8051 = vpop.f32.mrf.mxu0
  %8052 = vdwg.mxu0
  %v8053 = vadd.f32 %v7713, %v7965
  %v8054 = vadd.f32 %v7714, %v7970
  %v8055 = vadd.f32 %v7715, %v7975
  %v8056 = vadd.f32 %v7716, %v7980
  %v8057 = vadd.f32 %v7717, %v7985
  %v8058 = vadd.f32 %v7718, %v7990
  %v8059 = vadd.f32 %v7719, %v7995
  %v8060 = vadd.f32 %v7720, %v8000
  %v8061 = vadd.f32 %v7721, %v8005
  %v8062 = vadd.f32 %v7722, %v8010
  %v8063 = vadd.f32 %v7723, %v8015
  %v8064 = vadd.f32 %v7724, %v8020
  %v8065 = vadd.f32 %v7725, %v8025
  %v8066 = vadd.f32 %v7726, %v8030
  %v8067 = vadd.f32 %v7727, %v8035
  %v8068 = vadd.f32 %v7728, %v8040
  %v8069 = vadd.f32 %v7729, %v8045
  %v8070 = vadd.f32 %v7730, %v8050
  %v8071 = vld [vmem:[%s3] sm:$0xff]
  %v8072 = vld [vmem:[%s3 + $0x8] sm:$0xff]
  %v8073 = vld [vmem:[%s3 + $0x10] sm:$0xff]
  %v8074 = vld [vmem:[%s3 + $0x18] sm:$0xff]
  %v8075 = vld [vmem:[%s3 + $0x20] sm:$0xff]
  %v8076 = vld [vmem:[%s3 + $0x28] sm:$0xff]
  %v8077 = vld [vmem:[%s3 + $0x30] sm:$0xff]
  %v8078 = vld [vmem:[%s3 + $0x38] sm:$0xff]
  %v8079 = vld [vmem:[%s3 + $0x40] sm:$0xff]
  %v8080 = vld [vmem:[%s3 + $0x48] sm:$0xff]
  %v8081 = vld [vmem:[%s3 + $0x50] sm:$0xff]
  %v8082 = vld [vmem:[%s3 + $0x58] sm:$0xff]
  %v8083 = vld [vmem:[%s3 + $0x60] sm:$0xff]
  %v8084 = vld [vmem:[%s3 + $0x68] sm:$0xff]
  %v8085 = vld [vmem:[%s3 + $0x70] sm:$0xff]
  %v8086 = vld [vmem:[%s3 + $0x78] sm:$0xff]
  %v8087 = vld [vmem:[%s3 + $0x80] sm:$0xff]
  %v8088 = vld [vmem:[%s3 + $0x88] sm:$0xff]
  %v8090 = vsel %vm1764, %v8072, 0
  %v8093 = vsel %vm1764, %v8074, 0
  %v8096 = vsel %vm1764, %v8076, 0
  %v8099 = vsel %vm1764, %v8078, 0
  %v8102 = vsel %vm1764, %v8080, 0
  %v8105 = vsel %vm1764, %v8082, 0
  %v8108 = vsel %vm1764, %v8084, 0
  %v8111 = vsel %vm1764, %v8086, 0
  %v8114 = vsel %vm1764, %v8088, 0
  %8116 = vmatprep.subr.mxu0 0.0
  %8117 = vmatpush1.msra.mxu0 %v8068
  %8118 = vmatprep.subr.mxu0 0.0
  %8119 = vmatpush1.msra.mxu0 %v8067
  %8120 = vmatprep.subr.mxu0 0.0
  %8121 = vmatpush1.msra.mxu0 %v8066
  %8122 = vmatprep.subr.mxu0 0.0
  %8123 = vmatpush1.msra.mxu0 %v8065
  %8124 = vmatprep.subr.mxu0 0.0
  %8125 = vmatpush1.msra.mxu0 %v8064
  %8126 = vmatprep.subr.mxu0 0.0
  %8127 = vmatpush1.msra.mxu0 %v8063
  %8128 = vmatprep.subr.mxu0 0.0
  %8129 = vmatpush1.msra.mxu0 %v8062
  %8130 = vmatprep.subr.mxu0 0.0
  %8131 = vmatpush1.msra.mxu0 %v8061
  %8132 = vmatprep.subr.mxu0 0.0
  %8133 = vmatpush1.msra.mxu0 %v8060
  %8134 = vmatprep.subr.mxu0 0.0
  %8135 = vmatpush1.msra.mxu0 %v8059
  %8136 = vmatprep.subr.mxu0 0.0
  %8137 = vmatpush1.msra.mxu0 %v8058
  %8138 = vmatprep.subr.mxu0 0.0
  %8139 = vmatpush1.msra.mxu0 %v8057
  %8140 = vmatprep.subr.mxu0 0.0
  %8141 = vmatpush1.msra.mxu0 %v8056
  %8142 = vmatprep.subr.mxu0 0.0
  %8143 = vmatpush1.msra.mxu0 %v8055
  %8144 = vmatprep.subr.mxu0 0.0
  %8145 = vmatpush1.msra.mxu0 %v8054
  %8146 = vmatprep.subr.mxu0 0.0
  %8147 = vmatpush1.msra.mxu0 %v8053
  %8148 = vmatprep.subr.mxu0 0.0
  %8149 = vmatpush2.msra.mxu0 0.0
  %8150 = vmatprep.subr.mxu0 0.0
  %8151 = vmatpush2.msra.mxu0 0.0
  %8152 = vmatprep.subr.mxu0 0.0
  %8153 = vmatpush2.msra.mxu0 0.0
  %8154 = vmatprep.subr.mxu0 0.0
  %8155 = vmatpush2.msra.mxu0 0.0
  %8156 = vmatprep.subr.mxu0 0.0
  %8157 = vmatpush2.msra.mxu0 0.0
  %8158 = vmatprep.subr.mxu0 0.0
  %8159 = vmatpush2.msra.mxu0 0.0
  %8160 = vmatprep.subr.mxu0 0.0
  %8161 = vmatpush2.msra.mxu0 0.0
  %8162 = vmatprep.subr.mxu0 0.0
  %8163 = vmatpush2.msra.mxu0 0.0
  %8164 = vmatprep.subr.mxu0 0.0
  %8165 = vmatpush2.msra.mxu0 0.0
  %8166 = vmatprep.subr.mxu0 0.0
  %8167 = vmatpush2.msra.mxu0 0.0
  %8168 = vmatprep.subr.mxu0 0.0
  %8169 = vmatpush2.msra.mxu0 0.0
  %8170 = vmatprep.subr.mxu0 0.0
  %8171 = vmatpush2.msra.mxu0 0.0
  %8172 = vmatprep.subr.mxu0 0.0
  %8173 = vmatpush2.msra.mxu0 0.0
  %8174 = vmatprep.subr.mxu0 0.0
  %8175 = vmatpush2.msra.mxu0 0.0
  %8176 = vmatprep.subr.mxu0 0.0
  %8177 = vmatpush2.msra.mxu0 %v8070
  %8178 = vmatprep.subr.mxu0 0.0
  %8179 = vmatpush2.msra.mxu0 %v8069
  %8180 = vmatprep.mubr.f32.mxu0 %v8090
  %8181 = vmatmul.mubr.f32.gmra.mxu0 %v8071
  %v8182 = vpop.f32.mrf.mxu0
  %v8183 = vadd.f32 0.0, %v8182
  %v8184 = vpop.f32.mrf.mxu0
  %8185 = vmatprep.mubr.f32.mxu0 %v8093
  %8186 = vmatmul.mubr.f32.gmra.mxu0 %v8073
  %v8187 = vpop.f32.mrf.mxu0
  %v8188 = vadd.f32 0.0, %v8187
  %v8189 = vpop.f32.mrf.mxu0
  %8190 = vmatprep.mubr.f32.mxu0 %v8096
  %8191 = vmatmul.mubr.f32.gmra.mxu0 %v8075
  %v8192 = vpop.f32.mrf.mxu0
  %v8193 = vadd.f32 0.0, %v8192
  %v8194 = vpop.f32.mrf.mxu0
  %8195 = vmatprep.mubr.f32.mxu0 %v8099
  %8196 = vmatmul.mubr.f32.gmra.mxu0 %v8077
  %v8197 = vpop.f32.mrf.mxu0
  %v8198 = vadd.f32 0.0, %v8197
  %v8199 = vpop.f32.mrf.mxu0
  %8200 = vmatprep.mubr.f32.mxu0 %v8102
  %8201 = vmatmul.mubr.f32.gmra.mxu0 %v8079
  %v8202 = vpop.f32.mrf.mxu0
  %v8203 = vadd.f32 0.0, %v8202
  %v8204 = vpop.f32.mrf.mxu0
  %8205 = vmatprep.mubr.f32.mxu0 %v8105
  %8206 = vmatmul.mubr.f32.gmra.mxu0 %v8081
  %v8207 = vpop.f32.mrf.mxu0
  %v8208 = vadd.f32 0.0, %v8207
  %v8209 = vpop.f32.mrf.mxu0
  %8210 = vmatprep.mubr.f32.mxu0 %v8108
  %8211 = vmatmul.mubr.f32.gmra.mxu0 %v8083
  %v8212 = vpop.f32.mrf.mxu0
  %v8213 = vadd.f32 0.0, %v8212
  %v8214 = vpop.f32.mrf.mxu0
  %8215 = vmatprep.mubr.f32.mxu0 %v8111
  %8216 = vmatmul.mubr.f32.gmra.mxu0 %v8085
  %v8217 = vpop.f32.mrf.mxu0
  %v8218 = vadd.f32 0.0, %v8217
  %v8219 = vpop.f32.mrf.mxu0
  %8220 = vmatprep.mubr.f32.mxu0 %v8114
  %8221 = vmatmul.mubr.f32.gmra.mxu0 %v8087
  %v8222 = vpop.f32.mrf.mxu0
  %v8223 = vadd.f32 0.0, %v8222
  %v8224 = vpop.f32.mrf.mxu0
  %8225 = vdwg.mxu0
  %v8226 = vld [vmem:[%s1902] sm:$0xff]
  %v8227 = vld [vmem:[%s1902 + $0x8] sm:$0xff]
  %v8228 = vld [vmem:[%s1902 + $0x10] sm:$0xff]
  %v8229 = vld [vmem:[%s1902 + $0x18] sm:$0xff]
  %v8230 = vld [vmem:[%s1902 + $0x20] sm:$0xff]
  %v8231 = vld [vmem:[%s1902 + $0x28] sm:$0xff]
  %v8232 = vld [vmem:[%s1902 + $0x30] sm:$0xff]
  %v8233 = vld [vmem:[%s1902 + $0x38] sm:$0xff]
  %v8234 = vld [vmem:[%s1902 + $0x40] sm:$0xff]
  %v8235 = vld [vmem:[%s1902 + $0x48] sm:$0xff]
  %v8236 = vld [vmem:[%s1902 + $0x50] sm:$0xff]
  %v8237 = vld [vmem:[%s1902 + $0x58] sm:$0xff]
  %v8238 = vld [vmem:[%s1902 + $0x60] sm:$0xff]
  %v8239 = vld [vmem:[%s1902 + $0x68] sm:$0xff]
  %v8240 = vld [vmem:[%s1902 + $0x70] sm:$0xff]
  %v8241 = vld [vmem:[%s1902 + $0x78] sm:$0xff]
  %v8242 = vld [vmem:[%s1902 + $0x80] sm:$0xff]
  %v8243 = vld [vmem:[%s1902 + $0x88] sm:$0xff]
  %v8245 = vsel %vm1764, %v8227, 0
  %v8248 = vsel %vm1764, %v8229, 0
  %v8251 = vsel %vm1764, %v8231, 0
  %v8254 = vsel %vm1764, %v8233, 0
  %v8257 = vsel %vm1764, %v8235, 0
  %v8260 = vsel %vm1764, %v8237, 0
  %v8263 = vsel %vm1764, %v8239, 0
  %v8266 = vsel %vm1764, %v8241, 0
  %v8269 = vsel %vm1764, %v8243, 0
  %8271 = vmatprep.subr.mxu0 0.0
  %8272 = vmatpush1.msra.mxu0 %v8068
  %8273 = vmatprep.subr.mxu0 0.0
  %8274 = vmatpush1.msra.mxu0 %v8067
  %8275 = vmatprep.subr.mxu0 0.0
  %8276 = vmatpush1.msra.mxu0 %v8066
  %8277 = vmatprep.subr.mxu0 0.0
  %8278 = vmatpush1.msra.mxu0 %v8065
  %8279 = vmatprep.subr.mxu0 0.0
  %8280 = vmatpush1.msra.mxu0 %v8064
  %8281 = vmatprep.subr.mxu0 0.0
  %8282 = vmatpush1.msra.mxu0 %v8063
  %8283 = vmatprep.subr.mxu0 0.0
  %8284 = vmatpush1.msra.mxu0 %v8062
  %8285 = vmatprep.subr.mxu0 0.0
  %8286 = vmatpush1.msra.mxu0 %v8061
  %8287 = vmatprep.subr.mxu0 0.0
  %8288 = vmatpush1.msra.mxu0 %v8060
  %8289 = vmatprep.subr.mxu0 0.0
  %8290 = vmatpush1.msra.mxu0 %v8059
  %8291 = vmatprep.subr.mxu0 0.0
  %8292 = vmatpush1.msra.mxu0 %v8058
  %8293 = vmatprep.subr.mxu0 0.0
  %8294 = vmatpush1.msra.mxu0 %v8057
  %8295 = vmatprep.subr.mxu0 0.0
  %8296 = vmatpush1.msra.mxu0 %v8056
  %8297 = vmatprep.subr.mxu0 0.0
  %8298 = vmatpush1.msra.mxu0 %v8055
  %8299 = vmatprep.subr.mxu0 0.0
  %8300 = vmatpush1.msra.mxu0 %v8054
  %8301 = vmatprep.subr.mxu0 0.0
  %8302 = vmatpush1.msra.mxu0 %v8053
  %8303 = vmatprep.subr.mxu0 0.0
  %8304 = vmatpush2.msra.mxu0 0.0
  %8305 = vmatprep.subr.mxu0 0.0
  %8306 = vmatpush2.msra.mxu0 0.0
  %8307 = vmatprep.subr.mxu0 0.0
  %8308 = vmatpush2.msra.mxu0 0.0
  %8309 = vmatprep.subr.mxu0 0.0
  %8310 = vmatpush2.msra.mxu0 0.0
  %8311 = vmatprep.subr.mxu0 0.0
  %8312 = vmatpush2.msra.mxu0 0.0
  %8313 = vmatprep.subr.mxu0 0.0
  %8314 = vmatpush2.msra.mxu0 0.0
  %8315 = vmatprep.subr.mxu0 0.0
  %8316 = vmatpush2.msra.mxu0 0.0
  %8317 = vmatprep.subr.mxu0 0.0
  %8318 = vmatpush2.msra.mxu0 0.0
  %8319 = vmatprep.subr.mxu0 0.0
  %8320 = vmatpush2.msra.mxu0 0.0
  %8321 = vmatprep.subr.mxu0 0.0
  %8322 = vmatpush2.msra.mxu0 0.0
  %8323 = vmatprep.subr.mxu0 0.0
  %8324 = vmatpush2.msra.mxu0 0.0
  %8325 = vmatprep.subr.mxu0 0.0
  %8326 = vmatpush2.msra.mxu0 0.0
  %8327 = vmatprep.subr.mxu0 0.0
  %8328 = vmatpush2.msra.mxu0 0.0
  %8329 = vmatprep.subr.mxu0 0.0
  %8330 = vmatpush2.msra.mxu0 0.0
  %8331 = vmatprep.subr.mxu0 0.0
  %8332 = vmatpush2.msra.mxu0 %v8070
  %8333 = vmatprep.subr.mxu0 0.0
  %8334 = vmatpush2.msra.mxu0 %v8069
  %8335 = vmatprep.mubr.f32.mxu0 %v8245
  %8336 = vmatmul.mubr.f32.gmra.mxu0 %v8226
  %v8337 = vpop.f32.mrf.mxu0
  %v8338 = vadd.f32 0.0, %v8337
  %v8339 = vpop.f32.mrf.mxu0
  %8340 = vmatprep.mubr.f32.mxu0 %v8248
  %8341 = vmatmul.mubr.f32.gmra.mxu0 %v8228
  %v8342 = vpop.f32.mrf.mxu0
  %v8343 = vadd.f32 0.0, %v8342
  %v8344 = vpop.f32.mrf.mxu0
  %8345 = vmatprep.mubr.f32.mxu0 %v8251
  %8346 = vmatmul.mubr.f32.gmra.mxu0 %v8230
  %v8347 = vpop.f32.mrf.mxu0
  %v8348 = vadd.f32 0.0, %v8347
  %v8349 = vpop.f32.mrf.mxu0
  %8350 = vmatprep.mubr.f32.mxu0 %v8254
  %8351 = vmatmul.mubr.f32.gmra.mxu0 %v8232
  %v8352 = vpop.f32.mrf.mxu0
  %v8353 = vadd.f32 0.0, %v8352
  %v8354 = vpop.f32.mrf.mxu0
  %8355 = vmatprep.mubr.f32.mxu0 %v8257
  %8356 = vmatmul.mubr.f32.gmra.mxu0 %v8234
  %v8357 = vpop.f32.mrf.mxu0
  %v8358 = vadd.f32 0.0, %v8357
  %v8359 = vpop.f32.mrf.mxu0
  %8360 = vmatprep.mubr.f32.mxu0 %v8260
  %8361 = vmatmul.mubr.f32.gmra.mxu0 %v8236
  %v8362 = vpop.f32.mrf.mxu0
  %v8363 = vadd.f32 0.0, %v8362
  %v8364 = vpop.f32.mrf.mxu0
  %8365 = vmatprep.mubr.f32.mxu0 %v8263
  %8366 = vmatmul.mubr.f32.gmra.mxu0 %v8238
  %v8367 = vpop.f32.mrf.mxu0
  %v8368 = vadd.f32 0.0, %v8367
  %v8369 = vpop.f32.mrf.mxu0
  %8370 = vmatprep.mubr.f32.mxu0 %v8266
  %8371 = vmatmul.mubr.f32.gmra.mxu0 %v8240
  %v8372 = vpop.f32.mrf.mxu0
  %v8373 = vadd.f32 0.0, %v8372
  %v8374 = vpop.f32.mrf.mxu0
  %8375 = vmatprep.mubr.f32.mxu0 %v8269
  %8376 = vmatmul.mubr.f32.gmra.mxu0 %v8242
  %v8377 = vpop.f32.mrf.mxu0
  %v8378 = vadd.f32 0.0, %v8377
  %v8379 = vpop.f32.mrf.mxu0
  %8380 = vdwg.mxu0
  %v8381 = vld [vmem:[%s4] sm:$0xff]
  %v8382 = vld [vmem:[%s4 + $0x8] sm:$0xff]
  %v8383 = vld [vmem:[%s4 + $0x10] sm:$0xff]
  %v8385 = vsel %vm2061, %v8183, 0
  %v8388 = vsel %vm2061, %v8188, 0
  %v8391 = vsel %vm2061, %v8193, 0
  %v8394 = vsel %vm2061, %v8198, 0
  %v8397 = vsel %vm2061, %v8203, 0
  %v8400 = vsel %vm2061, %v8208, 0
  %v8403 = vsel %vm2061, %v8213, 0
  %v8406 = vsel %vm2061, %v8218, 0
  %v8409 = vsel %vm2061, %v8223, 0
  %8411 = vmatprep.subr.mxu0 0.0
  %8412 = vmatpush1.msra.mxu0 0.0
  %8413 = vmatprep.subr.mxu0 0.0
  %8414 = vmatpush1.msra.mxu0 0.0
  %8415 = vmatprep.subr.mxu0 0.0
  %8416 = vmatpush1.msra.mxu0 0.0
  %8417 = vmatprep.subr.mxu0 0.0
  %8418 = vmatpush1.msra.mxu0 0.0
  %8419 = vmatprep.subr.mxu0 0.0
  %8420 = vmatpush1.msra.mxu0 0.0
  %8421 = vmatprep.subr.mxu0 0.0
  %8422 = vmatpush1.msra.mxu0 0.0
  %8423 = vmatprep.subr.mxu0 0.0
  %8424 = vmatpush1.msra.mxu0 0.0
  %8425 = vmatprep.subr.mxu0 0.0
  %8426 = vmatpush1.msra.mxu0 0.0
  %8427 = vmatprep.subr.mxu0 0.0
  %8428 = vmatpush1.msra.mxu0 0.0
  %8429 = vmatprep.subr.mxu0 0.0
  %8430 = vmatpush1.msra.mxu0 0.0
  %8431 = vmatprep.subr.mxu0 0.0
  %8432 = vmatpush1.msra.mxu0 0.0
  %8433 = vmatprep.subr.mxu0 0.0
  %8434 = vmatpush1.msra.mxu0 0.0
  %8435 = vmatprep.subr.mxu0 0.0
  %8436 = vmatpush1.msra.mxu0 0.0
  %8437 = vmatprep.subr.mxu0 0.0
  %8438 = vmatpush1.msra.mxu0 %v8383
  %8439 = vmatprep.subr.mxu0 0.0
  %8440 = vmatpush1.msra.mxu0 %v8382
  %8441 = vmatprep.subr.mxu0 0.0
  %8442 = vmatpush1.msra.mxu0 %v8381
  %8443 = vmatprep.subr.mxu0 0.0
  %8444 = vmatpush2.msra.mxu0 0.0
  %8445 = vmatprep.subr.mxu0 0.0
  %8446 = vmatpush2.msra.mxu0 0.0
  %8447 = vmatprep.subr.mxu0 0.0
  %8448 = vmatpush2.msra.mxu0 0.0
  %8449 = vmatprep.subr.mxu0 0.0
  %8450 = vmatpush2.msra.mxu0 0.0
  %8451 = vmatprep.subr.mxu0 0.0
  %8452 = vmatpush2.msra.mxu0 0.0
  %8453 = vmatprep.subr.mxu0 0.0
  %8454 = vmatpush2.msra.mxu0 0.0
  %8455 = vmatprep.subr.mxu0 0.0
  %8456 = vmatpush2.msra.mxu0 0.0
  %8457 = vmatprep.subr.mxu0 0.0
  %8458 = vmatpush2.msra.mxu0 0.0
  %8459 = vmatprep.subr.mxu0 0.0
  %8460 = vmatpush2.msra.mxu0 0.0
  %8461 = vmatprep.subr.mxu0 0.0
  %8462 = vmatpush2.msra.mxu0 0.0
  %8463 = vmatprep.subr.mxu0 0.0
  %8464 = vmatpush2.msra.mxu0 0.0
  %8465 = vmatprep.subr.mxu0 0.0
  %8466 = vmatpush2.msra.mxu0 0.0
  %8467 = vmatprep.subr.mxu0 0.0
  %8468 = vmatpush2.msra.mxu0 0.0
  %8469 = vmatprep.subr.mxu0 0.0
  %8470 = vmatpush2.msra.mxu0 0.0
  %8471 = vmatprep.subr.mxu0 0.0
  %8472 = vmatpush2.msra.mxu0 0.0
  %8473 = vmatprep.subr.mxu0 0.0
  %8474 = vmatpush2.msra.mxu0 0.0
  %8475 = vmatprep.mubr.f32.mxu0 0.0
  %8476 = vmatmul.mubr.f32.gmra.mxu0 %v8385
  %v8477 = vpop.f32.mrf.mxu0
  %v8478 = vadd.f32 0.0, %v8477
  %v8479 = vpop.f32.mrf.mxu0
  %8480 = vmatprep.mubr.f32.mxu0 0.0
  %8481 = vmatmul.mubr.f32.gmra.mxu0 %v8388
  %v8482 = vpop.f32.mrf.mxu0
  %v8483 = vadd.f32 0.0, %v8482
  %v8484 = vpop.f32.mrf.mxu0
  %8485 = vmatprep.mubr.f32.mxu0 0.0
  %8486 = vmatmul.mubr.f32.gmra.mxu0 %v8391
  %v8487 = vpop.f32.mrf.mxu0
  %v8488 = vadd.f32 0.0, %v8487
  %v8489 = vpop.f32.mrf.mxu0
  %8490 = vmatprep.mubr.f32.mxu0 0.0
  %8491 = vmatmul.mubr.f32.gmra.mxu0 %v8394
  %v8492 = vpop.f32.mrf.mxu0
  %v8493 = vadd.f32 0.0, %v8492
  %v8494 = vpop.f32.mrf.mxu0
  %8495 = vmatprep.mubr.f32.mxu0 0.0
  %8496 = vmatmul.mubr.f32.gmra.mxu0 %v8397
  %v8497 = vpop.f32.mrf.mxu0
  %v8498 = vadd.f32 0.0, %v8497
  %v8499 = vpop.f32.mrf.mxu0
  %8500 = vmatprep.mubr.f32.mxu0 0.0
  %8501 = vmatmul.mubr.f32.gmra.mxu0 %v8400
  %v8502 = vpop.f32.mrf.mxu0
  %v8503 = vadd.f32 0.0, %v8502
  %v8504 = vpop.f32.mrf.mxu0
  %8505 = vmatprep.mubr.f32.mxu0 0.0
  %8506 = vmatmul.mubr.f32.gmra.mxu0 %v8403
  %v8507 = vpop.f32.mrf.mxu0
  %v8508 = vadd.f32 0.0, %v8507
  %v8509 = vpop.f32.mrf.mxu0
  %8510 = vmatprep.mubr.f32.mxu0 0.0
  %8511 = vmatmul.mubr.f32.gmra.mxu0 %v8406
  %v8512 = vpop.f32.mrf.mxu0
  %v8513 = vadd.f32 0.0, %v8512
  %v8514 = vpop.f32.mrf.mxu0
  %8515 = vmatprep.mubr.f32.mxu0 0.0
  %8516 = vmatmul.mubr.f32.gmra.mxu0 %v8409
  %v8517 = vpop.f32.mrf.mxu0
  %v8518 = vadd.f32 0.0, %v8517
  %v8519 = vpop.f32.mrf.mxu0
  %8520 = vdwg.mxu0
  %v8521 = vld [vmem:[%s2199] sm:$0xff]
  %v8522 = vld [vmem:[%s2199 + $0x8] sm:$0xff]
  %v8523 = vld [vmem:[%s2199 + $0x10] sm:$0xff]
  %8524 = vmatprep.subr.mxu0 0.0
  %8525 = vmatpush1.msra.mxu0 0.0
  %8526 = vmatprep.subr.mxu0 0.0
  %8527 = vmatpush1.msra.mxu0 0.0
  %8528 = vmatprep.subr.mxu0 0.0
  %8529 = vmatpush1.msra.mxu0 0.0
  %8530 = vmatprep.subr.mxu0 0.0
  %8531 = vmatpush1.msra.mxu0 0.0
  %8532 = vmatprep.subr.mxu0 0.0
  %8533 = vmatpush1.msra.mxu0 0.0
  %8534 = vmatprep.subr.mxu0 0.0
  %8535 = vmatpush1.msra.mxu0 0.0
  %8536 = vmatprep.subr.mxu0 0.0
  %8537 = vmatpush1.msra.mxu0 0.0
  %8538 = vmatprep.subr.mxu0 0.0
  %8539 = vmatpush1.msra.mxu0 0.0
  %8540 = vmatprep.subr.mxu0 0.0
  %8541 = vmatpush1.msra.mxu0 0.0
  %8542 = vmatprep.subr.mxu0 0.0
  %8543 = vmatpush1.msra.mxu0 0.0
  %8544 = vmatprep.subr.mxu0 0.0
  %8545 = vmatpush1.msra.mxu0 0.0
  %8546 = vmatprep.subr.mxu0 0.0
  %8547 = vmatpush1.msra.mxu0 0.0
  %8548 = vmatprep.subr.mxu0 0.0
  %8549 = vmatpush1.msra.mxu0 0.0
  %8550 = vmatprep.subr.mxu0 0.0
  %8551 = vmatpush1.msra.mxu0 %v8523
  %8552 = vmatprep.subr.mxu0 0.0
  %8553 = vmatpush1.msra.mxu0 %v8522
  %8554 = vmatprep.subr.mxu0 0.0
  %8555 = vmatpush1.msra.mxu0 %v8521
  %8556 = vmatprep.subr.mxu0 0.0
  %8557 = vmatpush2.msra.mxu0 0.0
  %8558 = vmatprep.subr.mxu0 0.0
  %8559 = vmatpush2.msra.mxu0 0.0
  %8560 = vmatprep.subr.mxu0 0.0
  %8561 = vmatpush2.msra.mxu0 0.0
  %8562 = vmatprep.subr.mxu0 0.0
  %8563 = vmatpush2.msra.mxu0 0.0
  %8564 = vmatprep.subr.mxu0 0.0
  %8565 = vmatpush2.msra.mxu0 0.0
  %8566 = vmatprep.subr.mxu0 0.0
  %8567 = vmatpush2.msra.mxu0 0.0
  %8568 = vmatprep.subr.mxu0 0.0
  %8569 = vmatpush2.msra.mxu0 0.0
  %8570 = vmatprep.subr.mxu0 0.0
  %8571 = vmatpush2.msra.mxu0 0.0
  %8572 = vmatprep.subr.mxu0 0.0
  %8573 = vmatpush2.msra.mxu0 0.0
  %8574 = vmatprep.subr.mxu0 0.0
  %8575 = vmatpush2.msra.mxu0 0.0
  %8576 = vmatprep.subr.mxu0 0.0
  %8577 = vmatpush2.msra.mxu0 0.0
  %8578 = vmatprep.subr.mxu0 0.0
  %8579 = vmatpush2.msra.mxu0 0.0
  %8580 = vmatprep.subr.mxu0 0.0
  %8581 = vmatpush2.msra.mxu0 0.0
  %8582 = vmatprep.subr.mxu0 0.0
  %8583 = vmatpush2.msra.mxu0 0.0
  %8584 = vmatprep.subr.mxu0 0.0
  %8585 = vmatpush2.msra.mxu0 0.0
  %8586 = vmatprep.subr.mxu0 0.0
  %8587 = vmatpush2.msra.mxu0 0.0
  %8588 = vmatprep.mubr.f32.mxu0 0.0
  %8589 = vmatmul.mubr.f32.gmra.mxu0 %v8385
  %v8590 = vpop.f32.mrf.mxu0
  %v8591 = vadd.f32 0.0, %v8590
  %v8592 = vpop.f32.mrf.mxu0
  %8593 = vmatprep.mubr.f32.mxu0 0.0
  %8594 = vmatmul.mubr.f32.gmra.mxu0 %v8388
  %v8595 = vpop.f32.mrf.mxu0
  %v8596 = vadd.f32 0.0, %v8595
  %v8597 = vpop.f32.mrf.mxu0
  %8598 = vmatprep.mubr.f32.mxu0 0.0
  %8599 = vmatmul.mubr.f32.gmra.mxu0 %v8391
  %v8600 = vpop.f32.mrf.mxu0
  %v8601 = vadd.f32 0.0, %v8600
  %v8602 = vpop.f32.mrf.mxu0
  %8603 = vmatprep.mubr.f32.mxu0 0.0
  %8604 = vmatmul.mubr.f32.gmra.mxu0 %v8394
  %v8605 = vpop.f32.mrf.mxu0
  %v8606 = vadd.f32 0.0, %v8605
  %v8607 = vpop.f32.mrf.mxu0
  %8608 = vmatprep.mubr.f32.mxu0 0.0
  %8609 = vmatmul.mubr.f32.gmra.mxu0 %v8397
  %v8610 = vpop.f32.mrf.mxu0
  %v8611 = vadd.f32 0.0, %v8610
  %v8612 = vpop.f32.mrf.mxu0
  %8613 = vmatprep.mubr.f32.mxu0 0.0
  %8614 = vmatmul.mubr.f32.gmra.mxu0 %v8400
  %v8615 = vpop.f32.mrf.mxu0
  %v8616 = vadd.f32 0.0, %v8615
  %v8617 = vpop.f32.mrf.mxu0
  %8618 = vmatprep.mubr.f32.mxu0 0.0
  %8619 = vmatmul.mubr.f32.gmra.mxu0 %v8403
  %v8620 = vpop.f32.mrf.mxu0
  %v8621 = vadd.f32 0.0, %v8620
  %v8622 = vpop.f32.mrf.mxu0
  %8623 = vmatprep.mubr.f32.mxu0 0.0
  %8624 = vmatmul.mubr.f32.gmra.mxu0 %v8406
  %v8625 = vpop.f32.mrf.mxu0
  %v8626 = vadd.f32 0.0, %v8625
  %v8627 = vpop.f32.mrf.mxu0
  %8628 = vmatprep.mubr.f32.mxu0 0.0
  %8629 = vmatmul.mubr.f32.gmra.mxu0 %v8409
  %v8630 = vpop.f32.mrf.mxu0
  %v8631 = vadd.f32 0.0, %v8630
  %v8632 = vpop.f32.mrf.mxu0
  %8633 = vdwg.mxu0
  %v8635 = vsel %vm2061, %v8338, 0
  %v8638 = vsel %vm2061, %v8343, 0
  %v8641 = vsel %vm2061, %v8348, 0
  %v8644 = vsel %vm2061, %v8353, 0
  %v8647 = vsel %vm2061, %v8358, 0
  %v8650 = vsel %vm2061, %v8363, 0
  %v8653 = vsel %vm2061, %v8368, 0
  %v8656 = vsel %vm2061, %v8373, 0
  %v8659 = vsel %vm2061, %v8378, 0
  %8661 = vmatprep.subr.mxu0 0.0
  %8662 = vmatpush1.msra.mxu0 0.0
  %8663 = vmatprep.subr.mxu0 0.0
  %8664 = vmatpush1.msra.mxu0 0.0
  %8665 = vmatprep.subr.mxu0 0.0
  %8666 = vmatpush1.msra.mxu0 0.0
  %8667 = vmatprep.subr.mxu0 0.0
  %8668 = vmatpush1.msra.mxu0 0.0
  %8669 = vmatprep.subr.mxu0 0.0
  %8670 = vmatpush1.msra.mxu0 0.0
  %8671 = vmatprep.subr.mxu0 0.0
  %8672 = vmatpush1.msra.mxu0 0.0
  %8673 = vmatprep.subr.mxu0 0.0
  %8674 = vmatpush1.msra.mxu0 0.0
  %8675 = vmatprep.subr.mxu0 0.0
  %8676 = vmatpush1.msra.mxu0 0.0
  %8677 = vmatprep.subr.mxu0 0.0
  %8678 = vmatpush1.msra.mxu0 0.0
  %8679 = vmatprep.subr.mxu0 0.0
  %8680 = vmatpush1.msra.mxu0 0.0
  %8681 = vmatprep.subr.mxu0 0.0
  %8682 = vmatpush1.msra.mxu0 0.0
  %8683 = vmatprep.subr.mxu0 0.0
  %8684 = vmatpush1.msra.mxu0 0.0
  %8685 = vmatprep.subr.mxu0 0.0
  %8686 = vmatpush1.msra.mxu0 0.0
  %8687 = vmatprep.subr.mxu0 0.0
  %8688 = vmatpush1.msra.mxu0 %v8383
  %8689 = vmatprep.subr.mxu0 0.0
  %8690 = vmatpush1.msra.mxu0 %v8382
  %8691 = vmatprep.subr.mxu0 0.0
  %8692 = vmatpush1.msra.mxu0 %v8381
  %8693 = vmatprep.subr.mxu0 0.0
  %8694 = vmatpush2.msra.mxu0 0.0
  %8695 = vmatprep.subr.mxu0 0.0
  %8696 = vmatpush2.msra.mxu0 0.0
  %8697 = vmatprep.subr.mxu0 0.0
  %8698 = vmatpush2.msra.mxu0 0.0
  %8699 = vmatprep.subr.mxu0 0.0
  %8700 = vmatpush2.msra.mxu0 0.0
  %8701 = vmatprep.subr.mxu0 0.0
  %8702 = vmatpush2.msra.mxu0 0.0
  %8703 = vmatprep.subr.mxu0 0.0
  %8704 = vmatpush2.msra.mxu0 0.0
  %8705 = vmatprep.subr.mxu0 0.0
  %8706 = vmatpush2.msra.mxu0 0.0
  %8707 = vmatprep.subr.mxu0 0.0
  %8708 = vmatpush2.msra.mxu0 0.0
  %8709 = vmatprep.subr.mxu0 0.0
  %8710 = vmatpush2.msra.mxu0 0.0
  %8711 = vmatprep.subr.mxu0 0.0
  %8712 = vmatpush2.msra.mxu0 0.0
  %8713 = vmatprep.subr.mxu0 0.0
  %8714 = vmatpush2.msra.mxu0 0.0
  %8715 = vmatprep.subr.mxu0 0.0
  %8716 = vmatpush2.msra.mxu0 0.0
  %8717 = vmatprep.subr.mxu0 0.0
  %8718 = vmatpush2.msra.mxu0 0.0
  %8719 = vmatprep.subr.mxu0 0.0
  %8720 = vmatpush2.msra.mxu0 0.0
  %8721 = vmatprep.subr.mxu0 0.0
  %8722 = vmatpush2.msra.mxu0 0.0
  %8723 = vmatprep.subr.mxu0 0.0
  %8724 = vmatpush2.msra.mxu0 0.0
  %8725 = vmatprep.mubr.f32.mxu0 0.0
  %8726 = vmatmul.mubr.f32.gmra.mxu0 %v8635
  %v8727 = vpop.f32.mrf.mxu0
  %v8728 = vadd.f32 0.0, %v8727
  %v8729 = vpop.f32.mrf.mxu0
  %8730 = vmatprep.mubr.f32.mxu0 0.0
  %8731 = vmatmul.mubr.f32.gmra.mxu0 %v8638
  %v8732 = vpop.f32.mrf.mxu0
  %v8733 = vadd.f32 0.0, %v8732
  %v8734 = vpop.f32.mrf.mxu0
  %8735 = vmatprep.mubr.f32.mxu0 0.0
  %8736 = vmatmul.mubr.f32.gmra.mxu0 %v8641
  %v8737 = vpop.f32.mrf.mxu0
  %v8738 = vadd.f32 0.0, %v8737
  %v8739 = vpop.f32.mrf.mxu0
  %8740 = vmatprep.mubr.f32.mxu0 0.0
  %8741 = vmatmul.mubr.f32.gmra.mxu0 %v8644
  %v8742 = vpop.f32.mrf.mxu0
  %v8743 = vadd.f32 0.0, %v8742
  %v8744 = vpop.f32.mrf.mxu0
  %8745 = vmatprep.mubr.f32.mxu0 0.0
  %8746 = vmatmul.mubr.f32.gmra.mxu0 %v8647
  %v8747 = vpop.f32.mrf.mxu0
  %v8748 = vadd.f32 0.0, %v8747
  %v8749 = vpop.f32.mrf.mxu0
  %8750 = vmatprep.mubr.f32.mxu0 0.0
  %8751 = vmatmul.mubr.f32.gmra.mxu0 %v8650
  %v8752 = vpop.f32.mrf.mxu0
  %v8753 = vadd.f32 0.0, %v8752
  %v8754 = vpop.f32.mrf.mxu0
  %8755 = vmatprep.mubr.f32.mxu0 0.0
  %8756 = vmatmul.mubr.f32.gmra.mxu0 %v8653
  %v8757 = vpop.f32.mrf.mxu0
  %v8758 = vadd.f32 0.0, %v8757
  %v8759 = vpop.f32.mrf.mxu0
  %8760 = vmatprep.mubr.f32.mxu0 0.0
  %8761 = vmatmul.mubr.f32.gmra.mxu0 %v8656
  %v8762 = vpop.f32.mrf.mxu0
  %v8763 = vadd.f32 0.0, %v8762
  %v8764 = vpop.f32.mrf.mxu0
  %8765 = vmatprep.mubr.f32.mxu0 0.0
  %8766 = vmatmul.mubr.f32.gmra.mxu0 %v8659
  %v8767 = vpop.f32.mrf.mxu0
  %v8768 = vadd.f32 0.0, %v8767
  %v8769 = vpop.f32.mrf.mxu0
  %8770 = vdwg.mxu0
  %8771 = vmatprep.subr.mxu0 0.0
  %8772 = vmatpush1.msra.mxu0 0.0
  %8773 = vmatprep.subr.mxu0 0.0
  %8774 = vmatpush1.msra.mxu0 0.0
  %8775 = vmatprep.subr.mxu0 0.0
  %8776 = vmatpush1.msra.mxu0 0.0
  %8777 = vmatprep.subr.mxu0 0.0
  %8778 = vmatpush1.msra.mxu0 0.0
  %8779 = vmatprep.subr.mxu0 0.0
  %8780 = vmatpush1.msra.mxu0 0.0
  %8781 = vmatprep.subr.mxu0 0.0
  %8782 = vmatpush1.msra.mxu0 0.0
  %8783 = vmatprep.subr.mxu0 0.0
  %8784 = vmatpush1.msra.mxu0 0.0
  %8785 = vmatprep.subr.mxu0 0.0
  %8786 = vmatpush1.msra.mxu0 0.0
  %8787 = vmatprep.subr.mxu0 0.0
  %8788 = vmatpush1.msra.mxu0 0.0
  %8789 = vmatprep.subr.mxu0 0.0
  %8790 = vmatpush1.msra.mxu0 0.0
  %8791 = vmatprep.subr.mxu0 0.0
  %8792 = vmatpush1.msra.mxu0 0.0
  %8793 = vmatprep.subr.mxu0 0.0
  %8794 = vmatpush1.msra.mxu0 0.0
  %8795 = vmatprep.subr.mxu0 0.0
  %8796 = vmatpush1.msra.mxu0 0.0
  %8797 = vmatprep.subr.mxu0 0.0
  %8798 = vmatpush1.msra.mxu0 %v8523
  %8799 = vmatprep.subr.mxu0 0.0
  %8800 = vmatpush1.msra.mxu0 %v8522
  %8801 = vmatprep.subr.mxu0 0.0
  %8802 = vmatpush1.msra.mxu0 %v8521
  %8803 = vmatprep.subr.mxu0 0.0
  %8804 = vmatpush2.msra.mxu0 0.0
  %8805 = vmatprep.subr.mxu0 0.0
  %8806 = vmatpush2.msra.mxu0 0.0
  %8807 = vmatprep.subr.mxu0 0.0
  %8808 = vmatpush2.msra.mxu0 0.0
  %8809 = vmatprep.subr.mxu0 0.0
  %8810 = vmatpush2.msra.mxu0 0.0
  %8811 = vmatprep.subr.mxu0 0.0
  %8812 = vmatpush2.msra.mxu0 0.0
  %8813 = vmatprep.subr.mxu0 0.0
  %8814 = vmatpush2.msra.mxu0 0.0
  %8815 = vmatprep.subr.mxu0 0.0
  %8816 = vmatpush2.msra.mxu0 0.0
  %8817 = vmatprep.subr.mxu0 0.0
  %8818 = vmatpush2.msra.mxu0 0.0
  %8819 = vmatprep.subr.mxu0 0.0
  %8820 = vmatpush2.msra.mxu0 0.0
  %8821 = vmatprep.subr.mxu0 0.0
  %8822 = vmatpush2.msra.mxu0 0.0
  %8823 = vmatprep.subr.mxu0 0.0
  %8824 = vmatpush2.msra.mxu0 0.0
  %8825 = vmatprep.subr.mxu0 0.0
  %8826 = vmatpush2.msra.mxu0 0.0
  %8827 = vmatprep.subr.mxu0 0.0
  %8828 = vmatpush2.msra.mxu0 0.0
  %8829 = vmatprep.subr.mxu0 0.0
  %8830 = vmatpush2.msra.mxu0 0.0
  %8831 = vmatprep.subr.mxu0 0.0
  %8832 = vmatpush2.msra.mxu0 0.0
  %8833 = vmatprep.subr.mxu0 0.0
  %8834 = vmatpush2.msra.mxu0 0.0
  %8835 = vmatprep.mubr.f32.mxu0 0.0
  %8836 = vmatmul.mubr.f32.gmra.mxu0 %v8635
  %v8837 = vpop.f32.mrf.mxu0
  %v8838 = vadd.f32 0.0, %v8837
  %v8839 = vpop.f32.mrf.mxu0
  %8840 = vmatprep.mubr.f32.mxu0 0.0
  %8841 = vmatmul.mubr.f32.gmra.mxu0 %v8638
  %v8842 = vpop.f32.mrf.mxu0
  %v8843 = vadd.f32 0.0, %v8842
  %v8844 = vpop.f32.mrf.mxu0
  %8845 = vmatprep.mubr.f32.mxu0 0.0
  %8846 = vmatmul.mubr.f32.gmra.mxu0 %v8641
  %v8847 = vpop.f32.mrf.mxu0
  %v8848 = vadd.f32 0.0, %v8847
  %v8849 = vpop.f32.mrf.mxu0
  %8850 = vmatprep.mubr.f32.mxu0 0.0
  %8851 = vmatmul.mubr.f32.gmra.mxu0 %v8644
  %v8852 = vpop.f32.mrf.mxu0
  %v8853 = vadd.f32 0.0, %v8852
  %v8854 = vpop.f32.mrf.mxu0
  %8855 = vmatprep.mubr.f32.mxu0 0.0
  %8856 = vmatmul.mubr.f32.gmra.mxu0 %v8647
  %v8857 = vpop.f32.mrf.mxu0
  %v8858 = vadd.f32 0.0, %v8857
  %v8859 = vpop.f32.mrf.mxu0
  %8860 = vmatprep.mubr.f32.mxu0 0.0
  %8861 = vmatmul.mubr.f32.gmra.mxu0 %v8650
  %v8862 = vpop.f32.mrf.mxu0
  %v8863 = vadd.f32 0.0, %v8862
  %v8864 = vpop.f32.mrf.mxu0
  %8865 = vmatprep.mubr.f32.mxu0 0.0
  %8866 = vmatmul.mubr.f32.gmra.mxu0 %v8653
  %v8867 = vpop.f32.mrf.mxu0
  %v8868 = vadd.f32 0.0, %v8867
  %v8869 = vpop.f32.mrf.mxu0
  %8870 = vmatprep.mubr.f32.mxu0 0.0
  %8871 = vmatmul.mubr.f32.gmra.mxu0 %v8656
  %v8872 = vpop.f32.mrf.mxu0
  %v8873 = vadd.f32 0.0, %v8872
  %v8874 = vpop.f32.mrf.mxu0
  %8875 = vmatprep.mubr.f32.mxu0 0.0
  %8876 = vmatmul.mubr.f32.gmra.mxu0 %v8659
  %v8877 = vpop.f32.mrf.mxu0
  %v8878 = vadd.f32 0.0, %v8877
  %v8879 = vpop.f32.mrf.mxu0
  %8880 = vdwg.mxu0
  %v8881 = vmax.f32 %v8478, %v8591
  %v8882 = vmax.f32 %v8483, %v8596
  %v8883 = vmax.f32 %v8488, %v8601
  %v8884 = vmax.f32 %v8493, %v8606
  %v8885 = vmax.f32 %v8498, %v8611
  %v8886 = vmax.f32 %v8503, %v8616
  %v8887 = vmax.f32 %v8508, %v8621
  %v8888 = vmax.f32 %v8513, %v8626
  %v8889 = vmax.f32 %v8518, %v8631
  %v8890 = vmax.f32 %v8728, %v8838
  %v8891 = vmax.f32 %v8733, %v8843
  %v8892 = vmax.f32 %v8738, %v8848
  %v8893 = vmax.f32 %v8743, %v8853
  %v8894 = vmax.f32 %v8748, %v8858
  %v8895 = vmax.f32 %v8753, %v8863
  %v8896 = vmax.f32 %v8758, %v8868
  %v8897 = vmax.f32 %v8763, %v8873
  %v8898 = vmax.f32 %v8768, %v8878
  %v8899 = vmax.f32 %v8881, %v8890
  %v8900 = vmax.f32 %v8882, %v8891
  %v8901 = vmax.f32 %v8883, %v8892
  %v8902 = vmax.f32 %v8884, %v8893
  %v8903 = vmax.f32 %v8885, %v8894
  %v8904 = vmax.f32 %v8886, %v8895
  %v8905 = vmax.f32 %v8887, %v8896
  %v8906 = vmax.f32 %v8888, %v8897
  %v8907 = vmax.f32 %v8889, %v8898
  %v8908 = vld [vmem:[%s5] sm:$0xff]
  %v8909 = vld [vmem:[%s5 + $0x8] sm:$0xff]
  %v8910 = vld [vmem:[%s5 + $0x10] sm:$0xff]
  %v8911 = vld [vmem:[%s5 + $0x18] sm:$0xff]
  %v8912 = vld [vmem:[%s5 + $0x20] sm:$0xff]
  %v8913 = vld [vmem:[%s5 + $0x28] sm:$0xff]
  %v8914 = vld [vmem:[%s5 + $0x30] sm:$0xff]
  %v8915 = vld [vmem:[%s5 + $0x38] sm:$0xff]
  %v8916 = vld [vmem:[%s5 + $0x40] sm:$0xff]
  %8918 = vset.pattern.permute.xlu0 0
  %8919 = vperm.xlu0 %8918, %v8908
  %v8920 = vpop.permute.xlu0 %8919
  %8923 = vset.pattern.permute.xlu0 0
  %8924 = vperm.xlu0 %8923, %v8909
  %v8925 = vpop.permute.xlu0 %8924
  %8928 = vset.pattern.permute.xlu0 0
  %8929 = vperm.xlu0 %8928, %v8910
  %v8930 = vpop.permute.xlu0 %8929
  %8933 = vset.pattern.permute.xlu0 0
  %8934 = vperm.xlu0 %8933, %v8911
  %v8935 = vpop.permute.xlu0 %8934
  %8938 = vset.pattern.permute.xlu0 0
  %8939 = vperm.xlu0 %8938, %v8912
  %v8940 = vpop.permute.xlu0 %8939
  %8943 = vset.pattern.permute.xlu0 0
  %8944 = vperm.xlu0 %8943, %v8913
  %v8945 = vpop.permute.xlu0 %8944
  %8948 = vset.pattern.permute.xlu0 0
  %8949 = vperm.xlu0 %8948, %v8914
  %v8950 = vpop.permute.xlu0 %8949
  %8953 = vset.pattern.permute.xlu0 0
  %8954 = vperm.xlu0 %8953, %v8915
  %v8955 = vpop.permute.xlu0 %8954
  %8958 = vset.pattern.permute.xlu0 0
  %8959 = vperm.xlu0 %8958, %v8916
  %v8960 = vpop.permute.xlu0 %8959
  %v8962 = vadd.f32 %v8899, %v8920
  %v8963 = vadd.f32 %v8900, %v8925
  %v8964 = vadd.f32 %v8901, %v8930
  %v8965 = vadd.f32 %v8902, %v8935
  %v8966 = vadd.f32 %v8903, %v8940
  %v8967 = vadd.f32 %v8904, %v8945
  %v8968 = vadd.f32 %v8905, %v8950
  %v8969 = vadd.f32 %v8906, %v8955
  %v8970 = vadd.f32 %v8907, %v8960
  %v8971 = vmax.f32 %v8962, 0.0
  %v8972 = vmax.f32 %v8963, 0.0
  %v8973 = vmax.f32 %v8964, 0.0
  %v8974 = vmax.f32 %v8965, 0.0
  %v8975 = vmax.f32 %v8966, 0.0
  %v8976 = vmax.f32 %v8967, 0.0
  %v8977 = vmax.f32 %v8968, 0.0
  %v8978 = vmax.f32 %v8969, 0.0
  %v8979 = vmax.f32 %v8970, 0.0
  %v8980 = vld [vmem:[%s7] sm:$0xff]
  %v8981 = vld [vmem:[%s7 + $0x8] sm:$0xf]
  %v8983 = vsel %vm2661, %v8971, 0
  %v8986 = vsel %vm2661, %v8972, 0
  %v8989 = vsel %vm2661, %v8973, 0
  %v8992 = vsel %vm2661, %v8974, 0
  %v8995 = vsel %vm2661, %v8975, 0
  %v8998 = vsel %vm2661, %v8976, 0
  %v9001 = vsel %vm2661, %v8977, 0
  %v9004 = vsel %vm2661, %v8978, 0
  %v9007 = vsel %vm2661, %v8979, 0
  %v9010 = vsel %vm77, %v8981, 0
  %9012 = vmatprep.subr.mxu0 0.0
  %9013 = vmatpush1.msra.mxu0 0.0
  %9014 = vmatprep.subr.mxu0 0.0
  %9015 = vmatpush1.msra.mxu0 0.0
  %9016 = vmatprep.subr.mxu0 0.0
  %9017 = vmatpush1.msra.mxu0 0.0
  %9018 = vmatprep.subr.mxu0 0.0
  %9019 = vmatpush1.msra.mxu0 0.0
  %9020 = vmatprep.subr.mxu0 0.0
  %9021 = vmatpush1.msra.mxu0 0.0
  %9022 = vmatprep.subr.mxu0 0.0
  %9023 = vmatpush1.msra.mxu0 0.0
  %9024 = vmatprep.subr.mxu0 0.0
  %9025 = vmatpush1.msra.mxu0 0.0
  %9026 = vmatprep.subr.mxu0 0.0
  %9027 = vmatpush1.msra.mxu0 0.0
  %9028 = vmatprep.subr.mxu0 0.0
  %9029 = vmatpush1.msra.mxu0 0.0
  %9030 = vmatprep.subr.mxu0 0.0
  %9031 = vmatpush1.msra.mxu0 0.0
  %9032 = vmatprep.subr.mxu0 0.0
  %9033 = vmatpush1.msra.mxu0 0.0
  %9034 = vmatprep.subr.mxu0 0.0
  %9035 = vmatpush1.msra.mxu0 0.0
  %9036 = vmatprep.subr.mxu0 0.0
  %9037 = vmatpush1.msra.mxu0 0.0
  %9038 = vmatprep.subr.mxu0 0.0
  %9039 = vmatpush1.msra.mxu0 0.0
  %9040 = vmatprep.subr.mxu0 0.0
  %9041 = vmatpush1.msra.mxu0 %v9010
  %9042 = vmatprep.subr.mxu0 0.0
  %9043 = vmatpush1.msra.mxu0 %v8980
  %9044 = vmatprep.subr.mxu0 0.0
  %9045 = vmatpush2.msra.mxu0 0.0
  %9046 = vmatprep.subr.mxu0 0.0
  %9047 = vmatpush2.msra.mxu0 0.0
  %9048 = vmatprep.subr.mxu0 0.0
  %9049 = vmatpush2.msra.mxu0 0.0
  %9050 = vmatprep.subr.mxu0 0.0
  %9051 = vmatpush2.msra.mxu0 0.0
  %9052 = vmatprep.subr.mxu0 0.0
  %9053 = vmatpush2.msra.mxu0 0.0
  %9054 = vmatprep.subr.mxu0 0.0
  %9055 = vmatpush2.msra.mxu0 0.0
  %9056 = vmatprep.subr.mxu0 0.0
  %9057 = vmatpush2.msra.mxu0 0.0
  %9058 = vmatprep.subr.mxu0 0.0
  %9059 = vmatpush2.msra.mxu0 0.0
  %9060 = vmatprep.subr.mxu0 0.0
  %9061 = vmatpush2.msra.mxu0 0.0
  %9062 = vmatprep.subr.mxu0 0.0
  %9063 = vmatpush2.msra.mxu0 0.0
  %9064 = vmatprep.subr.mxu0 0.0
  %9065 = vmatpush2.msra.mxu0 0.0
  %9066 = vmatprep.subr.mxu0 0.0
  %9067 = vmatpush2.msra.mxu0 0.0
  %9068 = vmatprep.subr.mxu0 0.0
  %9069 = vmatpush2.msra.mxu0 0.0
  %9070 = vmatprep.subr.mxu0 0.0
  %9071 = vmatpush2.msra.mxu0 0.0
  %9072 = vmatprep.subr.mxu0 0.0
  %9073 = vmatpush2.msra.mxu0 0.0
  %9074 = vmatprep.subr.mxu0 0.0
  %9075 = vmatpush2.msra.mxu0 0.0
  %9076 = vmatprep.mubr.f32.mxu0 0.0
  %9077 = vmatmul.mubr.f32.gmra.mxu0 %v8983
  %v9078 = vpop.f32.mrf.mxu0
  %v9079 = vadd.f32 0.0, %v9078
  %v9080 = vpop.f32.mrf.mxu0
  %9081 = vmatprep.mubr.f32.mxu0 0.0
  %9082 = vmatmul.mubr.f32.gmra.mxu0 %v8986
  %v9083 = vpop.f32.mrf.mxu0
  %v9084 = vadd.f32 0.0, %v9083
  %v9085 = vpop.f32.mrf.mxu0
  %9086 = vmatprep.mubr.f32.mxu0 0.0
  %9087 = vmatmul.mubr.f32.gmra.mxu0 %v8989
  %v9088 = vpop.f32.mrf.mxu0
  %v9089 = vadd.f32 0.0, %v9088
  %v9090 = vpop.f32.mrf.mxu0
  %9091 = vmatprep.mubr.f32.mxu0 0.0
  %9092 = vmatmul.mubr.f32.gmra.mxu0 %v8992
  %v9093 = vpop.f32.mrf.mxu0
  %v9094 = vadd.f32 0.0, %v9093
  %v9095 = vpop.f32.mrf.mxu0
  %9096 = vmatprep.mubr.f32.mxu0 0.0
  %9097 = vmatmul.mubr.f32.gmra.mxu0 %v8995
  %v9098 = vpop.f32.mrf.mxu0
  %v9099 = vadd.f32 0.0, %v9098
  %v9100 = vpop.f32.mrf.mxu0
  %9101 = vmatprep.mubr.f32.mxu0 0.0
  %9102 = vmatmul.mubr.f32.gmra.mxu0 %v8998
  %v9103 = vpop.f32.mrf.mxu0
  %v9104 = vadd.f32 0.0, %v9103
  %v9105 = vpop.f32.mrf.mxu0
  %9106 = vmatprep.mubr.f32.mxu0 0.0
  %9107 = vmatmul.mubr.f32.gmra.mxu0 %v9001
  %v9108 = vpop.f32.mrf.mxu0
  %v9109 = vadd.f32 0.0, %v9108
  %v9110 = vpop.f32.mrf.mxu0
  %9111 = vmatprep.mubr.f32.mxu0 0.0
  %9112 = vmatmul.mubr.f32.gmra.mxu0 %v9004
  %v9113 = vpop.f32.mrf.mxu0
  %v9114 = vadd.f32 0.0, %v9113
  %v9115 = vpop.f32.mrf.mxu0
  %9116 = vmatprep.mubr.f32.mxu0 0.0
  %9117 = vmatmul.mubr.f32.gmra.mxu0 %v9007
  %v9118 = vpop.f32.mrf.mxu0
  %v9119 = vadd.f32 0.0, %v9118
  %v9120 = vpop.f32.mrf.mxu0
  %9121 = vdwg.mxu0
  %v9122 = vld [vmem:[%s6] sm:$0xff]
  %v9123 = vld [vmem:[%s6 + $0x8] sm:$0xff]
  %v9124 = vld [vmem:[%s6 + $0x10] sm:$0xff]
  %v9125 = vld [vmem:[%s6 + $0x18] sm:$0xff]
  %v9126 = vld [vmem:[%s6 + $0x20] sm:$0xff]
  %v9127 = vld [vmem:[%s6 + $0x28] sm:$0xff]
  %v9128 = vld [vmem:[%s6 + $0x30] sm:$0xff]
  %v9129 = vld [vmem:[%s6 + $0x38] sm:$0xff]
  %v9130 = vld [vmem:[%s6 + $0x40] sm:$0xff]
  %v9131 = vld [vmem:[%s6 + $0x48] sm:$0xff]
  %v9132 = vld [vmem:[%s6 + $0x50] sm:$0xff]
  %v9133 = vld [vmem:[%s6 + $0x58] sm:$0xff]
  %v9134 = vld [vmem:[%s6 + $0x60] sm:$0xff]
  %v9135 = vld [vmem:[%s6 + $0x68] sm:$0xff]
  %v9136 = vld [vmem:[%s6 + $0x70] sm:$0xff]
  %v9137 = vld [vmem:[%s6 + $0x78] sm:$0xff]
  %v9138 = vld [vmem:[%s2818] sm:$0xff]
  %v9139 = vld [vmem:[%s2818 + $0x8] sm:$0xf]
  %v9141 = vsel %vm77, %v9139, 0
  %9143 = vmatprep.subr.mxu0 0.0
  %9144 = vmatpush1.msra.mxu0 0.0
  %9145 = vmatprep.subr.mxu0 0.0
  %9146 = vmatpush1.msra.mxu0 0.0
  %9147 = vmatprep.subr.mxu0 0.0
  %9148 = vmatpush1.msra.mxu0 0.0
  %9149 = vmatprep.subr.mxu0 0.0
  %9150 = vmatpush1.msra.mxu0 0.0
  %9151 = vmatprep.subr.mxu0 0.0
  %9152 = vmatpush1.msra.mxu0 0.0
  %9153 = vmatprep.subr.mxu0 0.0
  %9154 = vmatpush1.msra.mxu0 0.0
  %9155 = vmatprep.subr.mxu0 0.0
  %9156 = vmatpush1.msra.mxu0 0.0
  %9157 = vmatprep.subr.mxu0 0.0
  %9158 = vmatpush1.msra.mxu0 0.0
  %9159 = vmatprep.subr.mxu0 0.0
  %9160 = vmatpush1.msra.mxu0 0.0
  %9161 = vmatprep.subr.mxu0 0.0
  %9162 = vmatpush1.msra.mxu0 0.0
  %9163 = vmatprep.subr.mxu0 0.0
  %9164 = vmatpush1.msra.mxu0 0.0
  %9165 = vmatprep.subr.mxu0 0.0
  %9166 = vmatpush1.msra.mxu0 0.0
  %9167 = vmatprep.subr.mxu0 0.0
  %9168 = vmatpush1.msra.mxu0 0.0
  %9169 = vmatprep.subr.mxu0 0.0
  %9170 = vmatpush1.msra.mxu0 0.0
  %9171 = vmatprep.subr.mxu0 0.0
  %9172 = vmatpush1.msra.mxu0 %v9141
  %9173 = vmatprep.subr.mxu0 0.0
  %9174 = vmatpush1.msra.mxu0 %v9138
  %9175 = vmatprep.subr.mxu0 0.0
  %9176 = vmatpush2.msra.mxu0 0.0
  %9177 = vmatprep.subr.mxu0 0.0
  %9178 = vmatpush2.msra.mxu0 0.0
  %9179 = vmatprep.subr.mxu0 0.0
  %9180 = vmatpush2.msra.mxu0 0.0
  %9181 = vmatprep.subr.mxu0 0.0
  %9182 = vmatpush2.msra.mxu0 0.0
  %9183 = vmatprep.subr.mxu0 0.0
  %9184 = vmatpush2.msra.mxu0 0.0
  %9185 = vmatprep.subr.mxu0 0.0
  %9186 = vmatpush2.msra.mxu0 0.0
  %9187 = vmatprep.subr.mxu0 0.0
  %9188 = vmatpush2.msra.mxu0 0.0
  %9189 = vmatprep.subr.mxu0 0.0
  %9190 = vmatpush2.msra.mxu0 0.0
  %9191 = vmatprep.subr.mxu0 0.0
  %9192 = vmatpush2.msra.mxu0 0.0
  %9193 = vmatprep.subr.mxu0 0.0
  %9194 = vmatpush2.msra.mxu0 0.0
  %9195 = vmatprep.subr.mxu0 0.0
  %9196 = vmatpush2.msra.mxu0 0.0
  %9197 = vmatprep.subr.mxu0 0.0
  %9198 = vmatpush2.msra.mxu0 0.0
  %9199 = vmatprep.subr.mxu0 0.0
  %9200 = vmatpush2.msra.mxu0 0.0
  %9201 = vmatprep.subr.mxu0 0.0
  %9202 = vmatpush2.msra.mxu0 0.0
  %9203 = vmatprep.subr.mxu0 0.0
  %9204 = vmatpush2.msra.mxu0 0.0
  %9205 = vmatprep.subr.mxu0 0.0
  %9206 = vmatpush2.msra.mxu0 0.0
  %9207 = vmatprep.mubr.f32.mxu0 0.0
  %9208 = vmatmul.mubr.f32.gmra.mxu0 %v8983
  %v9209 = vpop.f32.mrf.mxu0
  %v9210 = vadd.f32 0.0, %v9209
  %v9211 = vpop.f32.mrf.mxu0
  %9212 = vmatprep.mubr.f32.mxu0 0.0
  %9213 = vmatmul.mubr.f32.gmra.mxu0 %v8986
  %v9214 = vpop.f32.mrf.mxu0
  %v9215 = vadd.f32 0.0, %v9214
  %v9216 = vpop.f32.mrf.mxu0
  %9217 = vmatprep.mubr.f32.mxu0 0.0
  %9218 = vmatmul.mubr.f32.gmra.mxu0 %v8989
  %v9219 = vpop.f32.mrf.mxu0
  %v9220 = vadd.f32 0.0, %v9219
  %v9221 = vpop.f32.mrf.mxu0
  %9222 = vmatprep.mubr.f32.mxu0 0.0
  %9223 = vmatmul.mubr.f32.gmra.mxu0 %v8992
  %v9224 = vpop.f32.mrf.mxu0
  %v9225 = vadd.f32 0.0, %v9224
  %v9226 = vpop.f32.mrf.mxu0
  %9227 = vmatprep.mubr.f32.mxu0 0.0
  %9228 = vmatmul.mubr.f32.gmra.mxu0 %v8995
  %v9229 = vpop.f32.mrf.mxu0
  %v9230 = vadd.f32 0.0, %v9229
  %v9231 = vpop.f32.mrf.mxu0
  %9232 = vmatprep.mubr.f32.mxu0 0.0
  %9233 = vmatmul.mubr.f32.gmra.mxu0 %v8998
  %v9234 = vpop.f32.mrf.mxu0
  %v9235 = vadd.f32 0.0, %v9234
  %v9236 = vpop.f32.mrf.mxu0
  %9237 = vmatprep.mubr.f32.mxu0 0.0
  %9238 = vmatmul.mubr.f32.gmra.mxu0 %v9001
  %v9239 = vpop.f32.mrf.mxu0
  %v9240 = vadd.f32 0.0, %v9239
  %v9241 = vpop.f32.mrf.mxu0
  %9242 = vmatprep.mubr.f32.mxu0 0.0
  %9243 = vmatmul.mubr.f32.gmra.mxu0 %v9004
  %v9244 = vpop.f32.mrf.mxu0
  %v9245 = vadd.f32 0.0, %v9244
  %v9246 = vpop.f32.mrf.mxu0
  %9247 = vmatprep.mubr.f32.mxu0 0.0
  %9248 = vmatmul.mubr.f32.gmra.mxu0 %v9007
  %v9249 = vpop.f32.mrf.mxu0
  %v9250 = vadd.f32 0.0, %v9249
  %v9251 = vpop.f32.mrf.mxu0
  %9252 = vdwg.mxu0
  %v9253 = vld [vmem:[%s2934] sm:$0xff]
  %v9254 = vld [vmem:[%s2934 + $0x8] sm:$0xff]
  %v9255 = vld [vmem:[%s2934 + $0x10] sm:$0xff]
  %v9256 = vld [vmem:[%s2934 + $0x18] sm:$0xff]
  %v9257 = vld [vmem:[%s2934 + $0x20] sm:$0xff]
  %v9258 = vld [vmem:[%s2934 + $0x28] sm:$0xff]
  %v9259 = vld [vmem:[%s2934 + $0x30] sm:$0xff]
  %v9260 = vld [vmem:[%s2934 + $0x38] sm:$0xff]
  %v9261 = vld [vmem:[%s2934 + $0x40] sm:$0xff]
  %v9262 = vld [vmem:[%s2934 + $0x48] sm:$0xff]
  %v9263 = vld [vmem:[%s2934 + $0x50] sm:$0xff]
  %v9264 = vld [vmem:[%s2934 + $0x58] sm:$0xff]
  %v9265 = vld [vmem:[%s2934 + $0x60] sm:$0xff]
  %v9266 = vld [vmem:[%s2934 + $0x68] sm:$0xff]
  %v9267 = vld [vmem:[%s2934 + $0x70] sm:$0xff]
  %v9268 = vld [vmem:[%s2934 + $0x78] sm:$0xff]
  %v9270 = vsel %vm2951, %v9253, 0
  %v9273 = vsel %vm2951, %v9254, 0
  %v9276 = vsel %vm2951, %v9255, 0
  %v9279 = vsel %vm2951, %v9256, 0
  %v9282 = vsel %vm2951, %v9257, 0
  %v9285 = vsel %vm2951, %v9258, 0
  %v9288 = vsel %vm2951, %v9259, 0
  %v9291 = vsel %vm2951, %v9260, 0
  %v9294 = vsel %vm2951, %v9261, 0
  %v9297 = vsel %vm2951, %v9262, 0
  %v9300 = vsel %vm2951, %v9263, 0
  %v9303 = vsel %vm2951, %v9264, 0
  %v9306 = vsel %vm2951, %v9265, 0
  %v9309 = vsel %vm2951, %v9266, 0
  %v9312 = vsel %vm2951, %v9267, 0
  %v9315 = vsel %vm2951, %v9268, 0
  %9317 = vmatprep.subr.mxu0 0.0
  %9318 = vmatpush1.msra.mxu0 0.0
  %9319 = vmatprep.subr.mxu0 0.0
  %9320 = vmatpush1.msra.mxu0 0.0
  %9321 = vmatprep.subr.mxu0 0.0
  %9322 = vmatpush1.msra.mxu0 0.0
  %9323 = vmatprep.subr.mxu0 0.0
  %9324 = vmatpush1.msra.mxu0 0.0
  %9325 = vmatprep.subr.mxu0 0.0
  %9326 = vmatpush1.msra.mxu0 0.0
  %9327 = vmatprep.subr.mxu0 0.0
  %9328 = vmatpush1.msra.mxu0 0.0
  %9329 = vmatprep.subr.mxu0 0.0
  %9330 = vmatpush1.msra.mxu0 0.0
  %9331 = vmatprep.subr.mxu0 0.0
  %9332 = vmatpush1.msra.mxu0 %v9250
  %9333 = vmatprep.subr.mxu0 0.0
  %9334 = vmatpush1.msra.mxu0 %v9245
  %9335 = vmatprep.subr.mxu0 0.0
  %9336 = vmatpush1.msra.mxu0 %v9240
  %9337 = vmatprep.subr.mxu0 0.0
  %9338 = vmatpush1.msra.mxu0 %v9235
  %9339 = vmatprep.subr.mxu0 0.0
  %9340 = vmatpush1.msra.mxu0 %v9230
  %9341 = vmatprep.subr.mxu0 0.0
  %9342 = vmatpush1.msra.mxu0 %v9225
  %9343 = vmatprep.subr.mxu0 0.0
  %9344 = vmatpush1.msra.mxu0 %v9220
  %9345 = vmatprep.subr.mxu0 0.0
  %9346 = vmatpush1.msra.mxu0 %v9215
  %9347 = vmatprep.subr.mxu0 0.0
  %9348 = vmatpush1.msra.mxu0 %v9210
  %9349 = vmatprep.subr.mxu0 0.0
  %9350 = vmatpush2.msra.mxu0 0.0
  %9351 = vmatprep.subr.mxu0 0.0
  %9352 = vmatpush2.msra.mxu0 0.0
  %9353 = vmatprep.subr.mxu0 0.0
  %9354 = vmatpush2.msra.mxu0 0.0
  %9355 = vmatprep.subr.mxu0 0.0
  %9356 = vmatpush2.msra.mxu0 0.0
  %9357 = vmatprep.subr.mxu0 0.0
  %9358 = vmatpush2.msra.mxu0 0.0
  %9359 = vmatprep.subr.mxu0 0.0
  %9360 = vmatpush2.msra.mxu0 0.0
  %9361 = vmatprep.subr.mxu0 0.0
  %9362 = vmatpush2.msra.mxu0 0.0
  %9363 = vmatprep.subr.mxu0 0.0
  %9364 = vmatpush2.msra.mxu0 0.0
  %9365 = vmatprep.subr.mxu0 0.0
  %9366 = vmatpush2.msra.mxu0 0.0
  %9367 = vmatprep.subr.mxu0 0.0
  %9368 = vmatpush2.msra.mxu0 0.0
  %9369 = vmatprep.subr.mxu0 0.0
  %9370 = vmatpush2.msra.mxu0 0.0
  %9371 = vmatprep.subr.mxu0 0.0
  %9372 = vmatpush2.msra.mxu0 0.0
  %9373 = vmatprep.subr.mxu0 0.0
  %9374 = vmatpush2.msra.mxu0 0.0
  %9375 = vmatprep.subr.mxu0 0.0
  %9376 = vmatpush2.msra.mxu0 0.0
  %9377 = vmatprep.subr.mxu0 0.0
  %9378 = vmatpush2.msra.mxu0 0.0
  %9379 = vmatprep.subr.mxu0 0.0
  %9380 = vmatpush2.msra.mxu0 0.0
  %9381 = vmatprep.mubr.f32.mxu0 0.0
  %9382 = vmatmul.mubr.f32.gmra.mxu0 %v9270
  %v9383 = vpop.f32.mrf.mxu0
  %v9384 = vadd.f32 0.0, %v9383
  %v9385 = vpop.f32.mrf.mxu0
  %9386 = vmatprep.mubr.f32.mxu0 0.0
  %9387 = vmatmul.mubr.f32.gmra.mxu0 %v9273
  %v9388 = vpop.f32.mrf.mxu0
  %v9389 = vadd.f32 0.0, %v9388
  %v9390 = vpop.f32.mrf.mxu0
  %9391 = vmatprep.mubr.f32.mxu0 0.0
  %9392 = vmatmul.mubr.f32.gmra.mxu0 %v9276
  %v9393 = vpop.f32.mrf.mxu0
  %v9394 = vadd.f32 0.0, %v9393
  %v9395 = vpop.f32.mrf.mxu0
  %9396 = vmatprep.mubr.f32.mxu0 0.0
  %9397 = vmatmul.mubr.f32.gmra.mxu0 %v9279
  %v9398 = vpop.f32.mrf.mxu0
  %v9399 = vadd.f32 0.0, %v9398
  %v9400 = vpop.f32.mrf.mxu0
  %9401 = vmatprep.mubr.f32.mxu0 0.0
  %9402 = vmatmul.mubr.f32.gmra.mxu0 %v9282
  %v9403 = vpop.f32.mrf.mxu0
  %v9404 = vadd.f32 0.0, %v9403
  %v9405 = vpop.f32.mrf.mxu0
  %9406 = vmatprep.mubr.f32.mxu0 0.0
  %9407 = vmatmul.mubr.f32.gmra.mxu0 %v9285
  %v9408 = vpop.f32.mrf.mxu0
  %v9409 = vadd.f32 0.0, %v9408
  %v9410 = vpop.f32.mrf.mxu0
  %9411 = vmatprep.mubr.f32.mxu0 0.0
  %9412 = vmatmul.mubr.f32.gmra.mxu0 %v9288
  %v9413 = vpop.f32.mrf.mxu0
  %v9414 = vadd.f32 0.0, %v9413
  %v9415 = vpop.f32.mrf.mxu0
  %9416 = vmatprep.mubr.f32.mxu0 0.0
  %9417 = vmatmul.mubr.f32.gmra.mxu0 %v9291
  %v9418 = vpop.f32.mrf.mxu0
  %v9419 = vadd.f32 0.0, %v9418
  %v9420 = vpop.f32.mrf.mxu0
  %9421 = vmatprep.mubr.f32.mxu0 0.0
  %9422 = vmatmul.mubr.f32.gmra.mxu0 %v9294
  %v9423 = vpop.f32.mrf.mxu0
  %v9424 = vadd.f32 0.0, %v9423
  %v9425 = vpop.f32.mrf.mxu0
  %9426 = vmatprep.mubr.f32.mxu0 0.0
  %9427 = vmatmul.mubr.f32.gmra.mxu0 %v9297
  %v9428 = vpop.f32.mrf.mxu0
  %v9429 = vadd.f32 0.0, %v9428
  %v9430 = vpop.f32.mrf.mxu0
  %9431 = vmatprep.mubr.f32.mxu0 0.0
  %9432 = vmatmul.mubr.f32.gmra.mxu0 %v9300
  %v9433 = vpop.f32.mrf.mxu0
  %v9434 = vadd.f32 0.0, %v9433
  %v9435 = vpop.f32.mrf.mxu0
  %9436 = vmatprep.mubr.f32.mxu0 0.0
  %9437 = vmatmul.mubr.f32.gmra.mxu0 %v9303
  %v9438 = vpop.f32.mrf.mxu0
  %v9439 = vadd.f32 0.0, %v9438
  %v9440 = vpop.f32.mrf.mxu0
  %9441 = vmatprep.mubr.f32.mxu0 0.0
  %9442 = vmatmul.mubr.f32.gmra.mxu0 %v9306
  %v9443 = vpop.f32.mrf.mxu0
  %v9444 = vadd.f32 0.0, %v9443
  %v9445 = vpop.f32.mrf.mxu0
  %9446 = vmatprep.mubr.f32.mxu0 0.0
  %9447 = vmatmul.mubr.f32.gmra.mxu0 %v9309
  %v9448 = vpop.f32.mrf.mxu0
  %v9449 = vadd.f32 0.0, %v9448
  %v9450 = vpop.f32.mrf.mxu0
  %9451 = vmatprep.mubr.f32.mxu0 0.0
  %9452 = vmatmul.mubr.f32.gmra.mxu0 %v9312
  %v9453 = vpop.f32.mrf.mxu0
  %v9454 = vadd.f32 0.0, %v9453
  %v9455 = vpop.f32.mrf.mxu0
  %9456 = vmatprep.mubr.f32.mxu0 0.0
  %9457 = vmatmul.mubr.f32.gmra.mxu0 %v9315
  %v9458 = vpop.f32.mrf.mxu0
  %v9459 = vadd.f32 0.0, %v9458
  %v9460 = vpop.f32.mrf.mxu0
  %9461 = vdwg.mxu0
  %v9463 = vsel %vm2951, %v9122, 0
  %v9466 = vsel %vm2951, %v9123, 0
  %v9469 = vsel %vm2951, %v9124, 0
  %v9472 = vsel %vm2951, %v9125, 0
  %v9475 = vsel %vm2951, %v9126, 0
  %v9478 = vsel %vm2951, %v9127, 0
  %v9481 = vsel %vm2951, %v9128, 0
  %v9484 = vsel %vm2951, %v9129, 0
  %v9487 = vsel %vm2951, %v9130, 0
  %v9490 = vsel %vm2951, %v9131, 0
  %v9493 = vsel %vm2951, %v9132, 0
  %v9496 = vsel %vm2951, %v9133, 0
  %v9499 = vsel %vm2951, %v9134, 0
  %v9502 = vsel %vm2951, %v9135, 0
  %v9505 = vsel %vm2951, %v9136, 0
  %v9508 = vsel %vm2951, %v9137, 0
  %9510 = vmatprep.subr.mxu0 0.0
  %9511 = vmatpush1.msra.mxu0 0.0
  %9512 = vmatprep.subr.mxu0 0.0
  %9513 = vmatpush1.msra.mxu0 0.0
  %9514 = vmatprep.subr.mxu0 0.0
  %9515 = vmatpush1.msra.mxu0 0.0
  %9516 = vmatprep.subr.mxu0 0.0
  %9517 = vmatpush1.msra.mxu0 0.0
  %9518 = vmatprep.subr.mxu0 0.0
  %9519 = vmatpush1.msra.mxu0 0.0
  %9520 = vmatprep.subr.mxu0 0.0
  %9521 = vmatpush1.msra.mxu0 0.0
  %9522 = vmatprep.subr.mxu0 0.0
  %9523 = vmatpush1.msra.mxu0 0.0
  %9524 = vmatprep.subr.mxu0 0.0
  %9525 = vmatpush1.msra.mxu0 %v9119
  %9526 = vmatprep.subr.mxu0 0.0
  %9527 = vmatpush1.msra.mxu0 %v9114
  %9528 = vmatprep.subr.mxu0 0.0
  %9529 = vmatpush1.msra.mxu0 %v9109
  %9530 = vmatprep.subr.mxu0 0.0
  %9531 = vmatpush1.msra.mxu0 %v9104
  %9532 = vmatprep.subr.mxu0 0.0
  %9533 = vmatpush1.msra.mxu0 %v9099
  %9534 = vmatprep.subr.mxu0 0.0
  %9535 = vmatpush1.msra.mxu0 %v9094
  %9536 = vmatprep.subr.mxu0 0.0
  %9537 = vmatpush1.msra.mxu0 %v9089
  %9538 = vmatprep.subr.mxu0 0.0
  %9539 = vmatpush1.msra.mxu0 %v9084
  %9540 = vmatprep.subr.mxu0 0.0
  %9541 = vmatpush1.msra.mxu0 %v9079
  %9542 = vmatprep.subr.mxu0 0.0
  %9543 = vmatpush2.msra.mxu0 0.0
  %9544 = vmatprep.subr.mxu0 0.0
  %9545 = vmatpush2.msra.mxu0 0.0
  %9546 = vmatprep.subr.mxu0 0.0
  %9547 = vmatpush2.msra.mxu0 0.0
  %9548 = vmatprep.subr.mxu0 0.0
  %9549 = vmatpush2.msra.mxu0 0.0
  %9550 = vmatprep.subr.mxu0 0.0
  %9551 = vmatpush2.msra.mxu0 0.0
  %9552 = vmatprep.subr.mxu0 0.0
  %9553 = vmatpush2.msra.mxu0 0.0
  %9554 = vmatprep.subr.mxu0 0.0
  %9555 = vmatpush2.msra.mxu0 0.0
  %9556 = vmatprep.subr.mxu0 0.0
  %9557 = vmatpush2.msra.mxu0 0.0
  %9558 = vmatprep.subr.mxu0 0.0
  %9559 = vmatpush2.msra.mxu0 0.0
  %9560 = vmatprep.subr.mxu0 0.0
  %9561 = vmatpush2.msra.mxu0 0.0
  %9562 = vmatprep.subr.mxu0 0.0
  %9563 = vmatpush2.msra.mxu0 0.0
  %9564 = vmatprep.subr.mxu0 0.0
  %9565 = vmatpush2.msra.mxu0 0.0
  %9566 = vmatprep.subr.mxu0 0.0
  %9567 = vmatpush2.msra.mxu0 0.0
  %9568 = vmatprep.subr.mxu0 0.0
  %9569 = vmatpush2.msra.mxu0 0.0
  %9570 = vmatprep.subr.mxu0 0.0
  %9571 = vmatpush2.msra.mxu0 0.0
  %9572 = vmatprep.subr.mxu0 0.0
  %9573 = vmatpush2.msra.mxu0 0.0
  %9574 = vmatprep.mubr.f32.mxu0 0.0
  %9575 = vmatmul.mubr.f32.gmra.mxu0 %v9463
  %v9576 = vpop.f32.mrf.mxu0
  %v9577 = vadd.f32 %v9384, %v9576
  %v9578 = vpop.f32.mrf.mxu0
  %9579 = vmatprep.mubr.f32.mxu0 0.0
  %9580 = vmatmul.mubr.f32.gmra.mxu0 %v9466
  %v9581 = vpop.f32.mrf.mxu0
  %v9582 = vadd.f32 %v9389, %v9581
  %v9583 = vpop.f32.mrf.mxu0
  %9584 = vmatprep.mubr.f32.mxu0 0.0
  %9585 = vmatmul.mubr.f32.gmra.mxu0 %v9469
  %v9586 = vpop.f32.mrf.mxu0
  %v9587 = vadd.f32 %v9394, %v9586
  %v9588 = vpop.f32.mrf.mxu0
  %9589 = vmatprep.mubr.f32.mxu0 0.0
  %9590 = vmatmul.mubr.f32.gmra.mxu0 %v9472
  %v9591 = vpop.f32.mrf.mxu0
  %v9592 = vadd.f32 %v9399, %v9591
  %v9593 = vpop.f32.mrf.mxu0
  %9594 = vmatprep.mubr.f32.mxu0 0.0
  %9595 = vmatmul.mubr.f32.gmra.mxu0 %v9475
  %v9596 = vpop.f32.mrf.mxu0
  %v9597 = vadd.f32 %v9404, %v9596
  %v9598 = vpop.f32.mrf.mxu0
  %9599 = vmatprep.mubr.f32.mxu0 0.0
  %9600 = vmatmul.mubr.f32.gmra.mxu0 %v9478
  %v9601 = vpop.f32.mrf.mxu0
  %v9602 = vadd.f32 %v9409, %v9601
  %v9603 = vpop.f32.mrf.mxu0
  %9604 = vmatprep.mubr.f32.mxu0 0.0
  %9605 = vmatmul.mubr.f32.gmra.mxu0 %v9481
  %v9606 = vpop.f32.mrf.mxu0
  %v9607 = vadd.f32 %v9414, %v9606
  %v9608 = vpop.f32.mrf.mxu0
  %9609 = vmatprep.mubr.f32.mxu0 0.0
  %9610 = vmatmul.mubr.f32.gmra.mxu0 %v9484
  %v9611 = vpop.f32.mrf.mxu0
  %v9612 = vadd.f32 %v9419, %v9611
  %v9613 = vpop.f32.mrf.mxu0
  %9614 = vmatprep.mubr.f32.mxu0 0.0
  %9615 = vmatmul.mubr.f32.gmra.mxu0 %v9487
  %v9616 = vpop.f32.mrf.mxu0
  %v9617 = vadd.f32 %v9424, %v9616
  %v9618 = vpop.f32.mrf.mxu0
  %9619 = vmatprep.mubr.f32.mxu0 0.0
  %9620 = vmatmul.mubr.f32.gmra.mxu0 %v9490
  %v9621 = vpop.f32.mrf.mxu0
  %v9622 = vadd.f32 %v9429, %v9621
  %v9623 = vpop.f32.mrf.mxu0
  %9624 = vmatprep.mubr.f32.mxu0 0.0
  %9625 = vmatmul.mubr.f32.gmra.mxu0 %v9493
  %v9626 = vpop.f32.mrf.mxu0
  %v9627 = vadd.f32 %v9434, %v9626
  %v9628 = vpop.f32.mrf.mxu0
  %9629 = vmatprep.mubr.f32.mxu0 0.0
  %9630 = vmatmul.mubr.f32.gmra.mxu0 %v9496
  %v9631 = vpop.f32.mrf.mxu0
  %v9632 = vadd.f32 %v9439, %v9631
  %v9633 = vpop.f32.mrf.mxu0
  %9634 = vmatprep.mubr.f32.mxu0 0.0
  %9635 = vmatmul.mubr.f32.gmra.mxu0 %v9499
  %v9636 = vpop.f32.mrf.mxu0
  %v9637 = vadd.f32 %v9444, %v9636
  %v9638 = vpop.f32.mrf.mxu0
  %9639 = vmatprep.mubr.f32.mxu0 0.0
  %9640 = vmatmul.mubr.f32.gmra.mxu0 %v9502
  %v9641 = vpop.f32.mrf.mxu0
  %v9642 = vadd.f32 %v9449, %v9641
  %v9643 = vpop.f32.mrf.mxu0
  %9644 = vmatprep.mubr.f32.mxu0 0.0
  %9645 = vmatmul.mubr.f32.gmra.mxu0 %v9505
  %v9646 = vpop.f32.mrf.mxu0
  %v9647 = vadd.f32 %v9454, %v9646
  %v9648 = vpop.f32.mrf.mxu0
  %9649 = vmatprep.mubr.f32.mxu0 0.0
  %9650 = vmatmul.mubr.f32.gmra.mxu0 %v9508
  %v9651 = vpop.f32.mrf.mxu0
  %v9652 = vadd.f32 %v9459, %v9651
  %v9653 = vpop.f32.mrf.mxu0
  %9654 = vdwg.mxu0
  %v9655 = vld [vmem:[%s3338] sm:$0xff]
  %v9656 = vld [vmem:[%s3338 + $0x8] sm:$0xf]
  %v9658 = vsel %vm77, %v9656, 0
  %9660 = vmatprep.subr.mxu0 0.0
  %9661 = vmatpush1.msra.mxu0 0.0
  %9662 = vmatprep.subr.mxu0 0.0
  %9663 = vmatpush1.msra.mxu0 0.0
  %9664 = vmatprep.subr.mxu0 0.0
  %9665 = vmatpush1.msra.mxu0 0.0
  %9666 = vmatprep.subr.mxu0 0.0
  %9667 = vmatpush1.msra.mxu0 0.0
  %9668 = vmatprep.subr.mxu0 0.0
  %9669 = vmatpush1.msra.mxu0 0.0
  %9670 = vmatprep.subr.mxu0 0.0
  %9671 = vmatpush1.msra.mxu0 0.0
  %9672 = vmatprep.subr.mxu0 0.0
  %9673 = vmatpush1.msra.mxu0 0.0
  %9674 = vmatprep.subr.mxu0 0.0
  %9675 = vmatpush1.msra.mxu0 0.0
  %9676 = vmatprep.subr.mxu0 0.0
  %9677 = vmatpush1.msra.mxu0 0.0
  %9678 = vmatprep.subr.mxu0 0.0
  %9679 = vmatpush1.msra.mxu0 0.0
  %9680 = vmatprep.subr.mxu0 0.0
  %9681 = vmatpush1.msra.mxu0 0.0
  %9682 = vmatprep.subr.mxu0 0.0
  %9683 = vmatpush1.msra.mxu0 0.0
  %9684 = vmatprep.subr.mxu0 0.0
  %9685 = vmatpush1.msra.mxu0 0.0
  %9686 = vmatprep.subr.mxu0 0.0
  %9687 = vmatpush1.msra.mxu0 0.0
  %9688 = vmatprep.subr.mxu0 0.0
  %9689 = vmatpush1.msra.mxu0 %v9658
  %9690 = vmatprep.subr.mxu0 0.0
  %9691 = vmatpush1.msra.mxu0 %v9655
  %9692 = vmatprep.subr.mxu0 0.0
  %9693 = vmatpush2.msra.mxu0 0.0
  %9694 = vmatprep.subr.mxu0 0.0
  %9695 = vmatpush2.msra.mxu0 0.0
  %9696 = vmatprep.subr.mxu0 0.0
  %9697 = vmatpush2.msra.mxu0 0.0
  %9698 = vmatprep.subr.mxu0 0.0
  %9699 = vmatpush2.msra.mxu0 0.0
  %9700 = vmatprep.subr.mxu0 0.0
  %9701 = vmatpush2.msra.mxu0 0.0
  %9702 = vmatprep.subr.mxu0 0.0
  %9703 = vmatpush2.msra.mxu0 0.0
  %9704 = vmatprep.subr.mxu0 0.0
  %9705 = vmatpush2.msra.mxu0 0.0
  %9706 = vmatprep.subr.mxu0 0.0
  %9707 = vmatpush2.msra.mxu0 0.0
  %9708 = vmatprep.subr.mxu0 0.0
  %9709 = vmatpush2.msra.mxu0 0.0
  %9710 = vmatprep.subr.mxu0 0.0
  %9711 = vmatpush2.msra.mxu0 0.0
  %9712 = vmatprep.subr.mxu0 0.0
  %9713 = vmatpush2.msra.mxu0 0.0
  %9714 = vmatprep.subr.mxu0 0.0
  %9715 = vmatpush2.msra.mxu0 0.0
  %9716 = vmatprep.subr.mxu0 0.0
  %9717 = vmatpush2.msra.mxu0 0.0
  %9718 = vmatprep.subr.mxu0 0.0
  %9719 = vmatpush2.msra.mxu0 0.0
  %9720 = vmatprep.subr.mxu0 0.0
  %9721 = vmatpush2.msra.mxu0 0.0
  %9722 = vmatprep.subr.mxu0 0.0
  %9723 = vmatpush2.msra.mxu0 0.0
  %9724 = vmatprep.mubr.f32.mxu0 0.0
  %9725 = vmatmul.mubr.f32.gmra.mxu0 %v8983
  %v9726 = vpop.f32.mrf.mxu0
  %v9727 = vadd.f32 0.0, %v9726
  %v9728 = vpop.f32.mrf.mxu0
  %9729 = vmatprep.mubr.f32.mxu0 0.0
  %9730 = vmatmul.mubr.f32.gmra.mxu0 %v8986
  %v9731 = vpop.f32.mrf.mxu0
  %v9732 = vadd.f32 0.0, %v9731
  %v9733 = vpop.f32.mrf.mxu0
  %9734 = vmatprep.mubr.f32.mxu0 0.0
  %9735 = vmatmul.mubr.f32.gmra.mxu0 %v8989
  %v9736 = vpop.f32.mrf.mxu0
  %v9737 = vadd.f32 0.0, %v9736
  %v9738 = vpop.f32.mrf.mxu0
  %9739 = vmatprep.mubr.f32.mxu0 0.0
  %9740 = vmatmul.mubr.f32.gmra.mxu0 %v8992
  %v9741 = vpop.f32.mrf.mxu0
  %v9742 = vadd.f32 0.0, %v9741
  %v9743 = vpop.f32.mrf.mxu0
  %9744 = vmatprep.mubr.f32.mxu0 0.0
  %9745 = vmatmul.mubr.f32.gmra.mxu0 %v8995
  %v9746 = vpop.f32.mrf.mxu0
  %v9747 = vadd.f32 0.0, %v9746
  %v9748 = vpop.f32.mrf.mxu0
  %9749 = vmatprep.mubr.f32.mxu0 0.0
  %9750 = vmatmul.mubr.f32.gmra.mxu0 %v8998
  %v9751 = vpop.f32.mrf.mxu0
  %v9752 = vadd.f32 0.0, %v9751
  %v9753 = vpop.f32.mrf.mxu0
  %9754 = vmatprep.mubr.f32.mxu0 0.0
  %9755 = vmatmul.mubr.f32.gmra.mxu0 %v9001
  %v9756 = vpop.f32.mrf.mxu0
  %v9757 = vadd.f32 0.0, %v9756
  %v9758 = vpop.f32.mrf.mxu0
  %9759 = vmatprep.mubr.f32.mxu0 0.0
  %9760 = vmatmul.mubr.f32.gmra.mxu0 %v9004
  %v9761 = vpop.f32.mrf.mxu0
  %v9762 = vadd.f32 0.0, %v9761
  %v9763 = vpop.f32.mrf.mxu0
  %9764 = vmatprep.mubr.f32.mxu0 0.0
  %9765 = vmatmul.mubr.f32.gmra.mxu0 %v9007
  %v9766 = vpop.f32.mrf.mxu0
  %v9767 = vadd.f32 0.0, %v9766
  %v9768 = vpop.f32.mrf.mxu0
  %9769 = vdwg.mxu0
  %v9770 = vld [vmem:[%s3454] sm:$0xff]
  %v9771 = vld [vmem:[%s3454 + $0x8] sm:$0xff]
  %v9772 = vld [vmem:[%s3454 + $0x10] sm:$0xff]
  %v9773 = vld [vmem:[%s3454 + $0x18] sm:$0xff]
  %v9774 = vld [vmem:[%s3454 + $0x20] sm:$0xff]
  %v9775 = vld [vmem:[%s3454 + $0x28] sm:$0xff]
  %v9776 = vld [vmem:[%s3454 + $0x30] sm:$0xff]
  %v9777 = vld [vmem:[%s3454 + $0x38] sm:$0xff]
  %v9778 = vld [vmem:[%s3454 + $0x40] sm:$0xff]
  %v9779 = vld [vmem:[%s3454 + $0x48] sm:$0xff]
  %v9780 = vld [vmem:[%s3454 + $0x50] sm:$0xff]
  %v9781 = vld [vmem:[%s3454 + $0x58] sm:$0xff]
  %v9782 = vld [vmem:[%s3454 + $0x60] sm:$0xff]
  %v9783 = vld [vmem:[%s3454 + $0x68] sm:$0xff]
  %v9784 = vld [vmem:[%s3454 + $0x70] sm:$0xff]
  %v9785 = vld [vmem:[%s3454 + $0x78] sm:$0xff]
  %v9787 = vsel %vm2951, %v9770, 0
  %v9790 = vsel %vm2951, %v9771, 0
  %v9793 = vsel %vm2951, %v9772, 0
  %v9796 = vsel %vm2951, %v9773, 0
  %v9799 = vsel %vm2951, %v9774, 0
  %v9802 = vsel %vm2951, %v9775, 0
  %v9805 = vsel %vm2951, %v9776, 0
  %v9808 = vsel %vm2951, %v9777, 0
  %v9811 = vsel %vm2951, %v9778, 0
  %v9814 = vsel %vm2951, %v9779, 0
  %v9817 = vsel %vm2951, %v9780, 0
  %v9820 = vsel %vm2951, %v9781, 0
  %v9823 = vsel %vm2951, %v9782, 0
  %v9826 = vsel %vm2951, %v9783, 0
  %v9829 = vsel %vm2951, %v9784, 0
  %v9832 = vsel %vm2951, %v9785, 0
  %9834 = vmatprep.subr.mxu0 0.0
  %9835 = vmatpush1.msra.mxu0 0.0
  %9836 = vmatprep.subr.mxu0 0.0
  %9837 = vmatpush1.msra.mxu0 0.0
  %9838 = vmatprep.subr.mxu0 0.0
  %9839 = vmatpush1.msra.mxu0 0.0
  %9840 = vmatprep.subr.mxu0 0.0
  %9841 = vmatpush1.msra.mxu0 0.0
  %9842 = vmatprep.subr.mxu0 0.0
  %9843 = vmatpush1.msra.mxu0 0.0
  %9844 = vmatprep.subr.mxu0 0.0
  %9845 = vmatpush1.msra.mxu0 0.0
  %9846 = vmatprep.subr.mxu0 0.0
  %9847 = vmatpush1.msra.mxu0 0.0
  %9848 = vmatprep.subr.mxu0 0.0
  %9849 = vmatpush1.msra.mxu0 %v9767
  %9850 = vmatprep.subr.mxu0 0.0
  %9851 = vmatpush1.msra.mxu0 %v9762
  %9852 = vmatprep.subr.mxu0 0.0
  %9853 = vmatpush1.msra.mxu0 %v9757
  %9854 = vmatprep.subr.mxu0 0.0
  %9855 = vmatpush1.msra.mxu0 %v9752
  %9856 = vmatprep.subr.mxu0 0.0
  %9857 = vmatpush1.msra.mxu0 %v9747
  %9858 = vmatprep.subr.mxu0 0.0
  %9859 = vmatpush1.msra.mxu0 %v9742
  %9860 = vmatprep.subr.mxu0 0.0
  %9861 = vmatpush1.msra.mxu0 %v9737
  %9862 = vmatprep.subr.mxu0 0.0
  %9863 = vmatpush1.msra.mxu0 %v9732
  %9864 = vmatprep.subr.mxu0 0.0
  %9865 = vmatpush1.msra.mxu0 %v9727
  %9866 = vmatprep.subr.mxu0 0.0
  %9867 = vmatpush2.msra.mxu0 0.0
  %9868 = vmatprep.subr.mxu0 0.0
  %9869 = vmatpush2.msra.mxu0 0.0
  %9870 = vmatprep.subr.mxu0 0.0
  %9871 = vmatpush2.msra.mxu0 0.0
  %9872 = vmatprep.subr.mxu0 0.0
  %9873 = vmatpush2.msra.mxu0 0.0
  %9874 = vmatprep.subr.mxu0 0.0
  %9875 = vmatpush2.msra.mxu0 0.0
  %9876 = vmatprep.subr.mxu0 0.0
  %9877 = vmatpush2.msra.mxu0 0.0
  %9878 = vmatprep.subr.mxu0 0.0
  %9879 = vmatpush2.msra.mxu0 0.0
  %9880 = vmatprep.subr.mxu0 0.0
  %9881 = vmatpush2.msra.mxu0 0.0
  %9882 = vmatprep.subr.mxu0 0.0
  %9883 = vmatpush2.msra.mxu0 0.0
  %9884 = vmatprep.subr.mxu0 0.0
  %9885 = vmatpush2.msra.mxu0 0.0
  %9886 = vmatprep.subr.mxu0 0.0
  %9887 = vmatpush2.msra.mxu0 0.0
  %9888 = vmatprep.subr.mxu0 0.0
  %9889 = vmatpush2.msra.mxu0 0.0
  %9890 = vmatprep.subr.mxu0 0.0
  %9891 = vmatpush2.msra.mxu0 0.0
  %9892 = vmatprep.subr.mxu0 0.0
  %9893 = vmatpush2.msra.mxu0 0.0
  %9894 = vmatprep.subr.mxu0 0.0
  %9895 = vmatpush2.msra.mxu0 0.0
  %9896 = vmatprep.subr.mxu0 0.0
  %9897 = vmatpush2.msra.mxu0 0.0
  %9898 = vmatprep.mubr.f32.mxu0 0.0
  %9899 = vmatmul.mubr.f32.gmra.mxu0 %v9787
  %v9900 = vpop.f32.mrf.mxu0
  %v9901 = vadd.f32 0.0, %v9900
  %v9902 = vpop.f32.mrf.mxu0
  %9903 = vmatprep.mubr.f32.mxu0 0.0
  %9904 = vmatmul.mubr.f32.gmra.mxu0 %v9790
  %v9905 = vpop.f32.mrf.mxu0
  %v9906 = vadd.f32 0.0, %v9905
  %v9907 = vpop.f32.mrf.mxu0
  %9908 = vmatprep.mubr.f32.mxu0 0.0
  %9909 = vmatmul.mubr.f32.gmra.mxu0 %v9793
  %v9910 = vpop.f32.mrf.mxu0
  %v9911 = vadd.f32 0.0, %v9910
  %v9912 = vpop.f32.mrf.mxu0
  %9913 = vmatprep.mubr.f32.mxu0 0.0
  %9914 = vmatmul.mubr.f32.gmra.mxu0 %v9796
  %v9915 = vpop.f32.mrf.mxu0
  %v9916 = vadd.f32 0.0, %v9915
  %v9917 = vpop.f32.mrf.mxu0
  %9918 = vmatprep.mubr.f32.mxu0 0.0
  %9919 = vmatmul.mubr.f32.gmra.mxu0 %v9799
  %v9920 = vpop.f32.mrf.mxu0
  %v9921 = vadd.f32 0.0, %v9920
  %v9922 = vpop.f32.mrf.mxu0
  %9923 = vmatprep.mubr.f32.mxu0 0.0
  %9924 = vmatmul.mubr.f32.gmra.mxu0 %v9802
  %v9925 = vpop.f32.mrf.mxu0
  %v9926 = vadd.f32 0.0, %v9925
  %v9927 = vpop.f32.mrf.mxu0
  %9928 = vmatprep.mubr.f32.mxu0 0.0
  %9929 = vmatmul.mubr.f32.gmra.mxu0 %v9805
  %v9930 = vpop.f32.mrf.mxu0
  %v9931 = vadd.f32 0.0, %v9930
  %v9932 = vpop.f32.mrf.mxu0
  %9933 = vmatprep.mubr.f32.mxu0 0.0
  %9934 = vmatmul.mubr.f32.gmra.mxu0 %v9808
  %v9935 = vpop.f32.mrf.mxu0
  %v9936 = vadd.f32 0.0, %v9935
  %v9937 = vpop.f32.mrf.mxu0
  %9938 = vmatprep.mubr.f32.mxu0 0.0
  %9939 = vmatmul.mubr.f32.gmra.mxu0 %v9811
  %v9940 = vpop.f32.mrf.mxu0
  %v9941 = vadd.f32 0.0, %v9940
  %v9942 = vpop.f32.mrf.mxu0
  %9943 = vmatprep.mubr.f32.mxu0 0.0
  %9944 = vmatmul.mubr.f32.gmra.mxu0 %v9814
  %v9945 = vpop.f32.mrf.mxu0
  %v9946 = vadd.f32 0.0, %v9945
  %v9947 = vpop.f32.mrf.mxu0
  %9948 = vmatprep.mubr.f32.mxu0 0.0
  %9949 = vmatmul.mubr.f32.gmra.mxu0 %v9817
  %v9950 = vpop.f32.mrf.mxu0
  %v9951 = vadd.f32 0.0, %v9950
  %v9952 = vpop.f32.mrf.mxu0
  %9953 = vmatprep.mubr.f32.mxu0 0.0
  %9954 = vmatmul.mubr.f32.gmra.mxu0 %v9820
  %v9955 = vpop.f32.mrf.mxu0
  %v9956 = vadd.f32 0.0, %v9955
  %v9957 = vpop.f32.mrf.mxu0
  %9958 = vmatprep.mubr.f32.mxu0 0.0
  %9959 = vmatmul.mubr.f32.gmra.mxu0 %v9823
  %v9960 = vpop.f32.mrf.mxu0
  %v9961 = vadd.f32 0.0, %v9960
  %v9962 = vpop.f32.mrf.mxu0
  %9963 = vmatprep.mubr.f32.mxu0 0.0
  %9964 = vmatmul.mubr.f32.gmra.mxu0 %v9826
  %v9965 = vpop.f32.mrf.mxu0
  %v9966 = vadd.f32 0.0, %v9965
  %v9967 = vpop.f32.mrf.mxu0
  %9968 = vmatprep.mubr.f32.mxu0 0.0
  %9969 = vmatmul.mubr.f32.gmra.mxu0 %v9829
  %v9970 = vpop.f32.mrf.mxu0
  %v9971 = vadd.f32 0.0, %v9970
  %v9972 = vpop.f32.mrf.mxu0
  %9973 = vmatprep.mubr.f32.mxu0 0.0
  %9974 = vmatmul.mubr.f32.gmra.mxu0 %v9832
  %v9975 = vpop.f32.mrf.mxu0
  %v9976 = vadd.f32 0.0, %v9975
  %v9977 = vpop.f32.mrf.mxu0
  %9978 = vdwg.mxu0
  %v9979 = vadd.f32 %v9577, %v9901
  %v9980 = vadd.f32 %v9582, %v9906
  %v9981 = vadd.f32 %v9587, %v9911
  %v9982 = vadd.f32 %v9592, %v9916
  %v9983 = vadd.f32 %v9597, %v9921
  %v9984 = vadd.f32 %v9602, %v9926
  %v9985 = vadd.f32 %v9607, %v9931
  %v9986 = vadd.f32 %v9612, %v9936
  %v9987 = vadd.f32 %v9617, %v9941
  %v9988 = vadd.f32 %v9622, %v9946
  %v9989 = vadd.f32 %v9627, %v9951
  %v9990 = vadd.f32 %v9632, %v9956
  %v9991 = vadd.f32 %v9637, %v9961
  %v9992 = vadd.f32 %v9642, %v9966
  %v9993 = vadd.f32 %v9647, %v9971
  %v9994 = vadd.f32 %v9652, %v9976
  %v9995 = vld [vmem:[%s3680] sm:$0xff]
  %v9996 = vld [vmem:[%s3680 + $0x8] sm:$0xf]
  %v9998 = vsel %vm77, %v9996, 0
  %10000 = vmatprep.subr.mxu0 0.0
  %10001 = vmatpush1.msra.mxu0 0.0
  %10002 = vmatprep.subr.mxu0 0.0
  %10003 = vmatpush1.msra.mxu0 0.0
  %10004 = vmatprep.subr.mxu0 0.0
  %10005 = vmatpush1.msra.mxu0 0.0
  %10006 = vmatprep.subr.mxu0 0.0
  %10007 = vmatpush1.msra.mxu0 0.0
  %10008 = vmatprep.subr.mxu0 0.0
  %10009 = vmatpush1.msra.mxu0 0.0
  %10010 = vmatprep.subr.mxu0 0.0
  %10011 = vmatpush1.msra.mxu0 0.0
  %10012 = vmatprep.subr.mxu0 0.0
  %10013 = vmatpush1.msra.mxu0 0.0
  %10014 = vmatprep.subr.mxu0 0.0
  %10015 = vmatpush1.msra.mxu0 0.0
  %10016 = vmatprep.subr.mxu0 0.0
  %10017 = vmatpush1.msra.mxu0 0.0
  %10018 = vmatprep.subr.mxu0 0.0
  %10019 = vmatpush1.msra.mxu0 0.0
  %10020 = vmatprep.subr.mxu0 0.0
  %10021 = vmatpush1.msra.mxu0 0.0
  %10022 = vmatprep.subr.mxu0 0.0
  %10023 = vmatpush1.msra.mxu0 0.0
  %10024 = vmatprep.subr.mxu0 0.0
  %10025 = vmatpush1.msra.mxu0 0.0
  %10026 = vmatprep.subr.mxu0 0.0
  %10027 = vmatpush1.msra.mxu0 0.0
  %10028 = vmatprep.subr.mxu0 0.0
  %10029 = vmatpush1.msra.mxu0 %v9998
  %10030 = vmatprep.subr.mxu0 0.0
  %10031 = vmatpush1.msra.mxu0 %v9995
  %10032 = vmatprep.subr.mxu0 0.0
  %10033 = vmatpush2.msra.mxu0 0.0
  %10034 = vmatprep.subr.mxu0 0.0
  %10035 = vmatpush2.msra.mxu0 0.0
  %10036 = vmatprep.subr.mxu0 0.0
  %10037 = vmatpush2.msra.mxu0 0.0
  %10038 = vmatprep.subr.mxu0 0.0
  %10039 = vmatpush2.msra.mxu0 0.0
  %10040 = vmatprep.subr.mxu0 0.0
  %10041 = vmatpush2.msra.mxu0 0.0
  %10042 = vmatprep.subr.mxu0 0.0
  %10043 = vmatpush2.msra.mxu0 0.0
  %10044 = vmatprep.subr.mxu0 0.0
  %10045 = vmatpush2.msra.mxu0 0.0
  %10046 = vmatprep.subr.mxu0 0.0
  %10047 = vmatpush2.msra.mxu0 0.0
  %10048 = vmatprep.subr.mxu0 0.0
  %10049 = vmatpush2.msra.mxu0 0.0
  %10050 = vmatprep.subr.mxu0 0.0
  %10051 = vmatpush2.msra.mxu0 0.0
  %10052 = vmatprep.subr.mxu0 0.0
  %10053 = vmatpush2.msra.mxu0 0.0
  %10054 = vmatprep.subr.mxu0 0.0
  %10055 = vmatpush2.msra.mxu0 0.0
  %10056 = vmatprep.subr.mxu0 0.0
  %10057 = vmatpush2.msra.mxu0 0.0
  %10058 = vmatprep.subr.mxu0 0.0
  %10059 = vmatpush2.msra.mxu0 0.0
  %10060 = vmatprep.subr.mxu0 0.0
  %10061 = vmatpush2.msra.mxu0 0.0
  %10062 = vmatprep.subr.mxu0 0.0
  %10063 = vmatpush2.msra.mxu0 0.0
  %10064 = vmatprep.mubr.f32.mxu0 0.0
  %10065 = vmatmul.mubr.f32.gmra.mxu0 %v8983
  %v10066 = vpop.f32.mrf.mxu0
  %v10067 = vadd.f32 0.0, %v10066
  %v10068 = vpop.f32.mrf.mxu0
  %10069 = vmatprep.mubr.f32.mxu0 0.0
  %10070 = vmatmul.mubr.f32.gmra.mxu0 %v8986
  %v10071 = vpop.f32.mrf.mxu0
  %v10072 = vadd.f32 0.0, %v10071
  %v10073 = vpop.f32.mrf.mxu0
  %10074 = vmatprep.mubr.f32.mxu0 0.0
  %10075 = vmatmul.mubr.f32.gmra.mxu0 %v8989
  %v10076 = vpop.f32.mrf.mxu0
  %v10077 = vadd.f32 0.0, %v10076
  %v10078 = vpop.f32.mrf.mxu0
  %10079 = vmatprep.mubr.f32.mxu0 0.0
  %10080 = vmatmul.mubr.f32.gmra.mxu0 %v8992
  %v10081 = vpop.f32.mrf.mxu0
  %v10082 = vadd.f32 0.0, %v10081
  %v10083 = vpop.f32.mrf.mxu0
  %10084 = vmatprep.mubr.f32.mxu0 0.0
  %10085 = vmatmul.mubr.f32.gmra.mxu0 %v8995
  %v10086 = vpop.f32.mrf.mxu0
  %v10087 = vadd.f32 0.0, %v10086
  %v10088 = vpop.f32.mrf.mxu0
  %10089 = vmatprep.mubr.f32.mxu0 0.0
  %10090 = vmatmul.mubr.f32.gmra.mxu0 %v8998
  %v10091 = vpop.f32.mrf.mxu0
  %v10092 = vadd.f32 0.0, %v10091
  %v10093 = vpop.f32.mrf.mxu0
  %10094 = vmatprep.mubr.f32.mxu0 0.0
  %10095 = vmatmul.mubr.f32.gmra.mxu0 %v9001
  %v10096 = vpop.f32.mrf.mxu0
  %v10097 = vadd.f32 0.0, %v10096
  %v10098 = vpop.f32.mrf.mxu0
  %10099 = vmatprep.mubr.f32.mxu0 0.0
  %10100 = vmatmul.mubr.f32.gmra.mxu0 %v9004
  %v10101 = vpop.f32.mrf.mxu0
  %v10102 = vadd.f32 0.0, %v10101
  %v10103 = vpop.f32.mrf.mxu0
  %10104 = vmatprep.mubr.f32.mxu0 0.0
  %10105 = vmatmul.mubr.f32.gmra.mxu0 %v9007
  %v10106 = vpop.f32.mrf.mxu0
  %v10107 = vadd.f32 0.0, %v10106
  %v10108 = vpop.f32.mrf.mxu0
  %10109 = vdwg.mxu0
  %v10110 = vld [vmem:[%s3796] sm:$0xff]
  %v10111 = vld [vmem:[%s3796 + $0x8] sm:$0xff]
  %v10112 = vld [vmem:[%s3796 + $0x10] sm:$0xff]
  %v10113 = vld [vmem:[%s3796 + $0x18] sm:$0xff]
  %v10114 = vld [vmem:[%s3796 + $0x20] sm:$0xff]
  %v10115 = vld [vmem:[%s3796 + $0x28] sm:$0xff]
  %v10116 = vld [vmem:[%s3796 + $0x30] sm:$0xff]
  %v10117 = vld [vmem:[%s3796 + $0x38] sm:$0xff]
  %v10118 = vld [vmem:[%s3796 + $0x40] sm:$0xff]
  %v10119 = vld [vmem:[%s3796 + $0x48] sm:$0xff]
  %v10120 = vld [vmem:[%s3796 + $0x50] sm:$0xff]
  %v10121 = vld [vmem:[%s3796 + $0x58] sm:$0xff]
  %v10122 = vld [vmem:[%s3796 + $0x60] sm:$0xff]
  %v10123 = vld [vmem:[%s3796 + $0x68] sm:$0xff]
  %v10124 = vld [vmem:[%s3796 + $0x70] sm:$0xff]
  %v10125 = vld [vmem:[%s3796 + $0x78] sm:$0xff]
  %v10127 = vsel %vm2951, %v10110, 0
  %v10130 = vsel %vm2951, %v10111, 0
  %v10133 = vsel %vm2951, %v10112, 0
  %v10136 = vsel %vm2951, %v10113, 0
  %v10139 = vsel %vm2951, %v10114, 0
  %v10142 = vsel %vm2951, %v10115, 0
  %v10145 = vsel %vm2951, %v10116, 0
  %v10148 = vsel %vm2951, %v10117, 0
  %v10151 = vsel %vm2951, %v10118, 0
  %v10154 = vsel %vm2951, %v10119, 0
  %v10157 = vsel %vm2951, %v10120, 0
  %v10160 = vsel %vm2951, %v10121, 0
  %v10163 = vsel %vm2951, %v10122, 0
  %v10166 = vsel %vm2951, %v10123, 0
  %v10169 = vsel %vm2951, %v10124, 0
  %v10172 = vsel %vm2951, %v10125, 0
  %10174 = vmatprep.subr.mxu0 0.0
  %10175 = vmatpush1.msra.mxu0 0.0
  %10176 = vmatprep.subr.mxu0 0.0
  %10177 = vmatpush1.msra.mxu0 0.0
  %10178 = vmatprep.subr.mxu0 0.0
  %10179 = vmatpush1.msra.mxu0 0.0
  %10180 = vmatprep.subr.mxu0 0.0
  %10181 = vmatpush1.msra.mxu0 0.0
  %10182 = vmatprep.subr.mxu0 0.0
  %10183 = vmatpush1.msra.mxu0 0.0
  %10184 = vmatprep.subr.mxu0 0.0
  %10185 = vmatpush1.msra.mxu0 0.0
  %10186 = vmatprep.subr.mxu0 0.0
  %10187 = vmatpush1.msra.mxu0 0.0
  %10188 = vmatprep.subr.mxu0 0.0
  %10189 = vmatpush1.msra.mxu0 %v10107
  %10190 = vmatprep.subr.mxu0 0.0
  %10191 = vmatpush1.msra.mxu0 %v10102
  %10192 = vmatprep.subr.mxu0 0.0
  %10193 = vmatpush1.msra.mxu0 %v10097
  %10194 = vmatprep.subr.mxu0 0.0
  %10195 = vmatpush1.msra.mxu0 %v10092
  %10196 = vmatprep.subr.mxu0 0.0
  %10197 = vmatpush1.msra.mxu0 %v10087
  %10198 = vmatprep.subr.mxu0 0.0
  %10199 = vmatpush1.msra.mxu0 %v10082
  %10200 = vmatprep.subr.mxu0 0.0
  %10201 = vmatpush1.msra.mxu0 %v10077
  %10202 = vmatprep.subr.mxu0 0.0
  %10203 = vmatpush1.msra.mxu0 %v10072
  %10204 = vmatprep.subr.mxu0 0.0
  %10205 = vmatpush1.msra.mxu0 %v10067
  %10206 = vmatprep.subr.mxu0 0.0
  %10207 = vmatpush2.msra.mxu0 0.0
  %10208 = vmatprep.subr.mxu0 0.0
  %10209 = vmatpush2.msra.mxu0 0.0
  %10210 = vmatprep.subr.mxu0 0.0
  %10211 = vmatpush2.msra.mxu0 0.0
  %10212 = vmatprep.subr.mxu0 0.0
  %10213 = vmatpush2.msra.mxu0 0.0
  %10214 = vmatprep.subr.mxu0 0.0
  %10215 = vmatpush2.msra.mxu0 0.0
  %10216 = vmatprep.subr.mxu0 0.0
  %10217 = vmatpush2.msra.mxu0 0.0
  %10218 = vmatprep.subr.mxu0 0.0
  %10219 = vmatpush2.msra.mxu0 0.0
  %10220 = vmatprep.subr.mxu0 0.0
  %10221 = vmatpush2.msra.mxu0 0.0
  %10222 = vmatprep.subr.mxu0 0.0
  %10223 = vmatpush2.msra.mxu0 0.0
  %10224 = vmatprep.subr.mxu0 0.0
  %10225 = vmatpush2.msra.mxu0 0.0
  %10226 = vmatprep.subr.mxu0 0.0
  %10227 = vmatpush2.msra.mxu0 0.0
  %10228 = vmatprep.subr.mxu0 0.0
  %10229 = vmatpush2.msra.mxu0 0.0
  %10230 = vmatprep.subr.mxu0 0.0
  %10231 = vmatpush2.msra.mxu0 0.0
  %10232 = vmatprep.subr.mxu0 0.0
  %10233 = vmatpush2.msra.mxu0 0.0
  %10234 = vmatprep.subr.mxu0 0.0
  %10235 = vmatpush2.msra.mxu0 0.0
  %10236 = vmatprep.subr.mxu0 0.0
  %10237 = vmatpush2.msra.mxu0 0.0
  %10238 = vmatprep.mubr.f32.mxu0 0.0
  %10239 = vmatmul.mubr.f32.gmra.mxu0 %v10127
  %v10240 = vpop.f32.mrf.mxu0
  %v10241 = vadd.f32 0.0, %v10240
  %v10242 = vpop.f32.mrf.mxu0
  %10243 = vmatprep.mubr.f32.mxu0 0.0
  %10244 = vmatmul.mubr.f32.gmra.mxu0 %v10130
  %v10245 = vpop.f32.mrf.mxu0
  %v10246 = vadd.f32 0.0, %v10245
  %v10247 = vpop.f32.mrf.mxu0
  %10248 = vmatprep.mubr.f32.mxu0 0.0
  %10249 = vmatmul.mubr.f32.gmra.mxu0 %v10133
  %v10250 = vpop.f32.mrf.mxu0
  %v10251 = vadd.f32 0.0, %v10250
  %v10252 = vpop.f32.mrf.mxu0
  %10253 = vmatprep.mubr.f32.mxu0 0.0
  %10254 = vmatmul.mubr.f32.gmra.mxu0 %v10136
  %v10255 = vpop.f32.mrf.mxu0
  %v10256 = vadd.f32 0.0, %v10255
  %v10257 = vpop.f32.mrf.mxu0
  %10258 = vmatprep.mubr.f32.mxu0 0.0
  %10259 = vmatmul.mubr.f32.gmra.mxu0 %v10139
  %v10260 = vpop.f32.mrf.mxu0
  %v10261 = vadd.f32 0.0, %v10260
  %v10262 = vpop.f32.mrf.mxu0
  %10263 = vmatprep.mubr.f32.mxu0 0.0
  %10264 = vmatmul.mubr.f32.gmra.mxu0 %v10142
  %v10265 = vpop.f32.mrf.mxu0
  %v10266 = vadd.f32 0.0, %v10265
  %v10267 = vpop.f32.mrf.mxu0
  %10268 = vmatprep.mubr.f32.mxu0 0.0
  %10269 = vmatmul.mubr.f32.gmra.mxu0 %v10145
  %v10270 = vpop.f32.mrf.mxu0
  %v10271 = vadd.f32 0.0, %v10270
  %v10272 = vpop.f32.mrf.mxu0
  %10273 = vmatprep.mubr.f32.mxu0 0.0
  %10274 = vmatmul.mubr.f32.gmra.mxu0 %v10148
  %v10275 = vpop.f32.mrf.mxu0
  %v10276 = vadd.f32 0.0, %v10275
  %v10277 = vpop.f32.mrf.mxu0
  %10278 = vmatprep.mubr.f32.mxu0 0.0
  %10279 = vmatmul.mubr.f32.gmra.mxu0 %v10151
  %v10280 = vpop.f32.mrf.mxu0
  %v10281 = vadd.f32 0.0, %v10280
  %v10282 = vpop.f32.mrf.mxu0
  %10283 = vmatprep.mubr.f32.mxu0 0.0
  %10284 = vmatmul.mubr.f32.gmra.mxu0 %v10154
  %v10285 = vpop.f32.mrf.mxu0
  %v10286 = vadd.f32 0.0, %v10285
  %v10287 = vpop.f32.mrf.mxu0
  %10288 = vmatprep.mubr.f32.mxu0 0.0
  %10289 = vmatmul.mubr.f32.gmra.mxu0 %v10157
  %v10290 = vpop.f32.mrf.mxu0
  %v10291 = vadd.f32 0.0, %v10290
  %v10292 = vpop.f32.mrf.mxu0
  %10293 = vmatprep.mubr.f32.mxu0 0.0
  %10294 = vmatmul.mubr.f32.gmra.mxu0 %v10160
  %v10295 = vpop.f32.mrf.mxu0
  %v10296 = vadd.f32 0.0, %v10295
  %v10297 = vpop.f32.mrf.mxu0
  %10298 = vmatprep.mubr.f32.mxu0 0.0
  %10299 = vmatmul.mubr.f32.gmra.mxu0 %v10163
  %v10300 = vpop.f32.mrf.mxu0
  %v10301 = vadd.f32 0.0, %v10300
  %v10302 = vpop.f32.mrf.mxu0
  %10303 = vmatprep.mubr.f32.mxu0 0.0
  %10304 = vmatmul.mubr.f32.gmra.mxu0 %v10166
  %v10305 = vpop.f32.mrf.mxu0
  %v10306 = vadd.f32 0.0, %v10305
  %v10307 = vpop.f32.mrf.mxu0
  %10308 = vmatprep.mubr.f32.mxu0 0.0
  %10309 = vmatmul.mubr.f32.gmra.mxu0 %v10169
  %v10310 = vpop.f32.mrf.mxu0
  %v10311 = vadd.f32 0.0, %v10310
  %v10312 = vpop.f32.mrf.mxu0
  %10313 = vmatprep.mubr.f32.mxu0 0.0
  %10314 = vmatmul.mubr.f32.gmra.mxu0 %v10172
  %v10315 = vpop.f32.mrf.mxu0
  %v10316 = vadd.f32 0.0, %v10315
  %v10317 = vpop.f32.mrf.mxu0
  %10318 = vdwg.mxu0
  %v10319 = vadd.f32 %v9979, %v10241
  %v10320 = vadd.f32 %v9980, %v10246
  %v10321 = vadd.f32 %v9981, %v10251
  %v10322 = vadd.f32 %v9982, %v10256
  %v10323 = vadd.f32 %v9983, %v10261
  %v10324 = vadd.f32 %v9984, %v10266
  %v10325 = vadd.f32 %v9985, %v10271
  %v10326 = vadd.f32 %v9986, %v10276
  %v10327 = vadd.f32 %v9987, %v10281
  %v10328 = vadd.f32 %v9988, %v10286
  %v10329 = vadd.f32 %v9989, %v10291
  %v10330 = vadd.f32 %v9990, %v10296
  %v10331 = vadd.f32 %v9991, %v10301
  %v10332 = vadd.f32 %v9992, %v10306
  %v10333 = vadd.f32 %v9993, %v10311
  %v10334 = vadd.f32 %v9994, %v10316
  %v10335 = vld [vmem:[%s4022] sm:$0xff]
  %v10336 = vld [vmem:[%s4022 + $0x8] sm:$0xf]
  %v10338 = vsel %vm77, %v10336, 0
  %10340 = vmatprep.subr.mxu0 0.0
  %10341 = vmatpush1.msra.mxu0 0.0
  %10342 = vmatprep.subr.mxu0 0.0
  %10343 = vmatpush1.msra.mxu0 0.0
  %10344 = vmatprep.subr.mxu0 0.0
  %10345 = vmatpush1.msra.mxu0 0.0
  %10346 = vmatprep.subr.mxu0 0.0
  %10347 = vmatpush1.msra.mxu0 0.0
  %10348 = vmatprep.subr.mxu0 0.0
  %10349 = vmatpush1.msra.mxu0 0.0
  %10350 = vmatprep.subr.mxu0 0.0
  %10351 = vmatpush1.msra.mxu0 0.0
  %10352 = vmatprep.subr.mxu0 0.0
  %10353 = vmatpush1.msra.mxu0 0.0
  %10354 = vmatprep.subr.mxu0 0.0
  %10355 = vmatpush1.msra.mxu0 0.0
  %10356 = vmatprep.subr.mxu0 0.0
  %10357 = vmatpush1.msra.mxu0 0.0
  %10358 = vmatprep.subr.mxu0 0.0
  %10359 = vmatpush1.msra.mxu0 0.0
  %10360 = vmatprep.subr.mxu0 0.0
  %10361 = vmatpush1.msra.mxu0 0.0
  %10362 = vmatprep.subr.mxu0 0.0
  %10363 = vmatpush1.msra.mxu0 0.0
  %10364 = vmatprep.subr.mxu0 0.0
  %10365 = vmatpush1.msra.mxu0 0.0
  %10366 = vmatprep.subr.mxu0 0.0
  %10367 = vmatpush1.msra.mxu0 0.0
  %10368 = vmatprep.subr.mxu0 0.0
  %10369 = vmatpush1.msra.mxu0 %v10338
  %10370 = vmatprep.subr.mxu0 0.0
  %10371 = vmatpush1.msra.mxu0 %v10335
  %10372 = vmatprep.subr.mxu0 0.0
  %10373 = vmatpush2.msra.mxu0 0.0
  %10374 = vmatprep.subr.mxu0 0.0
  %10375 = vmatpush2.msra.mxu0 0.0
  %10376 = vmatprep.subr.mxu0 0.0
  %10377 = vmatpush2.msra.mxu0 0.0
  %10378 = vmatprep.subr.mxu0 0.0
  %10379 = vmatpush2.msra.mxu0 0.0
  %10380 = vmatprep.subr.mxu0 0.0
  %10381 = vmatpush2.msra.mxu0 0.0
  %10382 = vmatprep.subr.mxu0 0.0
  %10383 = vmatpush2.msra.mxu0 0.0
  %10384 = vmatprep.subr.mxu0 0.0
  %10385 = vmatpush2.msra.mxu0 0.0
  %10386 = vmatprep.subr.mxu0 0.0
  %10387 = vmatpush2.msra.mxu0 0.0
  %10388 = vmatprep.subr.mxu0 0.0
  %10389 = vmatpush2.msra.mxu0 0.0
  %10390 = vmatprep.subr.mxu0 0.0
  %10391 = vmatpush2.msra.mxu0 0.0
  %10392 = vmatprep.subr.mxu0 0.0
  %10393 = vmatpush2.msra.mxu0 0.0
  %10394 = vmatprep.subr.mxu0 0.0
  %10395 = vmatpush2.msra.mxu0 0.0
  %10396 = vmatprep.subr.mxu0 0.0
  %10397 = vmatpush2.msra.mxu0 0.0
  %10398 = vmatprep.subr.mxu0 0.0
  %10399 = vmatpush2.msra.mxu0 0.0
  %10400 = vmatprep.subr.mxu0 0.0
  %10401 = vmatpush2.msra.mxu0 0.0
  %10402 = vmatprep.subr.mxu0 0.0
  %10403 = vmatpush2.msra.mxu0 0.0
  %10404 = vmatprep.mubr.f32.mxu0 0.0
  %10405 = vmatmul.mubr.f32.gmra.mxu0 %v8983
  %v10406 = vpop.f32.mrf.mxu0
  %v10407 = vadd.f32 0.0, %v10406
  %v10408 = vpop.f32.mrf.mxu0
  %10409 = vmatprep.mubr.f32.mxu0 0.0
  %10410 = vmatmul.mubr.f32.gmra.mxu0 %v8986
  %v10411 = vpop.f32.mrf.mxu0
  %v10412 = vadd.f32 0.0, %v10411
  %v10413 = vpop.f32.mrf.mxu0
  %10414 = vmatprep.mubr.f32.mxu0 0.0
  %10415 = vmatmul.mubr.f32.gmra.mxu0 %v8989
  %v10416 = vpop.f32.mrf.mxu0
  %v10417 = vadd.f32 0.0, %v10416
  %v10418 = vpop.f32.mrf.mxu0
  %10419 = vmatprep.mubr.f32.mxu0 0.0
  %10420 = vmatmul.mubr.f32.gmra.mxu0 %v8992
  %v10421 = vpop.f32.mrf.mxu0
  %v10422 = vadd.f32 0.0, %v10421
  %v10423 = vpop.f32.mrf.mxu0
  %10424 = vmatprep.mubr.f32.mxu0 0.0
  %10425 = vmatmul.mubr.f32.gmra.mxu0 %v8995
  %v10426 = vpop.f32.mrf.mxu0
  %v10427 = vadd.f32 0.0, %v10426
  %v10428 = vpop.f32.mrf.mxu0
  %10429 = vmatprep.mubr.f32.mxu0 0.0
  %10430 = vmatmul.mubr.f32.gmra.mxu0 %v8998
  %v10431 = vpop.f32.mrf.mxu0
  %v10432 = vadd.f32 0.0, %v10431
  %v10433 = vpop.f32.mrf.mxu0
  %10434 = vmatprep.mubr.f32.mxu0 0.0
  %10435 = vmatmul.mubr.f32.gmra.mxu0 %v9001
  %v10436 = vpop.f32.mrf.mxu0
  %v10437 = vadd.f32 0.0, %v10436
  %v10438 = vpop.f32.mrf.mxu0
  %10439 = vmatprep.mubr.f32.mxu0 0.0
  %10440 = vmatmul.mubr.f32.gmra.mxu0 %v9004
  %v10441 = vpop.f32.mrf.mxu0
  %v10442 = vadd.f32 0.0, %v10441
  %v10443 = vpop.f32.mrf.mxu0
  %10444 = vmatprep.mubr.f32.mxu0 0.0
  %10445 = vmatmul.mubr.f32.gmra.mxu0 %v9007
  %v10446 = vpop.f32.mrf.mxu0
  %v10447 = vadd.f32 0.0, %v10446
  %v10448 = vpop.f32.mrf.mxu0
  %10449 = vdwg.mxu0
  %v10450 = vld [vmem:[%s4138] sm:$0xff]
  %v10451 = vld [vmem:[%s4138 + $0x8] sm:$0xff]
  %v10452 = vld [vmem:[%s4138 + $0x10] sm:$0xff]
  %v10453 = vld [vmem:[%s4138 + $0x18] sm:$0xff]
  %v10454 = vld [vmem:[%s4138 + $0x20] sm:$0xff]
  %v10455 = vld [vmem:[%s4138 + $0x28] sm:$0xff]
  %v10456 = vld [vmem:[%s4138 + $0x30] sm:$0xff]
  %v10457 = vld [vmem:[%s4138 + $0x38] sm:$0xff]
  %v10458 = vld [vmem:[%s4138 + $0x40] sm:$0xff]
  %v10459 = vld [vmem:[%s4138 + $0x48] sm:$0xff]
  %v10460 = vld [vmem:[%s4138 + $0x50] sm:$0xff]
  %v10461 = vld [vmem:[%s4138 + $0x58] sm:$0xff]
  %v10462 = vld [vmem:[%s4138 + $0x60] sm:$0xff]
  %v10463 = vld [vmem:[%s4138 + $0x68] sm:$0xff]
  %v10464 = vld [vmem:[%s4138 + $0x70] sm:$0xff]
  %v10465 = vld [vmem:[%s4138 + $0x78] sm:$0xff]
  %v10467 = vsel %vm2951, %v10450, 0
  %v10470 = vsel %vm2951, %v10451, 0
  %v10473 = vsel %vm2951, %v10452, 0
  %v10476 = vsel %vm2951, %v10453, 0
  %v10479 = vsel %vm2951, %v10454, 0
  %v10482 = vsel %vm2951, %v10455, 0
  %v10485 = vsel %vm2951, %v10456, 0
  %v10488 = vsel %vm2951, %v10457, 0
  %v10491 = vsel %vm2951, %v10458, 0
  %v10494 = vsel %vm2951, %v10459, 0
  %v10497 = vsel %vm2951, %v10460, 0
  %v10500 = vsel %vm2951, %v10461, 0
  %v10503 = vsel %vm2951, %v10462, 0
  %v10506 = vsel %vm2951, %v10463, 0
  %v10509 = vsel %vm2951, %v10464, 0
  %v10512 = vsel %vm2951, %v10465, 0
  %10514 = vmatprep.subr.mxu0 0.0
  %10515 = vmatpush1.msra.mxu0 0.0
  %10516 = vmatprep.subr.mxu0 0.0
  %10517 = vmatpush1.msra.mxu0 0.0
  %10518 = vmatprep.subr.mxu0 0.0
  %10519 = vmatpush1.msra.mxu0 0.0
  %10520 = vmatprep.subr.mxu0 0.0
  %10521 = vmatpush1.msra.mxu0 0.0
  %10522 = vmatprep.subr.mxu0 0.0
  %10523 = vmatpush1.msra.mxu0 0.0
  %10524 = vmatprep.subr.mxu0 0.0
  %10525 = vmatpush1.msra.mxu0 0.0
  %10526 = vmatprep.subr.mxu0 0.0
  %10527 = vmatpush1.msra.mxu0 0.0
  %10528 = vmatprep.subr.mxu0 0.0
  %10529 = vmatpush1.msra.mxu0 %v10447
  %10530 = vmatprep.subr.mxu0 0.0
  %10531 = vmatpush1.msra.mxu0 %v10442
  %10532 = vmatprep.subr.mxu0 0.0
  %10533 = vmatpush1.msra.mxu0 %v10437
  %10534 = vmatprep.subr.mxu0 0.0
  %10535 = vmatpush1.msra.mxu0 %v10432
  %10536 = vmatprep.subr.mxu0 0.0
  %10537 = vmatpush1.msra.mxu0 %v10427
  %10538 = vmatprep.subr.mxu0 0.0
  %10539 = vmatpush1.msra.mxu0 %v10422
  %10540 = vmatprep.subr.mxu0 0.0
  %10541 = vmatpush1.msra.mxu0 %v10417
  %10542 = vmatprep.subr.mxu0 0.0
  %10543 = vmatpush1.msra.mxu0 %v10412
  %10544 = vmatprep.subr.mxu0 0.0
  %10545 = vmatpush1.msra.mxu0 %v10407
  %10546 = vmatprep.subr.mxu0 0.0
  %10547 = vmatpush2.msra.mxu0 0.0
  %10548 = vmatprep.subr.mxu0 0.0
  %10549 = vmatpush2.msra.mxu0 0.0
  %10550 = vmatprep.subr.mxu0 0.0
  %10551 = vmatpush2.msra.mxu0 0.0
  %10552 = vmatprep.subr.mxu0 0.0
  %10553 = vmatpush2.msra.mxu0 0.0
  %10554 = vmatprep.subr.mxu0 0.0
  %10555 = vmatpush2.msra.mxu0 0.0
  %10556 = vmatprep.subr.mxu0 0.0
  %10557 = vmatpush2.msra.mxu0 0.0
  %10558 = vmatprep.subr.mxu0 0.0
  %10559 = vmatpush2.msra.mxu0 0.0
  %10560 = vmatprep.subr.mxu0 0.0
  %10561 = vmatpush2.msra.mxu0 0.0
  %10562 = vmatprep.subr.mxu0 0.0
  %10563 = vmatpush2.msra.mxu0 0.0
  %10564 = vmatprep.subr.mxu0 0.0
  %10565 = vmatpush2.msra.mxu0 0.0
  %10566 = vmatprep.subr.mxu0 0.0
  %10567 = vmatpush2.msra.mxu0 0.0
  %10568 = vmatprep.subr.mxu0 0.0
  %10569 = vmatpush2.msra.mxu0 0.0
  %10570 = vmatprep.subr.mxu0 0.0
  %10571 = vmatpush2.msra.mxu0 0.0
  %10572 = vmatprep.subr.mxu0 0.0
  %10573 = vmatpush2.msra.mxu0 0.0
  %10574 = vmatprep.subr.mxu0 0.0
  %10575 = vmatpush2.msra.mxu0 0.0
  %10576 = vmatprep.subr.mxu0 0.0
  %10577 = vmatpush2.msra.mxu0 0.0
  %10578 = vmatprep.mubr.f32.mxu0 0.0
  %10579 = vmatmul.mubr.f32.gmra.mxu0 %v10467
  %v10580 = vpop.f32.mrf.mxu0
  %v10581 = vadd.f32 0.0, %v10580
  %v10582 = vpop.f32.mrf.mxu0
  %10583 = vmatprep.mubr.f32.mxu0 0.0
  %10584 = vmatmul.mubr.f32.gmra.mxu0 %v10470
  %v10585 = vpop.f32.mrf.mxu0
  %v10586 = vadd.f32 0.0, %v10585
  %v10587 = vpop.f32.mrf.mxu0
  %10588 = vmatprep.mubr.f32.mxu0 0.0
  %10589 = vmatmul.mubr.f32.gmra.mxu0 %v10473
  %v10590 = vpop.f32.mrf.mxu0
  %v10591 = vadd.f32 0.0, %v10590
  %v10592 = vpop.f32.mrf.mxu0
  %10593 = vmatprep.mubr.f32.mxu0 0.0
  %10594 = vmatmul.mubr.f32.gmra.mxu0 %v10476
  %v10595 = vpop.f32.mrf.mxu0
  %v10596 = vadd.f32 0.0, %v10595
  %v10597 = vpop.f32.mrf.mxu0
  %10598 = vmatprep.mubr.f32.mxu0 0.0
  %10599 = vmatmul.mubr.f32.gmra.mxu0 %v10479
  %v10600 = vpop.f32.mrf.mxu0
  %v10601 = vadd.f32 0.0, %v10600
  %v10602 = vpop.f32.mrf.mxu0
  %10603 = vmatprep.mubr.f32.mxu0 0.0
  %10604 = vmatmul.mubr.f32.gmra.mxu0 %v10482
  %v10605 = vpop.f32.mrf.mxu0
  %v10606 = vadd.f32 0.0, %v10605
  %v10607 = vpop.f32.mrf.mxu0
  %10608 = vmatprep.mubr.f32.mxu0 0.0
  %10609 = vmatmul.mubr.f32.gmra.mxu0 %v10485
  %v10610 = vpop.f32.mrf.mxu0
  %v10611 = vadd.f32 0.0, %v10610
  %v10612 = vpop.f32.mrf.mxu0
  %10613 = vmatprep.mubr.f32.mxu0 0.0
  %10614 = vmatmul.mubr.f32.gmra.mxu0 %v10488
  %v10615 = vpop.f32.mrf.mxu0
  %v10616 = vadd.f32 0.0, %v10615
  %v10617 = vpop.f32.mrf.mxu0
  %10618 = vmatprep.mubr.f32.mxu0 0.0
  %10619 = vmatmul.mubr.f32.gmra.mxu0 %v10491
  %v10620 = vpop.f32.mrf.mxu0
  %v10621 = vadd.f32 0.0, %v10620
  %v10622 = vpop.f32.mrf.mxu0
  %10623 = vmatprep.mubr.f32.mxu0 0.0
  %10624 = vmatmul.mubr.f32.gmra.mxu0 %v10494
  %v10625 = vpop.f32.mrf.mxu0
  %v10626 = vadd.f32 0.0, %v10625
  %v10627 = vpop.f32.mrf.mxu0
  %10628 = vmatprep.mubr.f32.mxu0 0.0
  %10629 = vmatmul.mubr.f32.gmra.mxu0 %v10497
  %v10630 = vpop.f32.mrf.mxu0
  %v10631 = vadd.f32 0.0, %v10630
  %v10632 = vpop.f32.mrf.mxu0
  %10633 = vmatprep.mubr.f32.mxu0 0.0
  %10634 = vmatmul.mubr.f32.gmra.mxu0 %v10500
  %v10635 = vpop.f32.mrf.mxu0
  %v10636 = vadd.f32 0.0, %v10635
  %v10637 = vpop.f32.mrf.mxu0
  %10638 = vmatprep.mubr.f32.mxu0 0.0
  %10639 = vmatmul.mubr.f32.gmra.mxu0 %v10503
  %v10640 = vpop.f32.mrf.mxu0
  %v10641 = vadd.f32 0.0, %v10640
  %v10642 = vpop.f32.mrf.mxu0
  %10643 = vmatprep.mubr.f32.mxu0 0.0
  %10644 = vmatmul.mubr.f32.gmra.mxu0 %v10506
  %v10645 = vpop.f32.mrf.mxu0
  %v10646 = vadd.f32 0.0, %v10645
  %v10647 = vpop.f32.mrf.mxu0
  %10648 = vmatprep.mubr.f32.mxu0 0.0
  %10649 = vmatmul.mubr.f32.gmra.mxu0 %v10509
  %v10650 = vpop.f32.mrf.mxu0
  %v10651 = vadd.f32 0.0, %v10650
  %v10652 = vpop.f32.mrf.mxu0
  %10653 = vmatprep.mubr.f32.mxu0 0.0
  %10654 = vmatmul.mubr.f32.gmra.mxu0 %v10512
  %v10655 = vpop.f32.mrf.mxu0
  %v10656 = vadd.f32 0.0, %v10655
  %v10657 = vpop.f32.mrf.mxu0
  %10658 = vdwg.mxu0
  %v10659 = vadd.f32 %v10319, %v10581
  %v10660 = vadd.f32 %v10320, %v10586
  %v10661 = vadd.f32 %v10321, %v10591
  %v10662 = vadd.f32 %v10322, %v10596
  %v10663 = vadd.f32 %v10323, %v10601
  %v10664 = vadd.f32 %v10324, %v10606
  %v10665 = vadd.f32 %v10325, %v10611
  %v10666 = vadd.f32 %v10326, %v10616
  %v10667 = vadd.f32 %v10327, %v10621
  %v10668 = vadd.f32 %v10328, %v10626
  %v10669 = vadd.f32 %v10329, %v10631
  %v10670 = vadd.f32 %v10330, %v10636
  %v10671 = vadd.f32 %v10331, %v10641
  %v10672 = vadd.f32 %v10332, %v10646
  %v10673 = vadd.f32 %v10333, %v10651
  %v10674 = vadd.f32 %v10334, %v10656
  %v10675 = vld [vmem:[%s8] sm:$0xff]
  %v10676 = vld [vmem:[%s8 + $0x8] sm:$0xff]
  %v10677 = vld [vmem:[%s8 + $0x10] sm:$0xff]
  %v10678 = vld [vmem:[%s8 + $0x18] sm:$0xff]
  %v10679 = vld [vmem:[%s8 + $0x20] sm:$0xff]
  %v10680 = vld [vmem:[%s8 + $0x28] sm:$0xff]
  %v10681 = vld [vmem:[%s8 + $0x30] sm:$0xff]
  %v10682 = vld [vmem:[%s8 + $0x38] sm:$0xff]
  %10683 = vmatprep.subr.mxu0 0.0
  %10684 = vmatpush1.msra.mxu0 %v10674
  %10685 = vmatprep.subr.mxu0 0.0
  %10686 = vmatpush1.msra.mxu0 %v10673
  %10687 = vmatprep.subr.mxu0 0.0
  %10688 = vmatpush1.msra.mxu0 %v10672
  %10689 = vmatprep.subr.mxu0 0.0
  %10690 = vmatpush1.msra.mxu0 %v10671
  %10691 = vmatprep.subr.mxu0 0.0
  %10692 = vmatpush1.msra.mxu0 %v10670
  %10693 = vmatprep.subr.mxu0 0.0
  %10694 = vmatpush1.msra.mxu0 %v10669
  %10695 = vmatprep.subr.mxu0 0.0
  %10696 = vmatpush1.msra.mxu0 %v10668
  %10697 = vmatprep.subr.mxu0 0.0
  %10698 = vmatpush1.msra.mxu0 %v10667
  %10699 = vmatprep.subr.mxu0 0.0
  %10700 = vmatpush1.msra.mxu0 %v10666
  %10701 = vmatprep.subr.mxu0 0.0
  %10702 = vmatpush1.msra.mxu0 %v10665
  %10703 = vmatprep.subr.mxu0 0.0
  %10704 = vmatpush1.msra.mxu0 %v10664
  %10705 = vmatprep.subr.mxu0 0.0
  %10706 = vmatpush1.msra.mxu0 %v10663
  %10707 = vmatprep.subr.mxu0 0.0
  %10708 = vmatpush1.msra.mxu0 %v10662
  %10709 = vmatprep.subr.mxu0 0.0
  %10710 = vmatpush1.msra.mxu0 %v10661
  %10711 = vmatprep.subr.mxu0 0.0
  %10712 = vmatpush1.msra.mxu0 %v10660
  %10713 = vmatprep.subr.mxu0 0.0
  %10714 = vmatpush1.msra.mxu0 %v10659
  %10715 = vmatprep.subr.mxu0 0.0
  %10716 = vmatpush2.msra.mxu0 0.0
  %10717 = vmatprep.subr.mxu0 0.0
  %10718 = vmatpush2.msra.mxu0 0.0
  %10719 = vmatprep.subr.mxu0 0.0
  %10720 = vmatpush2.msra.mxu0 0.0
  %10721 = vmatprep.subr.mxu0 0.0
  %10722 = vmatpush2.msra.mxu0 0.0
  %10723 = vmatprep.subr.mxu0 0.0
  %10724 = vmatpush2.msra.mxu0 0.0
  %10725 = vmatprep.subr.mxu0 0.0
  %10726 = vmatpush2.msra.mxu0 0.0
  %10727 = vmatprep.subr.mxu0 0.0
  %10728 = vmatpush2.msra.mxu0 0.0
  %10729 = vmatprep.subr.mxu0 0.0
  %10730 = vmatpush2.msra.mxu0 0.0
  %10731 = vmatprep.subr.mxu0 0.0
  %10732 = vmatpush2.msra.mxu0 0.0
  %10733 = vmatprep.subr.mxu0 0.0
  %10734 = vmatpush2.msra.mxu0 0.0
  %10735 = vmatprep.subr.mxu0 0.0
  %10736 = vmatpush2.msra.mxu0 0.0
  %10737 = vmatprep.subr.mxu0 0.0
  %10738 = vmatpush2.msra.mxu0 0.0
  %10739 = vmatprep.subr.mxu0 0.0
  %10740 = vmatpush2.msra.mxu0 0.0
  %10741 = vmatprep.subr.mxu0 0.0
  %10742 = vmatpush2.msra.mxu0 0.0
  %10743 = vmatprep.subr.mxu0 0.0
  %10744 = vmatpush2.msra.mxu0 0.0
  %10745 = vmatprep.subr.mxu0 0.0
  %10746 = vmatpush2.msra.mxu0 0.0
  %10747 = vmatprep.mubr.f32.mxu0 0.0
  %10748 = vmatmul.mubr.f32.gmra.mxu0 %v10675
  %v10749 = vpop.f32.mrf.mxu0
  %v10750 = vadd.f32 0.0, %v10749
  %v10751 = vpop.f32.mrf.mxu0
  %10752 = vmatprep.mubr.f32.mxu0 0.0
  %10753 = vmatmul.mubr.f32.gmra.mxu0 %v10676
  %v10754 = vpop.f32.mrf.mxu0
  %v10755 = vadd.f32 0.0, %v10754
  %v10756 = vpop.f32.mrf.mxu0
  %10757 = vmatprep.mubr.f32.mxu0 0.0
  %10758 = vmatmul.mubr.f32.gmra.mxu0 %v10677
  %v10759 = vpop.f32.mrf.mxu0
  %v10760 = vadd.f32 0.0, %v10759
  %v10761 = vpop.f32.mrf.mxu0
  %10762 = vmatprep.mubr.f32.mxu0 0.0
  %10763 = vmatmul.mubr.f32.gmra.mxu0 %v10678
  %v10764 = vpop.f32.mrf.mxu0
  %v10765 = vadd.f32 0.0, %v10764
  %v10766 = vpop.f32.mrf.mxu0
  %10767 = vmatprep.mubr.f32.mxu0 0.0
  %10768 = vmatmul.mubr.f32.gmra.mxu0 %v10679
  %v10769 = vpop.f32.mrf.mxu0
  %v10770 = vadd.f32 0.0, %v10769
  %v10771 = vpop.f32.mrf.mxu0
  %10772 = vmatprep.mubr.f32.mxu0 0.0
  %10773 = vmatmul.mubr.f32.gmra.mxu0 %v10680
  %v10774 = vpop.f32.mrf.mxu0
  %v10775 = vadd.f32 0.0, %v10774
  %v10776 = vpop.f32.mrf.mxu0
  %10777 = vmatprep.mubr.f32.mxu0 0.0
  %10778 = vmatmul.mubr.f32.gmra.mxu0 %v10681
  %v10779 = vpop.f32.mrf.mxu0
  %v10780 = vadd.f32 0.0, %v10779
  %v10781 = vpop.f32.mrf.mxu0
  %10782 = vmatprep.mubr.f32.mxu0 0.0
  %10783 = vmatmul.mubr.f32.gmra.mxu0 %v10682
  %v10784 = vpop.f32.mrf.mxu0
  %v10785 = vadd.f32 0.0, %v10784
  %v10786 = vpop.f32.mrf.mxu0
  %10787 = vdwg.mxu0
  %v10788 = vld [vmem:[%s4477] sm:$0xff]
  %v10789 = vld [vmem:[%s4477 + $0x8] sm:$0xff]
  %v10790 = vld [vmem:[%s4477 + $0x10] sm:$0xff]
  %v10791 = vld [vmem:[%s4477 + $0x18] sm:$0xff]
  %v10792 = vld [vmem:[%s4477 + $0x20] sm:$0xff]
  %v10793 = vld [vmem:[%s4477 + $0x28] sm:$0xff]
  %v10794 = vld [vmem:[%s4477 + $0x30] sm:$0xff]
  %v10795 = vld [vmem:[%s4477 + $0x38] sm:$0xff]
  %10796 = vmatprep.subr.mxu0 0.0
  %10797 = vmatpush1.msra.mxu0 %v10674
  %10798 = vmatprep.subr.mxu0 0.0
  %10799 = vmatpush1.msra.mxu0 %v10673
  %10800 = vmatprep.subr.mxu0 0.0
  %10801 = vmatpush1.msra.mxu0 %v10672
  %10802 = vmatprep.subr.mxu0 0.0
  %10803 = vmatpush1.msra.mxu0 %v10671
  %10804 = vmatprep.subr.mxu0 0.0
  %10805 = vmatpush1.msra.mxu0 %v10670
  %10806 = vmatprep.subr.mxu0 0.0
  %10807 = vmatpush1.msra.mxu0 %v10669
  %10808 = vmatprep.subr.mxu0 0.0
  %10809 = vmatpush1.msra.mxu0 %v10668
  %10810 = vmatprep.subr.mxu0 0.0
  %10811 = vmatpush1.msra.mxu0 %v10667
  %10812 = vmatprep.subr.mxu0 0.0
  %10813 = vmatpush1.msra.mxu0 %v10666
  %10814 = vmatprep.subr.mxu0 0.0
  %10815 = vmatpush1.msra.mxu0 %v10665
  %10816 = vmatprep.subr.mxu0 0.0
  %10817 = vmatpush1.msra.mxu0 %v10664
  %10818 = vmatprep.subr.mxu0 0.0
  %10819 = vmatpush1.msra.mxu0 %v10663
  %10820 = vmatprep.subr.mxu0 0.0
  %10821 = vmatpush1.msra.mxu0 %v10662
  %10822 = vmatprep.subr.mxu0 0.0
  %10823 = vmatpush1.msra.mxu0 %v10661
  %10824 = vmatprep.subr.mxu0 0.0
  %10825 = vmatpush1.msra.mxu0 %v10660
  %10826 = vmatprep.subr.mxu0 0.0
  %10827 = vmatpush1.msra.mxu0 %v10659
  %10828 = vmatprep.subr.mxu0 0.0
  %10829 = vmatpush2.msra.mxu0 0.0
  %10830 = vmatprep.subr.mxu0 0.0
  %10831 = vmatpush2.msra.mxu0 0.0
  %10832 = vmatprep.subr.mxu0 0.0
  %10833 = vmatpush2.msra.mxu0 0.0
  %10834 = vmatprep.subr.mxu0 0.0
  %10835 = vmatpush2.msra.mxu0 0.0
  %10836 = vmatprep.subr.mxu0 0.0
  %10837 = vmatpush2.msra.mxu0 0.0
  %10838 = vmatprep.subr.mxu0 0.0
  %10839 = vmatpush2.msra.mxu0 0.0
  %10840 = vmatprep.subr.mxu0 0.0
  %10841 = vmatpush2.msra.mxu0 0.0
  %10842 = vmatprep.subr.mxu0 0.0
  %10843 = vmatpush2.msra.mxu0 0.0
  %10844 = vmatprep.subr.mxu0 0.0
  %10845 = vmatpush2.msra.mxu0 0.0
  %10846 = vmatprep.subr.mxu0 0.0
  %10847 = vmatpush2.msra.mxu0 0.0
  %10848 = vmatprep.subr.mxu0 0.0
  %10849 = vmatpush2.msra.mxu0 0.0
  %10850 = vmatprep.subr.mxu0 0.0
  %10851 = vmatpush2.msra.mxu0 0.0
  %10852 = vmatprep.subr.mxu0 0.0
  %10853 = vmatpush2.msra.mxu0 0.0
  %10854 = vmatprep.subr.mxu0 0.0
  %10855 = vmatpush2.msra.mxu0 0.0
  %10856 = vmatprep.subr.mxu0 0.0
  %10857 = vmatpush2.msra.mxu0 0.0
  %10858 = vmatprep.subr.mxu0 0.0
  %10859 = vmatpush2.msra.mxu0 0.0
  %10860 = vmatprep.mubr.f32.mxu0 0.0
  %10861 = vmatmul.mubr.f32.gmra.mxu0 %v10788
  %v10862 = vpop.f32.mrf.mxu0
  %v10863 = vadd.f32 0.0, %v10862
  %v10864 = vpop.f32.mrf.mxu0
  %10865 = vmatprep.mubr.f32.mxu0 0.0
  %10866 = vmatmul.mubr.f32.gmra.mxu0 %v10789
  %v10867 = vpop.f32.mrf.mxu0
  %v10868 = vadd.f32 0.0, %v10867
  %v10869 = vpop.f32.mrf.mxu0
  %10870 = vmatprep.mubr.f32.mxu0 0.0
  %10871 = vmatmul.mubr.f32.gmra.mxu0 %v10790
  %v10872 = vpop.f32.mrf.mxu0
  %v10873 = vadd.f32 0.0, %v10872
  %v10874 = vpop.f32.mrf.mxu0
  %10875 = vmatprep.mubr.f32.mxu0 0.0
  %10876 = vmatmul.mubr.f32.gmra.mxu0 %v10791
  %v10877 = vpop.f32.mrf.mxu0
  %v10878 = vadd.f32 0.0, %v10877
  %v10879 = vpop.f32.mrf.mxu0
  %10880 = vmatprep.mubr.f32.mxu0 0.0
  %10881 = vmatmul.mubr.f32.gmra.mxu0 %v10792
  %v10882 = vpop.f32.mrf.mxu0
  %v10883 = vadd.f32 0.0, %v10882
  %v10884 = vpop.f32.mrf.mxu0
  %10885 = vmatprep.mubr.f32.mxu0 0.0
  %10886 = vmatmul.mubr.f32.gmra.mxu0 %v10793
  %v10887 = vpop.f32.mrf.mxu0
  %v10888 = vadd.f32 0.0, %v10887
  %v10889 = vpop.f32.mrf.mxu0
  %10890 = vmatprep.mubr.f32.mxu0 0.0
  %10891 = vmatmul.mubr.f32.gmra.mxu0 %v10794
  %v10892 = vpop.f32.mrf.mxu0
  %v10893 = vadd.f32 0.0, %v10892
  %v10894 = vpop.f32.mrf.mxu0
  %10895 = vmatprep.mubr.f32.mxu0 0.0
  %10896 = vmatmul.mubr.f32.gmra.mxu0 %v10795
  %v10897 = vpop.f32.mrf.mxu0
  %v10898 = vadd.f32 0.0, %v10897
  %v10899 = vpop.f32.mrf.mxu0
  %10900 = vdwg.mxu0
  %v10901 = vld [vmem:[%s9] sm:$0xff]
  %v10903 = vsel %vm4592, %v10750, 0
  %v10906 = vsel %vm4592, %v10755, 0
  %v10909 = vsel %vm4592, %v10760, 0
  %v10912 = vsel %vm4592, %v10765, 0
  %v10915 = vsel %vm4592, %v10770, 0
  %v10918 = vsel %vm4592, %v10775, 0
  %v10921 = vsel %vm4592, %v10780, 0
  %v10924 = vsel %vm4592, %v10785, 0
  %10926 = vmatprep.subr.mxu0 0.0
  %10927 = vmatpush1.msra.mxu0 0.0
  %10928 = vmatprep.subr.mxu0 0.0
  %10929 = vmatpush1.msra.mxu0 0.0
  %10930 = vmatprep.subr.mxu0 0.0
  %10931 = vmatpush1.msra.mxu0 0.0
  %10932 = vmatprep.subr.mxu0 0.0
  %10933 = vmatpush1.msra.mxu0 0.0
  %10934 = vmatprep.subr.mxu0 0.0
  %10935 = vmatpush1.msra.mxu0 0.0
  %10936 = vmatprep.subr.mxu0 0.0
  %10937 = vmatpush1.msra.mxu0 0.0
  %10938 = vmatprep.subr.mxu0 0.0
  %10939 = vmatpush1.msra.mxu0 0.0
  %10940 = vmatprep.subr.mxu0 0.0
  %10941 = vmatpush1.msra.mxu0 0.0
  %10942 = vmatprep.subr.mxu0 0.0
  %10943 = vmatpush1.msra.mxu0 0.0
  %10944 = vmatprep.subr.mxu0 0.0
  %10945 = vmatpush1.msra.mxu0 0.0
  %10946 = vmatprep.subr.mxu0 0.0
  %10947 = vmatpush1.msra.mxu0 0.0
  %10948 = vmatprep.subr.mxu0 0.0
  %10949 = vmatpush1.msra.mxu0 0.0
  %10950 = vmatprep.subr.mxu0 0.0
  %10951 = vmatpush1.msra.mxu0 0.0
  %10952 = vmatprep.subr.mxu0 0.0
  %10953 = vmatpush1.msra.mxu0 0.0
  %10954 = vmatprep.subr.mxu0 0.0
  %10955 = vmatpush1.msra.mxu0 0.0
  %10956 = vmatprep.subr.mxu0 0.0
  %10957 = vmatpush1.msra.mxu0 %v10901
  %10958 = vmatprep.subr.mxu0 0.0
  %10959 = vmatpush2.msra.mxu0 0.0
  %10960 = vmatprep.subr.mxu0 0.0
  %10961 = vmatpush2.msra.mxu0 0.0
  %10962 = vmatprep.subr.mxu0 0.0
  %10963 = vmatpush2.msra.mxu0 0.0
  %10964 = vmatprep.subr.mxu0 0.0
  %10965 = vmatpush2.msra.mxu0 0.0
  %10966 = vmatprep.subr.mxu0 0.0
  %10967 = vmatpush2.msra.mxu0 0.0
  %10968 = vmatprep.subr.mxu0 0.0
  %10969 = vmatpush2.msra.mxu0 0.0
  %10970 = vmatprep.subr.mxu0 0.0
  %10971 = vmatpush2.msra.mxu0 0.0
  %10972 = vmatprep.subr.mxu0 0.0
  %10973 = vmatpush2.msra.mxu0 0.0
  %10974 = vmatprep.subr.mxu0 0.0
  %10975 = vmatpush2.msra.mxu0 0.0
  %10976 = vmatprep.subr.mxu0 0.0
  %10977 = vmatpush2.msra.mxu0 0.0
  %10978 = vmatprep.subr.mxu0 0.0
  %10979 = vmatpush2.msra.mxu0 0.0
  %10980 = vmatprep.subr.mxu0 0.0
  %10981 = vmatpush2.msra.mxu0 0.0
  %10982 = vmatprep.subr.mxu0 0.0
  %10983 = vmatpush2.msra.mxu0 0.0
  %10984 = vmatprep.subr.mxu0 0.0
  %10985 = vmatpush2.msra.mxu0 0.0
  %10986 = vmatprep.subr.mxu0 0.0
  %10987 = vmatpush2.msra.mxu0 0.0
  %10988 = vmatprep.subr.mxu0 0.0
  %10989 = vmatpush2.msra.mxu0 0.0
  %10990 = vmatprep.mubr.f32.mxu0 0.0
  %10991 = vmatmul.mubr.f32.gmra.mxu0 %v10903
  %v10992 = vpop.f32.mrf.mxu0
  %v10993 = vadd.f32 0.0, %v10992
  %v10994 = vpop.f32.mrf.mxu0
  %10995 = vmatprep.mubr.f32.mxu0 0.0
  %10996 = vmatmul.mubr.f32.gmra.mxu0 %v10906
  %v10997 = vpop.f32.mrf.mxu0
  %v10998 = vadd.f32 0.0, %v10997
  %v10999 = vpop.f32.mrf.mxu0
  %11000 = vmatprep.mubr.f32.mxu0 0.0
  %11001 = vmatmul.mubr.f32.gmra.mxu0 %v10909
  %v11002 = vpop.f32.mrf.mxu0
  %v11003 = vadd.f32 0.0, %v11002
  %v11004 = vpop.f32.mrf.mxu0
  %11005 = vmatprep.mubr.f32.mxu0 0.0
  %11006 = vmatmul.mubr.f32.gmra.mxu0 %v10912
  %v11007 = vpop.f32.mrf.mxu0
  %v11008 = vadd.f32 0.0, %v11007
  %v11009 = vpop.f32.mrf.mxu0
  %11010 = vmatprep.mubr.f32.mxu0 0.0
  %11011 = vmatmul.mubr.f32.gmra.mxu0 %v10915
  %v11012 = vpop.f32.mrf.mxu0
  %v11013 = vadd.f32 0.0, %v11012
  %v11014 = vpop.f32.mrf.mxu0
  %11015 = vmatprep.mubr.f32.mxu0 0.0
  %11016 = vmatmul.mubr.f32.gmra.mxu0 %v10918
  %v11017 = vpop.f32.mrf.mxu0
  %v11018 = vadd.f32 0.0, %v11017
  %v11019 = vpop.f32.mrf.mxu0
  %11020 = vmatprep.mubr.f32.mxu0 0.0
  %11021 = vmatmul.mubr.f32.gmra.mxu0 %v10921
  %v11022 = vpop.f32.mrf.mxu0
  %v11023 = vadd.f32 0.0, %v11022
  %v11024 = vpop.f32.mrf.mxu0
  %11025 = vmatprep.mubr.f32.mxu0 0.0
  %11026 = vmatmul.mubr.f32.gmra.mxu0 %v10924
  %v11027 = vpop.f32.mrf.mxu0
  %v11028 = vadd.f32 0.0, %v11027
  %v11029 = vpop.f32.mrf.mxu0
  %11030 = vdwg.mxu0
  %v11031 = vld [vmem:[%s4722] sm:$0xff]
  %11032 = vmatprep.subr.mxu0 0.0
  %11033 = vmatpush1.msra.mxu0 0.0
  %11034 = vmatprep.subr.mxu0 0.0
  %11035 = vmatpush1.msra.mxu0 0.0
  %11036 = vmatprep.subr.mxu0 0.0
  %11037 = vmatpush1.msra.mxu0 0.0
  %11038 = vmatprep.subr.mxu0 0.0
  %11039 = vmatpush1.msra.mxu0 0.0
  %11040 = vmatprep.subr.mxu0 0.0
  %11041 = vmatpush1.msra.mxu0 0.0
  %11042 = vmatprep.subr.mxu0 0.0
  %11043 = vmatpush1.msra.mxu0 0.0
  %11044 = vmatprep.subr.mxu0 0.0
  %11045 = vmatpush1.msra.mxu0 0.0
  %11046 = vmatprep.subr.mxu0 0.0
  %11047 = vmatpush1.msra.mxu0 0.0
  %11048 = vmatprep.subr.mxu0 0.0
  %11049 = vmatpush1.msra.mxu0 0.0
  %11050 = vmatprep.subr.mxu0 0.0
  %11051 = vmatpush1.msra.mxu0 0.0
  %11052 = vmatprep.subr.mxu0 0.0
  %11053 = vmatpush1.msra.mxu0 0.0
  %11054 = vmatprep.subr.mxu0 0.0
  %11055 = vmatpush1.msra.mxu0 0.0
  %11056 = vmatprep.subr.mxu0 0.0
  %11057 = vmatpush1.msra.mxu0 0.0
  %11058 = vmatprep.subr.mxu0 0.0
  %11059 = vmatpush1.msra.mxu0 0.0
  %11060 = vmatprep.subr.mxu0 0.0
  %11061 = vmatpush1.msra.mxu0 0.0
  %11062 = vmatprep.subr.mxu0 0.0
  %11063 = vmatpush1.msra.mxu0 %v11031
  %11064 = vmatprep.subr.mxu0 0.0
  %11065 = vmatpush2.msra.mxu0 0.0
  %11066 = vmatprep.subr.mxu0 0.0
  %11067 = vmatpush2.msra.mxu0 0.0
  %11068 = vmatprep.subr.mxu0 0.0
  %11069 = vmatpush2.msra.mxu0 0.0
  %11070 = vmatprep.subr.mxu0 0.0
  %11071 = vmatpush2.msra.mxu0 0.0
  %11072 = vmatprep.subr.mxu0 0.0
  %11073 = vmatpush2.msra.mxu0 0.0
  %11074 = vmatprep.subr.mxu0 0.0
  %11075 = vmatpush2.msra.mxu0 0.0
  %11076 = vmatprep.subr.mxu0 0.0
  %11077 = vmatpush2.msra.mxu0 0.0
  %11078 = vmatprep.subr.mxu0 0.0
  %11079 = vmatpush2.msra.mxu0 0.0
  %11080 = vmatprep.subr.mxu0 0.0
  %11081 = vmatpush2.msra.mxu0 0.0
  %11082 = vmatprep.subr.mxu0 0.0
  %11083 = vmatpush2.msra.mxu0 0.0
  %11084 = vmatprep.subr.mxu0 0.0
  %11085 = vmatpush2.msra.mxu0 0.0
  %11086 = vmatprep.subr.mxu0 0.0
  %11087 = vmatpush2.msra.mxu0 0.0
  %11088 = vmatprep.subr.mxu0 0.0
  %11089 = vmatpush2.msra.mxu0 0.0
  %11090 = vmatprep.subr.mxu0 0.0
  %11091 = vmatpush2.msra.mxu0 0.0
  %11092 = vmatprep.subr.mxu0 0.0
  %11093 = vmatpush2.msra.mxu0 0.0
  %11094 = vmatprep.subr.mxu0 0.0
  %11095 = vmatpush2.msra.mxu0 0.0
  %11096 = vmatprep.mubr.f32.mxu0 0.0
  %11097 = vmatmul.mubr.f32.gmra.mxu0 %v10903
  %v11098 = vpop.f32.mrf.mxu0
  %v11099 = vadd.f32 0.0, %v11098
  %v11100 = vpop.f32.mrf.mxu0
  %11101 = vmatprep.mubr.f32.mxu0 0.0
  %11102 = vmatmul.mubr.f32.gmra.mxu0 %v10906
  %v11103 = vpop.f32.mrf.mxu0
  %v11104 = vadd.f32 0.0, %v11103
  %v11105 = vpop.f32.mrf.mxu0
  %11106 = vmatprep.mubr.f32.mxu0 0.0
  %11107 = vmatmul.mubr.f32.gmra.mxu0 %v10909
  %v11108 = vpop.f32.mrf.mxu0
  %v11109 = vadd.f32 0.0, %v11108
  %v11110 = vpop.f32.mrf.mxu0
  %11111 = vmatprep.mubr.f32.mxu0 0.0
  %11112 = vmatmul.mubr.f32.gmra.mxu0 %v10912
  %v11113 = vpop.f32.mrf.mxu0
  %v11114 = vadd.f32 0.0, %v11113
  %v11115 = vpop.f32.mrf.mxu0
  %11116 = vmatprep.mubr.f32.mxu0 0.0
  %11117 = vmatmul.mubr.f32.gmra.mxu0 %v10915
  %v11118 = vpop.f32.mrf.mxu0
  %v11119 = vadd.f32 0.0, %v11118
  %v11120 = vpop.f32.mrf.mxu0
  %11121 = vmatprep.mubr.f32.mxu0 0.0
  %11122 = vmatmul.mubr.f32.gmra.mxu0 %v10918
  %v11123 = vpop.f32.mrf.mxu0
  %v11124 = vadd.f32 0.0, %v11123
  %v11125 = vpop.f32.mrf.mxu0
  %11126 = vmatprep.mubr.f32.mxu0 0.0
  %11127 = vmatmul.mubr.f32.gmra.mxu0 %v10921
  %v11128 = vpop.f32.mrf.mxu0
  %v11129 = vadd.f32 0.0, %v11128
  %v11130 = vpop.f32.mrf.mxu0
  %11131 = vmatprep.mubr.f32.mxu0 0.0
  %11132 = vmatmul.mubr.f32.gmra.mxu0 %v10924
  %v11133 = vpop.f32.mrf.mxu0
  %v11134 = vadd.f32 0.0, %v11133
  %v11135 = vpop.f32.mrf.mxu0
  %11136 = vdwg.mxu0
  %v11138 = vsel %vm4592, %v10863, 0
  %v11141 = vsel %vm4592, %v10868, 0
  %v11144 = vsel %vm4592, %v10873, 0
  %v11147 = vsel %vm4592, %v10878, 0
  %v11150 = vsel %vm4592, %v10883, 0
  %v11153 = vsel %vm4592, %v10888, 0
  %v11156 = vsel %vm4592, %v10893, 0
  %v11159 = vsel %vm4592, %v10898, 0
  %11161 = vmatprep.subr.mxu0 0.0
  %11162 = vmatpush1.msra.mxu0 0.0
  %11163 = vmatprep.subr.mxu0 0.0
  %11164 = vmatpush1.msra.mxu0 0.0
  %11165 = vmatprep.subr.mxu0 0.0
  %11166 = vmatpush1.msra.mxu0 0.0
  %11167 = vmatprep.subr.mxu0 0.0
  %11168 = vmatpush1.msra.mxu0 0.0
  %11169 = vmatprep.subr.mxu0 0.0
  %11170 = vmatpush1.msra.mxu0 0.0
  %11171 = vmatprep.subr.mxu0 0.0
  %11172 = vmatpush1.msra.mxu0 0.0
  %11173 = vmatprep.subr.mxu0 0.0
  %11174 = vmatpush1.msra.mxu0 0.0
  %11175 = vmatprep.subr.mxu0 0.0
  %11176 = vmatpush1.msra.mxu0 0.0
  %11177 = vmatprep.subr.mxu0 0.0
  %11178 = vmatpush1.msra.mxu0 0.0
  %11179 = vmatprep.subr.mxu0 0.0
  %11180 = vmatpush1.msra.mxu0 0.0
  %11181 = vmatprep.subr.mxu0 0.0
  %11182 = vmatpush1.msra.mxu0 0.0
  %11183 = vmatprep.subr.mxu0 0.0
  %11184 = vmatpush1.msra.mxu0 0.0
  %11185 = vmatprep.subr.mxu0 0.0
  %11186 = vmatpush1.msra.mxu0 0.0
  %11187 = vmatprep.subr.mxu0 0.0
  %11188 = vmatpush1.msra.mxu0 0.0
  %11189 = vmatprep.subr.mxu0 0.0
  %11190 = vmatpush1.msra.mxu0 0.0
  %11191 = vmatprep.subr.mxu0 0.0
  %11192 = vmatpush1.msra.mxu0 %v10901
  %11193 = vmatprep.subr.mxu0 0.0
  %11194 = vmatpush2.msra.mxu0 0.0
  %11195 = vmatprep.subr.mxu0 0.0
  %11196 = vmatpush2.msra.mxu0 0.0
  %11197 = vmatprep.subr.mxu0 0.0
  %11198 = vmatpush2.msra.mxu0 0.0
  %11199 = vmatprep.subr.mxu0 0.0
  %11200 = vmatpush2.msra.mxu0 0.0
  %11201 = vmatprep.subr.mxu0 0.0
  %11202 = vmatpush2.msra.mxu0 0.0
  %11203 = vmatprep.subr.mxu0 0.0
  %11204 = vmatpush2.msra.mxu0 0.0
  %11205 = vmatprep.subr.mxu0 0.0
  %11206 = vmatpush2.msra.mxu0 0.0
  %11207 = vmatprep.subr.mxu0 0.0
  %11208 = vmatpush2.msra.mxu0 0.0
  %11209 = vmatprep.subr.mxu0 0.0
  %11210 = vmatpush2.msra.mxu0 0.0
  %11211 = vmatprep.subr.mxu0 0.0
  %11212 = vmatpush2.msra.mxu0 0.0
  %11213 = vmatprep.subr.mxu0 0.0
  %11214 = vmatpush2.msra.mxu0 0.0
  %11215 = vmatprep.subr.mxu0 0.0
  %11216 = vmatpush2.msra.mxu0 0.0
  %11217 = vmatprep.subr.mxu0 0.0
  %11218 = vmatpush2.msra.mxu0 0.0
  %11219 = vmatprep.subr.mxu0 0.0
  %11220 = vmatpush2.msra.mxu0 0.0
  %11221 = vmatprep.subr.mxu0 0.0
  %11222 = vmatpush2.msra.mxu0 0.0
  %11223 = vmatprep.subr.mxu0 0.0
  %11224 = vmatpush2.msra.mxu0 0.0
  %11225 = vmatprep.mubr.f32.mxu0 0.0
  %11226 = vmatmul.mubr.f32.gmra.mxu0 %v11138
  %v11227 = vpop.f32.mrf.mxu0
  %v11228 = vadd.f32 0.0, %v11227
  %v11229 = vpop.f32.mrf.mxu0
  %11230 = vmatprep.mubr.f32.mxu0 0.0
  %11231 = vmatmul.mubr.f32.gmra.mxu0 %v11141
  %v11232 = vpop.f32.mrf.mxu0
  %v11233 = vadd.f32 0.0, %v11232
  %v11234 = vpop.f32.mrf.mxu0
  %11235 = vmatprep.mubr.f32.mxu0 0.0
  %11236 = vmatmul.mubr.f32.gmra.mxu0 %v11144
  %v11237 = vpop.f32.mrf.mxu0
  %v11238 = vadd.f32 0.0, %v11237
  %v11239 = vpop.f32.mrf.mxu0
  %11240 = vmatprep.mubr.f32.mxu0 0.0
  %11241 = vmatmul.mubr.f32.gmra.mxu0 %v11147
  %v11242 = vpop.f32.mrf.mxu0
  %v11243 = vadd.f32 0.0, %v11242
  %v11244 = vpop.f32.mrf.mxu0
  %11245 = vmatprep.mubr.f32.mxu0 0.0
  %11246 = vmatmul.mubr.f32.gmra.mxu0 %v11150
  %v11247 = vpop.f32.mrf.mxu0
  %v11248 = vadd.f32 0.0, %v11247
  %v11249 = vpop.f32.mrf.mxu0
  %11250 = vmatprep.mubr.f32.mxu0 0.0
  %11251 = vmatmul.mubr.f32.gmra.mxu0 %v11153
  %v11252 = vpop.f32.mrf.mxu0
  %v11253 = vadd.f32 0.0, %v11252
  %v11254 = vpop.f32.mrf.mxu0
  %11255 = vmatprep.mubr.f32.mxu0 0.0
  %11256 = vmatmul.mubr.f32.gmra.mxu0 %v11156
  %v11257 = vpop.f32.mrf.mxu0
  %v11258 = vadd.f32 0.0, %v11257
  %v11259 = vpop.f32.mrf.mxu0
  %11260 = vmatprep.mubr.f32.mxu0 0.0
  %11261 = vmatmul.mubr.f32.gmra.mxu0 %v11159
  %v11262 = vpop.f32.mrf.mxu0
  %v11263 = vadd.f32 0.0, %v11262
  %v11264 = vpop.f32.mrf.mxu0
  %11265 = vdwg.mxu0
  %11266 = vmatprep.subr.mxu0 0.0
  %11267 = vmatpush1.msra.mxu0 0.0
  %11268 = vmatprep.subr.mxu0 0.0
  %11269 = vmatpush1.msra.mxu0 0.0
  %11270 = vmatprep.subr.mxu0 0.0
  %11271 = vmatpush1.msra.mxu0 0.0
  %11272 = vmatprep.subr.mxu0 0.0
  %11273 = vmatpush1.msra.mxu0 0.0
  %11274 = vmatprep.subr.mxu0 0.0
  %11275 = vmatpush1.msra.mxu0 0.0
  %11276 = vmatprep.subr.mxu0 0.0
  %11277 = vmatpush1.msra.mxu0 0.0
  %11278 = vmatprep.subr.mxu0 0.0
  %11279 = vmatpush1.msra.mxu0 0.0
  %11280 = vmatprep.subr.mxu0 0.0
  %11281 = vmatpush1.msra.mxu0 0.0
  %11282 = vmatprep.subr.mxu0 0.0
  %11283 = vmatpush1.msra.mxu0 0.0
  %11284 = vmatprep.subr.mxu0 0.0
  %11285 = vmatpush1.msra.mxu0 0.0
  %11286 = vmatprep.subr.mxu0 0.0
  %11287 = vmatpush1.msra.mxu0 0.0
  %11288 = vmatprep.subr.mxu0 0.0
  %11289 = vmatpush1.msra.mxu0 0.0
  %11290 = vmatprep.subr.mxu0 0.0
  %11291 = vmatpush1.msra.mxu0 0.0
  %11292 = vmatprep.subr.mxu0 0.0
  %11293 = vmatpush1.msra.mxu0 0.0
  %11294 = vmatprep.subr.mxu0 0.0
  %11295 = vmatpush1.msra.mxu0 0.0
  %11296 = vmatprep.subr.mxu0 0.0
  %11297 = vmatpush1.msra.mxu0 %v11031
  %11298 = vmatprep.subr.mxu0 0.0
  %11299 = vmatpush2.msra.mxu0 0.0
  %11300 = vmatprep.subr.mxu0 0.0
  %11301 = vmatpush2.msra.mxu0 0.0
  %11302 = vmatprep.subr.mxu0 0.0
  %11303 = vmatpush2.msra.mxu0 0.0
  %11304 = vmatprep.subr.mxu0 0.0
  %11305 = vmatpush2.msra.mxu0 0.0
  %11306 = vmatprep.subr.mxu0 0.0
  %11307 = vmatpush2.msra.mxu0 0.0
  %11308 = vmatprep.subr.mxu0 0.0
  %11309 = vmatpush2.msra.mxu0 0.0
  %11310 = vmatprep.subr.mxu0 0.0
  %11311 = vmatpush2.msra.mxu0 0.0
  %11312 = vmatprep.subr.mxu0 0.0
  %11313 = vmatpush2.msra.mxu0 0.0
  %11314 = vmatprep.subr.mxu0 0.0
  %11315 = vmatpush2.msra.mxu0 0.0
  %11316 = vmatprep.subr.mxu0 0.0
  %11317 = vmatpush2.msra.mxu0 0.0
  %11318 = vmatprep.subr.mxu0 0.0
  %11319 = vmatpush2.msra.mxu0 0.0
  %11320 = vmatprep.subr.mxu0 0.0
  %11321 = vmatpush2.msra.mxu0 0.0
  %11322 = vmatprep.subr.mxu0 0.0
  %11323 = vmatpush2.msra.mxu0 0.0
  %11324 = vmatprep.subr.mxu0 0.0
  %11325 = vmatpush2.msra.mxu0 0.0
  %11326 = vmatprep.subr.mxu0 0.0
  %11327 = vmatpush2.msra.mxu0 0.0
  %11328 = vmatprep.subr.mxu0 0.0
  %11329 = vmatpush2.msra.mxu0 0.0
  %11330 = vmatprep.mubr.f32.mxu0 0.0
  %11331 = vmatmul.mubr.f32.gmra.mxu0 %v11138
  %v11332 = vpop.f32.mrf.mxu0
  %v11333 = vadd.f32 0.0, %v11332
  %v11334 = vpop.f32.mrf.mxu0
  %11335 = vmatprep.mubr.f32.mxu0 0.0
  %11336 = vmatmul.mubr.f32.gmra.mxu0 %v11141
  %v11337 = vpop.f32.mrf.mxu0
  %v11338 = vadd.f32 0.0, %v11337
  %v11339 = vpop.f32.mrf.mxu0
  %11340 = vmatprep.mubr.f32.mxu0 0.0
  %11341 = vmatmul.mubr.f32.gmra.mxu0 %v11144
  %v11342 = vpop.f32.mrf.mxu0
  %v11343 = vadd.f32 0.0, %v11342
  %v11344 = vpop.f32.mrf.mxu0
  %11345 = vmatprep.mubr.f32.mxu0 0.0
  %11346 = vmatmul.mubr.f32.gmra.mxu0 %v11147
  %v11347 = vpop.f32.mrf.mxu0
  %v11348 = vadd.f32 0.0, %v11347
  %v11349 = vpop.f32.mrf.mxu0
  %11350 = vmatprep.mubr.f32.mxu0 0.0
  %11351 = vmatmul.mubr.f32.gmra.mxu0 %v11150
  %v11352 = vpop.f32.mrf.mxu0
  %v11353 = vadd.f32 0.0, %v11352
  %v11354 = vpop.f32.mrf.mxu0
  %11355 = vmatprep.mubr.f32.mxu0 0.0
  %11356 = vmatmul.mubr.f32.gmra.mxu0 %v11153
  %v11357 = vpop.f32.mrf.mxu0
  %v11358 = vadd.f32 0.0, %v11357
  %v11359 = vpop.f32.mrf.mxu0
  %11360 = vmatprep.mubr.f32.mxu0 0.0
  %11361 = vmatmul.mubr.f32.gmra.mxu0 %v11156
  %v11362 = vpop.f32.mrf.mxu0
  %v11363 = vadd.f32 0.0, %v11362
  %v11364 = vpop.f32.mrf.mxu0
  %11365 = vmatprep.mubr.f32.mxu0 0.0
  %11366 = vmatmul.mubr.f32.gmra.mxu0 %v11159
  %v11367 = vpop.f32.mrf.mxu0
  %v11368 = vadd.f32 0.0, %v11367
  %v11369 = vpop.f32.mrf.mxu0
  %11370 = vdwg.mxu0
  %v11371 = vmax.f32 %v10993, %v11099
  %v11372 = vmax.f32 %v10998, %v11104
  %v11373 = vmax.f32 %v11003, %v11109
  %v11374 = vmax.f32 %v11008, %v11114
  %v11375 = vmax.f32 %v11013, %v11119
  %v11376 = vmax.f32 %v11018, %v11124
  %v11377 = vmax.f32 %v11023, %v11129
  %v11378 = vmax.f32 %v11028, %v11134
  %v11379 = vmax.f32 %v11228, %v11333
  %v11380 = vmax.f32 %v11233, %v11338
  %v11381 = vmax.f32 %v11238, %v11343
  %v11382 = vmax.f32 %v11243, %v11348
  %v11383 = vmax.f32 %v11248, %v11353
  %v11384 = vmax.f32 %v11253, %v11358
  %v11385 = vmax.f32 %v11258, %v11363
  %v11386 = vmax.f32 %v11263, %v11368
  %v11387 = vmax.f32 %v11371, %v11379
  %v11388 = vmax.f32 %v11372, %v11380
  %v11389 = vmax.f32 %v11373, %v11381
  %v11390 = vmax.f32 %v11374, %v11382
  %v11391 = vmax.f32 %v11375, %v11383
  %v11392 = vmax.f32 %v11376, %v11384
  %v11393 = vmax.f32 %v11377, %v11385
  %v11394 = vmax.f32 %v11378, %v11386
  %v11395 = vld [vmem:[%s10] sm:$0xff]
  %v11396 = vld [vmem:[%s10 + $0x8] sm:$0xff]
  %v11397 = vld [vmem:[%s10 + $0x10] sm:$0xff]
  %v11398 = vld [vmem:[%s10 + $0x18] sm:$0xff]
  %v11399 = vld [vmem:[%s10 + $0x20] sm:$0xff]
  %v11400 = vld [vmem:[%s10 + $0x28] sm:$0xff]
  %v11401 = vld [vmem:[%s10 + $0x30] sm:$0xff]
  %v11402 = vld [vmem:[%s10 + $0x38] sm:$0xff]
  %11404 = vset.pattern.permute.xlu0 0
  %11405 = vperm.xlu0 %11404, %v11395
  %v11406 = vpop.permute.xlu0 %11405
  %11409 = vset.pattern.permute.xlu0 0
  %11410 = vperm.xlu0 %11409, %v11396
  %v11411 = vpop.permute.xlu0 %11410
  %11414 = vset.pattern.permute.xlu0 0
  %11415 = vperm.xlu0 %11414, %v11397
  %v11416 = vpop.permute.xlu0 %11415
  %11419 = vset.pattern.permute.xlu0 0
  %11420 = vperm.xlu0 %11419, %v11398
  %v11421 = vpop.permute.xlu0 %11420
  %11424 = vset.pattern.permute.xlu0 0
  %11425 = vperm.xlu0 %11424, %v11399
  %v11426 = vpop.permute.xlu0 %11425
  %11429 = vset.pattern.permute.xlu0 0
  %11430 = vperm.xlu0 %11429, %v11400
  %v11431 = vpop.permute.xlu0 %11430
  %11434 = vset.pattern.permute.xlu0 0
  %11435 = vperm.xlu0 %11434, %v11401
  %v11436 = vpop.permute.xlu0 %11435
  %11439 = vset.pattern.permute.xlu0 0
  %11440 = vperm.xlu0 %11439, %v11402
  %v11441 = vpop.permute.xlu0 %11440
  %v11443 = vadd.f32 %v11387, %v11406
  %v11444 = vadd.f32 %v11388, %v11411
  %v11445 = vadd.f32 %v11389, %v11416
  %v11446 = vadd.f32 %v11390, %v11421
  %v11447 = vadd.f32 %v11391, %v11426
  %v11448 = vadd.f32 %v11392, %v11431
  %v11449 = vadd.f32 %v11393, %v11436
  %v11450 = vadd.f32 %v11394, %v11441
  %v11451 = vmax.f32 %v11443, 0.0
  %v11452 = vmax.f32 %v11444, 0.0
  %v11453 = vmax.f32 %v11445, 0.0
  %v11454 = vmax.f32 %v11446, 0.0
  %v11455 = vmax.f32 %v11447, 0.0
  %v11456 = vmax.f32 %v11448, 0.0
  %v11457 = vmax.f32 %v11449, 0.0
  %v11458 = vmax.f32 %v11450, 0.0
  %v11459 = vld [vmem:[%s11] sm:$0xff]
  %v11460 = vld [vmem:[%s11 + $0x8] sm:$0xff]
  %v11461 = vld [vmem:[%s11 + $0x10] sm:$0xff]
  %v11462 = vld [vmem:[%s11 + $0x18] sm:$0xff]
  %v11463 = vld [vmem:[%s11 + $0x20] sm:$0xff]
  %v11464 = vld [vmem:[%s11 + $0x28] sm:$0xff]
  %v11465 = vld [vmem:[%s11 + $0x30] sm:$0xff]
  %v11466 = vld [vmem:[%s11 + $0x38] sm:$0xff]
  %v11467 = vld [vmem:[%s11 + $0x40] sm:$0xff]
  %v11468 = vld [vmem:[%s11 + $0x48] sm:$0xff]
  %v11469 = vld [vmem:[%s11 + $0x50] sm:$0xff]
  %v11470 = vld [vmem:[%s11 + $0x58] sm:$0xff]
  %v11471 = vld [vmem:[%s11 + $0x60] sm:$0xff]
  %v11472 = vld [vmem:[%s11 + $0x68] sm:$0xff]
  %v11473 = vld [vmem:[%s11 + $0x70] sm:$0xff]
  %v11474 = vld [vmem:[%s5166] sm:$0xff]
  %v11475 = vld [vmem:[%s5166 + $0x8] sm:$0xff]
  %v11476 = vld [vmem:[%s5166 + $0x10] sm:$0xff]
  %v11477 = vld [vmem:[%s5166 + $0x18] sm:$0xff]
  %v11478 = vld [vmem:[%s5166 + $0x20] sm:$0xff]
  %v11479 = vld [vmem:[%s5166 + $0x28] sm:$0xff]
  %v11480 = vld [vmem:[%s5166 + $0x30] sm:$0xff]
  %v11481 = vld [vmem:[%s5166 + $0x38] sm:$0xff]
  %v11482 = vld [vmem:[%s5166 + $0x40] sm:$0xff]
  %v11483 = vld [vmem:[%s5166 + $0x48] sm:$0xff]
  %v11484 = vld [vmem:[%s5166 + $0x50] sm:$0xff]
  %v11485 = vld [vmem:[%s5166 + $0x58] sm:$0xff]
  %v11486 = vld [vmem:[%s5166 + $0x60] sm:$0xff]
  %v11487 = vld [vmem:[%s5166 + $0x68] sm:$0xff]
  %v11488 = vld [vmem:[%s5166 + $0x70] sm:$0xff]
  %11497 = vrot.lane.b32.xlu0 %v11451, 127
  %v11498 = vpop.permute.xlu0 %11497
  %11499 = vrot.lane.b32.xlu0 %v11452, 127
  %v11500 = vpop.permute.xlu0 %11499
  %11501 = vrot.lane.b32.xlu0 %v11453, 127
  %v11502 = vpop.permute.xlu0 %11501
  %11503 = vrot.lane.b32.xlu0 %v11454, 127
  %v11504 = vpop.permute.xlu0 %11503
  %11505 = vrot.lane.b32.xlu0 %v11455, 127
  %v11506 = vpop.permute.xlu0 %11505
  %11507 = vrot.lane.b32.xlu0 %v11456, 127
  %v11508 = vpop.permute.xlu0 %11507
  %11509 = vrot.lane.b32.xlu0 %v11457, 127
  %v11510 = vpop.permute.xlu0 %11509
  %11511 = vrot.lane.b32.xlu0 %v11458, 127
  %v11512 = vpop.permute.xlu0 %11511
  %v11522 = vsel %vm5214, %v11474, 0
  %v11525 = vsel %vm5214, %v11475, 0
  %v11528 = vsel %vm5214, %v11476, 0
  %v11531 = vsel %vm5214, %v11477, 0
  %v11534 = vsel %vm5214, %v11478, 0
  %v11537 = vsel %vm5214, %v11479, 0
  %v11540 = vsel %vm5214, %v11480, 0
  %v11543 = vsel %vm5214, %v11481, 0
  %v11546 = vsel %vm5214, %v11482, 0
  %v11549 = vsel %vm5214, %v11483, 0
  %v11552 = vsel %vm5214, %v11484, 0
  %v11555 = vsel %vm5214, %v11485, 0
  %v11558 = vsel %vm5214, %v11486, 0
  %v11561 = vsel %vm5214, %v11487, 0
  %v11564 = vsel %vm5214, %v11488, 0
  %11566 = vmatprep.subr.mxu0 0.0
  %11567 = vmatpush1.msra.mxu0 0.0
  %11568 = vmatprep.subr.mxu0 0.0
  %11569 = vmatpush1.msra.mxu0 0.0
  %11570 = vmatprep.subr.mxu0 0.0
  %11571 = vmatpush1.msra.mxu0 0.0
  %11572 = vmatprep.subr.mxu0 0.0
  %11573 = vmatpush1.msra.mxu0 0.0
  %11574 = vmatprep.subr.mxu0 0.0
  %11575 = vmatpush1.msra.mxu0 0.0
  %11576 = vmatprep.subr.mxu0 0.0
  %11577 = vmatpush1.msra.mxu0 0.0
  %11578 = vmatprep.subr.mxu0 0.0
  %11579 = vmatpush1.msra.mxu0 0.0
  %11580 = vmatprep.subr.mxu0 0.0
  %11581 = vmatpush1.msra.mxu0 0.0
  %11582 = vmatprep.subr.mxu0 0.0
  %11583 = vmatpush1.msra.mxu0 %v11512
  %11584 = vmatprep.subr.mxu0 0.0
  %11585 = vmatpush1.msra.mxu0 %v11510
  %11586 = vmatprep.subr.mxu0 0.0
  %11587 = vmatpush1.msra.mxu0 %v11508
  %11588 = vmatprep.subr.mxu0 0.0
  %11589 = vmatpush1.msra.mxu0 %v11506
  %11590 = vmatprep.subr.mxu0 0.0
  %11591 = vmatpush1.msra.mxu0 %v11504
  %11592 = vmatprep.subr.mxu0 0.0
  %11593 = vmatpush1.msra.mxu0 %v11502
  %11594 = vmatprep.subr.mxu0 0.0
  %11595 = vmatpush1.msra.mxu0 %v11500
  %11596 = vmatprep.subr.mxu0 0.0
  %11597 = vmatpush1.msra.mxu0 %v11498
  %11598 = vmatprep.subr.mxu0 0.0
  %11599 = vmatpush2.msra.mxu0 0.0
  %11600 = vmatprep.subr.mxu0 0.0
  %11601 = vmatpush2.msra.mxu0 0.0
  %11602 = vmatprep.subr.mxu0 0.0
  %11603 = vmatpush2.msra.mxu0 0.0
  %11604 = vmatprep.subr.mxu0 0.0
  %11605 = vmatpush2.msra.mxu0 0.0
  %11606 = vmatprep.subr.mxu0 0.0
  %11607 = vmatpush2.msra.mxu0 0.0
  %11608 = vmatprep.subr.mxu0 0.0
  %11609 = vmatpush2.msra.mxu0 0.0
  %11610 = vmatprep.subr.mxu0 0.0
  %11611 = vmatpush2.msra.mxu0 0.0
  %11612 = vmatprep.subr.mxu0 0.0
  %11613 = vmatpush2.msra.mxu0 0.0
  %11614 = vmatprep.subr.mxu0 0.0
  %11615 = vmatpush2.msra.mxu0 0.0
  %11616 = vmatprep.subr.mxu0 0.0
  %11617 = vmatpush2.msra.mxu0 0.0
  %11618 = vmatprep.subr.mxu0 0.0
  %11619 = vmatpush2.msra.mxu0 0.0
  %11620 = vmatprep.subr.mxu0 0.0
  %11621 = vmatpush2.msra.mxu0 0.0
  %11622 = vmatprep.subr.mxu0 0.0
  %11623 = vmatpush2.msra.mxu0 0.0
  %11624 = vmatprep.subr.mxu0 0.0
  %11625 = vmatpush2.msra.mxu0 0.0
  %11626 = vmatprep.subr.mxu0 0.0
  %11627 = vmatpush2.msra.mxu0 0.0
  %11628 = vmatprep.subr.mxu0 0.0
  %11629 = vmatpush2.msra.mxu0 0.0
  %11630 = vmatprep.mubr.f32.mxu0 0.0
  %11631 = vmatmul.mubr.f32.gmra.mxu0 %v11522
  %v11632 = vpop.f32.mrf.mxu0
  %v11633 = vadd.f32 0.0, %v11632
  %v11634 = vpop.f32.mrf.mxu0
  %11635 = vmatprep.mubr.f32.mxu0 0.0
  %11636 = vmatmul.mubr.f32.gmra.mxu0 %v11525
  %v11637 = vpop.f32.mrf.mxu0
  %v11638 = vadd.f32 0.0, %v11637
  %v11639 = vpop.f32.mrf.mxu0
  %11640 = vmatprep.mubr.f32.mxu0 0.0
  %11641 = vmatmul.mubr.f32.gmra.mxu0 %v11528
  %v11642 = vpop.f32.mrf.mxu0
  %v11643 = vadd.f32 0.0, %v11642
  %v11644 = vpop.f32.mrf.mxu0
  %11645 = vmatprep.mubr.f32.mxu0 0.0
  %11646 = vmatmul.mubr.f32.gmra.mxu0 %v11531
  %v11647 = vpop.f32.mrf.mxu0
  %v11648 = vadd.f32 0.0, %v11647
  %v11649 = vpop.f32.mrf.mxu0
  %11650 = vmatprep.mubr.f32.mxu0 0.0
  %11651 = vmatmul.mubr.f32.gmra.mxu0 %v11534
  %v11652 = vpop.f32.mrf.mxu0
  %v11653 = vadd.f32 0.0, %v11652
  %v11654 = vpop.f32.mrf.mxu0
  %11655 = vmatprep.mubr.f32.mxu0 0.0
  %11656 = vmatmul.mubr.f32.gmra.mxu0 %v11537
  %v11657 = vpop.f32.mrf.mxu0
  %v11658 = vadd.f32 0.0, %v11657
  %v11659 = vpop.f32.mrf.mxu0
  %11660 = vmatprep.mubr.f32.mxu0 0.0
  %11661 = vmatmul.mubr.f32.gmra.mxu0 %v11540
  %v11662 = vpop.f32.mrf.mxu0
  %v11663 = vadd.f32 0.0, %v11662
  %v11664 = vpop.f32.mrf.mxu0
  %11665 = vmatprep.mubr.f32.mxu0 0.0
  %11666 = vmatmul.mubr.f32.gmra.mxu0 %v11543
  %v11667 = vpop.f32.mrf.mxu0
  %v11668 = vadd.f32 0.0, %v11667
  %v11669 = vpop.f32.mrf.mxu0
  %11670 = vmatprep.mubr.f32.mxu0 0.0
  %11671 = vmatmul.mubr.f32.gmra.mxu0 %v11546
  %v11672 = vpop.f32.mrf.mxu0
  %v11673 = vadd.f32 0.0, %v11672
  %v11674 = vpop.f32.mrf.mxu0
  %11675 = vmatprep.mubr.f32.mxu0 0.0
  %11676 = vmatmul.mubr.f32.gmra.mxu0 %v11549
  %v11677 = vpop.f32.mrf.mxu0
  %v11678 = vadd.f32 0.0, %v11677
  %v11679 = vpop.f32.mrf.mxu0
  %11680 = vmatprep.mubr.f32.mxu0 0.0
  %11681 = vmatmul.mubr.f32.gmra.mxu0 %v11552
  %v11682 = vpop.f32.mrf.mxu0
  %v11683 = vadd.f32 0.0, %v11682
  %v11684 = vpop.f32.mrf.mxu0
  %11685 = vmatprep.mubr.f32.mxu0 0.0
  %11686 = vmatmul.mubr.f32.gmra.mxu0 %v11555
  %v11687 = vpop.f32.mrf.mxu0
  %v11688 = vadd.f32 0.0, %v11687
  %v11689 = vpop.f32.mrf.mxu0
  %11690 = vmatprep.mubr.f32.mxu0 0.0
  %11691 = vmatmul.mubr.f32.gmra.mxu0 %v11558
  %v11692 = vpop.f32.mrf.mxu0
  %v11693 = vadd.f32 0.0, %v11692
  %v11694 = vpop.f32.mrf.mxu0
  %11695 = vmatprep.mubr.f32.mxu0 0.0
  %11696 = vmatmul.mubr.f32.gmra.mxu0 %v11561
  %v11697 = vpop.f32.mrf.mxu0
  %v11698 = vadd.f32 0.0, %v11697
  %v11699 = vpop.f32.mrf.mxu0
  %11700 = vmatprep.mubr.f32.mxu0 0.0
  %11701 = vmatmul.mubr.f32.gmra.mxu0 %v11564
  %v11702 = vpop.f32.mrf.mxu0
  %v11703 = vadd.f32 0.0, %v11702
  %v11704 = vpop.f32.mrf.mxu0
  %11705 = vdwg.mxu0
  %v11707 = vsel %vm5214, %v11459, 0
  %v11710 = vsel %vm5214, %v11460, 0
  %v11713 = vsel %vm5214, %v11461, 0
  %v11716 = vsel %vm5214, %v11462, 0
  %v11719 = vsel %vm5214, %v11463, 0
  %v11722 = vsel %vm5214, %v11464, 0
  %v11725 = vsel %vm5214, %v11465, 0
  %v11728 = vsel %vm5214, %v11466, 0
  %v11731 = vsel %vm5214, %v11467, 0
  %v11734 = vsel %vm5214, %v11468, 0
  %v11737 = vsel %vm5214, %v11469, 0
  %v11740 = vsel %vm5214, %v11470, 0
  %v11743 = vsel %vm5214, %v11471, 0
  %v11746 = vsel %vm5214, %v11472, 0
  %v11749 = vsel %vm5214, %v11473, 0
  %11751 = vmatprep.subr.mxu0 0.0
  %11752 = vmatpush1.msra.mxu0 0.0
  %11753 = vmatprep.subr.mxu0 0.0
  %11754 = vmatpush1.msra.mxu0 0.0
  %11755 = vmatprep.subr.mxu0 0.0
  %11756 = vmatpush1.msra.mxu0 0.0
  %11757 = vmatprep.subr.mxu0 0.0
  %11758 = vmatpush1.msra.mxu0 0.0
  %11759 = vmatprep.subr.mxu0 0.0
  %11760 = vmatpush1.msra.mxu0 0.0
  %11761 = vmatprep.subr.mxu0 0.0
  %11762 = vmatpush1.msra.mxu0 0.0
  %11763 = vmatprep.subr.mxu0 0.0
  %11764 = vmatpush1.msra.mxu0 0.0
  %11765 = vmatprep.subr.mxu0 0.0
  %11766 = vmatpush1.msra.mxu0 0.0
  %11767 = vmatprep.subr.mxu0 0.0
  %11768 = vmatpush1.msra.mxu0 %v11458
  %11769 = vmatprep.subr.mxu0 0.0
  %11770 = vmatpush1.msra.mxu0 %v11457
  %11771 = vmatprep.subr.mxu0 0.0
  %11772 = vmatpush1.msra.mxu0 %v11456
  %11773 = vmatprep.subr.mxu0 0.0
  %11774 = vmatpush1.msra.mxu0 %v11455
  %11775 = vmatprep.subr.mxu0 0.0
  %11776 = vmatpush1.msra.mxu0 %v11454
  %11777 = vmatprep.subr.mxu0 0.0
  %11778 = vmatpush1.msra.mxu0 %v11453
  %11779 = vmatprep.subr.mxu0 0.0
  %11780 = vmatpush1.msra.mxu0 %v11452
  %11781 = vmatprep.subr.mxu0 0.0
  %11782 = vmatpush1.msra.mxu0 %v11451
  %11783 = vmatprep.subr.mxu0 0.0
  %11784 = vmatpush2.msra.mxu0 0.0
  %11785 = vmatprep.subr.mxu0 0.0
  %11786 = vmatpush2.msra.mxu0 0.0
  %11787 = vmatprep.subr.mxu0 0.0
  %11788 = vmatpush2.msra.mxu0 0.0
  %11789 = vmatprep.subr.mxu0 0.0
  %11790 = vmatpush2.msra.mxu0 0.0
  %11791 = vmatprep.subr.mxu0 0.0
  %11792 = vmatpush2.msra.mxu0 0.0
  %11793 = vmatprep.subr.mxu0 0.0
  %11794 = vmatpush2.msra.mxu0 0.0
  %11795 = vmatprep.subr.mxu0 0.0
  %11796 = vmatpush2.msra.mxu0 0.0
  %11797 = vmatprep.subr.mxu0 0.0
  %11798 = vmatpush2.msra.mxu0 0.0
  %11799 = vmatprep.subr.mxu0 0.0
  %11800 = vmatpush2.msra.mxu0 0.0
  %11801 = vmatprep.subr.mxu0 0.0
  %11802 = vmatpush2.msra.mxu0 0.0
  %11803 = vmatprep.subr.mxu0 0.0
  %11804 = vmatpush2.msra.mxu0 0.0
  %11805 = vmatprep.subr.mxu0 0.0
  %11806 = vmatpush2.msra.mxu0 0.0
  %11807 = vmatprep.subr.mxu0 0.0
  %11808 = vmatpush2.msra.mxu0 0.0
  %11809 = vmatprep.subr.mxu0 0.0
  %11810 = vmatpush2.msra.mxu0 0.0
  %11811 = vmatprep.subr.mxu0 0.0
  %11812 = vmatpush2.msra.mxu0 0.0
  %11813 = vmatprep.subr.mxu0 0.0
  %11814 = vmatpush2.msra.mxu0 0.0
  %11815 = vmatprep.mubr.f32.mxu0 0.0
  %11816 = vmatmul.mubr.f32.gmra.mxu0 %v11707
  %v11817 = vpop.f32.mrf.mxu0
  %v11818 = vadd.f32 %v11633, %v11817
  %v11819 = vpop.f32.mrf.mxu0
  %11820 = vmatprep.mubr.f32.mxu0 0.0
  %11821 = vmatmul.mubr.f32.gmra.mxu0 %v11710
  %v11822 = vpop.f32.mrf.mxu0
  %v11823 = vadd.f32 %v11638, %v11822
  %v11824 = vpop.f32.mrf.mxu0
  %11825 = vmatprep.mubr.f32.mxu0 0.0
  %11826 = vmatmul.mubr.f32.gmra.mxu0 %v11713
  %v11827 = vpop.f32.mrf.mxu0
  %v11828 = vadd.f32 %v11643, %v11827
  %v11829 = vpop.f32.mrf.mxu0
  %11830 = vmatprep.mubr.f32.mxu0 0.0
  %11831 = vmatmul.mubr.f32.gmra.mxu0 %v11716
  %v11832 = vpop.f32.mrf.mxu0
  %v11833 = vadd.f32 %v11648, %v11832
  %v11834 = vpop.f32.mrf.mxu0
  %11835 = vmatprep.mubr.f32.mxu0 0.0
  %11836 = vmatmul.mubr.f32.gmra.mxu0 %v11719
  %v11837 = vpop.f32.mrf.mxu0
  %v11838 = vadd.f32 %v11653, %v11837
  %v11839 = vpop.f32.mrf.mxu0
  %11840 = vmatprep.mubr.f32.mxu0 0.0
  %11841 = vmatmul.mubr.f32.gmra.mxu0 %v11722
  %v11842 = vpop.f32.mrf.mxu0
  %v11843 = vadd.f32 %v11658, %v11842
  %v11844 = vpop.f32.mrf.mxu0
  %11845 = vmatprep.mubr.f32.mxu0 0.0
  %11846 = vmatmul.mubr.f32.gmra.mxu0 %v11725
  %v11847 = vpop.f32.mrf.mxu0
  %v11848 = vadd.f32 %v11663, %v11847
  %v11849 = vpop.f32.mrf.mxu0
  %11850 = vmatprep.mubr.f32.mxu0 0.0
  %11851 = vmatmul.mubr.f32.gmra.mxu0 %v11728
  %v11852 = vpop.f32.mrf.mxu0
  %v11853 = vadd.f32 %v11668, %v11852
  %v11854 = vpop.f32.mrf.mxu0
  %11855 = vmatprep.mubr.f32.mxu0 0.0
  %11856 = vmatmul.mubr.f32.gmra.mxu0 %v11731
  %v11857 = vpop.f32.mrf.mxu0
  %v11858 = vadd.f32 %v11673, %v11857
  %v11859 = vpop.f32.mrf.mxu0
  %11860 = vmatprep.mubr.f32.mxu0 0.0
  %11861 = vmatmul.mubr.f32.gmra.mxu0 %v11734
  %v11862 = vpop.f32.mrf.mxu0
  %v11863 = vadd.f32 %v11678, %v11862
  %v11864 = vpop.f32.mrf.mxu0
  %11865 = vmatprep.mubr.f32.mxu0 0.0
  %11866 = vmatmul.mubr.f32.gmra.mxu0 %v11737
  %v11867 = vpop.f32.mrf.mxu0
  %v11868 = vadd.f32 %v11683, %v11867
  %v11869 = vpop.f32.mrf.mxu0
  %11870 = vmatprep.mubr.f32.mxu0 0.0
  %11871 = vmatmul.mubr.f32.gmra.mxu0 %v11740
  %v11872 = vpop.f32.mrf.mxu0
  %v11873 = vadd.f32 %v11688, %v11872
  %v11874 = vpop.f32.mrf.mxu0
  %11875 = vmatprep.mubr.f32.mxu0 0.0
  %11876 = vmatmul.mubr.f32.gmra.mxu0 %v11743
  %v11877 = vpop.f32.mrf.mxu0
  %v11878 = vadd.f32 %v11693, %v11877
  %v11879 = vpop.f32.mrf.mxu0
  %11880 = vmatprep.mubr.f32.mxu0 0.0
  %11881 = vmatmul.mubr.f32.gmra.mxu0 %v11746
  %v11882 = vpop.f32.mrf.mxu0
  %v11883 = vadd.f32 %v11698, %v11882
  %v11884 = vpop.f32.mrf.mxu0
  %11885 = vmatprep.mubr.f32.mxu0 0.0
  %11886 = vmatmul.mubr.f32.gmra.mxu0 %v11749
  %v11887 = vpop.f32.mrf.mxu0
  %v11888 = vadd.f32 %v11703, %v11887
  %v11889 = vpop.f32.mrf.mxu0
  %11890 = vdwg.mxu0
  %v11891 = vld [vmem:[%s5585] sm:$0xff]
  %v11892 = vld [vmem:[%s5585 + $0x8] sm:$0xff]
  %v11893 = vld [vmem:[%s5585 + $0x10] sm:$0xff]
  %v11894 = vld [vmem:[%s5585 + $0x18] sm:$0xff]
  %v11895 = vld [vmem:[%s5585 + $0x20] sm:$0xff]
  %v11896 = vld [vmem:[%s5585 + $0x28] sm:$0xff]
  %v11897 = vld [vmem:[%s5585 + $0x30] sm:$0xff]
  %v11898 = vld [vmem:[%s5585 + $0x38] sm:$0xff]
  %v11899 = vld [vmem:[%s5585 + $0x40] sm:$0xff]
  %v11900 = vld [vmem:[%s5585 + $0x48] sm:$0xff]
  %v11901 = vld [vmem:[%s5585 + $0x50] sm:$0xff]
  %v11902 = vld [vmem:[%s5585 + $0x58] sm:$0xff]
  %v11903 = vld [vmem:[%s5585 + $0x60] sm:$0xff]
  %v11904 = vld [vmem:[%s5585 + $0x68] sm:$0xff]
  %v11905 = vld [vmem:[%s5585 + $0x70] sm:$0xff]
  %11906 = vrot.lane.b32.xlu0 %v11451, 126
  %v11907 = vpop.permute.xlu0 %11906
  %11908 = vrot.lane.b32.xlu0 %v11452, 126
  %v11909 = vpop.permute.xlu0 %11908
  %11910 = vrot.lane.b32.xlu0 %v11453, 126
  %v11911 = vpop.permute.xlu0 %11910
  %11912 = vrot.lane.b32.xlu0 %v11454, 126
  %v11913 = vpop.permute.xlu0 %11912
  %11914 = vrot.lane.b32.xlu0 %v11455, 126
  %v11915 = vpop.permute.xlu0 %11914
  %11916 = vrot.lane.b32.xlu0 %v11456, 126
  %v11917 = vpop.permute.xlu0 %11916
  %11918 = vrot.lane.b32.xlu0 %v11457, 126
  %v11919 = vpop.permute.xlu0 %11918
  %11920 = vrot.lane.b32.xlu0 %v11458, 126
  %v11921 = vpop.permute.xlu0 %11920
  %v11931 = vsel %vm5214, %v11891, 0
  %v11934 = vsel %vm5214, %v11892, 0
  %v11937 = vsel %vm5214, %v11893, 0
  %v11940 = vsel %vm5214, %v11894, 0
  %v11943 = vsel %vm5214, %v11895, 0
  %v11946 = vsel %vm5214, %v11896, 0
  %v11949 = vsel %vm5214, %v11897, 0
  %v11952 = vsel %vm5214, %v11898, 0
  %v11955 = vsel %vm5214, %v11899, 0
  %v11958 = vsel %vm5214, %v11900, 0
  %v11961 = vsel %vm5214, %v11901, 0
  %v11964 = vsel %vm5214, %v11902, 0
  %v11967 = vsel %vm5214, %v11903, 0
  %v11970 = vsel %vm5214, %v11904, 0
  %v11973 = vsel %vm5214, %v11905, 0
  %11975 = vmatprep.subr.mxu0 0.0
  %11976 = vmatpush1.msra.mxu0 0.0
  %11977 = vmatprep.subr.mxu0 0.0
  %11978 = vmatpush1.msra.mxu0 0.0
  %11979 = vmatprep.subr.mxu0 0.0
  %11980 = vmatpush1.msra.mxu0 0.0
  %11981 = vmatprep.subr.mxu0 0.0
  %11982 = vmatpush1.msra.mxu0 0.0
  %11983 = vmatprep.subr.mxu0 0.0
  %11984 = vmatpush1.msra.mxu0 0.0
  %11985 = vmatprep.subr.mxu0 0.0
  %11986 = vmatpush1.msra.mxu0 0.0
  %11987 = vmatprep.subr.mxu0 0.0
  %11988 = vmatpush1.msra.mxu0 0.0
  %11989 = vmatprep.subr.mxu0 0.0
  %11990 = vmatpush1.msra.mxu0 0.0
  %11991 = vmatprep.subr.mxu0 0.0
  %11992 = vmatpush1.msra.mxu0 %v11921
  %11993 = vmatprep.subr.mxu0 0.0
  %11994 = vmatpush1.msra.mxu0 %v11919
  %11995 = vmatprep.subr.mxu0 0.0
  %11996 = vmatpush1.msra.mxu0 %v11917
  %11997 = vmatprep.subr.mxu0 0.0
  %11998 = vmatpush1.msra.mxu0 %v11915
  %11999 = vmatprep.subr.mxu0 0.0
  %12000 = vmatpush1.msra.mxu0 %v11913
  %12001 = vmatprep.subr.mxu0 0.0
  %12002 = vmatpush1.msra.mxu0 %v11911
  %12003 = vmatprep.subr.mxu0 0.0
  %12004 = vmatpush1.msra.mxu0 %v11909
  %12005 = vmatprep.subr.mxu0 0.0
  %12006 = vmatpush1.msra.mxu0 %v11907
  %12007 = vmatprep.subr.mxu0 0.0
  %12008 = vmatpush2.msra.mxu0 0.0
  %12009 = vmatprep.subr.mxu0 0.0
  %12010 = vmatpush2.msra.mxu0 0.0
  %12011 = vmatprep.subr.mxu0 0.0
  %12012 = vmatpush2.msra.mxu0 0.0
  %12013 = vmatprep.subr.mxu0 0.0
  %12014 = vmatpush2.msra.mxu0 0.0
  %12015 = vmatprep.subr.mxu0 0.0
  %12016 = vmatpush2.msra.mxu0 0.0
  %12017 = vmatprep.subr.mxu0 0.0
  %12018 = vmatpush2.msra.mxu0 0.0
  %12019 = vmatprep.subr.mxu0 0.0
  %12020 = vmatpush2.msra.mxu0 0.0
  %12021 = vmatprep.subr.mxu0 0.0
  %12022 = vmatpush2.msra.mxu0 0.0
  %12023 = vmatprep.subr.mxu0 0.0
  %12024 = vmatpush2.msra.mxu0 0.0
  %12025 = vmatprep.subr.mxu0 0.0
  %12026 = vmatpush2.msra.mxu0 0.0
  %12027 = vmatprep.subr.mxu0 0.0
  %12028 = vmatpush2.msra.mxu0 0.0
  %12029 = vmatprep.subr.mxu0 0.0
  %12030 = vmatpush2.msra.mxu0 0.0
  %12031 = vmatprep.subr.mxu0 0.0
  %12032 = vmatpush2.msra.mxu0 0.0
  %12033 = vmatprep.subr.mxu0 0.0
  %12034 = vmatpush2.msra.mxu0 0.0
  %12035 = vmatprep.subr.mxu0 0.0
  %12036 = vmatpush2.msra.mxu0 0.0
  %12037 = vmatprep.subr.mxu0 0.0
  %12038 = vmatpush2.msra.mxu0 0.0
  %12039 = vmatprep.mubr.f32.mxu0 0.0
  %12040 = vmatmul.mubr.f32.gmra.mxu0 %v11931
  %v12041 = vpop.f32.mrf.mxu0
  %v12042 = vadd.f32 0.0, %v12041
  %v12043 = vpop.f32.mrf.mxu0
  %12044 = vmatprep.mubr.f32.mxu0 0.0
  %12045 = vmatmul.mubr.f32.gmra.mxu0 %v11934
  %v12046 = vpop.f32.mrf.mxu0
  %v12047 = vadd.f32 0.0, %v12046
  %v12048 = vpop.f32.mrf.mxu0
  %12049 = vmatprep.mubr.f32.mxu0 0.0
  %12050 = vmatmul.mubr.f32.gmra.mxu0 %v11937
  %v12051 = vpop.f32.mrf.mxu0
  %v12052 = vadd.f32 0.0, %v12051
  %v12053 = vpop.f32.mrf.mxu0
  %12054 = vmatprep.mubr.f32.mxu0 0.0
  %12055 = vmatmul.mubr.f32.gmra.mxu0 %v11940
  %v12056 = vpop.f32.mrf.mxu0
  %v12057 = vadd.f32 0.0, %v12056
  %v12058 = vpop.f32.mrf.mxu0
  %12059 = vmatprep.mubr.f32.mxu0 0.0
  %12060 = vmatmul.mubr.f32.gmra.mxu0 %v11943
  %v12061 = vpop.f32.mrf.mxu0
  %v12062 = vadd.f32 0.0, %v12061
  %v12063 = vpop.f32.mrf.mxu0
  %12064 = vmatprep.mubr.f32.mxu0 0.0
  %12065 = vmatmul.mubr.f32.gmra.mxu0 %v11946
  %v12066 = vpop.f32.mrf.mxu0
  %v12067 = vadd.f32 0.0, %v12066
  %v12068 = vpop.f32.mrf.mxu0
  %12069 = vmatprep.mubr.f32.mxu0 0.0
  %12070 = vmatmul.mubr.f32.gmra.mxu0 %v11949
  %v12071 = vpop.f32.mrf.mxu0
  %v12072 = vadd.f32 0.0, %v12071
  %v12073 = vpop.f32.mrf.mxu0
  %12074 = vmatprep.mubr.f32.mxu0 0.0
  %12075 = vmatmul.mubr.f32.gmra.mxu0 %v11952
  %v12076 = vpop.f32.mrf.mxu0
  %v12077 = vadd.f32 0.0, %v12076
  %v12078 = vpop.f32.mrf.mxu0
  %12079 = vmatprep.mubr.f32.mxu0 0.0
  %12080 = vmatmul.mubr.f32.gmra.mxu0 %v11955
  %v12081 = vpop.f32.mrf.mxu0
  %v12082 = vadd.f32 0.0, %v12081
  %v12083 = vpop.f32.mrf.mxu0
  %12084 = vmatprep.mubr.f32.mxu0 0.0
  %12085 = vmatmul.mubr.f32.gmra.mxu0 %v11958
  %v12086 = vpop.f32.mrf.mxu0
  %v12087 = vadd.f32 0.0, %v12086
  %v12088 = vpop.f32.mrf.mxu0
  %12089 = vmatprep.mubr.f32.mxu0 0.0
  %12090 = vmatmul.mubr.f32.gmra.mxu0 %v11961
  %v12091 = vpop.f32.mrf.mxu0
  %v12092 = vadd.f32 0.0, %v12091
  %v12093 = vpop.f32.mrf.mxu0
  %12094 = vmatprep.mubr.f32.mxu0 0.0
  %12095 = vmatmul.mubr.f32.gmra.mxu0 %v11964
  %v12096 = vpop.f32.mrf.mxu0
  %v12097 = vadd.f32 0.0, %v12096
  %v12098 = vpop.f32.mrf.mxu0
  %12099 = vmatprep.mubr.f32.mxu0 0.0
  %12100 = vmatmul.mubr.f32.gmra.mxu0 %v11967
  %v12101 = vpop.f32.mrf.mxu0
  %v12102 = vadd.f32 0.0, %v12101
  %v12103 = vpop.f32.mrf.mxu0
  %12104 = vmatprep.mubr.f32.mxu0 0.0
  %12105 = vmatmul.mubr.f32.gmra.mxu0 %v11970
  %v12106 = vpop.f32.mrf.mxu0
  %v12107 = vadd.f32 0.0, %v12106
  %v12108 = vpop.f32.mrf.mxu0
  %12109 = vmatprep.mubr.f32.mxu0 0.0
  %12110 = vmatmul.mubr.f32.gmra.mxu0 %v11973
  %v12111 = vpop.f32.mrf.mxu0
  %v12112 = vadd.f32 0.0, %v12111
  %v12113 = vpop.f32.mrf.mxu0
  %12114 = vdwg.mxu0
  %v12115 = vadd.f32 %v11818, %v12042
  %v12116 = vadd.f32 %v11823, %v12047
  %v12117 = vadd.f32 %v11828, %v12052
  %v12118 = vadd.f32 %v11833, %v12057
  %v12119 = vadd.f32 %v11838, %v12062
  %v12120 = vadd.f32 %v11843, %v12067
  %v12121 = vadd.f32 %v11848, %v12072
  %v12122 = vadd.f32 %v11853, %v12077
  %v12123 = vadd.f32 %v11858, %v12082
  %v12124 = vadd.f32 %v11863, %v12087
  %v12125 = vadd.f32 %v11868, %v12092
  %v12126 = vadd.f32 %v11873, %v12097
  %v12127 = vadd.f32 %v11878, %v12102
  %v12128 = vadd.f32 %v11883, %v12107
  %v12129 = vadd.f32 %v11888, %v12112
  %v12130 = vld [vmem:[%s5825] sm:$0xff]
  %v12131 = vld [vmem:[%s5825 + $0x8] sm:$0xff]
  %v12132 = vld [vmem:[%s5825 + $0x10] sm:$0xff]
  %v12133 = vld [vmem:[%s5825 + $0x18] sm:$0xff]
  %v12134 = vld [vmem:[%s5825 + $0x20] sm:$0xff]
  %v12135 = vld [vmem:[%s5825 + $0x28] sm:$0xff]
  %v12136 = vld [vmem:[%s5825 + $0x30] sm:$0xff]
  %v12137 = vld [vmem:[%s5825 + $0x38] sm:$0xff]
  %v12138 = vld [vmem:[%s5825 + $0x40] sm:$0xff]
  %v12139 = vld [vmem:[%s5825 + $0x48] sm:$0xff]
  %v12140 = vld [vmem:[%s5825 + $0x50] sm:$0xff]
  %v12141 = vld [vmem:[%s5825 + $0x58] sm:$0xff]
  %v12142 = vld [vmem:[%s5825 + $0x60] sm:$0xff]
  %v12143 = vld [vmem:[%s5825 + $0x68] sm:$0xff]
  %v12144 = vld [vmem:[%s5825 + $0x70] sm:$0xff]
  %12145 = vrot.lane.b32.xlu0 %v11451, 125
  %v12146 = vpop.permute.xlu0 %12145
  %12147 = vrot.lane.b32.xlu0 %v11452, 125
  %v12148 = vpop.permute.xlu0 %12147
  %12149 = vrot.lane.b32.xlu0 %v11453, 125
  %v12150 = vpop.permute.xlu0 %12149
  %12151 = vrot.lane.b32.xlu0 %v11454, 125
  %v12152 = vpop.permute.xlu0 %12151
  %12153 = vrot.lane.b32.xlu0 %v11455, 125
  %v12154 = vpop.permute.xlu0 %12153
  %12155 = vrot.lane.b32.xlu0 %v11456, 125
  %v12156 = vpop.permute.xlu0 %12155
  %12157 = vrot.lane.b32.xlu0 %v11457, 125
  %v12158 = vpop.permute.xlu0 %12157
  %12159 = vrot.lane.b32.xlu0 %v11458, 125
  %v12160 = vpop.permute.xlu0 %12159
  %v12170 = vsel %vm5214, %v12130, 0
  %v12173 = vsel %vm5214, %v12131, 0
  %v12176 = vsel %vm5214, %v12132, 0
  %v12179 = vsel %vm5214, %v12133, 0
  %v12182 = vsel %vm5214, %v12134, 0
  %v12185 = vsel %vm5214, %v12135, 0
  %v12188 = vsel %vm5214, %v12136, 0
  %v12191 = vsel %vm5214, %v12137, 0
  %v12194 = vsel %vm5214, %v12138, 0
  %v12197 = vsel %vm5214, %v12139, 0
  %v12200 = vsel %vm5214, %v12140, 0
  %v12203 = vsel %vm5214, %v12141, 0
  %v12206 = vsel %vm5214, %v12142, 0
  %v12209 = vsel %vm5214, %v12143, 0
  %v12212 = vsel %vm5214, %v12144, 0
  %12214 = vmatprep.subr.mxu0 0.0
  %12215 = vmatpush1.msra.mxu0 0.0
  %12216 = vmatprep.subr.mxu0 0.0
  %12217 = vmatpush1.msra.mxu0 0.0
  %12218 = vmatprep.subr.mxu0 0.0
  %12219 = vmatpush1.msra.mxu0 0.0
  %12220 = vmatprep.subr.mxu0 0.0
  %12221 = vmatpush1.msra.mxu0 0.0
  %12222 = vmatprep.subr.mxu0 0.0
  %12223 = vmatpush1.msra.mxu0 0.0
  %12224 = vmatprep.subr.mxu0 0.0
  %12225 = vmatpush1.msra.mxu0 0.0
  %12226 = vmatprep.subr.mxu0 0.0
  %12227 = vmatpush1.msra.mxu0 0.0
  %12228 = vmatprep.subr.mxu0 0.0
  %12229 = vmatpush1.msra.mxu0 0.0
  %12230 = vmatprep.subr.mxu0 0.0
  %12231 = vmatpush1.msra.mxu0 %v12160
  %12232 = vmatprep.subr.mxu0 0.0
  %12233 = vmatpush1.msra.mxu0 %v12158
  %12234 = vmatprep.subr.mxu0 0.0
  %12235 = vmatpush1.msra.mxu0 %v12156
  %12236 = vmatprep.subr.mxu0 0.0
  %12237 = vmatpush1.msra.mxu0 %v12154
  %12238 = vmatprep.subr.mxu0 0.0
  %12239 = vmatpush1.msra.mxu0 %v12152
  %12240 = vmatprep.subr.mxu0 0.0
  %12241 = vmatpush1.msra.mxu0 %v12150
  %12242 = vmatprep.subr.mxu0 0.0
  %12243 = vmatpush1.msra.mxu0 %v12148
  %12244 = vmatprep.subr.mxu0 0.0
  %12245 = vmatpush1.msra.mxu0 %v12146
  %12246 = vmatprep.subr.mxu0 0.0
  %12247 = vmatpush2.msra.mxu0 0.0
  %12248 = vmatprep.subr.mxu0 0.0
  %12249 = vmatpush2.msra.mxu0 0.0
  %12250 = vmatprep.subr.mxu0 0.0
  %12251 = vmatpush2.msra.mxu0 0.0
  %12252 = vmatprep.subr.mxu0 0.0
  %12253 = vmatpush2.msra.mxu0 0.0
  %12254 = vmatprep.subr.mxu0 0.0
  %12255 = vmatpush2.msra.mxu0 0.0
  %12256 = vmatprep.subr.mxu0 0.0
  %12257 = vmatpush2.msra.mxu0 0.0
  %12258 = vmatprep.subr.mxu0 0.0
  %12259 = vmatpush2.msra.mxu0 0.0
  %12260 = vmatprep.subr.mxu0 0.0
  %12261 = vmatpush2.msra.mxu0 0.0
  %12262 = vmatprep.subr.mxu0 0.0
  %12263 = vmatpush2.msra.mxu0 0.0
  %12264 = vmatprep.subr.mxu0 0.0
  %12265 = vmatpush2.msra.mxu0 0.0
  %12266 = vmatprep.subr.mxu0 0.0
  %12267 = vmatpush2.msra.mxu0 0.0
  %12268 = vmatprep.subr.mxu0 0.0
  %12269 = vmatpush2.msra.mxu0 0.0
  %12270 = vmatprep.subr.mxu0 0.0
  %12271 = vmatpush2.msra.mxu0 0.0
  %12272 = vmatprep.subr.mxu0 0.0
  %12273 = vmatpush2.msra.mxu0 0.0
  %12274 = vmatprep.subr.mxu0 0.0
  %12275 = vmatpush2.msra.mxu0 0.0
  %12276 = vmatprep.subr.mxu0 0.0
  %12277 = vmatpush2.msra.mxu0 0.0
  %12278 = vmatprep.mubr.f32.mxu0 0.0
  %12279 = vmatmul.mubr.f32.gmra.mxu0 %v12170
  %v12280 = vpop.f32.mrf.mxu0
  %v12281 = vadd.f32 0.0, %v12280
  %v12282 = vpop.f32.mrf.mxu0
  %12283 = vmatprep.mubr.f32.mxu0 0.0
  %12284 = vmatmul.mubr.f32.gmra.mxu0 %v12173
  %v12285 = vpop.f32.mrf.mxu0
  %v12286 = vadd.f32 0.0, %v12285
  %v12287 = vpop.f32.mrf.mxu0
  %12288 = vmatprep.mubr.f32.mxu0 0.0
  %12289 = vmatmul.mubr.f32.gmra.mxu0 %v12176
  %v12290 = vpop.f32.mrf.mxu0
  %v12291 = vadd.f32 0.0, %v12290
  %v12292 = vpop.f32.mrf.mxu0
  %12293 = vmatprep.mubr.f32.mxu0 0.0
  %12294 = vmatmul.mubr.f32.gmra.mxu0 %v12179
  %v12295 = vpop.f32.mrf.mxu0
  %v12296 = vadd.f32 0.0, %v12295
  %v12297 = vpop.f32.mrf.mxu0
  %12298 = vmatprep.mubr.f32.mxu0 0.0
  %12299 = vmatmul.mubr.f32.gmra.mxu0 %v12182
  %v12300 = vpop.f32.mrf.mxu0
  %v12301 = vadd.f32 0.0, %v12300
  %v12302 = vpop.f32.mrf.mxu0
  %12303 = vmatprep.mubr.f32.mxu0 0.0
  %12304 = vmatmul.mubr.f32.gmra.mxu0 %v12185
  %v12305 = vpop.f32.mrf.mxu0
  %v12306 = vadd.f32 0.0, %v12305
  %v12307 = vpop.f32.mrf.mxu0
  %12308 = vmatprep.mubr.f32.mxu0 0.0
  %12309 = vmatmul.mubr.f32.gmra.mxu0 %v12188
  %v12310 = vpop.f32.mrf.mxu0
  %v12311 = vadd.f32 0.0, %v12310
  %v12312 = vpop.f32.mrf.mxu0
  %12313 = vmatprep.mubr.f32.mxu0 0.0
  %12314 = vmatmul.mubr.f32.gmra.mxu0 %v12191
  %v12315 = vpop.f32.mrf.mxu0
  %v12316 = vadd.f32 0.0, %v12315
  %v12317 = vpop.f32.mrf.mxu0
  %12318 = vmatprep.mubr.f32.mxu0 0.0
  %12319 = vmatmul.mubr.f32.gmra.mxu0 %v12194
  %v12320 = vpop.f32.mrf.mxu0
  %v12321 = vadd.f32 0.0, %v12320
  %v12322 = vpop.f32.mrf.mxu0
  %12323 = vmatprep.mubr.f32.mxu0 0.0
  %12324 = vmatmul.mubr.f32.gmra.mxu0 %v12197
  %v12325 = vpop.f32.mrf.mxu0
  %v12326 = vadd.f32 0.0, %v12325
  %v12327 = vpop.f32.mrf.mxu0
  %12328 = vmatprep.mubr.f32.mxu0 0.0
  %12329 = vmatmul.mubr.f32.gmra.mxu0 %v12200
  %v12330 = vpop.f32.mrf.mxu0
  %v12331 = vadd.f32 0.0, %v12330
  %v12332 = vpop.f32.mrf.mxu0
  %12333 = vmatprep.mubr.f32.mxu0 0.0
  %12334 = vmatmul.mubr.f32.gmra.mxu0 %v12203
  %v12335 = vpop.f32.mrf.mxu0
  %v12336 = vadd.f32 0.0, %v12335
  %v12337 = vpop.f32.mrf.mxu0
  %12338 = vmatprep.mubr.f32.mxu0 0.0
  %12339 = vmatmul.mubr.f32.gmra.mxu0 %v12206
  %v12340 = vpop.f32.mrf.mxu0
  %v12341 = vadd.f32 0.0, %v12340
  %v12342 = vpop.f32.mrf.mxu0
  %12343 = vmatprep.mubr.f32.mxu0 0.0
  %12344 = vmatmul.mubr.f32.gmra.mxu0 %v12209
  %v12345 = vpop.f32.mrf.mxu0
  %v12346 = vadd.f32 0.0, %v12345
  %v12347 = vpop.f32.mrf.mxu0
  %12348 = vmatprep.mubr.f32.mxu0 0.0
  %12349 = vmatmul.mubr.f32.gmra.mxu0 %v12212
  %v12350 = vpop.f32.mrf.mxu0
  %v12351 = vadd.f32 0.0, %v12350
  %v12352 = vpop.f32.mrf.mxu0
  %12353 = vdwg.mxu0
  %v12354 = vadd.f32 %v12115, %v12281
  %v12355 = vadd.f32 %v12116, %v12286
  %v12356 = vadd.f32 %v12117, %v12291
  %v12357 = vadd.f32 %v12118, %v12296
  %v12358 = vadd.f32 %v12119, %v12301
  %v12359 = vadd.f32 %v12120, %v12306
  %v12360 = vadd.f32 %v12121, %v12311
  %v12361 = vadd.f32 %v12122, %v12316
  %v12362 = vadd.f32 %v12123, %v12321
  %v12363 = vadd.f32 %v12124, %v12326
  %v12364 = vadd.f32 %v12125, %v12331
  %v12365 = vadd.f32 %v12126, %v12336
  %v12366 = vadd.f32 %v12127, %v12341
  %v12367 = vadd.f32 %v12128, %v12346
  %v12368 = vadd.f32 %v12129, %v12351
  %v12369 = vld [vmem:[%s12] sm:$0xff]
  %v12370 = vld [vmem:[%s12 + $0x8] sm:$0xff]
  %v12371 = vld [vmem:[%s12 + $0x10] sm:$0xff]
  %v12372 = vld [vmem:[%s12 + $0x18] sm:$0xff]
  %v12373 = vld [vmem:[%s12 + $0x20] sm:$0xff]
  %v12374 = vld [vmem:[%s12 + $0x28] sm:$0xff]
  %v12375 = vld [vmem:[%s12 + $0x30] sm:$0xff]
  %v12376 = vld [vmem:[%s12 + $0x38] sm:$0xff]
  %v12377 = vld [vmem:[%s12 + $0x40] sm:$0xff]
  %v12378 = vld [vmem:[%s12 + $0x48] sm:$0xff]
  %v12379 = vld [vmem:[%s12 + $0x50] sm:$0xff]
  %v12380 = vld [vmem:[%s12 + $0x58] sm:$0xff]
  %v12381 = vld [vmem:[%s12 + $0x60] sm:$0xff]
  %v12382 = vld [vmem:[%s12 + $0x68] sm:$0xff]
  %v12383 = vld [vmem:[%s12 + $0x70] sm:$0xff]
  %v12384 = vadd.f32 %v12354, %v12369
  %v12385 = vadd.f32 %v12355, %v12370
  %v12386 = vadd.f32 %v12356, %v12371
  %v12387 = vadd.f32 %v12357, %v12372
  %v12388 = vadd.f32 %v12358, %v12373
  %v12389 = vadd.f32 %v12359, %v12374
  %v12390 = vadd.f32 %v12360, %v12375
  %v12391 = vadd.f32 %v12361, %v12376
  %v12392 = vadd.f32 %v12362, %v12377
  %v12393 = vadd.f32 %v12363, %v12378
  %v12394 = vadd.f32 %v12364, %v12379
  %v12395 = vadd.f32 %v12365, %v12380
  %v12396 = vadd.f32 %v12366, %v12381
  %v12397 = vadd.f32 %v12367, %v12382
  %v12398 = vadd.f32 %v12368, %v12383
  %v12399 = vmax.f32 %v12384, 0.0
  %v12400 = vmax.f32 %v12385, 0.0
  %v12401 = vmax.f32 %v12386, 0.0
  %v12402 = vmax.f32 %v12387, 0.0
  %v12403 = vmax.f32 %v12388, 0.0
  %v12404 = vmax.f32 %v12389, 0.0
  %v12405 = vmax.f32 %v12390, 0.0
  %v12406 = vmax.f32 %v12391, 0.0
  %v12407 = vmax.f32 %v12392, 0.0
  %v12408 = vmax.f32 %v12393, 0.0
  %v12409 = vmax.f32 %v12394, 0.0
  %v12410 = vmax.f32 %v12395, 0.0
  %v12411 = vmax.f32 %v12396, 0.0
  %v12412 = vmax.f32 %v12397, 0.0
  %v12413 = vmax.f32 %v12398, 0.0
  %v12414 = vld [vmem:[%s13] sm:$0xff]
  %v12415 = vld [vmem:[%s13 + $0x8] sm:$0xff]
  %v12416 = vld [vmem:[%s13 + $0x10] sm:$0xff]
  %v12417 = vld [vmem:[%s13 + $0x18] sm:$0xff]
  %v12418 = vld [vmem:[%s13 + $0x20] sm:$0xff]
  %v12419 = vld [vmem:[%s13 + $0x28] sm:$0xff]
  %v12420 = vld [vmem:[%s13 + $0x30] sm:$0xff]
  %v12421 = vld [vmem:[%s13 + $0x38] sm:$0xff]
  %v12422 = vld [vmem:[%s13 + $0x40] sm:$0xff]
  %v12423 = vld [vmem:[%s13 + $0x48] sm:$0xff]
  %v12424 = vld [vmem:[%s13 + $0x50] sm:$0xf]
  %v12425 = vld [vmem:[%s14] sm:$0xff]
  %v12426 = vld [vmem:[%s14 + $0x8] sm:$0xff]
  %v12427 = vld [vmem:[%s14 + $0x10] sm:$0xff]
  %v12428 = vld [vmem:[%s14 + $0x18] sm:$0xff]
  %v12429 = vld [vmem:[%s14 + $0x20] sm:$0xff]
  %v12430 = vld [vmem:[%s14 + $0x28] sm:$0xff]
  %v12431 = vld [vmem:[%s14 + $0x30] sm:$0xff]
  %v12432 = vld [vmem:[%s14 + $0x38] sm:$0xff]
  %v12433 = vld [vmem:[%s14 + $0x40] sm:$0xff]
  %v12434 = vld [vmem:[%s14 + $0x48] sm:$0xff]
  %v12435 = vld [vmem:[%s14 + $0x50] sm:$0xf]
  %v12437 = vsel %vm6132, %v12414, 0
  %v12440 = vsel %vm6132, %v12415, 0
  %v12443 = vsel %vm6132, %v12416, 0
  %v12446 = vsel %vm6132, %v12417, 0
  %v12449 = vsel %vm6132, %v12418, 0
  %v12452 = vsel %vm6132, %v12419, 0
  %v12455 = vsel %vm6132, %v12420, 0
  %v12458 = vsel %vm6132, %v12421, 0
  %v12461 = vsel %vm6132, %v12422, 0
  %v12464 = vsel %vm6132, %v12423, 0
  %v12467 = vsel %vm6132, %v12424, 0
  %12469 = vmatprep.subr.mxu0 0.0
  %12470 = vmatpush1.msra.mxu0 0.0
  %12471 = vmatprep.subr.mxu0 0.0
  %12472 = vmatpush1.msra.mxu0 %v12413
  %12473 = vmatprep.subr.mxu0 0.0
  %12474 = vmatpush1.msra.mxu0 %v12412
  %12475 = vmatprep.subr.mxu0 0.0
  %12476 = vmatpush1.msra.mxu0 %v12411
  %12477 = vmatprep.subr.mxu0 0.0
  %12478 = vmatpush1.msra.mxu0 %v12410
  %12479 = vmatprep.subr.mxu0 0.0
  %12480 = vmatpush1.msra.mxu0 %v12409
  %12481 = vmatprep.subr.mxu0 0.0
  %12482 = vmatpush1.msra.mxu0 %v12408
  %12483 = vmatprep.subr.mxu0 0.0
  %12484 = vmatpush1.msra.mxu0 %v12407
  %12485 = vmatprep.subr.mxu0 0.0
  %12486 = vmatpush1.msra.mxu0 %v12406
  %12487 = vmatprep.subr.mxu0 0.0
  %12488 = vmatpush1.msra.mxu0 %v12405
  %12489 = vmatprep.subr.mxu0 0.0
  %12490 = vmatpush1.msra.mxu0 %v12404
  %12491 = vmatprep.subr.mxu0 0.0
  %12492 = vmatpush1.msra.mxu0 %v12403
  %12493 = vmatprep.subr.mxu0 0.0
  %12494 = vmatpush1.msra.mxu0 %v12402
  %12495 = vmatprep.subr.mxu0 0.0
  %12496 = vmatpush1.msra.mxu0 %v12401
  %12497 = vmatprep.subr.mxu0 0.0
  %12498 = vmatpush1.msra.mxu0 %v12400
  %12499 = vmatprep.subr.mxu0 0.0
  %12500 = vmatpush1.msra.mxu0 %v12399
  %12501 = vmatprep.subr.mxu0 0.0
  %12502 = vmatpush2.msra.mxu0 0.0
  %12503 = vmatprep.subr.mxu0 0.0
  %12504 = vmatpush2.msra.mxu0 0.0
  %12505 = vmatprep.subr.mxu0 0.0
  %12506 = vmatpush2.msra.mxu0 0.0
  %12507 = vmatprep.subr.mxu0 0.0
  %12508 = vmatpush2.msra.mxu0 0.0
  %12509 = vmatprep.subr.mxu0 0.0
  %12510 = vmatpush2.msra.mxu0 0.0
  %12511 = vmatprep.subr.mxu0 0.0
  %12512 = vmatpush2.msra.mxu0 0.0
  %12513 = vmatprep.subr.mxu0 0.0
  %12514 = vmatpush2.msra.mxu0 0.0
  %12515 = vmatprep.subr.mxu0 0.0
  %12516 = vmatpush2.msra.mxu0 0.0
  %12517 = vmatprep.subr.mxu0 0.0
  %12518 = vmatpush2.msra.mxu0 0.0
  %12519 = vmatprep.subr.mxu0 0.0
  %12520 = vmatpush2.msra.mxu0 0.0
  %12521 = vmatprep.subr.mxu0 0.0
  %12522 = vmatpush2.msra.mxu0 0.0
  %12523 = vmatprep.subr.mxu0 0.0
  %12524 = vmatpush2.msra.mxu0 0.0
  %12525 = vmatprep.subr.mxu0 0.0
  %12526 = vmatpush2.msra.mxu0 0.0
  %12527 = vmatprep.subr.mxu0 0.0
  %12528 = vmatpush2.msra.mxu0 0.0
  %12529 = vmatprep.subr.mxu0 0.0
  %12530 = vmatpush2.msra.mxu0 0.0
  %12531 = vmatprep.subr.mxu0 0.0
  %12532 = vmatpush2.msra.mxu0 0.0
  %12533 = vmatprep.mubr.f32.mxu0 0.0
  %12534 = vmatmul.mubr.f32.gmra.mxu0 %v12437
  %v12535 = vpop.f32.mrf.mxu0
  %v12536 = vadd.f32 %v12425, %v12535
  %v12537 = vpop.f32.mrf.mxu0
  %12538 = vmatprep.mubr.f32.mxu0 0.0
  %12539 = vmatmul.mubr.f32.gmra.mxu0 %v12440
  %v12540 = vpop.f32.mrf.mxu0
  %v12541 = vadd.f32 %v12426, %v12540
  %v12542 = vpop.f32.mrf.mxu0
  %12543 = vmatprep.mubr.f32.mxu0 0.0
  %12544 = vmatmul.mubr.f32.gmra.mxu0 %v12443
  %v12545 = vpop.f32.mrf.mxu0
  %v12546 = vadd.f32 %v12427, %v12545
  %v12547 = vpop.f32.mrf.mxu0
  %12548 = vmatprep.mubr.f32.mxu0 0.0
  %12549 = vmatmul.mubr.f32.gmra.mxu0 %v12446
  %v12550 = vpop.f32.mrf.mxu0
  %v12551 = vadd.f32 %v12428, %v12550
  %v12552 = vpop.f32.mrf.mxu0
  %12553 = vmatprep.mubr.f32.mxu0 0.0
  %12554 = vmatmul.mubr.f32.gmra.mxu0 %v12449
  %v12555 = vpop.f32.mrf.mxu0
  %v12556 = vadd.f32 %v12429, %v12555
  %v12557 = vpop.f32.mrf.mxu0
  %12558 = vmatprep.mubr.f32.mxu0 0.0
  %12559 = vmatmul.mubr.f32.gmra.mxu0 %v12452
  %v12560 = vpop.f32.mrf.mxu0
  %v12561 = vadd.f32 %v12430, %v12560
  %v12562 = vpop.f32.mrf.mxu0
  %12563 = vmatprep.mubr.f32.mxu0 0.0
  %12564 = vmatmul.mubr.f32.gmra.mxu0 %v12455
  %v12565 = vpop.f32.mrf.mxu0
  %v12566 = vadd.f32 %v12431, %v12565
  %v12567 = vpop.f32.mrf.mxu0
  %12568 = vmatprep.mubr.f32.mxu0 0.0
  %12569 = vmatmul.mubr.f32.gmra.mxu0 %v12458
  %v12570 = vpop.f32.mrf.mxu0
  %v12571 = vadd.f32 %v12432, %v12570
  %v12572 = vpop.f32.mrf.mxu0
  %12573 = vmatprep.mubr.f32.mxu0 0.0
  %12574 = vmatmul.mubr.f32.gmra.mxu0 %v12461
  %v12575 = vpop.f32.mrf.mxu0
  %v12576 = vadd.f32 %v12433, %v12575
  %v12577 = vpop.f32.mrf.mxu0
  %12578 = vmatprep.mubr.f32.mxu0 0.0
  %12579 = vmatmul.mubr.f32.gmra.mxu0 %v12464
  %v12580 = vpop.f32.mrf.mxu0
  %v12581 = vadd.f32 %v12434, %v12580
  %v12582 = vpop.f32.mrf.mxu0
  %12583 = vmatprep.mubr.f32.mxu0 0.0
  %12584 = vmatmul.mubr.f32.gmra.mxu0 %v12467
  %v12585 = vpop.f32.mrf.mxu0
  %v12586 = vadd.f32 %v12435, %v12585
  %v12587 = vpop.f32.mrf.mxu0
  %12588 = vdwg.mxu0
  %v12589 = vmax.f32 %v12536, 0.0
  %v12590 = vmax.f32 %v12541, 0.0
  %v12591 = vmax.f32 %v12546, 0.0
  %v12592 = vmax.f32 %v12551, 0.0
  %v12593 = vmax.f32 %v12556, 0.0
  %v12594 = vmax.f32 %v12561, 0.0
  %v12595 = vmax.f32 %v12566, 0.0
  %v12596 = vmax.f32 %v12571, 0.0
  %v12597 = vmax.f32 %v12576, 0.0
  %v12598 = vmax.f32 %v12581, 0.0
  %v12599 = vmax.f32 %v12586, 0.0
  %v12600 = vld [vmem:[%s15] sm:$0xff]
  %v12601 = vld [vmem:[%s15 + $0x8] sm:$0x3]
  %v12602 = vld [vmem:[%s16] sm:$0xff]
  %v12603 = vld [vmem:[%s16 + $0x8] sm:$0x3]
  %v12605 = vsel %vm6301, %v12600, 0
  %v12608 = vsel %vm6301, %v12601, 0
  %v12611 = vsel %vm77, %v12599, 0
  %12613 = vmatprep.subr.mxu0 0.0
  %12614 = vmatpush1.msra.mxu0 0.0
  %12615 = vmatprep.subr.mxu0 0.0
  %12616 = vmatpush1.msra.mxu0 0.0
  %12617 = vmatprep.subr.mxu0 0.0
  %12618 = vmatpush1.msra.mxu0 0.0
  %12619 = vmatprep.subr.mxu0 0.0
  %12620 = vmatpush1.msra.mxu0 0.0
  %12621 = vmatprep.subr.mxu0 0.0
  %12622 = vmatpush1.msra.mxu0 0.0
  %12623 = vmatprep.subr.mxu0 0.0
  %12624 = vmatpush1.msra.mxu0 %v12611
  %12625 = vmatprep.subr.mxu0 0.0
  %12626 = vmatpush1.msra.mxu0 %v12598
  %12627 = vmatprep.subr.mxu0 0.0
  %12628 = vmatpush1.msra.mxu0 %v12597
  %12629 = vmatprep.subr.mxu0 0.0
  %12630 = vmatpush1.msra.mxu0 %v12596
  %12631 = vmatprep.subr.mxu0 0.0
  %12632 = vmatpush1.msra.mxu0 %v12595
  %12633 = vmatprep.subr.mxu0 0.0
  %12634 = vmatpush1.msra.mxu0 %v12594
  %12635 = vmatprep.subr.mxu0 0.0
  %12636 = vmatpush1.msra.mxu0 %v12593
  %12637 = vmatprep.subr.mxu0 0.0
  %12638 = vmatpush1.msra.mxu0 %v12592
  %12639 = vmatprep.subr.mxu0 0.0
  %12640 = vmatpush1.msra.mxu0 %v12591
  %12641 = vmatprep.subr.mxu0 0.0
  %12642 = vmatpush1.msra.mxu0 %v12590
  %12643 = vmatprep.subr.mxu0 0.0
  %12644 = vmatpush1.msra.mxu0 %v12589
  %12645 = vmatprep.subr.mxu0 0.0
  %12646 = vmatpush2.msra.mxu0 0.0
  %12647 = vmatprep.subr.mxu0 0.0
  %12648 = vmatpush2.msra.mxu0 0.0
  %12649 = vmatprep.subr.mxu0 0.0
  %12650 = vmatpush2.msra.mxu0 0.0
  %12651 = vmatprep.subr.mxu0 0.0
  %12652 = vmatpush2.msra.mxu0 0.0
  %12653 = vmatprep.subr.mxu0 0.0
  %12654 = vmatpush2.msra.mxu0 0.0
  %12655 = vmatprep.subr.mxu0 0.0
  %12656 = vmatpush2.msra.mxu0 0.0
  %12657 = vmatprep.subr.mxu0 0.0
  %12658 = vmatpush2.msra.mxu0 0.0
  %12659 = vmatprep.subr.mxu0 0.0
  %12660 = vmatpush2.msra.mxu0 0.0
  %12661 = vmatprep.subr.mxu0 0.0
  %12662 = vmatpush2.msra.mxu0 0.0
  %12663 = vmatprep.subr.mxu0 0.0
  %12664 = vmatpush2.msra.mxu0 0.0
  %12665 = vmatprep.subr.mxu0 0.0
  %12666 = vmatpush2.msra.mxu0 0.0
  %12667 = vmatprep.subr.mxu0 0.0
  %12668 = vmatpush2.msra.mxu0 0.0
  %12669 = vmatprep.subr.mxu0 0.0
  %12670 = vmatpush2.msra.mxu0 0.0
  %12671 = vmatprep.subr.mxu0 0.0
  %12672 = vmatpush2.msra.mxu0 0.0
  %12673 = vmatprep.subr.mxu0 0.0
  %12674 = vmatpush2.msra.mxu0 0.0
  %12675 = vmatprep.subr.mxu0 0.0
  %12676 = vmatpush2.msra.mxu0 0.0
  %12677 = vmatprep.mubr.f32.mxu0 0.0
  %12678 = vmatmul.mubr.f32.gmra.mxu0 %v12605
  %v12679 = vpop.f32.mrf.mxu0
  %v12680 = vadd.f32 %v12602, %v12679
  %v12681 = vpop.f32.mrf.mxu0
  %12682 = vmatprep.mubr.f32.mxu0 0.0
  %12683 = vmatmul.mubr.f32.gmra.mxu0 %v12608
  %v12684 = vpop.f32.mrf.mxu0
  %v12685 = vadd.f32 %v12603, %v12684
  %v12686 = vpop.f32.mrf.mxu0
  %12687 = vdwg.mxu0
  %s12688 = scalar_lea.vmem %s17, 16
  %12689 = vst.msk [vmem:[%s12688] sm:$0xff] %vm6386, %v12680
  %12690 = vst.msk [vmem:[%s12688 + $0x8] sm:$0x3] %vm6388, %v12685
  // Predicated region
  $region70: #{lenet_forward.1} parent=0 // pred_check
    _
  $region71: #{lenet_forward.1} parent=0 // pred_check_branch
    %12692 = sbr.rel (0) target = $region73
  $region72: #{lenet_forward.1} parent=0 // pred_region
    _
  $region73: #{lenet_forward.1} parent=0 // pred_fallthru
    _
  // Predicated region
  $region74: #{lenet_forward.1} parent=0 // pred_check
    _
  $region75: #{lenet_forward.1} parent=0 // pred_check_branch
    %12694 = sbr.rel (0) target = $region77
  $region76: #{lenet_forward.1} parent=0 // pred_region
    _
  $region77: #{lenet_forward.1} parent=0 // pred_fallthru
    _

</llo_original>
